<compile_context>
chip_gen: v5e
topology: v5e:2x2
jax: 0.10.0
libtpu: 0.0.40
codegen_flags: <defaults>
</compile_context>

<pallas_src>
import jax
import jax.numpy as jnp
from jax import lax
from jax.experimental import pallas as pl
from jax.experimental.pallas import tpu as pltpu

HIDDEN = 128          # d_model
HEADS = 8
HEAD_DIM = HIDDEN // HEADS
FFN_DIM = 128         # dim_feedforward
LAYERS = 2
EPS = 1e-5            # PyTorch LayerNorm default
INPUT_VOCAB = 24      # input_size
TARGET_VOCAB = 10     # target_size
NEG_INF = -1e30


def _round_up(x, m):
    return ((x + m - 1) // m) * m


# Embedding tables padded to 16-row multiples so every weight-slab slice is
# aligned to the bf16 (16,128) native tile.
EMB_SRC_ROWS = _round_up(INPUT_VOCAB, 16)    # 32
EMB_TGT_ROWS = _round_up(TARGET_VOCAB, 16)   # 16


# --------------------------- static slab layouts ---------------------------

def _build_w_layout():
    order = [('emb_src', EMB_SRC_ROWS), ('emb_tgt', EMB_TGT_ROWS)]
    for l in range(LAYERS):
        pre = f'enc{l}_'
        for nm in ('self_wq', 'self_wk', 'self_wv', 'self_wo', 'w1', 'w2'):
            order.append((pre + nm, HIDDEN))
    for l in range(LAYERS):
        pre = f'dec{l}_'
        for nm in ('self_wq', 'self_wk', 'self_wv', 'self_wo',
                   'cross_wq', 'cross_wk', 'cross_wv', 'cross_wo', 'w1', 'w2'):
            order.append((pre + nm, HIDDEN))
    order.append(('fc_w', HIDDEN))
    layout, off = {}, 0
    for name, rows in order:
        layout[name] = (off, rows)
        off += rows
    return order, layout, off


W_ORDER, W_LAYOUT, W_ROWS = _build_w_layout()

V_STRIDE = 8   # one (8,128) f32 tile per vector -> every load sublane-aligned


def _build_v_layout():
    names = []
    for l in range(LAYERS):
        pre = f'enc{l}_'
        names += [pre + n for n in ('self_bq', 'self_bk', 'self_bv', 'self_bo',
                                    'norm1_g', 'norm1_b', 'b1', 'b2',
                                    'norm2_g', 'norm2_b')]
    for l in range(LAYERS):
        pre = f'dec{l}_'
        names += [pre + n for n in ('self_bq', 'self_bk', 'self_bv', 'self_bo',
                                    'cross_bq', 'cross_bk', 'cross_bv', 'cross_bo',
                                    'norm1_g', 'norm1_b', 'norm2_g', 'norm2_b',
                                    'norm3_g', 'norm3_b', 'b1', 'b2')]
    names += ['enc_norm_g', 'enc_norm_b', 'dec_norm_g', 'dec_norm_b', 'fc_b']
    layout = {name: i * V_STRIDE for i, name in enumerate(names)}
    return names, layout, len(names) * V_STRIDE


V_ORDER, V_LAYOUT, V_ROWS = _build_v_layout()


# --------------------------------- kernel ---------------------------------

def _kernel(src_ref, tgt_ref, bias_ss_ref, bias_tt_ref, bias_ts_ref,
            w_ref, v_ref, out_ref):
    def W(name):                              # bf16 (rows, 128), 16-row aligned
        off, rows = W_LAYOUT[name]
        return w_ref[off:off + rows, :]

    def V(name):                              # f32 (1, 128), 8-row aligned
        off = V_LAYOUT[name]
        return v_ref[off:off + 1, :]

    def mm(x, wname):                         # bf16 operands, f32 accumulation
        return jnp.dot(x.astype(jnp.bfloat16), W(wname),
                       preferred_element_type=jnp.float32)

    def layernorm(x, gname, bname):           # f32 elementwise math
        mean = jnp.mean(x, axis=-1, keepdims=True)
        xc = x - mean
        var = jnp.mean(xc * xc, axis=-1, keepdims=True)
        return xc * lax.rsqrt(var + EPS) * V(gname) + V(bname)

    def embed(tok_ref, tname):                # iota-one-hot @ table on the MXU
        table = W(tname)
        rows = tok_ref.shape[0]
        onehot = (tok_ref[...] ==
                  lax.broadcasted_iota(jnp.int32, (rows, table.shape[0]), 1)
                  ).astype(jnp.bfloat16)
        return jnp.dot(onehot, table, preferred_element_type=jnp.float32)

    def mha(x_q, x_kv, prefix, bias):
        rq, rk = x_q.shape[0], x_kv.shape[0]
        # Full-width 128x128 projections (1/sqrt(head_dim) folded into wq/bq).
        q = mm(x_q, prefix + 'wq') + V(prefix + 'bq')
        k = mm(x_kv, prefix + 'wk') + V(prefix + 'bk')
        v = mm(x_kv, prefix + 'wv') + V(prefix + 'bv')
        # Per-head scores (contract last dims directly -> no K transpose),
        # stacked so the softmax reductions run once for all heads.
        dn = (((1,), (1,)), ((), ()))
        scores = []
        for h in range(HEADS):
            sl = slice(h * HEAD_DIM, (h + 1) * HEAD_DIM)
            s = lax.dot_general(q[:, sl], k[:, sl], dn,
                                preferred_element_type=jnp.float32)
            scores.append(s + bias)
        s_all = jnp.concatenate(scores, axis=0)            # (H*rq, rk)
        m = jnp.max(s_all, axis=-1, keepdims=True)
        e = jnp.exp(s_all - m)
        p = e * pl.reciprocal(jnp.sum(e, axis=-1, keepdims=True), approx=True)
        # Per-head context written into lane slices -> lane-dense (rq, 128).
        ctx = []
        for h in range(HEADS):
            sl = slice(h * HEAD_DIM, (h + 1) * HEAD_DIM)
            ctx.append(jnp.dot(p[h * rq:(h + 1) * rq, :], v[:, sl],
                               preferred_element_type=jnp.float32))
        ctx = jnp.concatenate(ctx, axis=1)                  # (rq, 128)
        # ONE full-width output projection.
        return mm(ctx, prefix + 'wo') + V(prefix + 'bo')

    def ffn(x, pre):
        h = jnp.maximum(mm(x, pre + 'w1') + V(pre + 'b1'), 0.0)   # ReLU
        return mm(h, pre + 'w2') + V(pre + 'b2')

    bias_ss = bias_ss_ref[...]
    bias_tt = bias_tt_ref[...]
    bias_ts = bias_ts_ref[...]

    # ------------------------------ encoder ------------------------------
    mem = embed(src_ref, 'emb_src')
    for l in range(LAYERS):
        pre = f'enc{l}_'
        mem = layernorm(mem + mha(mem, mem, pre + 'self_', bias_ss),
                        pre + 'norm1_g', pre + 'norm1_b')
        mem = layernorm(mem + ffn(mem, pre), pre + 'norm2_g', pre + 'norm2_b')
    mem = layernorm(mem, 'enc_norm_g', 'enc_norm_b')

    # ------------------------------ decoder ------------------------------
    x = embed(tgt_ref, 'emb_tgt')
    for l in range(LAYERS):
        pre = f'dec{l}_'
        x = layernorm(x + mha(x, x, pre + 'self_', bias_tt),
                      pre + 'norm1_g', pre + 'norm1_b')
        x = layernorm(x + mha(x, mem, pre + 'cross_', bias_ts),
                      pre + 'norm2_g', pre + 'norm2_b')
        x = layernorm(x + ffn(x, pre), pre + 'norm3_g', pre + 'norm3_b')
    x = layernorm(x, 'dec_norm_g', 'dec_norm_b')

    # --------------- output head (lane-dense, padded to 128) --------------
    out_ref[...] = mm(x, 'fc_w') + V('fc_b')


# ------------------- one-time (outside jit) parameter packing -------------------

def pack_params(params):
    """PyTorch-layout params -> (bf16 weight slab (W_ROWS,128), f32 vector slab
    (V_ROWS,128)).  Call ONCE outside jit: all transposes, padding and the
    1/sqrt(head_dim) folding happen here, never per forward call."""
    scale = HEAD_DIM ** -0.5
    wparts, vparts = {}, {}

    def set_w(name, mat):
        off, rows = W_LAYOUT[name]
        mat = jnp.asarray(mat, jnp.float32)
        assert mat.shape[1] == HIDDEN and mat.shape[0] <= rows
        wparts[name] = jnp.pad(mat, ((0, rows - mat.shape[0]), (0, 0)))

    def set_v(name, vec):
        vparts[name] = jnp.asarray(vec, jnp.float32).reshape(1, HIDDEN)

    def set_attn(prefix, in_w, in_b, out_w, out_b):
        set_w(prefix + 'wq', in_w[:HIDDEN].T * scale)        # scale folded into Q
        set_w(prefix + 'wk', in_w[HIDDEN:2 * HIDDEN].T)
        set_w(prefix + 'wv', in_w[2 * HIDDEN:].T)
        set_w(prefix + 'wo', out_w.T)
        set_v(prefix + 'bq', in_b[:HIDDEN] * scale)
        set_v(prefix + 'bk', in_b[HIDDEN:2 * HIDDEN])
        set_v(prefix + 'bv', in_b[2 * HIDDEN:])
        set_v(prefix + 'bo', out_b)

    set_w('emb_src', params['emb_src'])
    set_w('emb_tgt', params['emb_tgt'])
    for l, lp in enumerate(params['enc_layers']):
        pre = f'enc{l}_'
        set_attn(pre + 'self_', lp['attn_in_w'], lp['attn_in_b'],
                 lp['attn_out_w'], lp['attn_out_b'])
        set_w(pre + 'w1', lp['lin1_w'].T); set_v(pre + 'b1', lp['lin1_b'])
        set_w(pre + 'w2', lp['lin2_w'].T); set_v(pre + 'b2', lp['lin2_b'])
        set_v(pre + 'norm1_g', lp['norm1_w']); set_v(pre + 'norm1_b', lp['norm1_b'])
        set_v(pre + 'norm2_g', lp['norm2_w']); set_v(pre + 'norm2_b', lp['norm2_b'])
    for l, lp in enumerate(params['dec_layers']):
        pre = f'dec{l}_'
        set_attn(pre + 'self_', lp['self_in_w'], lp['self_in_b'],
                 lp['self_out_w'], lp['self_out_b'])
        set_attn(pre + 'cross_', lp['cross_in_w'], lp['cross_in_b'],
                 lp['cross_out_w'], lp['cross_out_b'])
        set_w(pre + 'w1', lp['lin1_w'].T); set_v(pre + 'b1', lp['lin1_b'])
        set_w(pre + 'w2', lp['lin2_w'].T); set_v(pre + 'b2', lp['lin2_b'])
        set_v(pre + 'norm1_g', lp['norm1_w']); set_v(pre + 'norm1_b', lp['norm1_b'])
        set_v(pre + 'norm2_g', lp['norm2_w']); set_v(pre + 'norm2_b', lp['norm2_b'])
        set_v(pre + 'norm3_g', lp['norm3_w']); set_v(pre + 'norm3_b', lp['norm3_b'])
    set_v('enc_norm_g', params['enc_norm_w']); set_v('enc_norm_b', params['enc_norm_b'])
    set_v('dec_norm_g', params['dec_norm_w']); set_v('dec_norm_b', params['dec_norm_b'])
    fc_w = params['fc_w'].T                                   # (HIDDEN, TARGET_VOCAB)
    set_w('fc_w', jnp.pad(fc_w, ((0, 0), (0, HIDDEN - fc_w.shape[1]))))
    set_v('fc_b', jnp.pad(params['fc_b'], (0, HIDDEN - params['fc_b'].shape[0])))

    w_slab = jnp.concatenate([wparts[name] for name, _ in W_ORDER], axis=0)
    assert w_slab.shape == (W_ROWS, HIDDEN)
    v_slab = jnp.concatenate(
        [jnp.pad(vparts[name], ((0, V_STRIDE - 1), (0, 0))) for name in V_ORDER],
        axis=0)
    assert v_slab.shape == (V_ROWS, HIDDEN)
    return w_slab.astype(jnp.bfloat16), v_slab


def make_block_bias(n, lq, lk):
    """Block-diagonal additive mask (precomputed once, outside jit)."""
    bq = jnp.arange(n * lq, dtype=jnp.int32)[:, None] // lq
    bk = jnp.arange(n * lk, dtype=jnp.int32)[None, :] // lk
    return jnp.where(bq == bk, 0.0, NEG_INF).astype(jnp.float32)


def _full_spec(shape):
    # Whole-array block (grid = ()); satisfies the (8,128) rule via
    # "block equals full array dims".
    return pl.BlockSpec(shape, lambda: (0,) * len(shape))


@jax.jit
def transformer_forward(src_tokens, tgt_tokens, w_slab, v_slab,
                        bias_ss, bias_tt, bias_ts):
    """src: (S,N) int32, tgt: (T,N) int32 -> (T, N, TARGET_VOCAB) f32."""
    S, N = src_tokens.shape
    T = tgt_tokens.shape[0]

    # Batch-major token rows (row = n*L + l): each sequence occupies contiguous
    # rows, so whole-batch attention is one block-diagonal-masked score per head.
    src_bm = jnp.transpose(src_tokens).reshape(N * S, 1).astype(jnp.int32)
    tgt_bm = jnp.transpose(tgt_tokens).reshape(N * T, 1).astype(jnp.int32)

    inputs = [src_bm, tgt_bm, bias_ss, bias_tt, bias_ts, w_slab, v_slab]
    out = pl.pallas_call(
        _kernel,
        out_shape=jax.ShapeDtypeStruct((N * T, HIDDEN), jnp.float32),
        in_specs=[_full_spec(x.shape) for x in inputs],
        out_specs=_full_spec((N * T, HIDDEN)),
        # Actual footprint ~3 MB; 8 MiB leaves headroom and fits v5e's default
        # scoped budget.  If batch*seq grows, add a leading "parallel" grid axis
        # over batch (per-sequence attention) for v7x's two TensorCores.
        compiler_params=pltpu.CompilerParams(vmem_limit_bytes=8 * 1024 * 1024),
    )(*inputs)

    # (N*T, 128) batch-major padded logits -> (T, N, TARGET_VOCAB) sequence-first.
    logits = out.reshape(N, T, HIDDEN)[:, :, :TARGET_VOCAB]
    return jnp.transpose(logits, (1, 0, 2))


# ---------------- deterministic parameter init (PyTorch-shaped) ----------------

def init_params(key):
    counter = [0]

    def nxt():
        counter[0] += 1
        return jax.random.fold_in(key, counter[0])

    def dense(shape):
        return (0.02 * jax.random.normal(nxt(), shape)).astype(jnp.float32)

    def zeros(shape):
        return jnp.zeros(shape, jnp.float32)

    def ones(shape):
        return jnp.ones(shape, jnp.float32)

    def mha(prefix):
        return {
            f'{prefix}in_w': dense((3 * HIDDEN, HIDDEN)),   # packed q,k,v (PyTorch layout)
            f'{prefix}in_b': zeros((3 * HIDDEN,)),
            f'{prefix}out_w': dense((HIDDEN, HIDDEN)),
            f'{prefix}out_b': zeros((HIDDEN,)),
        }

    def enc_layer():
        d = mha('attn_')
        d.update(
            norm1_w=ones((HIDDEN,)), norm1_b=zeros((HIDDEN,)),
            lin1_w=dense((FFN_DIM, HIDDEN)), lin1_b=zeros((FFN_DIM,)),
            lin2_w=dense((HIDDEN, FFN_DIM)), lin2_b=zeros((HIDDEN,)),
            norm2_w=ones((HIDDEN,)), norm2_b=zeros((HIDDEN,)),
        )
        return d

    def dec_layer():
        d = {}
        d.update(mha('self_'))
        d.update(mha('cross_'))
        d.update(
            norm1_w=ones((HIDDEN,)), norm1_b=zeros((HIDDEN,)),
            norm2_w=ones((HIDDEN,)), norm2_b=zeros((HIDDEN,)),
            norm3_w=ones((HIDDEN,)), norm3_b=zeros((HIDDEN,)),
            lin1_w=dense((FFN_DIM, HIDDEN)), lin1_b=zeros((FFN_DIM,)),
            lin2_w=dense((HIDDEN, FFN_DIM)), lin2_b=zeros((HIDDEN,)),
        )
        return d

    return dict(
        emb_src=dense((INPUT_VOCAB, HIDDEN)),
        emb_tgt=dense((TARGET_VOCAB, HIDDEN)),
        enc_layers=[enc_layer() for _ in range(LAYERS)],
        enc_norm_w=ones((HIDDEN,)), enc_norm_b=zeros((HIDDEN,)),
        dec_layers=[dec_layer() for _ in range(LAYERS)],
        dec_norm_w=ones((HIDDEN,)), dec_norm_b=zeros((HIDDEN,)),
        fc_w=dense((TARGET_VOCAB, HIDDEN)),
        fc_b=zeros((TARGET_VOCAB,)),
    )


if __name__ == "__main__":
    key = jax.random.PRNGKey(0)
    pkey, skey, tkey = jax.random.split(key, 3)
    params = init_params(pkey)

    # One-time host-side prep (outside jit): slab packing + block-diag masks.
    w_slab, v_slab = pack_params(params)
    S, T, N = 8, 8, 2   # (src_len, tgt_len, batch) — sequence-first like PyTorch
    bias_ss = make_block_bias(N, S, S)
    bias_tt = make_block_bias(N, T, T)
    bias_ts = make_block_bias(N, T, S)

    src = jax.random.randint(skey, (S, N), 0, INPUT_VOCAB, dtype=jnp.int32)
    tgt = jax.random.randint(tkey, (T, N), 0, TARGET_VOCAB, dtype=jnp.int32)

    out = transformer_forward(src, tgt, w_slab, v_slab, bias_ss, bias_tt, bias_ts)
    out = jax.block_until_ready(out)
    assert out.shape == (T, N, TARGET_VOCAB)
    assert out.dtype == jnp.float32
    assert bool(jnp.all(jnp.isfinite(out)))
    print("KERNEL_OK")
</pallas_src>

<mosaic_0001>
module attributes {stable_mosaic.version = 11 : i64} {
  func.func @_kernel(%arg0: memref<16x1xi32, #tpu.memory_space<vmem>>, %arg1: memref<16x1xi32, #tpu.memory_space<vmem>>, %arg2: memref<16x16xf32, #tpu.memory_space<vmem>>, %arg3: memref<16x16xf32, #tpu.memory_space<vmem>>, %arg4: memref<16x16xf32, #tpu.memory_space<vmem>>, %arg5: memref<4272x128xbf16, #tpu.memory_space<vmem>>, %arg6: memref<456x128xf32, #tpu.memory_space<vmem>>, %arg7: memref<16x128xf32, #tpu.memory_space<vmem>>) attributes {dimension_semantics = [], scalar_prefetch = 0 : i64, scratch_operands = 0 : i64, tpu.core_type = #tpu.core_type<tc>} {
    %c0 = arith.constant 0 : index
    %c0_0 = arith.constant 0 : index
    %0 = vector.load %arg2[%c0, %c0_0] : memref<16x16xf32, #tpu.memory_space<vmem>>, vector<16x16xf32>
    %c0_1 = arith.constant 0 : index
    %c0_2 = arith.constant 0 : index
    %1 = vector.load %arg3[%c0_1, %c0_2] : memref<16x16xf32, #tpu.memory_space<vmem>>, vector<16x16xf32>
    %c0_3 = arith.constant 0 : index
    %c0_4 = arith.constant 0 : index
    %2 = vector.load %arg4[%c0_3, %c0_4] : memref<16x16xf32, #tpu.memory_space<vmem>>, vector<16x16xf32>
    %c0_5 = arith.constant 0 : index
    %c0_6 = arith.constant 0 : index
    %3 = vector.load %arg5[%c0_5, %c0_6] : memref<4272x128xbf16, #tpu.memory_space<vmem>>, vector<32x128xbf16>
    %c0_7 = arith.constant 0 : index
    %c0_8 = arith.constant 0 : index
    %4 = vector.load %arg0[%c0_7, %c0_8] : memref<16x1xi32, #tpu.memory_space<vmem>>, vector<16x1xi32>
    %5 = tpu.iota {dimensions = array<i32: 1>} : vector<16x32xi32>
    %6 = vector.broadcast %4 : vector<16x1xi32> to vector<16x32xi32>
    %7 = arith.cmpi eq, %6, %5 : vector<16x32xi32>
    %8 = arith.extui %7 : vector<16x32xi1> to vector<16x32xi32>
    %9 = arith.sitofp %8 : vector<16x32xi32> to vector<16x32xf32>
    %10 = arith.truncf %9 : vector<16x32xf32> to vector<16x32xbf16>
    %cst = arith.constant dense<0.000000e+00> : vector<16x128xf32>
    %11 = tpu.matmul %10, %3, %cst {dimension_numbers = #tpu.dot_dimension_numbers<[1], [0], [0], [1], [0, 0, 1, 1], [], []>} : vector<16x32xbf16>, vector<32x128xbf16>, vector<16x128xf32> -> vector<16x128xf32>
    %12 = arith.truncf %11 : vector<16x128xf32> to vector<16x128xbf16>
    %c48 = arith.constant 48 : index
    %c0_9 = arith.constant 0 : index
    %13 = vector.load %arg5[%c48, %c0_9] : memref<4272x128xbf16, #tpu.memory_space<vmem>>, vector<128x128xbf16>
    %cst_10 = arith.constant dense<0.000000e+00> : vector<16x128xf32>
    %14 = tpu.matmul %12, %13, %cst_10 {dimension_numbers = #tpu.dot_dimension_numbers<[1], [0], [0], [1], [0, 0, 1, 1], [], []>} : vector<16x128xbf16>, vector<128x128xbf16>, vector<16x128xf32> -> vector<16x128xf32>
    %c0_11 = arith.constant 0 : index
    %c0_12 = arith.constant 0 : index
    %15 = vector.load %arg6[%c0_11, %c0_12] : memref<456x128xf32, #tpu.memory_space<vmem>>, vector<1x128xf32>
    %16 = vector.broadcast %15 : vector<1x128xf32> to vector<16x128xf32>
    %17 = arith.addf %14, %16 : vector<16x128xf32>
    %18 = arith.truncf %11 : vector<16x128xf32> to vector<16x128xbf16>
    %c176 = arith.constant 176 : index
    %c0_13 = arith.constant 0 : index
    %19 = vector.load %arg5[%c176, %c0_13] : memref<4272x128xbf16, #tpu.memory_space<vmem>>, vector<128x128xbf16>
    %cst_14 = arith.constant dense<0.000000e+00> : vector<16x128xf32>
    %20 = tpu.matmul %18, %19, %cst_14 {dimension_numbers = #tpu.dot_dimension_numbers<[1], [0], [0], [1], [0, 0, 1, 1], [], []>} : vector<16x128xbf16>, vector<128x128xbf16>, vector<16x128xf32> -> vector<16x128xf32>
    %c8 = arith.constant 8 : index
    %c0_15 = arith.constant 0 : index
    %21 = vector.load %arg6[%c8, %c0_15] : memref<456x128xf32, #tpu.memory_space<vmem>>, vector<1x128xf32>
    %22 = vector.broadcast %21 : vector<1x128xf32> to vector<16x128xf32>
    %23 = arith.addf %20, %22 : vector<16x128xf32>
    %24 = arith.truncf %11 : vector<16x128xf32> to vector<16x128xbf16>
    %c304 = arith.constant 304 : index
    %c0_16 = arith.constant 0 : index
    %25 = vector.load %arg5[%c304, %c0_16] : memref<4272x128xbf16, #tpu.memory_space<vmem>>, vector<128x128xbf16>
    %cst_17 = arith.constant dense<0.000000e+00> : vector<16x128xf32>
    %26 = tpu.matmul %24, %25, %cst_17 {dimension_numbers = #tpu.dot_dimension_numbers<[1], [0], [0], [1], [0, 0, 1, 1], [], []>} : vector<16x128xbf16>, vector<128x128xbf16>, vector<16x128xf32> -> vector<16x128xf32>
    %c16 = arith.constant 16 : index
    %c0_18 = arith.constant 0 : index
    %27 = vector.load %arg6[%c16, %c0_18] : memref<456x128xf32, #tpu.memory_space<vmem>>, vector<1x128xf32>
    %28 = vector.broadcast %27 : vector<1x128xf32> to vector<16x128xf32>
    %29 = arith.addf %26, %28 : vector<16x128xf32>
    %30 = vector.extract_strided_slice %17 {offsets = [0, 0], sizes = [16, 16], strides = [1, 1]} : vector<16x128xf32> to vector<16x16xf32>
    %31 = vector.extract_strided_slice %23 {offsets = [0, 0], sizes = [16, 16], strides = [1, 1]} : vector<16x128xf32> to vector<16x16xf32>
    %cst_19 = arith.constant dense<0.000000e+00> : vector<16x16xf32>
    %32 = tpu.matmul %30, %31, %cst_19 {dimension_numbers = #tpu.dot_dimension_numbers<[1], [1], [0], [0], [0, 0, 1, 0], [], []>} : vector<16x16xf32>, vector<16x16xf32>, vector<16x16xf32> -> vector<16x16xf32>
    %33 = arith.addf %32, %0 : vector<16x16xf32>
    %34 = vector.extract_strided_slice %17 {offsets = [0, 16], sizes = [16, 16], strides = [1, 1]} : vector<16x128xf32> to vector<16x16xf32>
    %35 = vector.extract_strided_slice %23 {offsets = [0, 16], sizes = [16, 16], strides = [1, 1]} : vector<16x128xf32> to vector<16x16xf32>
    %cst_20 = arith.constant dense<0.000000e+00> : vector<16x16xf32>
    %36 = tpu.matmul %34, %35, %cst_20 {dimension_numbers = #tpu.dot_dimension_numbers<[1], [1], [0], [0], [0, 0, 1, 0], [], []>} : vector<16x16xf32>, vector<16x16xf32>, vector<16x16xf32> -> vector<16x16xf32>
    %37 = arith.addf %36, %0 : vector<16x16xf32>
    %38 = vector.extract_strided_slice %17 {offsets = [0, 32], sizes = [16, 16], strides = [1, 1]} : vector<16x128xf32> to vector<16x16xf32>
    %39 = vector.extract_strided_slice %23 {offsets = [0, 32], sizes = [16, 16], strides = [1, 1]} : vector<16x128xf32> to vector<16x16xf32>
    %cst_21 = arith.constant dense<0.000000e+00> : vector<16x16xf32>
    %40 = tpu.matmul %38, %39, %cst_21 {dimension_numbers = #tpu.dot_dimension_numbers<[1], [1], [0], [0], [0, 0, 1, 0], [], []>} : vector<16x16xf32>, vector<16x16xf32>, vector<16x16xf32> -> vector<16x16xf32>
    %41 = arith.addf %40, %0 : vector<16x16xf32>
    %42 = vector.extract_strided_slice %17 {offsets = [0, 48], sizes = [16, 16], strides = [1, 1]} : vector<16x128xf32> to vector<16x16xf32>
    %43 = vector.extract_strided_slice %23 {offsets = [0, 48], sizes = [16, 16], strides = [1, 1]} : vector<16x128xf32> to vector<16x16xf32>
    %cst_22 = arith.constant dense<0.000000e+00> : vector<16x16xf32>
    %44 = tpu.matmul %42, %43, %cst_22 {dimension_numbers = #tpu.dot_dimension_numbers<[1], [1], [0], [0], [0, 0, 1, 0], [], []>} : vector<16x16xf32>, vector<16x16xf32>, vector<16x16xf32> -> vector<16x16xf32>
    %45 = arith.addf %44, %0 : vector<16x16xf32>
    %46 = vector.extract_strided_slice %17 {offsets = [0, 64], sizes = [16, 16], strides = [1, 1]} : vector<16x128xf32> to vector<16x16xf32>
    %47 = vector.extract_strided_slice %23 {offsets = [0, 64], sizes = [16, 16], strides = [1, 1]} : vector<16x128xf32> to vector<16x16xf32>
    %cst_23 = arith.constant dense<0.000000e+00> : vector<16x16xf32>
    %48 = tpu.matmul %46, %47, %cst_23 {dimension_numbers = #tpu.dot_dimension_numbers<[1], [1], [0], [0], [0, 0, 1, 0], [], []>} : vector<16x16xf32>, vector<16x16xf32>, vector<16x16xf32> -> vector<16x16xf32>
    %49 = arith.addf %48, %0 : vector<16x16xf32>
    %50 = vector.extract_strided_slice %17 {offsets = [0, 80], sizes = [16, 16], strides = [1, 1]} : vector<16x128xf32> to vector<16x16xf32>
    %51 = vector.extract_strided_slice %23 {offsets = [0, 80], sizes = [16, 16], strides = [1, 1]} : vector<16x128xf32> to vector<16x16xf32>
    %cst_24 = arith.constant dense<0.000000e+00> : vector<16x16xf32>
    %52 = tpu.matmul %50, %51, %cst_24 {dimension_numbers = #tpu.dot_dimension_numbers<[1], [1], [0], [0], [0, 0, 1, 0], [], []>} : vector<16x16xf32>, vector<16x16xf32>, vector<16x16xf32> -> vector<16x16xf32>
    %53 = arith.addf %52, %0 : vector<16x16xf32>
    %54 = vector.extract_strided_slice %17 {offsets = [0, 96], sizes = [16, 16], strides = [1, 1]} : vector<16x128xf32> to vector<16x16xf32>
    %55 = vector.extract_strided_slice %23 {offsets = [0, 96], sizes = [16, 16], strides = [1, 1]} : vector<16x128xf32> to vector<16x16xf32>
    %cst_25 = arith.constant dense<0.000000e+00> : vector<16x16xf32>
    %56 = tpu.matmul %54, %55, %cst_25 {dimension_numbers = #tpu.dot_dimension_numbers<[1], [1], [0], [0], [0, 0, 1, 0], [], []>} : vector<16x16xf32>, vector<16x16xf32>, vector<16x16xf32> -> vector<16x16xf32>
    %57 = arith.addf %56, %0 : vector<16x16xf32>
    %58 = vector.extract_strided_slice %17 {offsets = [0, 112], sizes = [16, 16], strides = [1, 1]} : vector<16x128xf32> to vector<16x16xf32>
    %59 = vector.extract_strided_slice %23 {offsets = [0, 112], sizes = [16, 16], strides = [1, 1]} : vector<16x128xf32> to vector<16x16xf32>
    %cst_26 = arith.constant dense<0.000000e+00> : vector<16x16xf32>
    %60 = tpu.matmul %58, %59, %cst_26 {dimension_numbers = #tpu.dot_dimension_numbers<[1], [1], [0], [0], [0, 0, 1, 0], [], []>} : vector<16x16xf32>, vector<16x16xf32>, vector<16x16xf32> -> vector<16x16xf32>
    %61 = arith.addf %60, %0 : vector<16x16xf32>
    %62 = tpu.concatenate %33, %37, %41, %45, %49, %53, %57, %61 in 0 : vector<16x16xf32>, vector<16x16xf32>, vector<16x16xf32>, vector<16x16xf32>, vector<16x16xf32>, vector<16x16xf32>, vector<16x16xf32>, vector<16x16xf32> -> vector<128x16xf32>
    %cst_27 = arith.constant dense<0xFF800000> : vector<128xf32>
    %63 = vector.multi_reduction <maximumf>, %62, %cst_27 [1] : vector<128x16xf32> to vector<128xf32>
    %64 = vector.shape_cast %63 : vector<128xf32> to vector<128x1xf32>
    %65 = vector.broadcast %64 : vector<128x1xf32> to vector<128x16xf32>
    %66 = arith.subf %62, %65 : vector<128x16xf32>
    %67 = math.exp %66 : vector<128x16xf32>
    %cst_28 = arith.constant dense<0.000000e+00> : vector<128xf32>
    %68 = vector.multi_reduction <add>, %67, %cst_28 [1] : vector<128x16xf32> to vector<128xf32>
    %69 = vector.shape_cast %68 : vector<128xf32> to vector<128x1xf32>
    %70 = tpu.reciprocal %69 {approx = true} : vector<128x1xf32> -> vector<128x1xf32>
    %71 = vector.broadcast %70 : vector<128x1xf32> to vector<128x16xf32>
    %72 = arith.mulf %67, %71 : vector<128x16xf32>
    %73 = vector.extract_strided_slice %72 {offsets = [0, 0], sizes = [16, 16], strides = [1, 1]} : vector<128x16xf32> to vector<16x16xf32>
    %74 = vector.extract_strided_slice %29 {offsets = [0, 0], sizes = [16, 16], strides = [1, 1]} : vector<16x128xf32> to vector<16x16xf32>
    %cst_29 = arith.constant dense<0.000000e+00> : vector<16x16xf32>
    %75 = tpu.matmul %73, %74, %cst_29 {dimension_numbers = #tpu.dot_dimension_numbers<[1], [0], [0], [1], [0, 0, 1, 1], [], []>} : vector<16x16xf32>, vector<16x16xf32>, vector<16x16xf32> -> vector<16x16xf32>
    %76 = vector.extract_strided_slice %72 {offsets = [16, 0], sizes = [16, 16], strides = [1, 1]} : vector<128x16xf32> to vector<16x16xf32>
    %77 = vector.extract_strided_slice %29 {offsets = [0, 16], sizes = [16, 16], strides = [1, 1]} : vector<16x128xf32> to vector<16x16xf32>
    %cst_30 = arith.constant dense<0.000000e+00> : vector<16x16xf32>
    %78 = tpu.matmul %76, %77, %cst_30 {dimension_numbers = #tpu.dot_dimension_numbers<[1], [0], [0], [1], [0, 0, 1, 1], [], []>} : vector<16x16xf32>, vector<16x16xf32>, vector<16x16xf32> -> vector<16x16xf32>
    %79 = vector.extract_strided_slice %72 {offsets = [32, 0], sizes = [16, 16], strides = [1, 1]} : vector<128x16xf32> to vector<16x16xf32>
    %80 = vector.extract_strided_slice %29 {offsets = [0, 32], sizes = [16, 16], strides = [1, 1]} : vector<16x128xf32> to vector<16x16xf32>
    %cst_31 = arith.constant dense<0.000000e+00> : vector<16x16xf32>
    %81 = tpu.matmul %79, %80, %cst_31 {dimension_numbers = #tpu.dot_dimension_numbers<[1], [0], [0], [1], [0, 0, 1, 1], [], []>} : vector<16x16xf32>, vector<16x16xf32>, vector<16x16xf32> -> vector<16x16xf32>
    %82 = vector.extract_strided_slice %72 {offsets = [48, 0], sizes = [16, 16], strides = [1, 1]} : vector<128x16xf32> to vector<16x16xf32>
    %83 = vector.extract_strided_slice %29 {offsets = [0, 48], sizes = [16, 16], strides = [1, 1]} : vector<16x128xf32> to vector<16x16xf32>
    %cst_32 = arith.constant dense<0.000000e+00> : vector<16x16xf32>
    %84 = tpu.matmul %82, %83, %cst_32 {dimension_numbers = #tpu.dot_dimension_numbers<[1], [0], [0], [1], [0, 0, 1, 1], [], []>} : vector<16x16xf32>, vector<16x16xf32>, vector<16x16xf32> -> vector<16x16xf32>
    %85 = vector.extract_strided_slice %72 {offsets = [64, 0], sizes = [16, 16], strides = [1, 1]} : vector<128x16xf32> to vector<16x16xf32>
    %86 = vector.extract_strided_slice %29 {offsets = [0, 64], sizes = [16, 16], strides = [1, 1]} : vector<16x128xf32> to vector<16x16xf32>
    %cst_33 = arith.constant dense<0.000000e+00> : vector<16x16xf32>
    %87 = tpu.matmul %85, %86, %cst_33 {dimension_numbers = #tpu.dot_dimension_numbers<[1], [0], [0], [1], [0, 0, 1, 1], [], []>} : vector<16x16xf32>, vector<16x16xf32>, vector<16x16xf32> -> vector<16x16xf32>
    %88 = vector.extract_strided_slice %72 {offsets = [80, 0], sizes = [16, 16], strides = [1, 1]} : vector<128x16xf32> to vector<16x16xf32>
    %89 = vector.extract_strided_slice %29 {offsets = [0, 80], sizes = [16, 16], strides = [1, 1]} : vector<16x128xf32> to vector<16x16xf32>
    %cst_34 = arith.constant dense<0.000000e+00> : vector<16x16xf32>
    %90 = tpu.matmul %88, %89, %cst_34 {dimension_numbers = #tpu.dot_dimension_numbers<[1], [0], [0], [1], [0, 0, 1, 1], [], []>} : vector<16x16xf32>, vector<16x16xf32>, vector<16x16xf32> -> vector<16x16xf32>
    %91 = vector.extract_strided_slice %72 {offsets = [96, 0], sizes = [16, 16], strides = [1, 1]} : vector<128x16xf32> to vector<16x16xf32>
    %92 = vector.extract_strided_slice %29 {offsets = [0, 96], sizes = [16, 16], strides = [1, 1]} : vector<16x128xf32> to vector<16x16xf32>
    %cst_35 = arith.constant dense<0.000000e+00> : vector<16x16xf32>
    %93 = tpu.matmul %91, %92, %cst_35 {dimension_numbers = #tpu.dot_dimension_numbers<[1], [0], [0], [1], [0, 0, 1, 1], [], []>} : vector<16x16xf32>, vector<16x16xf32>, vector<16x16xf32> -> vector<16x16xf32>
    %94 = vector.extract_strided_slice %72 {offsets = [112, 0], sizes = [16, 16], strides = [1, 1]} : vector<128x16xf32> to vector<16x16xf32>
    %95 = vector.extract_strided_slice %29 {offsets = [0, 112], sizes = [16, 16], strides = [1, 1]} : vector<16x128xf32> to vector<16x16xf32>
    %cst_36 = arith.constant dense<0.000000e+00> : vector<16x16xf32>
    %96 = tpu.matmul %94, %95, %cst_36 {dimension_numbers = #tpu.dot_dimension_numbers<[1], [0], [0], [1], [0, 0, 1, 1], [], []>} : vector<16x16xf32>, vector<16x16xf32>, vector<16x16xf32> -> vector<16x16xf32>
    %97 = tpu.concatenate %75, %78, %81, %84, %87, %90, %93, %96 in 1 : vector<16x16xf32>, vector<16x16xf32>, vector<16x16xf32>, vector<16x16xf32>, vector<16x16xf32>, vector<16x16xf32>, vector<16x16xf32>, vector<16x16xf32> -> vector<16x128xf32>
    %98 = arith.truncf %97 : vector<16x128xf32> to vector<16x128xbf16>
    %c432 = arith.constant 432 : index
    %c0_37 = arith.constant 0 : index
    %99 = vector.load %arg5[%c432, %c0_37] : memref<4272x128xbf16, #tpu.memory_space<vmem>>, vector<128x128xbf16>
    %cst_38 = arith.constant dense<0.000000e+00> : vector<16x128xf32>
    %100 = tpu.matmul %98, %99, %cst_38 {dimension_numbers = #tpu.dot_dimension_numbers<[1], [0], [0], [1], [0, 0, 1, 1], [], []>} : vector<16x128xbf16>, vector<128x128xbf16>, vector<16x128xf32> -> vector<16x128xf32>
    %c24 = arith.constant 24 : index
    %c0_39 = arith.constant 0 : index
    %101 = vector.load %arg6[%c24, %c0_39] : memref<456x128xf32, #tpu.memory_space<vmem>>, vector<1x128xf32>
    %102 = vector.broadcast %101 : vector<1x128xf32> to vector<16x128xf32>
    %103 = arith.addf %100, %102 : vector<16x128xf32>
    %104 = arith.addf %11, %103 : vector<16x128xf32>
    %cst_40 = arith.constant dense<0.000000e+00> : vector<16xf32>
    %105 = vector.multi_reduction <add>, %104, %cst_40 [1] : vector<16x128xf32> to vector<16xf32>
    %106 = vector.shape_cast %105 : vector<16xf32> to vector<16x1xf32>
    %cst_41 = arith.constant 1.280000e+02 : f32
    %107 = vector.broadcast %cst_41 : f32 to vector<16x1xf32>
    %108 = arith.divf %106, %107 : vector<16x1xf32>
    %109 = vector.broadcast %108 : vector<16x1xf32> to vector<16x128xf32>
    %110 = arith.subf %104, %109 : vector<16x128xf32>
    %111 = arith.mulf %110, %110 : vector<16x128xf32>
    %cst_42 = arith.constant dense<0.000000e+00> : vector<16xf32>
    %112 = vector.multi_reduction <add>, %111, %cst_42 [1] : vector<16x128xf32> to vector<16xf32>
    %113 = vector.shape_cast %112 : vector<16xf32> to vector<16x1xf32>
    %cst_43 = arith.constant 1.280000e+02 : f32
    %114 = vector.broadcast %cst_43 : f32 to vector<16x1xf32>
    %115 = arith.divf %113, %114 : vector<16x1xf32>
    %cst_44 = arith.constant 9.99999974E-6 : f32
    %116 = vector.broadcast %cst_44 : f32 to vector<16x1xf32>
    %117 = arith.addf %115, %116 : vector<16x1xf32>
    %118 = math.rsqrt %117 : vector<16x1xf32>
    %119 = vector.broadcast %118 : vector<16x1xf32> to vector<16x128xf32>
    %120 = arith.mulf %110, %119 : vector<16x128xf32>
    %c32 = arith.constant 32 : index
    %c0_45 = arith.constant 0 : index
    %121 = vector.load %arg6[%c32, %c0_45] : memref<456x128xf32, #tpu.memory_space<vmem>>, vector<1x128xf32>
    %122 = vector.broadcast %121 : vector<1x128xf32> to vector<16x128xf32>
    %123 = arith.mulf %120, %122 : vector<16x128xf32>
    %c40 = arith.constant 40 : index
    %c0_46 = arith.constant 0 : index
    %124 = vector.load %arg6[%c40, %c0_46] : memref<456x128xf32, #tpu.memory_space<vmem>>, vector<1x128xf32>
    %125 = vector.broadcast %124 : vector<1x128xf32> to vector<16x128xf32>
    %126 = arith.addf %123, %125 : vector<16x128xf32>
    %127 = arith.truncf %126 : vector<16x128xf32> to vector<16x128xbf16>
    %c560 = arith.constant 560 : index
    %c0_47 = arith.constant 0 : index
    %128 = vector.load %arg5[%c560, %c0_47] : memref<4272x128xbf16, #tpu.memory_space<vmem>>, vector<128x128xbf16>
    %cst_48 = arith.constant dense<0.000000e+00> : vector<16x128xf32>
    %129 = tpu.matmul %127, %128, %cst_48 {dimension_numbers = #tpu.dot_dimension_numbers<[1], [0], [0], [1], [0, 0, 1, 1], [], []>} : vector<16x128xbf16>, vector<128x128xbf16>, vector<16x128xf32> -> vector<16x128xf32>
    %c48_49 = arith.constant 48 : index
    %c0_50 = arith.constant 0 : index
    %130 = vector.load %arg6[%c48_49, %c0_50] : memref<456x128xf32, #tpu.memory_space<vmem>>, vector<1x128xf32>
    %131 = vector.broadcast %130 : vector<1x128xf32> to vector<16x128xf32>
    %132 = arith.addf %129, %131 : vector<16x128xf32>
    %cst_51 = arith.constant 0.000000e+00 : f32
    %133 = vector.broadcast %cst_51 : f32 to vector<16x128xf32>
    %134 = arith.maximumf %132, %133 : vector<16x128xf32>
    %135 = arith.truncf %134 : vector<16x128xf32> to vector<16x128xbf16>
    %c688 = arith.constant 688 : index
    %c0_52 = arith.constant 0 : index
    %136 = vector.load %arg5[%c688, %c0_52] : memref<4272x128xbf16, #tpu.memory_space<vmem>>, vector<128x128xbf16>
    %cst_53 = arith.constant dense<0.000000e+00> : vector<16x128xf32>
    %137 = tpu.matmul %135, %136, %cst_53 {dimension_numbers = #tpu.dot_dimension_numbers<[1], [0], [0], [1], [0, 0, 1, 1], [], []>} : vector<16x128xbf16>, vector<128x128xbf16>, vector<16x128xf32> -> vector<16x128xf32>
    %c56 = arith.constant 56 : index
    %c0_54 = arith.constant 0 : index
    %138 = vector.load %arg6[%c56, %c0_54] : memref<456x128xf32, #tpu.memory_space<vmem>>, vector<1x128xf32>
    %139 = vector.broadcast %138 : vector<1x128xf32> to vector<16x128xf32>
    %140 = arith.addf %137, %139 : vector<16x128xf32>
    %141 = arith.addf %126, %140 : vector<16x128xf32>
    %cst_55 = arith.constant dense<0.000000e+00> : vector<16xf32>
    %142 = vector.multi_reduction <add>, %141, %cst_55 [1] : vector<16x128xf32> to vector<16xf32>
    %143 = vector.shape_cast %142 : vector<16xf32> to vector<16x1xf32>
    %cst_56 = arith.constant 1.280000e+02 : f32
    %144 = vector.broadcast %cst_56 : f32 to vector<16x1xf32>
    %145 = arith.divf %143, %144 : vector<16x1xf32>
    %146 = vector.broadcast %145 : vector<16x1xf32> to vector<16x128xf32>
    %147 = arith.subf %141, %146 : vector<16x128xf32>
    %148 = arith.mulf %147, %147 : vector<16x128xf32>
    %cst_57 = arith.constant dense<0.000000e+00> : vector<16xf32>
    %149 = vector.multi_reduction <add>, %148, %cst_57 [1] : vector<16x128xf32> to vector<16xf32>
    %150 = vector.shape_cast %149 : vector<16xf32> to vector<16x1xf32>
    %cst_58 = arith.constant 1.280000e+02 : f32
    %151 = vector.broadcast %cst_58 : f32 to vector<16x1xf32>
    %152 = arith.divf %150, %151 : vector<16x1xf32>
    %cst_59 = arith.constant 9.99999974E-6 : f32
    %153 = vector.broadcast %cst_59 : f32 to vector<16x1xf32>
    %154 = arith.addf %152, %153 : vector<16x1xf32>
    %155 = math.rsqrt %154 : vector<16x1xf32>
    %156 = vector.broadcast %155 : vector<16x1xf32> to vector<16x128xf32>
    %157 = arith.mulf %147, %156 : vector<16x128xf32>
    %c64 = arith.constant 64 : index
    %c0_60 = arith.constant 0 : index
    %158 = vector.load %arg6[%c64, %c0_60] : memref<456x128xf32, #tpu.memory_space<vmem>>, vector<1x128xf32>
    %159 = vector.broadcast %158 : vector<1x128xf32> to vector<16x128xf32>
    %160 = arith.mulf %157, %159 : vector<16x128xf32>
    %c72 = arith.constant 72 : index
    %c0_61 = arith.constant 0 : index
    %161 = vector.load %arg6[%c72, %c0_61] : memref<456x128xf32, #tpu.memory_space<vmem>>, vector<1x128xf32>
    %162 = vector.broadcast %161 : vector<1x128xf32> to vector<16x128xf32>
    %163 = arith.addf %160, %162 : vector<16x128xf32>
    %164 = arith.truncf %163 : vector<16x128xf32> to vector<16x128xbf16>
    %c816 = arith.constant 816 : index
    %c0_62 = arith.constant 0 : index
    %165 = vector.load %arg5[%c816, %c0_62] : memref<4272x128xbf16, #tpu.memory_space<vmem>>, vector<128x128xbf16>
    %cst_63 = arith.constant dense<0.000000e+00> : vector<16x128xf32>
    %166 = tpu.matmul %164, %165, %cst_63 {dimension_numbers = #tpu.dot_dimension_numbers<[1], [0], [0], [1], [0, 0, 1, 1], [], []>} : vector<16x128xbf16>, vector<128x128xbf16>, vector<16x128xf32> -> vector<16x128xf32>
    %c80 = arith.constant 80 : index
    %c0_64 = arith.constant 0 : index
    %167 = vector.load %arg6[%c80, %c0_64] : memref<456x128xf32, #tpu.memory_space<vmem>>, vector<1x128xf32>
    %168 = vector.broadcast %167 : vector<1x128xf32> to vector<16x128xf32>
    %169 = arith.addf %166, %168 : vector<16x128xf32>
    %170 = arith.truncf %163 : vector<16x128xf32> to vector<16x128xbf16>
    %c944 = arith.constant 944 : index
    %c0_65 = arith.constant 0 : index
    %171 = vector.load %arg5[%c944, %c0_65] : memref<4272x128xbf16, #tpu.memory_space<vmem>>, vector<128x128xbf16>
    %cst_66 = arith.constant dense<0.000000e+00> : vector<16x128xf32>
    %172 = tpu.matmul %170, %171, %cst_66 {dimension_numbers = #tpu.dot_dimension_numbers<[1], [0], [0], [1], [0, 0, 1, 1], [], []>} : vector<16x128xbf16>, vector<128x128xbf16>, vector<16x128xf32> -> vector<16x128xf32>
    %c88 = arith.constant 88 : index
    %c0_67 = arith.constant 0 : index
    %173 = vector.load %arg6[%c88, %c0_67] : memref<456x128xf32, #tpu.memory_space<vmem>>, vector<1x128xf32>
    %174 = vector.broadcast %173 : vector<1x128xf32> to vector<16x128xf32>
    %175 = arith.addf %172, %174 : vector<16x128xf32>
    %176 = arith.truncf %163 : vector<16x128xf32> to vector<16x128xbf16>
    %c1072 = arith.constant 1072 : index
    %c0_68 = arith.constant 0 : index
    %177 = vector.load %arg5[%c1072, %c0_68] : memref<4272x128xbf16, #tpu.memory_space<vmem>>, vector<128x128xbf16>
    %cst_69 = arith.constant dense<0.000000e+00> : vector<16x128xf32>
    %178 = tpu.matmul %176, %177, %cst_69 {dimension_numbers = #tpu.dot_dimension_numbers<[1], [0], [0], [1], [0, 0, 1, 1], [], []>} : vector<16x128xbf16>, vector<128x128xbf16>, vector<16x128xf32> -> vector<16x128xf32>
    %c96 = arith.constant 96 : index
    %c0_70 = arith.constant 0 : index
    %179 = vector.load %arg6[%c96, %c0_70] : memref<456x128xf32, #tpu.memory_space<vmem>>, vector<1x128xf32>
    %180 = vector.broadcast %179 : vector<1x128xf32> to vector<16x128xf32>
    %181 = arith.addf %178, %180 : vector<16x128xf32>
    %182 = vector.extract_strided_slice %169 {offsets = [0, 0], sizes = [16, 16], strides = [1, 1]} : vector<16x128xf32> to vector<16x16xf32>
    %183 = vector.extract_strided_slice %175 {offsets = [0, 0], sizes = [16, 16], strides = [1, 1]} : vector<16x128xf32> to vector<16x16xf32>
    %cst_71 = arith.constant dense<0.000000e+00> : vector<16x16xf32>
    %184 = tpu.matmul %182, %183, %cst_71 {dimension_numbers = #tpu.dot_dimension_numbers<[1], [1], [0], [0], [0, 0, 1, 0], [], []>} : vector<16x16xf32>, vector<16x16xf32>, vector<16x16xf32> -> vector<16x16xf32>
    %185 = arith.addf %184, %0 : vector<16x16xf32>
    %186 = vector.extract_strided_slice %169 {offsets = [0, 16], sizes = [16, 16], strides = [1, 1]} : vector<16x128xf32> to vector<16x16xf32>
    %187 = vector.extract_strided_slice %175 {offsets = [0, 16], sizes = [16, 16], strides = [1, 1]} : vector<16x128xf32> to vector<16x16xf32>
    %cst_72 = arith.constant dense<0.000000e+00> : vector<16x16xf32>
    %188 = tpu.matmul %186, %187, %cst_72 {dimension_numbers = #tpu.dot_dimension_numbers<[1], [1], [0], [0], [0, 0, 1, 0], [], []>} : vector<16x16xf32>, vector<16x16xf32>, vector<16x16xf32> -> vector<16x16xf32>
    %189 = arith.addf %188, %0 : vector<16x16xf32>
    %190 = vector.extract_strided_slice %169 {offsets = [0, 32], sizes = [16, 16], strides = [1, 1]} : vector<16x128xf32> to vector<16x16xf32>
    %191 = vector.extract_strided_slice %175 {offsets = [0, 32], sizes = [16, 16], strides = [1, 1]} : vector<16x128xf32> to vector<16x16xf32>
    %cst_73 = arith.constant dense<0.000000e+00> : vector<16x16xf32>
    %192 = tpu.matmul %190, %191, %cst_73 {dimension_numbers = #tpu.dot_dimension_numbers<[1], [1], [0], [0], [0, 0, 1, 0], [], []>} : vector<16x16xf32>, vector<16x16xf32>, vector<16x16xf32> -> vector<16x16xf32>
    %193 = arith.addf %192, %0 : vector<16x16xf32>
    %194 = vector.extract_strided_slice %169 {offsets = [0, 48], sizes = [16, 16], strides = [1, 1]} : vector<16x128xf32> to vector<16x16xf32>
    %195 = vector.extract_strided_slice %175 {offsets = [0, 48], sizes = [16, 16], strides = [1, 1]} : vector<16x128xf32> to vector<16x16xf32>
    %cst_74 = arith.constant dense<0.000000e+00> : vector<16x16xf32>
    %196 = tpu.matmul %194, %195, %cst_74 {dimension_numbers = #tpu.dot_dimension_numbers<[1], [1], [0], [0], [0, 0, 1, 0], [], []>} : vector<16x16xf32>, vector<16x16xf32>, vector<16x16xf32> -> vector<16x16xf32>
    %197 = arith.addf %196, %0 : vector<16x16xf32>
    %198 = vector.extract_strided_slice %169 {offsets = [0, 64], sizes = [16, 16], strides = [1, 1]} : vector<16x128xf32> to vector<16x16xf32>
    %199 = vector.extract_strided_slice %175 {offsets = [0, 64], sizes = [16, 16], strides = [1, 1]} : vector<16x128xf32> to vector<16x16xf32>
    %cst_75 = arith.constant dense<0.000000e+00> : vector<16x16xf32>
    %200 = tpu.matmul %198, %199, %cst_75 {dimension_numbers = #tpu.dot_dimension_numbers<[1], [1], [0], [0], [0, 0, 1, 0], [], []>} : vector<16x16xf32>, vector<16x16xf32>, vector<16x16xf32> -> vector<16x16xf32>
    %201 = arith.addf %200, %0 : vector<16x16xf32>
    %202 = vector.extract_strided_slice %169 {offsets = [0, 80], sizes = [16, 16], strides = [1, 1]} : vector<16x128xf32> to vector<16x16xf32>
    %203 = vector.extract_strided_slice %175 {offsets = [0, 80], sizes = [16, 16], strides = [1, 1]} : vector<16x128xf32> to vector<16x16xf32>
    %cst_76 = arith.constant dense<0.000000e+00> : vector<16x16xf32>
    %204 = tpu.matmul %202, %203, %cst_76 {dimension_numbers = #tpu.dot_dimension_numbers<[1], [1], [0], [0], [0, 0, 1, 0], [], []>} : vector<16x16xf32>, vector<16x16xf32>, vector<16x16xf32> -> vector<16x16xf32>
    %205 = arith.addf %204, %0 : vector<16x16xf32>
    %206 = vector.extract_strided_slice %169 {offsets = [0, 96], sizes = [16, 16], strides = [1, 1]} : vector<16x128xf32> to vector<16x16xf32>
    %207 = vector.extract_strided_slice %175 {offsets = [0, 96], sizes = [16, 16], strides = [1, 1]} : vector<16x128xf32> to vector<16x16xf32>
    %cst_77 = arith.constant dense<0.000000e+00> : vector<16x16xf32>
    %208 = tpu.matmul %206, %207, %cst_77 {dimension_numbers = #tpu.dot_dimension_numbers<[1], [1], [0], [0], [0, 0, 1, 0], [], []>} : vector<16x16xf32>, vector<16x16xf32>, vector<16x16xf32> -> vector<16x16xf32>
    %209 = arith.addf %208, %0 : vector<16x16xf32>
    %210 = vector.extract_strided_slice %169 {offsets = [0, 112], sizes = [16, 16], strides = [1, 1]} : vector<16x128xf32> to vector<16x16xf32>
    %211 = vector.extract_strided_slice %175 {offsets = [0, 112], sizes = [16, 16], strides = [1, 1]} : vector<16x128xf32> to vector<16x16xf32>
    %cst_78 = arith.constant dense<0.000000e+00> : vector<16x16xf32>
    %212 = tpu.matmul %210, %211, %cst_78 {dimension_numbers = #tpu.dot_dimension_numbers<[1], [1], [0], [0], [0, 0, 1, 0], [], []>} : vector<16x16xf32>, vector<16x16xf32>, vector<16x16xf32> -> vector<16x16xf32>
    %213 = arith.addf %212, %0 : vector<16x16xf32>
    %214 = tpu.concatenate %185, %189, %193, %197, %201, %205, %209, %213 in 0 : vector<16x16xf32>, vector<16x16xf32>, vector<16x16xf32>, vector<16x16xf32>, vector<16x16xf32>, vector<16x16xf32>, vector<16x16xf32>, vector<16x16xf32> -> vector<128x16xf32>
    %cst_79 = arith.constant dense<0xFF800000> : vector<128xf32>
    %215 = vector.multi_reduction <maximumf>, %214, %cst_79 [1] : vector<128x16xf32> to vector<128xf32>
    %216 = vector.shape_cast %215 : vector<128xf32> to vector<128x1xf32>
    %217 = vector.broadcast %216 : vector<128x1xf32> to vector<128x16xf32>
    %218 = arith.subf %214, %217 : vector<128x16xf32>
    %219 = math.exp %218 : vector<128x16xf32>
    %cst_80 = arith.constant dense<0.000000e+00> : vector<128xf32>
    %220 = vector.multi_reduction <add>, %219, %cst_80 [1] : vector<128x16xf32> to vector<128xf32>
    %221 = vector.shape_cast %220 : vector<128xf32> to vector<128x1xf32>
    %222 = tpu.reciprocal %221 {approx = true} : vector<128x1xf32> -> vector<128x1xf32>
    %223 = vector.broadcast %222 : vector<128x1xf32> to vector<128x16xf32>
    %224 = arith.mulf %219, %223 : vector<128x16xf32>
    %225 = vector.extract_strided_slice %224 {offsets = [0, 0], sizes = [16, 16], strides = [1, 1]} : vector<128x16xf32> to vector<16x16xf32>
    %226 = vector.extract_strided_slice %181 {offsets = [0, 0], sizes = [16, 16], strides = [1, 1]} : vector<16x128xf32> to vector<16x16xf32>
    %cst_81 = arith.constant dense<0.000000e+00> : vector<16x16xf32>
    %227 = tpu.matmul %225, %226, %cst_81 {dimension_numbers = #tpu.dot_dimension_numbers<[1], [0], [0], [1], [0, 0, 1, 1], [], []>} : vector<16x16xf32>, vector<16x16xf32>, vector<16x16xf32> -> vector<16x16xf32>
    %228 = vector.extract_strided_slice %224 {offsets = [16, 0], sizes = [16, 16], strides = [1, 1]} : vector<128x16xf32> to vector<16x16xf32>
    %229 = vector.extract_strided_slice %181 {offsets = [0, 16], sizes = [16, 16], strides = [1, 1]} : vector<16x128xf32> to vector<16x16xf32>
    %cst_82 = arith.constant dense<0.000000e+00> : vector<16x16xf32>
    %230 = tpu.matmul %228, %229, %cst_82 {dimension_numbers = #tpu.dot_dimension_numbers<[1], [0], [0], [1], [0, 0, 1, 1], [], []>} : vector<16x16xf32>, vector<16x16xf32>, vector<16x16xf32> -> vector<16x16xf32>
    %231 = vector.extract_strided_slice %224 {offsets = [32, 0], sizes = [16, 16], strides = [1, 1]} : vector<128x16xf32> to vector<16x16xf32>
    %232 = vector.extract_strided_slice %181 {offsets = [0, 32], sizes = [16, 16], strides = [1, 1]} : vector<16x128xf32> to vector<16x16xf32>
    %cst_83 = arith.constant dense<0.000000e+00> : vector<16x16xf32>
    %233 = tpu.matmul %231, %232, %cst_83 {dimension_numbers = #tpu.dot_dimension_numbers<[1], [0], [0], [1], [0, 0, 1, 1], [], []>} : vector<16x16xf32>, vector<16x16xf32>, vector<16x16xf32> -> vector<16x16xf32>
    %234 = vector.extract_strided_slice %224 {offsets = [48, 0], sizes = [16, 16], strides = [1, 1]} : vector<128x16xf32> to vector<16x16xf32>
    %235 = vector.extract_strided_slice %181 {offsets = [0, 48], sizes = [16, 16], strides = [1, 1]} : vector<16x128xf32> to vector<16x16xf32>
    %cst_84 = arith.constant dense<0.000000e+00> : vector<16x16xf32>
    %236 = tpu.matmul %234, %235, %cst_84 {dimension_numbers = #tpu.dot_dimension_numbers<[1], [0], [0], [1], [0, 0, 1, 1], [], []>} : vector<16x16xf32>, vector<16x16xf32>, vector<16x16xf32> -> vector<16x16xf32>
    %237 = vector.extract_strided_slice %224 {offsets = [64, 0], sizes = [16, 16], strides = [1, 1]} : vector<128x16xf32> to vector<16x16xf32>
    %238 = vector.extract_strided_slice %181 {offsets = [0, 64], sizes = [16, 16], strides = [1, 1]} : vector<16x128xf32> to vector<16x16xf32>
    %cst_85 = arith.constant dense<0.000000e+00> : vector<16x16xf32>
    %239 = tpu.matmul %237, %238, %cst_85 {dimension_numbers = #tpu.dot_dimension_numbers<[1], [0], [0], [1], [0, 0, 1, 1], [], []>} : vector<16x16xf32>, vector<16x16xf32>, vector<16x16xf32> -> vector<16x16xf32>
    %240 = vector.extract_strided_slice %224 {offsets = [80, 0], sizes = [16, 16], strides = [1, 1]} : vector<128x16xf32> to vector<16x16xf32>
    %241 = vector.extract_strided_slice %181 {offsets = [0, 80], sizes = [16, 16], strides = [1, 1]} : vector<16x128xf32> to vector<16x16xf32>
    %cst_86 = arith.constant dense<0.000000e+00> : vector<16x16xf32>
    %242 = tpu.matmul %240, %241, %cst_86 {dimension_numbers = #tpu.dot_dimension_numbers<[1], [0], [0], [1], [0, 0, 1, 1], [], []>} : vector<16x16xf32>, vector<16x16xf32>, vector<16x16xf32> -> vector<16x16xf32>
    %243 = vector.extract_strided_slice %224 {offsets = [96, 0], sizes = [16, 16], strides = [1, 1]} : vector<128x16xf32> to vector<16x16xf32>
    %244 = vector.extract_strided_slice %181 {offsets = [0, 96], sizes = [16, 16], strides = [1, 1]} : vector<16x128xf32> to vector<16x16xf32>
    %cst_87 = arith.constant dense<0.000000e+00> : vector<16x16xf32>
    %245 = tpu.matmul %243, %244, %cst_87 {dimension_numbers = #tpu.dot_dimension_numbers<[1], [0], [0], [1], [0, 0, 1, 1], [], []>} : vector<16x16xf32>, vector<16x16xf32>, vector<16x16xf32> -> vector<16x16xf32>
    %246 = vector.extract_strided_slice %224 {offsets = [112, 0], sizes = [16, 16], strides = [1, 1]} : vector<128x16xf32> to vector<16x16xf32>
    %247 = vector.extract_strided_slice %181 {offsets = [0, 112], sizes = [16, 16], strides = [1, 1]} : vector<16x128xf32> to vector<16x16xf32>
    %cst_88 = arith.constant dense<0.000000e+00> : vector<16x16xf32>
    %248 = tpu.matmul %246, %247, %cst_88 {dimension_numbers = #tpu.dot_dimension_numbers<[1], [0], [0], [1], [0, 0, 1, 1], [], []>} : vector<16x16xf32>, vector<16x16xf32>, vector<16x16xf32> -> vector<16x16xf32>
    %249 = tpu.concatenate %227, %230, %233, %236, %239, %242, %245, %248 in 1 : vector<16x16xf32>, vector<16x16xf32>, vector<16x16xf32>, vector<16x16xf32>, vector<16x16xf32>, vector<16x16xf32>, vector<16x16xf32>, vector<16x16xf32> -> vector<16x128xf32>
    %250 = arith.truncf %249 : vector<16x128xf32> to vector<16x128xbf16>
    %c1200 = arith.constant 1200 : index
    %c0_89 = arith.constant 0 : index
    %251 = vector.load %arg5[%c1200, %c0_89] : memref<4272x128xbf16, #tpu.memory_space<vmem>>, vector<128x128xbf16>
    %cst_90 = arith.constant dense<0.000000e+00> : vector<16x128xf32>
    %252 = tpu.matmul %250, %251, %cst_90 {dimension_numbers = #tpu.dot_dimension_numbers<[1], [0], [0], [1], [0, 0, 1, 1], [], []>} : vector<16x128xbf16>, vector<128x128xbf16>, vector<16x128xf32> -> vector<16x128xf32>
    %c104 = arith.constant 104 : index
    %c0_91 = arith.constant 0 : index
    %253 = vector.load %arg6[%c104, %c0_91] : memref<456x128xf32, #tpu.memory_space<vmem>>, vector<1x128xf32>
    %254 = vector.broadcast %253 : vector<1x128xf32> to vector<16x128xf32>
    %255 = arith.addf %252, %254 : vector<16x128xf32>
    %256 = arith.addf %163, %255 : vector<16x128xf32>
    %cst_92 = arith.constant dense<0.000000e+00> : vector<16xf32>
    %257 = vector.multi_reduction <add>, %256, %cst_92 [1] : vector<16x128xf32> to vector<16xf32>
    %258 = vector.shape_cast %257 : vector<16xf32> to vector<16x1xf32>
    %cst_93 = arith.constant 1.280000e+02 : f32
    %259 = vector.broadcast %cst_93 : f32 to vector<16x1xf32>
    %260 = arith.divf %258, %259 : vector<16x1xf32>
    %261 = vector.broadcast %260 : vector<16x1xf32> to vector<16x128xf32>
    %262 = arith.subf %256, %261 : vector<16x128xf32>
    %263 = arith.mulf %262, %262 : vector<16x128xf32>
    %cst_94 = arith.constant dense<0.000000e+00> : vector<16xf32>
    %264 = vector.multi_reduction <add>, %263, %cst_94 [1] : vector<16x128xf32> to vector<16xf32>
    %265 = vector.shape_cast %264 : vector<16xf32> to vector<16x1xf32>
    %cst_95 = arith.constant 1.280000e+02 : f32
    %266 = vector.broadcast %cst_95 : f32 to vector<16x1xf32>
    %267 = arith.divf %265, %266 : vector<16x1xf32>
    %cst_96 = arith.constant 9.99999974E-6 : f32
    %268 = vector.broadcast %cst_96 : f32 to vector<16x1xf32>
    %269 = arith.addf %267, %268 : vector<16x1xf32>
    %270 = math.rsqrt %269 : vector<16x1xf32>
    %271 = vector.broadcast %270 : vector<16x1xf32> to vector<16x128xf32>
    %272 = arith.mulf %262, %271 : vector<16x128xf32>
    %c112 = arith.constant 112 : index
    %c0_97 = arith.constant 0 : index
    %273 = vector.load %arg6[%c112, %c0_97] : memref<456x128xf32, #tpu.memory_space<vmem>>, vector<1x128xf32>
    %274 = vector.broadcast %273 : vector<1x128xf32> to vector<16x128xf32>
    %275 = arith.mulf %272, %274 : vector<16x128xf32>
    %c120 = arith.constant 120 : index
    %c0_98 = arith.constant 0 : index
    %276 = vector.load %arg6[%c120, %c0_98] : memref<456x128xf32, #tpu.memory_space<vmem>>, vector<1x128xf32>
    %277 = vector.broadcast %276 : vector<1x128xf32> to vector<16x128xf32>
    %278 = arith.addf %275, %277 : vector<16x128xf32>
    %279 = arith.truncf %278 : vector<16x128xf32> to vector<16x128xbf16>
    %c1328 = arith.constant 1328 : index
    %c0_99 = arith.constant 0 : index
    %280 = vector.load %arg5[%c1328, %c0_99] : memref<4272x128xbf16, #tpu.memory_space<vmem>>, vector<128x128xbf16>
    %cst_100 = arith.constant dense<0.000000e+00> : vector<16x128xf32>
    %281 = tpu.matmul %279, %280, %cst_100 {dimension_numbers = #tpu.dot_dimension_numbers<[1], [0], [0], [1], [0, 0, 1, 1], [], []>} : vector<16x128xbf16>, vector<128x128xbf16>, vector<16x128xf32> -> vector<16x128xf32>
    %c128 = arith.constant 128 : index
    %c0_101 = arith.constant 0 : index
    %282 = vector.load %arg6[%c128, %c0_101] : memref<456x128xf32, #tpu.memory_space<vmem>>, vector<1x128xf32>
    %283 = vector.broadcast %282 : vector<1x128xf32> to vector<16x128xf32>
    %284 = arith.addf %281, %283 : vector<16x128xf32>
    %cst_102 = arith.constant 0.000000e+00 : f32
    %285 = vector.broadcast %cst_102 : f32 to vector<16x128xf32>
    %286 = arith.maximumf %284, %285 : vector<16x128xf32>
    %287 = arith.truncf %286 : vector<16x128xf32> to vector<16x128xbf16>
    %c1456 = arith.constant 1456 : index
    %c0_103 = arith.constant 0 : index
    %288 = vector.load %arg5[%c1456, %c0_103] : memref<4272x128xbf16, #tpu.memory_space<vmem>>, vector<128x128xbf16>
    %cst_104 = arith.constant dense<0.000000e+00> : vector<16x128xf32>
    %289 = tpu.matmul %287, %288, %cst_104 {dimension_numbers = #tpu.dot_dimension_numbers<[1], [0], [0], [1], [0, 0, 1, 1], [], []>} : vector<16x128xbf16>, vector<128x128xbf16>, vector<16x128xf32> -> vector<16x128xf32>
    %c136 = arith.constant 136 : index
    %c0_105 = arith.constant 0 : index
    %290 = vector.load %arg6[%c136, %c0_105] : memref<456x128xf32, #tpu.memory_space<vmem>>, vector<1x128xf32>
    %291 = vector.broadcast %290 : vector<1x128xf32> to vector<16x128xf32>
    %292 = arith.addf %289, %291 : vector<16x128xf32>
    %293 = arith.addf %278, %292 : vector<16x128xf32>
    %cst_106 = arith.constant dense<0.000000e+00> : vector<16xf32>
    %294 = vector.multi_reduction <add>, %293, %cst_106 [1] : vector<16x128xf32> to vector<16xf32>
    %295 = vector.shape_cast %294 : vector<16xf32> to vector<16x1xf32>
    %cst_107 = arith.constant 1.280000e+02 : f32
    %296 = vector.broadcast %cst_107 : f32 to vector<16x1xf32>
    %297 = arith.divf %295, %296 : vector<16x1xf32>
    %298 = vector.broadcast %297 : vector<16x1xf32> to vector<16x128xf32>
    %299 = arith.subf %293, %298 : vector<16x128xf32>
    %300 = arith.mulf %299, %299 : vector<16x128xf32>
    %cst_108 = arith.constant dense<0.000000e+00> : vector<16xf32>
    %301 = vector.multi_reduction <add>, %300, %cst_108 [1] : vector<16x128xf32> to vector<16xf32>
    %302 = vector.shape_cast %301 : vector<16xf32> to vector<16x1xf32>
    %cst_109 = arith.constant 1.280000e+02 : f32
    %303 = vector.broadcast %cst_109 : f32 to vector<16x1xf32>
    %304 = arith.divf %302, %303 : vector<16x1xf32>
    %cst_110 = arith.constant 9.99999974E-6 : f32
    %305 = vector.broadcast %cst_110 : f32 to vector<16x1xf32>
    %306 = arith.addf %304, %305 : vector<16x1xf32>
    %307 = math.rsqrt %306 : vector<16x1xf32>
    %308 = vector.broadcast %307 : vector<16x1xf32> to vector<16x128xf32>
    %309 = arith.mulf %299, %308 : vector<16x128xf32>
    %c144 = arith.constant 144 : index
    %c0_111 = arith.constant 0 : index
    %310 = vector.load %arg6[%c144, %c0_111] : memref<456x128xf32, #tpu.memory_space<vmem>>, vector<1x128xf32>
    %311 = vector.broadcast %310 : vector<1x128xf32> to vector<16x128xf32>
    %312 = arith.mulf %309, %311 : vector<16x128xf32>
    %c152 = arith.constant 152 : index
    %c0_112 = arith.constant 0 : index
    %313 = vector.load %arg6[%c152, %c0_112] : memref<456x128xf32, #tpu.memory_space<vmem>>, vector<1x128xf32>
    %314 = vector.broadcast %313 : vector<1x128xf32> to vector<16x128xf32>
    %315 = arith.addf %312, %314 : vector<16x128xf32>
    %cst_113 = arith.constant dense<0.000000e+00> : vector<16xf32>
    %316 = vector.multi_reduction <add>, %315, %cst_113 [1] : vector<16x128xf32> to vector<16xf32>
    %317 = vector.shape_cast %316 : vector<16xf32> to vector<16x1xf32>
    %cst_114 = arith.constant 1.280000e+02 : f32
    %318 = vector.broadcast %cst_114 : f32 to vector<16x1xf32>
    %319 = arith.divf %317, %318 : vector<16x1xf32>
    %320 = vector.broadcast %319 : vector<16x1xf32> to vector<16x128xf32>
    %321 = arith.subf %315, %320 : vector<16x128xf32>
    %322 = arith.mulf %321, %321 : vector<16x128xf32>
    %cst_115 = arith.constant dense<0.000000e+00> : vector<16xf32>
    %323 = vector.multi_reduction <add>, %322, %cst_115 [1] : vector<16x128xf32> to vector<16xf32>
    %324 = vector.shape_cast %323 : vector<16xf32> to vector<16x1xf32>
    %cst_116 = arith.constant 1.280000e+02 : f32
    %325 = vector.broadcast %cst_116 : f32 to vector<16x1xf32>
    %326 = arith.divf %324, %325 : vector<16x1xf32>
    %cst_117 = arith.constant 9.99999974E-6 : f32
    %327 = vector.broadcast %cst_117 : f32 to vector<16x1xf32>
    %328 = arith.addf %326, %327 : vector<16x1xf32>
    %329 = math.rsqrt %328 : vector<16x1xf32>
    %330 = vector.broadcast %329 : vector<16x1xf32> to vector<16x128xf32>
    %331 = arith.mulf %321, %330 : vector<16x128xf32>
    %c416 = arith.constant 416 : index
    %c0_118 = arith.constant 0 : index
    %332 = vector.load %arg6[%c416, %c0_118] : memref<456x128xf32, #tpu.memory_space<vmem>>, vector<1x128xf32>
    %333 = vector.broadcast %332 : vector<1x128xf32> to vector<16x128xf32>
    %334 = arith.mulf %331, %333 : vector<16x128xf32>
    %c424 = arith.constant 424 : index
    %c0_119 = arith.constant 0 : index
    %335 = vector.load %arg6[%c424, %c0_119] : memref<456x128xf32, #tpu.memory_space<vmem>>, vector<1x128xf32>
    %336 = vector.broadcast %335 : vector<1x128xf32> to vector<16x128xf32>
    %337 = arith.addf %334, %336 : vector<16x128xf32>
    %c32_120 = arith.constant 32 : index
    %c0_121 = arith.constant 0 : index
    %338 = vector.load %arg5[%c32_120, %c0_121] : memref<4272x128xbf16, #tpu.memory_space<vmem>>, vector<16x128xbf16>
    %c0_122 = arith.constant 0 : index
    %c0_123 = arith.constant 0 : index
    %339 = vector.load %arg1[%c0_122, %c0_123] : memref<16x1xi32, #tpu.memory_space<vmem>>, vector<16x1xi32>
    %340 = tpu.iota {dimensions = array<i32: 1>} : vector<16x16xi32>
    %341 = vector.broadcast %339 : vector<16x1xi32> to vector<16x16xi32>
    %342 = arith.cmpi eq, %341, %340 : vector<16x16xi32>
    %343 = arith.extui %342 : vector<16x16xi1> to vector<16x16xi32>
    %344 = arith.sitofp %343 : vector<16x16xi32> to vector<16x16xf32>
    %345 = arith.truncf %344 : vector<16x16xf32> to vector<16x16xbf16>
    %cst_124 = arith.constant dense<0.000000e+00> : vector<16x128xf32>
    %346 = tpu.matmul %345, %338, %cst_124 {dimension_numbers = #tpu.dot_dimension_numbers<[1], [0], [0], [1], [0, 0, 1, 1], [], []>} : vector<16x16xbf16>, vector<16x128xbf16>, vector<16x128xf32> -> vector<16x128xf32>
    %347 = arith.truncf %346 : vector<16x128xf32> to vector<16x128xbf16>
    %c1584 = arith.constant 1584 : index
    %c0_125 = arith.constant 0 : index
    %348 = vector.load %arg5[%c1584, %c0_125] : memref<4272x128xbf16, #tpu.memory_space<vmem>>, vector<128x128xbf16>
    %cst_126 = arith.constant dense<0.000000e+00> : vector<16x128xf32>
    %349 = tpu.matmul %347, %348, %cst_126 {dimension_numbers = #tpu.dot_dimension_numbers<[1], [0], [0], [1], [0, 0, 1, 1], [], []>} : vector<16x128xbf16>, vector<128x128xbf16>, vector<16x128xf32> -> vector<16x128xf32>
    %c160 = arith.constant 160 : index
    %c0_127 = arith.constant 0 : index
    %350 = vector.load %arg6[%c160, %c0_127] : memref<456x128xf32, #tpu.memory_space<vmem>>, vector<1x128xf32>
    %351 = vector.broadcast %350 : vector<1x128xf32> to vector<16x128xf32>
    %352 = arith.addf %349, %351 : vector<16x128xf32>
    %353 = arith.truncf %346 : vector<16x128xf32> to vector<16x128xbf16>
    %c1712 = arith.constant 1712 : index
    %c0_128 = arith.constant 0 : index
    %354 = vector.load %arg5[%c1712, %c0_128] : memref<4272x128xbf16, #tpu.memory_space<vmem>>, vector<128x128xbf16>
    %cst_129 = arith.constant dense<0.000000e+00> : vector<16x128xf32>
    %355 = tpu.matmul %353, %354, %cst_129 {dimension_numbers = #tpu.dot_dimension_numbers<[1], [0], [0], [1], [0, 0, 1, 1], [], []>} : vector<16x128xbf16>, vector<128x128xbf16>, vector<16x128xf32> -> vector<16x128xf32>
    %c168 = arith.constant 168 : index
    %c0_130 = arith.constant 0 : index
    %356 = vector.load %arg6[%c168, %c0_130] : memref<456x128xf32, #tpu.memory_space<vmem>>, vector<1x128xf32>
    %357 = vector.broadcast %356 : vector<1x128xf32> to vector<16x128xf32>
    %358 = arith.addf %355, %357 : vector<16x128xf32>
    %359 = arith.truncf %346 : vector<16x128xf32> to vector<16x128xbf16>
    %c1840 = arith.constant 1840 : index
    %c0_131 = arith.constant 0 : index
    %360 = vector.load %arg5[%c1840, %c0_131] : memref<4272x128xbf16, #tpu.memory_space<vmem>>, vector<128x128xbf16>
    %cst_132 = arith.constant dense<0.000000e+00> : vector<16x128xf32>
    %361 = tpu.matmul %359, %360, %cst_132 {dimension_numbers = #tpu.dot_dimension_numbers<[1], [0], [0], [1], [0, 0, 1, 1], [], []>} : vector<16x128xbf16>, vector<128x128xbf16>, vector<16x128xf32> -> vector<16x128xf32>
    %c176_133 = arith.constant 176 : index
    %c0_134 = arith.constant 0 : index
    %362 = vector.load %arg6[%c176_133, %c0_134] : memref<456x128xf32, #tpu.memory_space<vmem>>, vector<1x128xf32>
    %363 = vector.broadcast %362 : vector<1x128xf32> to vector<16x128xf32>
    %364 = arith.addf %361, %363 : vector<16x128xf32>
    %365 = vector.extract_strided_slice %352 {offsets = [0, 0], sizes = [16, 16], strides = [1, 1]} : vector<16x128xf32> to vector<16x16xf32>
    %366 = vector.extract_strided_slice %358 {offsets = [0, 0], sizes = [16, 16], strides = [1, 1]} : vector<16x128xf32> to vector<16x16xf32>
    %cst_135 = arith.constant dense<0.000000e+00> : vector<16x16xf32>
    %367 = tpu.matmul %365, %366, %cst_135 {dimension_numbers = #tpu.dot_dimension_numbers<[1], [1], [0], [0], [0, 0, 1, 0], [], []>} : vector<16x16xf32>, vector<16x16xf32>, vector<16x16xf32> -> vector<16x16xf32>
    %368 = arith.addf %367, %1 : vector<16x16xf32>
    %369 = vector.extract_strided_slice %352 {offsets = [0, 16], sizes = [16, 16], strides = [1, 1]} : vector<16x128xf32> to vector<16x16xf32>
    %370 = vector.extract_strided_slice %358 {offsets = [0, 16], sizes = [16, 16], strides = [1, 1]} : vector<16x128xf32> to vector<16x16xf32>
    %cst_136 = arith.constant dense<0.000000e+00> : vector<16x16xf32>
    %371 = tpu.matmul %369, %370, %cst_136 {dimension_numbers = #tpu.dot_dimension_numbers<[1], [1], [0], [0], [0, 0, 1, 0], [], []>} : vector<16x16xf32>, vector<16x16xf32>, vector<16x16xf32> -> vector<16x16xf32>
    %372 = arith.addf %371, %1 : vector<16x16xf32>
    %373 = vector.extract_strided_slice %352 {offsets = [0, 32], sizes = [16, 16], strides = [1, 1]} : vector<16x128xf32> to vector<16x16xf32>
    %374 = vector.extract_strided_slice %358 {offsets = [0, 32], sizes = [16, 16], strides = [1, 1]} : vector<16x128xf32> to vector<16x16xf32>
    %cst_137 = arith.constant dense<0.000000e+00> : vector<16x16xf32>
    %375 = tpu.matmul %373, %374, %cst_137 {dimension_numbers = #tpu.dot_dimension_numbers<[1], [1], [0], [0], [0, 0, 1, 0], [], []>} : vector<16x16xf32>, vector<16x16xf32>, vector<16x16xf32> -> vector<16x16xf32>
    %376 = arith.addf %375, %1 : vector<16x16xf32>
    %377 = vector.extract_strided_slice %352 {offsets = [0, 48], sizes = [16, 16], strides = [1, 1]} : vector<16x128xf32> to vector<16x16xf32>
    %378 = vector.extract_strided_slice %358 {offsets = [0, 48], sizes = [16, 16], strides = [1, 1]} : vector<16x128xf32> to vector<16x16xf32>
    %cst_138 = arith.constant dense<0.000000e+00> : vector<16x16xf32>
    %379 = tpu.matmul %377, %378, %cst_138 {dimension_numbers = #tpu.dot_dimension_numbers<[1], [1], [0], [0], [0, 0, 1, 0], [], []>} : vector<16x16xf32>, vector<16x16xf32>, vector<16x16xf32> -> vector<16x16xf32>
    %380 = arith.addf %379, %1 : vector<16x16xf32>
    %381 = vector.extract_strided_slice %352 {offsets = [0, 64], sizes = [16, 16], strides = [1, 1]} : vector<16x128xf32> to vector<16x16xf32>
    %382 = vector.extract_strided_slice %358 {offsets = [0, 64], sizes = [16, 16], strides = [1, 1]} : vector<16x128xf32> to vector<16x16xf32>
    %cst_139 = arith.constant dense<0.000000e+00> : vector<16x16xf32>
    %383 = tpu.matmul %381, %382, %cst_139 {dimension_numbers = #tpu.dot_dimension_numbers<[1], [1], [0], [0], [0, 0, 1, 0], [], []>} : vector<16x16xf32>, vector<16x16xf32>, vector<16x16xf32> -> vector<16x16xf32>
    %384 = arith.addf %383, %1 : vector<16x16xf32>
    %385 = vector.extract_strided_slice %352 {offsets = [0, 80], sizes = [16, 16], strides = [1, 1]} : vector<16x128xf32> to vector<16x16xf32>
    %386 = vector.extract_strided_slice %358 {offsets = [0, 80], sizes = [16, 16], strides = [1, 1]} : vector<16x128xf32> to vector<16x16xf32>
    %cst_140 = arith.constant dense<0.000000e+00> : vector<16x16xf32>
    %387 = tpu.matmul %385, %386, %cst_140 {dimension_numbers = #tpu.dot_dimension_numbers<[1], [1], [0], [0], [0, 0, 1, 0], [], []>} : vector<16x16xf32>, vector<16x16xf32>, vector<16x16xf32> -> vector<16x16xf32>
    %388 = arith.addf %387, %1 : vector<16x16xf32>
    %389 = vector.extract_strided_slice %352 {offsets = [0, 96], sizes = [16, 16], strides = [1, 1]} : vector<16x128xf32> to vector<16x16xf32>
    %390 = vector.extract_strided_slice %358 {offsets = [0, 96], sizes = [16, 16], strides = [1, 1]} : vector<16x128xf32> to vector<16x16xf32>
    %cst_141 = arith.constant dense<0.000000e+00> : vector<16x16xf32>
    %391 = tpu.matmul %389, %390, %cst_141 {dimension_numbers = #tpu.dot_dimension_numbers<[1], [1], [0], [0], [0, 0, 1, 0], [], []>} : vector<16x16xf32>, vector<16x16xf32>, vector<16x16xf32> -> vector<16x16xf32>
    %392 = arith.addf %391, %1 : vector<16x16xf32>
    %393 = vector.extract_strided_slice %352 {offsets = [0, 112], sizes = [16, 16], strides = [1, 1]} : vector<16x128xf32> to vector<16x16xf32>
    %394 = vector.extract_strided_slice %358 {offsets = [0, 112], sizes = [16, 16], strides = [1, 1]} : vector<16x128xf32> to vector<16x16xf32>
    %cst_142 = arith.constant dense<0.000000e+00> : vector<16x16xf32>
    %395 = tpu.matmul %393, %394, %cst_142 {dimension_numbers = #tpu.dot_dimension_numbers<[1], [1], [0], [0], [0, 0, 1, 0], [], []>} : vector<16x16xf32>, vector<16x16xf32>, vector<16x16xf32> -> vector<16x16xf32>
    %396 = arith.addf %395, %1 : vector<16x16xf32>
    %397 = tpu.concatenate %368, %372, %376, %380, %384, %388, %392, %396 in 0 : vector<16x16xf32>, vector<16x16xf32>, vector<16x16xf32>, vector<16x16xf32>, vector<16x16xf32>, vector<16x16xf32>, vector<16x16xf32>, vector<16x16xf32> -> vector<128x16xf32>
    %cst_143 = arith.constant dense<0xFF800000> : vector<128xf32>
    %398 = vector.multi_reduction <maximumf>, %397, %cst_143 [1] : vector<128x16xf32> to vector<128xf32>
    %399 = vector.shape_cast %398 : vector<128xf32> to vector<128x1xf32>
    %400 = vector.broadcast %399 : vector<128x1xf32> to vector<128x16xf32>
    %401 = arith.subf %397, %400 : vector<128x16xf32>
    %402 = math.exp %401 : vector<128x16xf32>
    %cst_144 = arith.constant dense<0.000000e+00> : vector<128xf32>
    %403 = vector.multi_reduction <add>, %402, %cst_144 [1] : vector<128x16xf32> to vector<128xf32>
    %404 = vector.shape_cast %403 : vector<128xf32> to vector<128x1xf32>
    %405 = tpu.reciprocal %404 {approx = true} : vector<128x1xf32> -> vector<128x1xf32>
    %406 = vector.broadcast %405 : vector<128x1xf32> to vector<128x16xf32>
    %407 = arith.mulf %402, %406 : vector<128x16xf32>
    %408 = vector.extract_strided_slice %407 {offsets = [0, 0], sizes = [16, 16], strides = [1, 1]} : vector<128x16xf32> to vector<16x16xf32>
    %409 = vector.extract_strided_slice %364 {offsets = [0, 0], sizes = [16, 16], strides = [1, 1]} : vector<16x128xf32> to vector<16x16xf32>
    %cst_145 = arith.constant dense<0.000000e+00> : vector<16x16xf32>
    %410 = tpu.matmul %408, %409, %cst_145 {dimension_numbers = #tpu.dot_dimension_numbers<[1], [0], [0], [1], [0, 0, 1, 1], [], []>} : vector<16x16xf32>, vector<16x16xf32>, vector<16x16xf32> -> vector<16x16xf32>
    %411 = vector.extract_strided_slice %407 {offsets = [16, 0], sizes = [16, 16], strides = [1, 1]} : vector<128x16xf32> to vector<16x16xf32>
    %412 = vector.extract_strided_slice %364 {offsets = [0, 16], sizes = [16, 16], strides = [1, 1]} : vector<16x128xf32> to vector<16x16xf32>
    %cst_146 = arith.constant dense<0.000000e+00> : vector<16x16xf32>
    %413 = tpu.matmul %411, %412, %cst_146 {dimension_numbers = #tpu.dot_dimension_numbers<[1], [0], [0], [1], [0, 0, 1, 1], [], []>} : vector<16x16xf32>, vector<16x16xf32>, vector<16x16xf32> -> vector<16x16xf32>
    %414 = vector.extract_strided_slice %407 {offsets = [32, 0], sizes = [16, 16], strides = [1, 1]} : vector<128x16xf32> to vector<16x16xf32>
    %415 = vector.extract_strided_slice %364 {offsets = [0, 32], sizes = [16, 16], strides = [1, 1]} : vector<16x128xf32> to vector<16x16xf32>
    %cst_147 = arith.constant dense<0.000000e+00> : vector<16x16xf32>
    %416 = tpu.matmul %414, %415, %cst_147 {dimension_numbers = #tpu.dot_dimension_numbers<[1], [0], [0], [1], [0, 0, 1, 1], [], []>} : vector<16x16xf32>, vector<16x16xf32>, vector<16x16xf32> -> vector<16x16xf32>
    %417 = vector.extract_strided_slice %407 {offsets = [48, 0], sizes = [16, 16], strides = [1, 1]} : vector<128x16xf32> to vector<16x16xf32>
    %418 = vector.extract_strided_slice %364 {offsets = [0, 48], sizes = [16, 16], strides = [1, 1]} : vector<16x128xf32> to vector<16x16xf32>
    %cst_148 = arith.constant dense<0.000000e+00> : vector<16x16xf32>
    %419 = tpu.matmul %417, %418, %cst_148 {dimension_numbers = #tpu.dot_dimension_numbers<[1], [0], [0], [1], [0, 0, 1, 1], [], []>} : vector<16x16xf32>, vector<16x16xf32>, vector<16x16xf32> -> vector<16x16xf32>
    %420 = vector.extract_strided_slice %407 {offsets = [64, 0], sizes = [16, 16], strides = [1, 1]} : vector<128x16xf32> to vector<16x16xf32>
    %421 = vector.extract_strided_slice %364 {offsets = [0, 64], sizes = [16, 16], strides = [1, 1]} : vector<16x128xf32> to vector<16x16xf32>
    %cst_149 = arith.constant dense<0.000000e+00> : vector<16x16xf32>
    %422 = tpu.matmul %420, %421, %cst_149 {dimension_numbers = #tpu.dot_dimension_numbers<[1], [0], [0], [1], [0, 0, 1, 1], [], []>} : vector<16x16xf32>, vector<16x16xf32>, vector<16x16xf32> -> vector<16x16xf32>
    %423 = vector.extract_strided_slice %407 {offsets = [80, 0], sizes = [16, 16], strides = [1, 1]} : vector<128x16xf32> to vector<16x16xf32>
    %424 = vector.extract_strided_slice %364 {offsets = [0, 80], sizes = [16, 16], strides = [1, 1]} : vector<16x128xf32> to vector<16x16xf32>
    %cst_150 = arith.constant dense<0.000000e+00> : vector<16x16xf32>
    %425 = tpu.matmul %423, %424, %cst_150 {dimension_numbers = #tpu.dot_dimension_numbers<[1], [0], [0], [1], [0, 0, 1, 1], [], []>} : vector<16x16xf32>, vector<16x16xf32>, vector<16x16xf32> -> vector<16x16xf32>
    %426 = vector.extract_strided_slice %407 {offsets = [96, 0], sizes = [16, 16], strides = [1, 1]} : vector<128x16xf32> to vector<16x16xf32>
    %427 = vector.extract_strided_slice %364 {offsets = [0, 96], sizes = [16, 16], strides = [1, 1]} : vector<16x128xf32> to vector<16x16xf32>
    %cst_151 = arith.constant dense<0.000000e+00> : vector<16x16xf32>
    %428 = tpu.matmul %426, %427, %cst_151 {dimension_numbers = #tpu.dot_dimension_numbers<[1], [0], [0], [1], [0, 0, 1, 1], [], []>} : vector<16x16xf32>, vector<16x16xf32>, vector<16x16xf32> -> vector<16x16xf32>
    %429 = vector.extract_strided_slice %407 {offsets = [112, 0], sizes = [16, 16], strides = [1, 1]} : vector<128x16xf32> to vector<16x16xf32>
    %430 = vector.extract_strided_slice %364 {offsets = [0, 112], sizes = [16, 16], strides = [1, 1]} : vector<16x128xf32> to vector<16x16xf32>
    %cst_152 = arith.constant dense<0.000000e+00> : vector<16x16xf32>
    %431 = tpu.matmul %429, %430, %cst_152 {dimension_numbers = #tpu.dot_dimension_numbers<[1], [0], [0], [1], [0, 0, 1, 1], [], []>} : vector<16x16xf32>, vector<16x16xf32>, vector<16x16xf32> -> vector<16x16xf32>
    %432 = tpu.concatenate %410, %413, %416, %419, %422, %425, %428, %431 in 1 : vector<16x16xf32>, vector<16x16xf32>, vector<16x16xf32>, vector<16x16xf32>, vector<16x16xf32>, vector<16x16xf32>, vector<16x16xf32>, vector<16x16xf32> -> vector<16x128xf32>
    %433 = arith.truncf %432 : vector<16x128xf32> to vector<16x128xbf16>
    %c1968 = arith.constant 1968 : index
    %c0_153 = arith.constant 0 : index
    %434 = vector.load %arg5[%c1968, %c0_153] : memref<4272x128xbf16, #tpu.memory_space<vmem>>, vector<128x128xbf16>
    %cst_154 = arith.constant dense<0.000000e+00> : vector<16x128xf32>
    %435 = tpu.matmul %433, %434, %cst_154 {dimension_numbers = #tpu.dot_dimension_numbers<[1], [0], [0], [1], [0, 0, 1, 1], [], []>} : vector<16x128xbf16>, vector<128x128xbf16>, vector<16x128xf32> -> vector<16x128xf32>
    %c184 = arith.constant 184 : index
    %c0_155 = arith.constant 0 : index
    %436 = vector.load %arg6[%c184, %c0_155] : memref<456x128xf32, #tpu.memory_space<vmem>>, vector<1x128xf32>
    %437 = vector.broadcast %436 : vector<1x128xf32> to vector<16x128xf32>
    %438 = arith.addf %435, %437 : vector<16x128xf32>
    %439 = arith.addf %346, %438 : vector<16x128xf32>
    %cst_156 = arith.constant dense<0.000000e+00> : vector<16xf32>
    %440 = vector.multi_reduction <add>, %439, %cst_156 [1] : vector<16x128xf32> to vector<16xf32>
    %441 = vector.shape_cast %440 : vector<16xf32> to vector<16x1xf32>
    %cst_157 = arith.constant 1.280000e+02 : f32
    %442 = vector.broadcast %cst_157 : f32 to vector<16x1xf32>
    %443 = arith.divf %441, %442 : vector<16x1xf32>
    %444 = vector.broadcast %443 : vector<16x1xf32> to vector<16x128xf32>
    %445 = arith.subf %439, %444 : vector<16x128xf32>
    %446 = arith.mulf %445, %445 : vector<16x128xf32>
    %cst_158 = arith.constant dense<0.000000e+00> : vector<16xf32>
    %447 = vector.multi_reduction <add>, %446, %cst_158 [1] : vector<16x128xf32> to vector<16xf32>
    %448 = vector.shape_cast %447 : vector<16xf32> to vector<16x1xf32>
    %cst_159 = arith.constant 1.280000e+02 : f32
    %449 = vector.broadcast %cst_159 : f32 to vector<16x1xf32>
    %450 = arith.divf %448, %449 : vector<16x1xf32>
    %cst_160 = arith.constant 9.99999974E-6 : f32
    %451 = vector.broadcast %cst_160 : f32 to vector<16x1xf32>
    %452 = arith.addf %450, %451 : vector<16x1xf32>
    %453 = math.rsqrt %452 : vector<16x1xf32>
    %454 = vector.broadcast %453 : vector<16x1xf32> to vector<16x128xf32>
    %455 = arith.mulf %445, %454 : vector<16x128xf32>
    %c224 = arith.constant 224 : index
    %c0_161 = arith.constant 0 : index
    %456 = vector.load %arg6[%c224, %c0_161] : memref<456x128xf32, #tpu.memory_space<vmem>>, vector<1x128xf32>
    %457 = vector.broadcast %456 : vector<1x128xf32> to vector<16x128xf32>
    %458 = arith.mulf %455, %457 : vector<16x128xf32>
    %c232 = arith.constant 232 : index
    %c0_162 = arith.constant 0 : index
    %459 = vector.load %arg6[%c232, %c0_162] : memref<456x128xf32, #tpu.memory_space<vmem>>, vector<1x128xf32>
    %460 = vector.broadcast %459 : vector<1x128xf32> to vector<16x128xf32>
    %461 = arith.addf %458, %460 : vector<16x128xf32>
    %462 = arith.truncf %461 : vector<16x128xf32> to vector<16x128xbf16>
    %c2096 = arith.constant 2096 : index
    %c0_163 = arith.constant 0 : index
    %463 = vector.load %arg5[%c2096, %c0_163] : memref<4272x128xbf16, #tpu.memory_space<vmem>>, vector<128x128xbf16>
    %cst_164 = arith.constant dense<0.000000e+00> : vector<16x128xf32>
    %464 = tpu.matmul %462, %463, %cst_164 {dimension_numbers = #tpu.dot_dimension_numbers<[1], [0], [0], [1], [0, 0, 1, 1], [], []>} : vector<16x128xbf16>, vector<128x128xbf16>, vector<16x128xf32> -> vector<16x128xf32>
    %c192 = arith.constant 192 : index
    %c0_165 = arith.constant 0 : index
    %465 = vector.load %arg6[%c192, %c0_165] : memref<456x128xf32, #tpu.memory_space<vmem>>, vector<1x128xf32>
    %466 = vector.broadcast %465 : vector<1x128xf32> to vector<16x128xf32>
    %467 = arith.addf %464, %466 : vector<16x128xf32>
    %468 = arith.truncf %337 : vector<16x128xf32> to vector<16x128xbf16>
    %c2224 = arith.constant 2224 : index
    %c0_166 = arith.constant 0 : index
    %469 = vector.load %arg5[%c2224, %c0_166] : memref<4272x128xbf16, #tpu.memory_space<vmem>>, vector<128x128xbf16>
    %cst_167 = arith.constant dense<0.000000e+00> : vector<16x128xf32>
    %470 = tpu.matmul %468, %469, %cst_167 {dimension_numbers = #tpu.dot_dimension_numbers<[1], [0], [0], [1], [0, 0, 1, 1], [], []>} : vector<16x128xbf16>, vector<128x128xbf16>, vector<16x128xf32> -> vector<16x128xf32>
    %c200 = arith.constant 200 : index
    %c0_168 = arith.constant 0 : index
    %471 = vector.load %arg6[%c200, %c0_168] : memref<456x128xf32, #tpu.memory_space<vmem>>, vector<1x128xf32>
    %472 = vector.broadcast %471 : vector<1x128xf32> to vector<16x128xf32>
    %473 = arith.addf %470, %472 : vector<16x128xf32>
    %474 = arith.truncf %337 : vector<16x128xf32> to vector<16x128xbf16>
    %c2352 = arith.constant 2352 : index
    %c0_169 = arith.constant 0 : index
    %475 = vector.load %arg5[%c2352, %c0_169] : memref<4272x128xbf16, #tpu.memory_space<vmem>>, vector<128x128xbf16>
    %cst_170 = arith.constant dense<0.000000e+00> : vector<16x128xf32>
    %476 = tpu.matmul %474, %475, %cst_170 {dimension_numbers = #tpu.dot_dimension_numbers<[1], [0], [0], [1], [0, 0, 1, 1], [], []>} : vector<16x128xbf16>, vector<128x128xbf16>, vector<16x128xf32> -> vector<16x128xf32>
    %c208 = arith.constant 208 : index
    %c0_171 = arith.constant 0 : index
    %477 = vector.load %arg6[%c208, %c0_171] : memref<456x128xf32, #tpu.memory_space<vmem>>, vector<1x128xf32>
    %478 = vector.broadcast %477 : vector<1x128xf32> to vector<16x128xf32>
    %479 = arith.addf %476, %478 : vector<16x128xf32>
    %480 = vector.extract_strided_slice %467 {offsets = [0, 0], sizes = [16, 16], strides = [1, 1]} : vector<16x128xf32> to vector<16x16xf32>
    %481 = vector.extract_strided_slice %473 {offsets = [0, 0], sizes = [16, 16], strides = [1, 1]} : vector<16x128xf32> to vector<16x16xf32>
    %cst_172 = arith.constant dense<0.000000e+00> : vector<16x16xf32>
    %482 = tpu.matmul %480, %481, %cst_172 {dimension_numbers = #tpu.dot_dimension_numbers<[1], [1], [0], [0], [0, 0, 1, 0], [], []>} : vector<16x16xf32>, vector<16x16xf32>, vector<16x16xf32> -> vector<16x16xf32>
    %483 = arith.addf %482, %2 : vector<16x16xf32>
    %484 = vector.extract_strided_slice %467 {offsets = [0, 16], sizes = [16, 16], strides = [1, 1]} : vector<16x128xf32> to vector<16x16xf32>
    %485 = vector.extract_strided_slice %473 {offsets = [0, 16], sizes = [16, 16], strides = [1, 1]} : vector<16x128xf32> to vector<16x16xf32>
    %cst_173 = arith.constant dense<0.000000e+00> : vector<16x16xf32>
    %486 = tpu.matmul %484, %485, %cst_173 {dimension_numbers = #tpu.dot_dimension_numbers<[1], [1], [0], [0], [0, 0, 1, 0], [], []>} : vector<16x16xf32>, vector<16x16xf32>, vector<16x16xf32> -> vector<16x16xf32>
    %487 = arith.addf %486, %2 : vector<16x16xf32>
    %488 = vector.extract_strided_slice %467 {offsets = [0, 32], sizes = [16, 16], strides = [1, 1]} : vector<16x128xf32> to vector<16x16xf32>
    %489 = vector.extract_strided_slice %473 {offsets = [0, 32], sizes = [16, 16], strides = [1, 1]} : vector<16x128xf32> to vector<16x16xf32>
    %cst_174 = arith.constant dense<0.000000e+00> : vector<16x16xf32>
    %490 = tpu.matmul %488, %489, %cst_174 {dimension_numbers = #tpu.dot_dimension_numbers<[1], [1], [0], [0], [0, 0, 1, 0], [], []>} : vector<16x16xf32>, vector<16x16xf32>, vector<16x16xf32> -> vector<16x16xf32>
    %491 = arith.addf %490, %2 : vector<16x16xf32>
    %492 = vector.extract_strided_slice %467 {offsets = [0, 48], sizes = [16, 16], strides = [1, 1]} : vector<16x128xf32> to vector<16x16xf32>
    %493 = vector.extract_strided_slice %473 {offsets = [0, 48], sizes = [16, 16], strides = [1, 1]} : vector<16x128xf32> to vector<16x16xf32>
    %cst_175 = arith.constant dense<0.000000e+00> : vector<16x16xf32>
    %494 = tpu.matmul %492, %493, %cst_175 {dimension_numbers = #tpu.dot_dimension_numbers<[1], [1], [0], [0], [0, 0, 1, 0], [], []>} : vector<16x16xf32>, vector<16x16xf32>, vector<16x16xf32> -> vector<16x16xf32>
    %495 = arith.addf %494, %2 : vector<16x16xf32>
    %496 = vector.extract_strided_slice %467 {offsets = [0, 64], sizes = [16, 16], strides = [1, 1]} : vector<16x128xf32> to vector<16x16xf32>
    %497 = vector.extract_strided_slice %473 {offsets = [0, 64], sizes = [16, 16], strides = [1, 1]} : vector<16x128xf32> to vector<16x16xf32>
    %cst_176 = arith.constant dense<0.000000e+00> : vector<16x16xf32>
    %498 = tpu.matmul %496, %497, %cst_176 {dimension_numbers = #tpu.dot_dimension_numbers<[1], [1], [0], [0], [0, 0, 1, 0], [], []>} : vector<16x16xf32>, vector<16x16xf32>, vector<16x16xf32> -> vector<16x16xf32>
    %499 = arith.addf %498, %2 : vector<16x16xf32>
    %500 = vector.extract_strided_slice %467 {offsets = [0, 80], sizes = [16, 16], strides = [1, 1]} : vector<16x128xf32> to vector<16x16xf32>
    %501 = vector.extract_strided_slice %473 {offsets = [0, 80], sizes = [16, 16], strides = [1, 1]} : vector<16x128xf32> to vector<16x16xf32>
    %cst_177 = arith.constant dense<0.000000e+00> : vector<16x16xf32>
    %502 = tpu.matmul %500, %501, %cst_177 {dimension_numbers = #tpu.dot_dimension_numbers<[1], [1], [0], [0], [0, 0, 1, 0], [], []>} : vector<16x16xf32>, vector<16x16xf32>, vector<16x16xf32> -> vector<16x16xf32>
    %503 = arith.addf %502, %2 : vector<16x16xf32>
    %504 = vector.extract_strided_slice %467 {offsets = [0, 96], sizes = [16, 16], strides = [1, 1]} : vector<16x128xf32> to vector<16x16xf32>
    %505 = vector.extract_strided_slice %473 {offsets = [0, 96], sizes = [16, 16], strides = [1, 1]} : vector<16x128xf32> to vector<16x16xf32>
    %cst_178 = arith.constant dense<0.000000e+00> : vector<16x16xf32>
    %506 = tpu.matmul %504, %505, %cst_178 {dimension_numbers = #tpu.dot_dimension_numbers<[1], [1], [0], [0], [0, 0, 1, 0], [], []>} : vector<16x16xf32>, vector<16x16xf32>, vector<16x16xf32> -> vector<16x16xf32>
    %507 = arith.addf %506, %2 : vector<16x16xf32>
    %508 = vector.extract_strided_slice %467 {offsets = [0, 112], sizes = [16, 16], strides = [1, 1]} : vector<16x128xf32> to vector<16x16xf32>
    %509 = vector.extract_strided_slice %473 {offsets = [0, 112], sizes = [16, 16], strides = [1, 1]} : vector<16x128xf32> to vector<16x16xf32>
    %cst_179 = arith.constant dense<0.000000e+00> : vector<16x16xf32>
    %510 = tpu.matmul %508, %509, %cst_179 {dimension_numbers = #tpu.dot_dimension_numbers<[1], [1], [0], [0], [0, 0, 1, 0], [], []>} : vector<16x16xf32>, vector<16x16xf32>, vector<16x16xf32> -> vector<16x16xf32>
    %511 = arith.addf %510, %2 : vector<16x16xf32>
    %512 = tpu.concatenate %483, %487, %491, %495, %499, %503, %507, %511 in 0 : vector<16x16xf32>, vector<16x16xf32>, vector<16x16xf32>, vector<16x16xf32>, vector<16x16xf32>, vector<16x16xf32>, vector<16x16xf32>, vector<16x16xf32> -> vector<128x16xf32>
    %cst_180 = arith.constant dense<0xFF800000> : vector<128xf32>
    %513 = vector.multi_reduction <maximumf>, %512, %cst_180 [1] : vector<128x16xf32> to vector<128xf32>
    %514 = vector.shape_cast %513 : vector<128xf32> to vector<128x1xf32>
    %515 = vector.broadcast %514 : vector<128x1xf32> to vector<128x16xf32>
    %516 = arith.subf %512, %515 : vector<128x16xf32>
    %517 = math.exp %516 : vector<128x16xf32>
    %cst_181 = arith.constant dense<0.000000e+00> : vector<128xf32>
    %518 = vector.multi_reduction <add>, %517, %cst_181 [1] : vector<128x16xf32> to vector<128xf32>
    %519 = vector.shape_cast %518 : vector<128xf32> to vector<128x1xf32>
    %520 = tpu.reciprocal %519 {approx = true} : vector<128x1xf32> -> vector<128x1xf32>
    %521 = vector.broadcast %520 : vector<128x1xf32> to vector<128x16xf32>
    %522 = arith.mulf %517, %521 : vector<128x16xf32>
    %523 = vector.extract_strided_slice %522 {offsets = [0, 0], sizes = [16, 16], strides = [1, 1]} : vector<128x16xf32> to vector<16x16xf32>
    %524 = vector.extract_strided_slice %479 {offsets = [0, 0], sizes = [16, 16], strides = [1, 1]} : vector<16x128xf32> to vector<16x16xf32>
    %cst_182 = arith.constant dense<0.000000e+00> : vector<16x16xf32>
    %525 = tpu.matmul %523, %524, %cst_182 {dimension_numbers = #tpu.dot_dimension_numbers<[1], [0], [0], [1], [0, 0, 1, 1], [], []>} : vector<16x16xf32>, vector<16x16xf32>, vector<16x16xf32> -> vector<16x16xf32>
    %526 = vector.extract_strided_slice %522 {offsets = [16, 0], sizes = [16, 16], strides = [1, 1]} : vector<128x16xf32> to vector<16x16xf32>
    %527 = vector.extract_strided_slice %479 {offsets = [0, 16], sizes = [16, 16], strides = [1, 1]} : vector<16x128xf32> to vector<16x16xf32>
    %cst_183 = arith.constant dense<0.000000e+00> : vector<16x16xf32>
    %528 = tpu.matmul %526, %527, %cst_183 {dimension_numbers = #tpu.dot_dimension_numbers<[1], [0], [0], [1], [0, 0, 1, 1], [], []>} : vector<16x16xf32>, vector<16x16xf32>, vector<16x16xf32> -> vector<16x16xf32>
    %529 = vector.extract_strided_slice %522 {offsets = [32, 0], sizes = [16, 16], strides = [1, 1]} : vector<128x16xf32> to vector<16x16xf32>
    %530 = vector.extract_strided_slice %479 {offsets = [0, 32], sizes = [16, 16], strides = [1, 1]} : vector<16x128xf32> to vector<16x16xf32>
    %cst_184 = arith.constant dense<0.000000e+00> : vector<16x16xf32>
    %531 = tpu.matmul %529, %530, %cst_184 {dimension_numbers = #tpu.dot_dimension_numbers<[1], [0], [0], [1], [0, 0, 1, 1], [], []>} : vector<16x16xf32>, vector<16x16xf32>, vector<16x16xf32> -> vector<16x16xf32>
    %532 = vector.extract_strided_slice %522 {offsets = [48, 0], sizes = [16, 16], strides = [1, 1]} : vector<128x16xf32> to vector<16x16xf32>
    %533 = vector.extract_strided_slice %479 {offsets = [0, 48], sizes = [16, 16], strides = [1, 1]} : vector<16x128xf32> to vector<16x16xf32>
    %cst_185 = arith.constant dense<0.000000e+00> : vector<16x16xf32>
    %534 = tpu.matmul %532, %533, %cst_185 {dimension_numbers = #tpu.dot_dimension_numbers<[1], [0], [0], [1], [0, 0, 1, 1], [], []>} : vector<16x16xf32>, vector<16x16xf32>, vector<16x16xf32> -> vector<16x16xf32>
    %535 = vector.extract_strided_slice %522 {offsets = [64, 0], sizes = [16, 16], strides = [1, 1]} : vector<128x16xf32> to vector<16x16xf32>
    %536 = vector.extract_strided_slice %479 {offsets = [0, 64], sizes = [16, 16], strides = [1, 1]} : vector<16x128xf32> to vector<16x16xf32>
    %cst_186 = arith.constant dense<0.000000e+00> : vector<16x16xf32>
    %537 = tpu.matmul %535, %536, %cst_186 {dimension_numbers = #tpu.dot_dimension_numbers<[1], [0], [0], [1], [0, 0, 1, 1], [], []>} : vector<16x16xf32>, vector<16x16xf32>, vector<16x16xf32> -> vector<16x16xf32>
    %538 = vector.extract_strided_slice %522 {offsets = [80, 0], sizes = [16, 16], strides = [1, 1]} : vector<128x16xf32> to vector<16x16xf32>
    %539 = vector.extract_strided_slice %479 {offsets = [0, 80], sizes = [16, 16], strides = [1, 1]} : vector<16x128xf32> to vector<16x16xf32>
    %cst_187 = arith.constant dense<0.000000e+00> : vector<16x16xf32>
    %540 = tpu.matmul %538, %539, %cst_187 {dimension_numbers = #tpu.dot_dimension_numbers<[1], [0], [0], [1], [0, 0, 1, 1], [], []>} : vector<16x16xf32>, vector<16x16xf32>, vector<16x16xf32> -> vector<16x16xf32>
    %541 = vector.extract_strided_slice %522 {offsets = [96, 0], sizes = [16, 16], strides = [1, 1]} : vector<128x16xf32> to vector<16x16xf32>
    %542 = vector.extract_strided_slice %479 {offsets = [0, 96], sizes = [16, 16], strides = [1, 1]} : vector<16x128xf32> to vector<16x16xf32>
    %cst_188 = arith.constant dense<0.000000e+00> : vector<16x16xf32>
    %543 = tpu.matmul %541, %542, %cst_188 {dimension_numbers = #tpu.dot_dimension_numbers<[1], [0], [0], [1], [0, 0, 1, 1], [], []>} : vector<16x16xf32>, vector<16x16xf32>, vector<16x16xf32> -> vector<16x16xf32>
    %544 = vector.extract_strided_slice %522 {offsets = [112, 0], sizes = [16, 16], strides = [1, 1]} : vector<128x16xf32> to vector<16x16xf32>
    %545 = vector.extract_strided_slice %479 {offsets = [0, 112], sizes = [16, 16], strides = [1, 1]} : vector<16x128xf32> to vector<16x16xf32>
    %cst_189 = arith.constant dense<0.000000e+00> : vector<16x16xf32>
    %546 = tpu.matmul %544, %545, %cst_189 {dimension_numbers = #tpu.dot_dimension_numbers<[1], [0], [0], [1], [0, 0, 1, 1], [], []>} : vector<16x16xf32>, vector<16x16xf32>, vector<16x16xf32> -> vector<16x16xf32>
    %547 = tpu.concatenate %525, %528, %531, %534, %537, %540, %543, %546 in 1 : vector<16x16xf32>, vector<16x16xf32>, vector<16x16xf32>, vector<16x16xf32>, vector<16x16xf32>, vector<16x16xf32>, vector<16x16xf32>, vector<16x16xf32> -> vector<16x128xf32>
    %548 = arith.truncf %547 : vector<16x128xf32> to vector<16x128xbf16>
    %c2480 = arith.constant 2480 : index
    %c0_190 = arith.constant 0 : index
    %549 = vector.load %arg5[%c2480, %c0_190] : memref<4272x128xbf16, #tpu.memory_space<vmem>>, vector<128x128xbf16>
    %cst_191 = arith.constant dense<0.000000e+00> : vector<16x128xf32>
    %550 = tpu.matmul %548, %549, %cst_191 {dimension_numbers = #tpu.dot_dimension_numbers<[1], [0], [0], [1], [0, 0, 1, 1], [], []>} : vector<16x128xbf16>, vector<128x128xbf16>, vector<16x128xf32> -> vector<16x128xf32>
    %c216 = arith.constant 216 : index
    %c0_192 = arith.constant 0 : index
    %551 = vector.load %arg6[%c216, %c0_192] : memref<456x128xf32, #tpu.memory_space<vmem>>, vector<1x128xf32>
    %552 = vector.broadcast %551 : vector<1x128xf32> to vector<16x128xf32>
    %553 = arith.addf %550, %552 : vector<16x128xf32>
    %554 = arith.addf %461, %553 : vector<16x128xf32>
    %cst_193 = arith.constant dense<0.000000e+00> : vector<16xf32>
    %555 = vector.multi_reduction <add>, %554, %cst_193 [1] : vector<16x128xf32> to vector<16xf32>
    %556 = vector.shape_cast %555 : vector<16xf32> to vector<16x1xf32>
    %cst_194 = arith.constant 1.280000e+02 : f32
    %557 = vector.broadcast %cst_194 : f32 to vector<16x1xf32>
    %558 = arith.divf %556, %557 : vector<16x1xf32>
    %559 = vector.broadcast %558 : vector<16x1xf32> to vector<16x128xf32>
    %560 = arith.subf %554, %559 : vector<16x128xf32>
    %561 = arith.mulf %560, %560 : vector<16x128xf32>
    %cst_195 = arith.constant dense<0.000000e+00> : vector<16xf32>
    %562 = vector.multi_reduction <add>, %561, %cst_195 [1] : vector<16x128xf32> to vector<16xf32>
    %563 = vector.shape_cast %562 : vector<16xf32> to vector<16x1xf32>
    %cst_196 = arith.constant 1.280000e+02 : f32
    %564 = vector.broadcast %cst_196 : f32 to vector<16x1xf32>
    %565 = arith.divf %563, %564 : vector<16x1xf32>
    %cst_197 = arith.constant 9.99999974E-6 : f32
    %566 = vector.broadcast %cst_197 : f32 to vector<16x1xf32>
    %567 = arith.addf %565, %566 : vector<16x1xf32>
    %568 = math.rsqrt %567 : vector<16x1xf32>
    %569 = vector.broadcast %568 : vector<16x1xf32> to vector<16x128xf32>
    %570 = arith.mulf %560, %569 : vector<16x128xf32>
    %c240 = arith.constant 240 : index
    %c0_198 = arith.constant 0 : index
    %571 = vector.load %arg6[%c240, %c0_198] : memref<456x128xf32, #tpu.memory_space<vmem>>, vector<1x128xf32>
    %572 = vector.broadcast %571 : vector<1x128xf32> to vector<16x128xf32>
    %573 = arith.mulf %570, %572 : vector<16x128xf32>
    %c248 = arith.constant 248 : index
    %c0_199 = arith.constant 0 : index
    %574 = vector.load %arg6[%c248, %c0_199] : memref<456x128xf32, #tpu.memory_space<vmem>>, vector<1x128xf32>
    %575 = vector.broadcast %574 : vector<1x128xf32> to vector<16x128xf32>
    %576 = arith.addf %573, %575 : vector<16x128xf32>
    %577 = arith.truncf %576 : vector<16x128xf32> to vector<16x128xbf16>
    %c2608 = arith.constant 2608 : index
    %c0_200 = arith.constant 0 : index
    %578 = vector.load %arg5[%c2608, %c0_200] : memref<4272x128xbf16, #tpu.memory_space<vmem>>, vector<128x128xbf16>
    %cst_201 = arith.constant dense<0.000000e+00> : vector<16x128xf32>
    %579 = tpu.matmul %577, %578, %cst_201 {dimension_numbers = #tpu.dot_dimension_numbers<[1], [0], [0], [1], [0, 0, 1, 1], [], []>} : vector<16x128xbf16>, vector<128x128xbf16>, vector<16x128xf32> -> vector<16x128xf32>
    %c272 = arith.constant 272 : index
    %c0_202 = arith.constant 0 : index
    %580 = vector.load %arg6[%c272, %c0_202] : memref<456x128xf32, #tpu.memory_space<vmem>>, vector<1x128xf32>
    %581 = vector.broadcast %580 : vector<1x128xf32> to vector<16x128xf32>
    %582 = arith.addf %579, %581 : vector<16x128xf32>
    %cst_203 = arith.constant 0.000000e+00 : f32
    %583 = vector.broadcast %cst_203 : f32 to vector<16x128xf32>
    %584 = arith.maximumf %582, %583 : vector<16x128xf32>
    %585 = arith.truncf %584 : vector<16x128xf32> to vector<16x128xbf16>
    %c2736 = arith.constant 2736 : index
    %c0_204 = arith.constant 0 : index
    %586 = vector.load %arg5[%c2736, %c0_204] : memref<4272x128xbf16, #tpu.memory_space<vmem>>, vector<128x128xbf16>
    %cst_205 = arith.constant dense<0.000000e+00> : vector<16x128xf32>
    %587 = tpu.matmul %585, %586, %cst_205 {dimension_numbers = #tpu.dot_dimension_numbers<[1], [0], [0], [1], [0, 0, 1, 1], [], []>} : vector<16x128xbf16>, vector<128x128xbf16>, vector<16x128xf32> -> vector<16x128xf32>
    %c280 = arith.constant 280 : index
    %c0_206 = arith.constant 0 : index
    %588 = vector.load %arg6[%c280, %c0_206] : memref<456x128xf32, #tpu.memory_space<vmem>>, vector<1x128xf32>
    %589 = vector.broadcast %588 : vector<1x128xf32> to vector<16x128xf32>
    %590 = arith.addf %587, %589 : vector<16x128xf32>
    %591 = arith.addf %576, %590 : vector<16x128xf32>
    %cst_207 = arith.constant dense<0.000000e+00> : vector<16xf32>
    %592 = vector.multi_reduction <add>, %591, %cst_207 [1] : vector<16x128xf32> to vector<16xf32>
    %593 = vector.shape_cast %592 : vector<16xf32> to vector<16x1xf32>
    %cst_208 = arith.constant 1.280000e+02 : f32
    %594 = vector.broadcast %cst_208 : f32 to vector<16x1xf32>
    %595 = arith.divf %593, %594 : vector<16x1xf32>
    %596 = vector.broadcast %595 : vector<16x1xf32> to vector<16x128xf32>
    %597 = arith.subf %591, %596 : vector<16x128xf32>
    %598 = arith.mulf %597, %597 : vector<16x128xf32>
    %cst_209 = arith.constant dense<0.000000e+00> : vector<16xf32>
    %599 = vector.multi_reduction <add>, %598, %cst_209 [1] : vector<16x128xf32> to vector<16xf32>
    %600 = vector.shape_cast %599 : vector<16xf32> to vector<16x1xf32>
    %cst_210 = arith.constant 1.280000e+02 : f32
    %601 = vector.broadcast %cst_210 : f32 to vector<16x1xf32>
    %602 = arith.divf %600, %601 : vector<16x1xf32>
    %cst_211 = arith.constant 9.99999974E-6 : f32
    %603 = vector.broadcast %cst_211 : f32 to vector<16x1xf32>
    %604 = arith.addf %602, %603 : vector<16x1xf32>
    %605 = math.rsqrt %604 : vector<16x1xf32>
    %606 = vector.broadcast %605 : vector<16x1xf32> to vector<16x128xf32>
    %607 = arith.mulf %597, %606 : vector<16x128xf32>
    %c256 = arith.constant 256 : index
    %c0_212 = arith.constant 0 : index
    %608 = vector.load %arg6[%c256, %c0_212] : memref<456x128xf32, #tpu.memory_space<vmem>>, vector<1x128xf32>
    %609 = vector.broadcast %608 : vector<1x128xf32> to vector<16x128xf32>
    %610 = arith.mulf %607, %609 : vector<16x128xf32>
    %c264 = arith.constant 264 : index
    %c0_213 = arith.constant 0 : index
    %611 = vector.load %arg6[%c264, %c0_213] : memref<456x128xf32, #tpu.memory_space<vmem>>, vector<1x128xf32>
    %612 = vector.broadcast %611 : vector<1x128xf32> to vector<16x128xf32>
    %613 = arith.addf %610, %612 : vector<16x128xf32>
    %614 = arith.truncf %613 : vector<16x128xf32> to vector<16x128xbf16>
    %c2864 = arith.constant 2864 : index
    %c0_214 = arith.constant 0 : index
    %615 = vector.load %arg5[%c2864, %c0_214] : memref<4272x128xbf16, #tpu.memory_space<vmem>>, vector<128x128xbf16>
    %cst_215 = arith.constant dense<0.000000e+00> : vector<16x128xf32>
    %616 = tpu.matmul %614, %615, %cst_215 {dimension_numbers = #tpu.dot_dimension_numbers<[1], [0], [0], [1], [0, 0, 1, 1], [], []>} : vector<16x128xbf16>, vector<128x128xbf16>, vector<16x128xf32> -> vector<16x128xf32>
    %c288 = arith.constant 288 : index
    %c0_216 = arith.constant 0 : index
    %617 = vector.load %arg6[%c288, %c0_216] : memref<456x128xf32, #tpu.memory_space<vmem>>, vector<1x128xf32>
    %618 = vector.broadcast %617 : vector<1x128xf32> to vector<16x128xf32>
    %619 = arith.addf %616, %618 : vector<16x128xf32>
    %620 = arith.truncf %613 : vector<16x128xf32> to vector<16x128xbf16>
    %c2992 = arith.constant 2992 : index
    %c0_217 = arith.constant 0 : index
    %621 = vector.load %arg5[%c2992, %c0_217] : memref<4272x128xbf16, #tpu.memory_space<vmem>>, vector<128x128xbf16>
    %cst_218 = arith.constant dense<0.000000e+00> : vector<16x128xf32>
    %622 = tpu.matmul %620, %621, %cst_218 {dimension_numbers = #tpu.dot_dimension_numbers<[1], [0], [0], [1], [0, 0, 1, 1], [], []>} : vector<16x128xbf16>, vector<128x128xbf16>, vector<16x128xf32> -> vector<16x128xf32>
    %c296 = arith.constant 296 : index
    %c0_219 = arith.constant 0 : index
    %623 = vector.load %arg6[%c296, %c0_219] : memref<456x128xf32, #tpu.memory_space<vmem>>, vector<1x128xf32>
    %624 = vector.broadcast %623 : vector<1x128xf32> to vector<16x128xf32>
    %625 = arith.addf %622, %624 : vector<16x128xf32>
    %626 = arith.truncf %613 : vector<16x128xf32> to vector<16x128xbf16>
    %c3120 = arith.constant 3120 : index
    %c0_220 = arith.constant 0 : index
    %627 = vector.load %arg5[%c3120, %c0_220] : memref<4272x128xbf16, #tpu.memory_space<vmem>>, vector<128x128xbf16>
    %cst_221 = arith.constant dense<0.000000e+00> : vector<16x128xf32>
    %628 = tpu.matmul %626, %627, %cst_221 {dimension_numbers = #tpu.dot_dimension_numbers<[1], [0], [0], [1], [0, 0, 1, 1], [], []>} : vector<16x128xbf16>, vector<128x128xbf16>, vector<16x128xf32> -> vector<16x128xf32>
    %c304_222 = arith.constant 304 : index
    %c0_223 = arith.constant 0 : index
    %629 = vector.load %arg6[%c304_222, %c0_223] : memref<456x128xf32, #tpu.memory_space<vmem>>, vector<1x128xf32>
    %630 = vector.broadcast %629 : vector<1x128xf32> to vector<16x128xf32>
    %631 = arith.addf %628, %630 : vector<16x128xf32>
    %632 = vector.extract_strided_slice %619 {offsets = [0, 0], sizes = [16, 16], strides = [1, 1]} : vector<16x128xf32> to vector<16x16xf32>
    %633 = vector.extract_strided_slice %625 {offsets = [0, 0], sizes = [16, 16], strides = [1, 1]} : vector<16x128xf32> to vector<16x16xf32>
    %cst_224 = arith.constant dense<0.000000e+00> : vector<16x16xf32>
    %634 = tpu.matmul %632, %633, %cst_224 {dimension_numbers = #tpu.dot_dimension_numbers<[1], [1], [0], [0], [0, 0, 1, 0], [], []>} : vector<16x16xf32>, vector<16x16xf32>, vector<16x16xf32> -> vector<16x16xf32>
    %635 = arith.addf %634, %1 : vector<16x16xf32>
    %636 = vector.extract_strided_slice %619 {offsets = [0, 16], sizes = [16, 16], strides = [1, 1]} : vector<16x128xf32> to vector<16x16xf32>
    %637 = vector.extract_strided_slice %625 {offsets = [0, 16], sizes = [16, 16], strides = [1, 1]} : vector<16x128xf32> to vector<16x16xf32>
    %cst_225 = arith.constant dense<0.000000e+00> : vector<16x16xf32>
    %638 = tpu.matmul %636, %637, %cst_225 {dimension_numbers = #tpu.dot_dimension_numbers<[1], [1], [0], [0], [0, 0, 1, 0], [], []>} : vector<16x16xf32>, vector<16x16xf32>, vector<16x16xf32> -> vector<16x16xf32>
    %639 = arith.addf %638, %1 : vector<16x16xf32>
    %640 = vector.extract_strided_slice %619 {offsets = [0, 32], sizes = [16, 16], strides = [1, 1]} : vector<16x128xf32> to vector<16x16xf32>
    %641 = vector.extract_strided_slice %625 {offsets = [0, 32], sizes = [16, 16], strides = [1, 1]} : vector<16x128xf32> to vector<16x16xf32>
    %cst_226 = arith.constant dense<0.000000e+00> : vector<16x16xf32>
    %642 = tpu.matmul %640, %641, %cst_226 {dimension_numbers = #tpu.dot_dimension_numbers<[1], [1], [0], [0], [0, 0, 1, 0], [], []>} : vector<16x16xf32>, vector<16x16xf32>, vector<16x16xf32> -> vector<16x16xf32>
    %643 = arith.addf %642, %1 : vector<16x16xf32>
    %644 = vector.extract_strided_slice %619 {offsets = [0, 48], sizes = [16, 16], strides = [1, 1]} : vector<16x128xf32> to vector<16x16xf32>
    %645 = vector.extract_strided_slice %625 {offsets = [0, 48], sizes = [16, 16], strides = [1, 1]} : vector<16x128xf32> to vector<16x16xf32>
    %cst_227 = arith.constant dense<0.000000e+00> : vector<16x16xf32>
    %646 = tpu.matmul %644, %645, %cst_227 {dimension_numbers = #tpu.dot_dimension_numbers<[1], [1], [0], [0], [0, 0, 1, 0], [], []>} : vector<16x16xf32>, vector<16x16xf32>, vector<16x16xf32> -> vector<16x16xf32>
    %647 = arith.addf %646, %1 : vector<16x16xf32>
    %648 = vector.extract_strided_slice %619 {offsets = [0, 64], sizes = [16, 16], strides = [1, 1]} : vector<16x128xf32> to vector<16x16xf32>
    %649 = vector.extract_strided_slice %625 {offsets = [0, 64], sizes = [16, 16], strides = [1, 1]} : vector<16x128xf32> to vector<16x16xf32>
    %cst_228 = arith.constant dense<0.000000e+00> : vector<16x16xf32>
    %650 = tpu.matmul %648, %649, %cst_228 {dimension_numbers = #tpu.dot_dimension_numbers<[1], [1], [0], [0], [0, 0, 1, 0], [], []>} : vector<16x16xf32>, vector<16x16xf32>, vector<16x16xf32> -> vector<16x16xf32>
    %651 = arith.addf %650, %1 : vector<16x16xf32>
    %652 = vector.extract_strided_slice %619 {offsets = [0, 80], sizes = [16, 16], strides = [1, 1]} : vector<16x128xf32> to vector<16x16xf32>
    %653 = vector.extract_strided_slice %625 {offsets = [0, 80], sizes = [16, 16], strides = [1, 1]} : vector<16x128xf32> to vector<16x16xf32>
    %cst_229 = arith.constant dense<0.000000e+00> : vector<16x16xf32>
    %654 = tpu.matmul %652, %653, %cst_229 {dimension_numbers = #tpu.dot_dimension_numbers<[1], [1], [0], [0], [0, 0, 1, 0], [], []>} : vector<16x16xf32>, vector<16x16xf32>, vector<16x16xf32> -> vector<16x16xf32>
    %655 = arith.addf %654, %1 : vector<16x16xf32>
    %656 = vector.extract_strided_slice %619 {offsets = [0, 96], sizes = [16, 16], strides = [1, 1]} : vector<16x128xf32> to vector<16x16xf32>
    %657 = vector.extract_strided_slice %625 {offsets = [0, 96], sizes = [16, 16], strides = [1, 1]} : vector<16x128xf32> to vector<16x16xf32>
    %cst_230 = arith.constant dense<0.000000e+00> : vector<16x16xf32>
    %658 = tpu.matmul %656, %657, %cst_230 {dimension_numbers = #tpu.dot_dimension_numbers<[1], [1], [0], [0], [0, 0, 1, 0], [], []>} : vector<16x16xf32>, vector<16x16xf32>, vector<16x16xf32> -> vector<16x16xf32>
    %659 = arith.addf %658, %1 : vector<16x16xf32>
    %660 = vector.extract_strided_slice %619 {offsets = [0, 112], sizes = [16, 16], strides = [1, 1]} : vector<16x128xf32> to vector<16x16xf32>
    %661 = vector.extract_strided_slice %625 {offsets = [0, 112], sizes = [16, 16], strides = [1, 1]} : vector<16x128xf32> to vector<16x16xf32>
    %cst_231 = arith.constant dense<0.000000e+00> : vector<16x16xf32>
    %662 = tpu.matmul %660, %661, %cst_231 {dimension_numbers = #tpu.dot_dimension_numbers<[1], [1], [0], [0], [0, 0, 1, 0], [], []>} : vector<16x16xf32>, vector<16x16xf32>, vector<16x16xf32> -> vector<16x16xf32>
    %663 = arith.addf %662, %1 : vector<16x16xf32>
    %664 = tpu.concatenate %635, %639, %643, %647, %651, %655, %659, %663 in 0 : vector<16x16xf32>, vector<16x16xf32>, vector<16x16xf32>, vector<16x16xf32>, vector<16x16xf32>, vector<16x16xf32>, vector<16x16xf32>, vector<16x16xf32> -> vector<128x16xf32>
    %cst_232 = arith.constant dense<0xFF800000> : vector<128xf32>
    %665 = vector.multi_reduction <maximumf>, %664, %cst_232 [1] : vector<128x16xf32> to vector<128xf32>
    %666 = vector.shape_cast %665 : vector<128xf32> to vector<128x1xf32>
    %667 = vector.broadcast %666 : vector<128x1xf32> to vector<128x16xf32>
    %668 = arith.subf %664, %667 : vector<128x16xf32>
    %669 = math.exp %668 : vector<128x16xf32>
    %cst_233 = arith.constant dense<0.000000e+00> : vector<128xf32>
    %670 = vector.multi_reduction <add>, %669, %cst_233 [1] : vector<128x16xf32> to vector<128xf32>
    %671 = vector.shape_cast %670 : vector<128xf32> to vector<128x1xf32>
    %672 = tpu.reciprocal %671 {approx = true} : vector<128x1xf32> -> vector<128x1xf32>
    %673 = vector.broadcast %672 : vector<128x1xf32> to vector<128x16xf32>
    %674 = arith.mulf %669, %673 : vector<128x16xf32>
    %675 = vector.extract_strided_slice %674 {offsets = [0, 0], sizes = [16, 16], strides = [1, 1]} : vector<128x16xf32> to vector<16x16xf32>
    %676 = vector.extract_strided_slice %631 {offsets = [0, 0], sizes = [16, 16], strides = [1, 1]} : vector<16x128xf32> to vector<16x16xf32>
    %cst_234 = arith.constant dense<0.000000e+00> : vector<16x16xf32>
    %677 = tpu.matmul %675, %676, %cst_234 {dimension_numbers = #tpu.dot_dimension_numbers<[1], [0], [0], [1], [0, 0, 1, 1], [], []>} : vector<16x16xf32>, vector<16x16xf32>, vector<16x16xf32> -> vector<16x16xf32>
    %678 = vector.extract_strided_slice %674 {offsets = [16, 0], sizes = [16, 16], strides = [1, 1]} : vector<128x16xf32> to vector<16x16xf32>
    %679 = vector.extract_strided_slice %631 {offsets = [0, 16], sizes = [16, 16], strides = [1, 1]} : vector<16x128xf32> to vector<16x16xf32>
    %cst_235 = arith.constant dense<0.000000e+00> : vector<16x16xf32>
    %680 = tpu.matmul %678, %679, %cst_235 {dimension_numbers = #tpu.dot_dimension_numbers<[1], [0], [0], [1], [0, 0, 1, 1], [], []>} : vector<16x16xf32>, vector<16x16xf32>, vector<16x16xf32> -> vector<16x16xf32>
    %681 = vector.extract_strided_slice %674 {offsets = [32, 0], sizes = [16, 16], strides = [1, 1]} : vector<128x16xf32> to vector<16x16xf32>
    %682 = vector.extract_strided_slice %631 {offsets = [0, 32], sizes = [16, 16], strides = [1, 1]} : vector<16x128xf32> to vector<16x16xf32>
    %cst_236 = arith.constant dense<0.000000e+00> : vector<16x16xf32>
    %683 = tpu.matmul %681, %682, %cst_236 {dimension_numbers = #tpu.dot_dimension_numbers<[1], [0], [0], [1], [0, 0, 1, 1], [], []>} : vector<16x16xf32>, vector<16x16xf32>, vector<16x16xf32> -> vector<16x16xf32>
    %684 = vector.extract_strided_slice %674 {offsets = [48, 0], sizes = [16, 16], strides = [1, 1]} : vector<128x16xf32> to vector<16x16xf32>
    %685 = vector.extract_strided_slice %631 {offsets = [0, 48], sizes = [16, 16], strides = [1, 1]} : vector<16x128xf32> to vector<16x16xf32>
    %cst_237 = arith.constant dense<0.000000e+00> : vector<16x16xf32>
    %686 = tpu.matmul %684, %685, %cst_237 {dimension_numbers = #tpu.dot_dimension_numbers<[1], [0], [0], [1], [0, 0, 1, 1], [], []>} : vector<16x16xf32>, vector<16x16xf32>, vector<16x16xf32> -> vector<16x16xf32>
    %687 = vector.extract_strided_slice %674 {offsets = [64, 0], sizes = [16, 16], strides = [1, 1]} : vector<128x16xf32> to vector<16x16xf32>
    %688 = vector.extract_strided_slice %631 {offsets = [0, 64], sizes = [16, 16], strides = [1, 1]} : vector<16x128xf32> to vector<16x16xf32>
    %cst_238 = arith.constant dense<0.000000e+00> : vector<16x16xf32>
    %689 = tpu.matmul %687, %688, %cst_238 {dimension_numbers = #tpu.dot_dimension_numbers<[1], [0], [0], [1], [0, 0, 1, 1], [], []>} : vector<16x16xf32>, vector<16x16xf32>, vector<16x16xf32> -> vector<16x16xf32>
    %690 = vector.extract_strided_slice %674 {offsets = [80, 0], sizes = [16, 16], strides = [1, 1]} : vector<128x16xf32> to vector<16x16xf32>
    %691 = vector.extract_strided_slice %631 {offsets = [0, 80], sizes = [16, 16], strides = [1, 1]} : vector<16x128xf32> to vector<16x16xf32>
    %cst_239 = arith.constant dense<0.000000e+00> : vector<16x16xf32>
    %692 = tpu.matmul %690, %691, %cst_239 {dimension_numbers = #tpu.dot_dimension_numbers<[1], [0], [0], [1], [0, 0, 1, 1], [], []>} : vector<16x16xf32>, vector<16x16xf32>, vector<16x16xf32> -> vector<16x16xf32>
    %693 = vector.extract_strided_slice %674 {offsets = [96, 0], sizes = [16, 16], strides = [1, 1]} : vector<128x16xf32> to vector<16x16xf32>
    %694 = vector.extract_strided_slice %631 {offsets = [0, 96], sizes = [16, 16], strides = [1, 1]} : vector<16x128xf32> to vector<16x16xf32>
    %cst_240 = arith.constant dense<0.000000e+00> : vector<16x16xf32>
    %695 = tpu.matmul %693, %694, %cst_240 {dimension_numbers = #tpu.dot_dimension_numbers<[1], [0], [0], [1], [0, 0, 1, 1], [], []>} : vector<16x16xf32>, vector<16x16xf32>, vector<16x16xf32> -> vector<16x16xf32>
    %696 = vector.extract_strided_slice %674 {offsets = [112, 0], sizes = [16, 16], strides = [1, 1]} : vector<128x16xf32> to vector<16x16xf32>
    %697 = vector.extract_strided_slice %631 {offsets = [0, 112], sizes = [16, 16], strides = [1, 1]} : vector<16x128xf32> to vector<16x16xf32>
    %cst_241 = arith.constant dense<0.000000e+00> : vector<16x16xf32>
    %698 = tpu.matmul %696, %697, %cst_241 {dimension_numbers = #tpu.dot_dimension_numbers<[1], [0], [0], [1], [0, 0, 1, 1], [], []>} : vector<16x16xf32>, vector<16x16xf32>, vector<16x16xf32> -> vector<16x16xf32>
    %699 = tpu.concatenate %677, %680, %683, %686, %689, %692, %695, %698 in 1 : vector<16x16xf32>, vector<16x16xf32>, vector<16x16xf32>, vector<16x16xf32>, vector<16x16xf32>, vector<16x16xf32>, vector<16x16xf32>, vector<16x16xf32> -> vector<16x128xf32>
    %700 = arith.truncf %699 : vector<16x128xf32> to vector<16x128xbf16>
    %c3248 = arith.constant 3248 : index
    %c0_242 = arith.constant 0 : index
    %701 = vector.load %arg5[%c3248, %c0_242] : memref<4272x128xbf16, #tpu.memory_space<vmem>>, vector<128x128xbf16>
    %cst_243 = arith.constant dense<0.000000e+00> : vector<16x128xf32>
    %702 = tpu.matmul %700, %701, %cst_243 {dimension_numbers = #tpu.dot_dimension_numbers<[1], [0], [0], [1], [0, 0, 1, 1], [], []>} : vector<16x128xbf16>, vector<128x128xbf16>, vector<16x128xf32> -> vector<16x128xf32>
    %c312 = arith.constant 312 : index
    %c0_244 = arith.constant 0 : index
    %703 = vector.load %arg6[%c312, %c0_244] : memref<456x128xf32, #tpu.memory_space<vmem>>, vector<1x128xf32>
    %704 = vector.broadcast %703 : vector<1x128xf32> to vector<16x128xf32>
    %705 = arith.addf %702, %704 : vector<16x128xf32>
    %706 = arith.addf %613, %705 : vector<16x128xf32>
    %cst_245 = arith.constant dense<0.000000e+00> : vector<16xf32>
    %707 = vector.multi_reduction <add>, %706, %cst_245 [1] : vector<16x128xf32> to vector<16xf32>
    %708 = vector.shape_cast %707 : vector<16xf32> to vector<16x1xf32>
    %cst_246 = arith.constant 1.280000e+02 : f32
    %709 = vector.broadcast %cst_246 : f32 to vector<16x1xf32>
    %710 = arith.divf %708, %709 : vector<16x1xf32>
    %711 = vector.broadcast %710 : vector<16x1xf32> to vector<16x128xf32>
    %712 = arith.subf %706, %711 : vector<16x128xf32>
    %713 = arith.mulf %712, %712 : vector<16x128xf32>
    %cst_247 = arith.constant dense<0.000000e+00> : vector<16xf32>
    %714 = vector.multi_reduction <add>, %713, %cst_247 [1] : vector<16x128xf32> to vector<16xf32>
    %715 = vector.shape_cast %714 : vector<16xf32> to vector<16x1xf32>
    %cst_248 = arith.constant 1.280000e+02 : f32
    %716 = vector.broadcast %cst_248 : f32 to vector<16x1xf32>
    %717 = arith.divf %715, %716 : vector<16x1xf32>
    %cst_249 = arith.constant 9.99999974E-6 : f32
    %718 = vector.broadcast %cst_249 : f32 to vector<16x1xf32>
    %719 = arith.addf %717, %718 : vector<16x1xf32>
    %720 = math.rsqrt %719 : vector<16x1xf32>
    %721 = vector.broadcast %720 : vector<16x1xf32> to vector<16x128xf32>
    %722 = arith.mulf %712, %721 : vector<16x128xf32>
    %c352 = arith.constant 352 : index
    %c0_250 = arith.constant 0 : index
    %723 = vector.load %arg6[%c352, %c0_250] : memref<456x128xf32, #tpu.memory_space<vmem>>, vector<1x128xf32>
    %724 = vector.broadcast %723 : vector<1x128xf32> to vector<16x128xf32>
    %725 = arith.mulf %722, %724 : vector<16x128xf32>
    %c360 = arith.constant 360 : index
    %c0_251 = arith.constant 0 : index
    %726 = vector.load %arg6[%c360, %c0_251] : memref<456x128xf32, #tpu.memory_space<vmem>>, vector<1x128xf32>
    %727 = vector.broadcast %726 : vector<1x128xf32> to vector<16x128xf32>
    %728 = arith.addf %725, %727 : vector<16x128xf32>
    %729 = arith.truncf %728 : vector<16x128xf32> to vector<16x128xbf16>
    %c3376 = arith.constant 3376 : index
    %c0_252 = arith.constant 0 : index
    %730 = vector.load %arg5[%c3376, %c0_252] : memref<4272x128xbf16, #tpu.memory_space<vmem>>, vector<128x128xbf16>
    %cst_253 = arith.constant dense<0.000000e+00> : vector<16x128xf32>
    %731 = tpu.matmul %729, %730, %cst_253 {dimension_numbers = #tpu.dot_dimension_numbers<[1], [0], [0], [1], [0, 0, 1, 1], [], []>} : vector<16x128xbf16>, vector<128x128xbf16>, vector<16x128xf32> -> vector<16x128xf32>
    %c320 = arith.constant 320 : index
    %c0_254 = arith.constant 0 : index
    %732 = vector.load %arg6[%c320, %c0_254] : memref<456x128xf32, #tpu.memory_space<vmem>>, vector<1x128xf32>
    %733 = vector.broadcast %732 : vector<1x128xf32> to vector<16x128xf32>
    %734 = arith.addf %731, %733 : vector<16x128xf32>
    %735 = arith.truncf %337 : vector<16x128xf32> to vector<16x128xbf16>
    %c3504 = arith.constant 3504 : index
    %c0_255 = arith.constant 0 : index
    %736 = vector.load %arg5[%c3504, %c0_255] : memref<4272x128xbf16, #tpu.memory_space<vmem>>, vector<128x128xbf16>
    %cst_256 = arith.constant dense<0.000000e+00> : vector<16x128xf32>
    %737 = tpu.matmul %735, %736, %cst_256 {dimension_numbers = #tpu.dot_dimension_numbers<[1], [0], [0], [1], [0, 0, 1, 1], [], []>} : vector<16x128xbf16>, vector<128x128xbf16>, vector<16x128xf32> -> vector<16x128xf32>
    %c328 = arith.constant 328 : index
    %c0_257 = arith.constant 0 : index
    %738 = vector.load %arg6[%c328, %c0_257] : memref<456x128xf32, #tpu.memory_space<vmem>>, vector<1x128xf32>
    %739 = vector.broadcast %738 : vector<1x128xf32> to vector<16x128xf32>
    %740 = arith.addf %737, %739 : vector<16x128xf32>
    %741 = arith.truncf %337 : vector<16x128xf32> to vector<16x128xbf16>
    %c3632 = arith.constant 3632 : index
    %c0_258 = arith.constant 0 : index
    %742 = vector.load %arg5[%c3632, %c0_258] : memref<4272x128xbf16, #tpu.memory_space<vmem>>, vector<128x128xbf16>
    %cst_259 = arith.constant dense<0.000000e+00> : vector<16x128xf32>
    %743 = tpu.matmul %741, %742, %cst_259 {dimension_numbers = #tpu.dot_dimension_numbers<[1], [0], [0], [1], [0, 0, 1, 1], [], []>} : vector<16x128xbf16>, vector<128x128xbf16>, vector<16x128xf32> -> vector<16x128xf32>
    %c336 = arith.constant 336 : index
    %c0_260 = arith.constant 0 : index
    %744 = vector.load %arg6[%c336, %c0_260] : memref<456x128xf32, #tpu.memory_space<vmem>>, vector<1x128xf32>
    %745 = vector.broadcast %744 : vector<1x128xf32> to vector<16x128xf32>
    %746 = arith.addf %743, %745 : vector<16x128xf32>
    %747 = vector.extract_strided_slice %734 {offsets = [0, 0], sizes = [16, 16], strides = [1, 1]} : vector<16x128xf32> to vector<16x16xf32>
    %748 = vector.extract_strided_slice %740 {offsets = [0, 0], sizes = [16, 16], strides = [1, 1]} : vector<16x128xf32> to vector<16x16xf32>
    %cst_261 = arith.constant dense<0.000000e+00> : vector<16x16xf32>
    %749 = tpu.matmul %747, %748, %cst_261 {dimension_numbers = #tpu.dot_dimension_numbers<[1], [1], [0], [0], [0, 0, 1, 0], [], []>} : vector<16x16xf32>, vector<16x16xf32>, vector<16x16xf32> -> vector<16x16xf32>
    %750 = arith.addf %749, %2 : vector<16x16xf32>
    %751 = vector.extract_strided_slice %734 {offsets = [0, 16], sizes = [16, 16], strides = [1, 1]} : vector<16x128xf32> to vector<16x16xf32>
    %752 = vector.extract_strided_slice %740 {offsets = [0, 16], sizes = [16, 16], strides = [1, 1]} : vector<16x128xf32> to vector<16x16xf32>
    %cst_262 = arith.constant dense<0.000000e+00> : vector<16x16xf32>
    %753 = tpu.matmul %751, %752, %cst_262 {dimension_numbers = #tpu.dot_dimension_numbers<[1], [1], [0], [0], [0, 0, 1, 0], [], []>} : vector<16x16xf32>, vector<16x16xf32>, vector<16x16xf32> -> vector<16x16xf32>
    %754 = arith.addf %753, %2 : vector<16x16xf32>
    %755 = vector.extract_strided_slice %734 {offsets = [0, 32], sizes = [16, 16], strides = [1, 1]} : vector<16x128xf32> to vector<16x16xf32>
    %756 = vector.extract_strided_slice %740 {offsets = [0, 32], sizes = [16, 16], strides = [1, 1]} : vector<16x128xf32> to vector<16x16xf32>
    %cst_263 = arith.constant dense<0.000000e+00> : vector<16x16xf32>
    %757 = tpu.matmul %755, %756, %cst_263 {dimension_numbers = #tpu.dot_dimension_numbers<[1], [1], [0], [0], [0, 0, 1, 0], [], []>} : vector<16x16xf32>, vector<16x16xf32>, vector<16x16xf32> -> vector<16x16xf32>
    %758 = arith.addf %757, %2 : vector<16x16xf32>
    %759 = vector.extract_strided_slice %734 {offsets = [0, 48], sizes = [16, 16], strides = [1, 1]} : vector<16x128xf32> to vector<16x16xf32>
    %760 = vector.extract_strided_slice %740 {offsets = [0, 48], sizes = [16, 16], strides = [1, 1]} : vector<16x128xf32> to vector<16x16xf32>
    %cst_264 = arith.constant dense<0.000000e+00> : vector<16x16xf32>
    %761 = tpu.matmul %759, %760, %cst_264 {dimension_numbers = #tpu.dot_dimension_numbers<[1], [1], [0], [0], [0, 0, 1, 0], [], []>} : vector<16x16xf32>, vector<16x16xf32>, vector<16x16xf32> -> vector<16x16xf32>
    %762 = arith.addf %761, %2 : vector<16x16xf32>
    %763 = vector.extract_strided_slice %734 {offsets = [0, 64], sizes = [16, 16], strides = [1, 1]} : vector<16x128xf32> to vector<16x16xf32>
    %764 = vector.extract_strided_slice %740 {offsets = [0, 64], sizes = [16, 16], strides = [1, 1]} : vector<16x128xf32> to vector<16x16xf32>
    %cst_265 = arith.constant dense<0.000000e+00> : vector<16x16xf32>
    %765 = tpu.matmul %763, %764, %cst_265 {dimension_numbers = #tpu.dot_dimension_numbers<[1], [1], [0], [0], [0, 0, 1, 0], [], []>} : vector<16x16xf32>, vector<16x16xf32>, vector<16x16xf32> -> vector<16x16xf32>
    %766 = arith.addf %765, %2 : vector<16x16xf32>
    %767 = vector.extract_strided_slice %734 {offsets = [0, 80], sizes = [16, 16], strides = [1, 1]} : vector<16x128xf32> to vector<16x16xf32>
    %768 = vector.extract_strided_slice %740 {offsets = [0, 80], sizes = [16, 16], strides = [1, 1]} : vector<16x128xf32> to vector<16x16xf32>
    %cst_266 = arith.constant dense<0.000000e+00> : vector<16x16xf32>
    %769 = tpu.matmul %767, %768, %cst_266 {dimension_numbers = #tpu.dot_dimension_numbers<[1], [1], [0], [0], [0, 0, 1, 0], [], []>} : vector<16x16xf32>, vector<16x16xf32>, vector<16x16xf32> -> vector<16x16xf32>
    %770 = arith.addf %769, %2 : vector<16x16xf32>
    %771 = vector.extract_strided_slice %734 {offsets = [0, 96], sizes = [16, 16], strides = [1, 1]} : vector<16x128xf32> to vector<16x16xf32>
    %772 = vector.extract_strided_slice %740 {offsets = [0, 96], sizes = [16, 16], strides = [1, 1]} : vector<16x128xf32> to vector<16x16xf32>
    %cst_267 = arith.constant dense<0.000000e+00> : vector<16x16xf32>
    %773 = tpu.matmul %771, %772, %cst_267 {dimension_numbers = #tpu.dot_dimension_numbers<[1], [1], [0], [0], [0, 0, 1, 0], [], []>} : vector<16x16xf32>, vector<16x16xf32>, vector<16x16xf32> -> vector<16x16xf32>
    %774 = arith.addf %773, %2 : vector<16x16xf32>
    %775 = vector.extract_strided_slice %734 {offsets = [0, 112], sizes = [16, 16], strides = [1, 1]} : vector<16x128xf32> to vector<16x16xf32>
    %776 = vector.extract_strided_slice %740 {offsets = [0, 112], sizes = [16, 16], strides = [1, 1]} : vector<16x128xf32> to vector<16x16xf32>
    %cst_268 = arith.constant dense<0.000000e+00> : vector<16x16xf32>
    %777 = tpu.matmul %775, %776, %cst_268 {dimension_numbers = #tpu.dot_dimension_numbers<[1], [1], [0], [0], [0, 0, 1, 0], [], []>} : vector<16x16xf32>, vector<16x16xf32>, vector<16x16xf32> -> vector<16x16xf32>
    %778 = arith.addf %777, %2 : vector<16x16xf32>
    %779 = tpu.concatenate %750, %754, %758, %762, %766, %770, %774, %778 in 0 : vector<16x16xf32>, vector<16x16xf32>, vector<16x16xf32>, vector<16x16xf32>, vector<16x16xf32>, vector<16x16xf32>, vector<16x16xf32>, vector<16x16xf32> -> vector<128x16xf32>
    %cst_269 = arith.constant dense<0xFF800000> : vector<128xf32>
    %780 = vector.multi_reduction <maximumf>, %779, %cst_269 [1] : vector<128x16xf32> to vector<128xf32>
    %781 = vector.shape_cast %780 : vector<128xf32> to vector<128x1xf32>
    %782 = vector.broadcast %781 : vector<128x1xf32> to vector<128x16xf32>
    %783 = arith.subf %779, %782 : vector<128x16xf32>
    %784 = math.exp %783 : vector<128x16xf32>
    %cst_270 = arith.constant dense<0.000000e+00> : vector<128xf32>
    %785 = vector.multi_reduction <add>, %784, %cst_270 [1] : vector<128x16xf32> to vector<128xf32>
    %786 = vector.shape_cast %785 : vector<128xf32> to vector<128x1xf32>
    %787 = tpu.reciprocal %786 {approx = true} : vector<128x1xf32> -> vector<128x1xf32>
    %788 = vector.broadcast %787 : vector<128x1xf32> to vector<128x16xf32>
    %789 = arith.mulf %784, %788 : vector<128x16xf32>
    %790 = vector.extract_strided_slice %789 {offsets = [0, 0], sizes = [16, 16], strides = [1, 1]} : vector<128x16xf32> to vector<16x16xf32>
    %791 = vector.extract_strided_slice %746 {offsets = [0, 0], sizes = [16, 16], strides = [1, 1]} : vector<16x128xf32> to vector<16x16xf32>
    %cst_271 = arith.constant dense<0.000000e+00> : vector<16x16xf32>
    %792 = tpu.matmul %790, %791, %cst_271 {dimension_numbers = #tpu.dot_dimension_numbers<[1], [0], [0], [1], [0, 0, 1, 1], [], []>} : vector<16x16xf32>, vector<16x16xf32>, vector<16x16xf32> -> vector<16x16xf32>
    %793 = vector.extract_strided_slice %789 {offsets = [16, 0], sizes = [16, 16], strides = [1, 1]} : vector<128x16xf32> to vector<16x16xf32>
    %794 = vector.extract_strided_slice %746 {offsets = [0, 16], sizes = [16, 16], strides = [1, 1]} : vector<16x128xf32> to vector<16x16xf32>
    %cst_272 = arith.constant dense<0.000000e+00> : vector<16x16xf32>
    %795 = tpu.matmul %793, %794, %cst_272 {dimension_numbers = #tpu.dot_dimension_numbers<[1], [0], [0], [1], [0, 0, 1, 1], [], []>} : vector<16x16xf32>, vector<16x16xf32>, vector<16x16xf32> -> vector<16x16xf32>
    %796 = vector.extract_strided_slice %789 {offsets = [32, 0], sizes = [16, 16], strides = [1, 1]} : vector<128x16xf32> to vector<16x16xf32>
    %797 = vector.extract_strided_slice %746 {offsets = [0, 32], sizes = [16, 16], strides = [1, 1]} : vector<16x128xf32> to vector<16x16xf32>
    %cst_273 = arith.constant dense<0.000000e+00> : vector<16x16xf32>
    %798 = tpu.matmul %796, %797, %cst_273 {dimension_numbers = #tpu.dot_dimension_numbers<[1], [0], [0], [1], [0, 0, 1, 1], [], []>} : vector<16x16xf32>, vector<16x16xf32>, vector<16x16xf32> -> vector<16x16xf32>
    %799 = vector.extract_strided_slice %789 {offsets = [48, 0], sizes = [16, 16], strides = [1, 1]} : vector<128x16xf32> to vector<16x16xf32>
    %800 = vector.extract_strided_slice %746 {offsets = [0, 48], sizes = [16, 16], strides = [1, 1]} : vector<16x128xf32> to vector<16x16xf32>
    %cst_274 = arith.constant dense<0.000000e+00> : vector<16x16xf32>
    %801 = tpu.matmul %799, %800, %cst_274 {dimension_numbers = #tpu.dot_dimension_numbers<[1], [0], [0], [1], [0, 0, 1, 1], [], []>} : vector<16x16xf32>, vector<16x16xf32>, vector<16x16xf32> -> vector<16x16xf32>
    %802 = vector.extract_strided_slice %789 {offsets = [64, 0], sizes = [16, 16], strides = [1, 1]} : vector<128x16xf32> to vector<16x16xf32>
    %803 = vector.extract_strided_slice %746 {offsets = [0, 64], sizes = [16, 16], strides = [1, 1]} : vector<16x128xf32> to vector<16x16xf32>
    %cst_275 = arith.constant dense<0.000000e+00> : vector<16x16xf32>
    %804 = tpu.matmul %802, %803, %cst_275 {dimension_numbers = #tpu.dot_dimension_numbers<[1], [0], [0], [1], [0, 0, 1, 1], [], []>} : vector<16x16xf32>, vector<16x16xf32>, vector<16x16xf32> -> vector<16x16xf32>
    %805 = vector.extract_strided_slice %789 {offsets = [80, 0], sizes = [16, 16], strides = [1, 1]} : vector<128x16xf32> to vector<16x16xf32>
    %806 = vector.extract_strided_slice %746 {offsets = [0, 80], sizes = [16, 16], strides = [1, 1]} : vector<16x128xf32> to vector<16x16xf32>
    %cst_276 = arith.constant dense<0.000000e+00> : vector<16x16xf32>
    %807 = tpu.matmul %805, %806, %cst_276 {dimension_numbers = #tpu.dot_dimension_numbers<[1], [0], [0], [1], [0, 0, 1, 1], [], []>} : vector<16x16xf32>, vector<16x16xf32>, vector<16x16xf32> -> vector<16x16xf32>
    %808 = vector.extract_strided_slice %789 {offsets = [96, 0], sizes = [16, 16], strides = [1, 1]} : vector<128x16xf32> to vector<16x16xf32>
    %809 = vector.extract_strided_slice %746 {offsets = [0, 96], sizes = [16, 16], strides = [1, 1]} : vector<16x128xf32> to vector<16x16xf32>
    %cst_277 = arith.constant dense<0.000000e+00> : vector<16x16xf32>
    %810 = tpu.matmul %808, %809, %cst_277 {dimension_numbers = #tpu.dot_dimension_numbers<[1], [0], [0], [1], [0, 0, 1, 1], [], []>} : vector<16x16xf32>, vector<16x16xf32>, vector<16x16xf32> -> vector<16x16xf32>
    %811 = vector.extract_strided_slice %789 {offsets = [112, 0], sizes = [16, 16], strides = [1, 1]} : vector<128x16xf32> to vector<16x16xf32>
    %812 = vector.extract_strided_slice %746 {offsets = [0, 112], sizes = [16, 16], strides = [1, 1]} : vector<16x128xf32> to vector<16x16xf32>
    %cst_278 = arith.constant dense<0.000000e+00> : vector<16x16xf32>
    %813 = tpu.matmul %811, %812, %cst_278 {dimension_numbers = #tpu.dot_dimension_numbers<[1], [0], [0], [1], [0, 0, 1, 1], [], []>} : vector<16x16xf32>, vector<16x16xf32>, vector<16x16xf32> -> vector<16x16xf32>
    %814 = tpu.concatenate %792, %795, %798, %801, %804, %807, %810, %813 in 1 : vector<16x16xf32>, vector<16x16xf32>, vector<16x16xf32>, vector<16x16xf32>, vector<16x16xf32>, vector<16x16xf32>, vector<16x16xf32>, vector<16x16xf32> -> vector<16x128xf32>
    %815 = arith.truncf %814 : vector<16x128xf32> to vector<16x128xbf16>
    %c3760 = arith.constant 3760 : index
    %c0_279 = arith.constant 0 : index
    %816 = vector.load %arg5[%c3760, %c0_279] : memref<4272x128xbf16, #tpu.memory_space<vmem>>, vector<128x128xbf16>
    %cst_280 = arith.constant dense<0.000000e+00> : vector<16x128xf32>
    %817 = tpu.matmul %815, %816, %cst_280 {dimension_numbers = #tpu.dot_dimension_numbers<[1], [0], [0], [1], [0, 0, 1, 1], [], []>} : vector<16x128xbf16>, vector<128x128xbf16>, vector<16x128xf32> -> vector<16x128xf32>
    %c344 = arith.constant 344 : index
    %c0_281 = arith.constant 0 : index
    %818 = vector.load %arg6[%c344, %c0_281] : memref<456x128xf32, #tpu.memory_space<vmem>>, vector<1x128xf32>
    %819 = vector.broadcast %818 : vector<1x128xf32> to vector<16x128xf32>
    %820 = arith.addf %817, %819 : vector<16x128xf32>
    %821 = arith.addf %728, %820 : vector<16x128xf32>
    %cst_282 = arith.constant dense<0.000000e+00> : vector<16xf32>
    %822 = vector.multi_reduction <add>, %821, %cst_282 [1] : vector<16x128xf32> to vector<16xf32>
    %823 = vector.shape_cast %822 : vector<16xf32> to vector<16x1xf32>
    %cst_283 = arith.constant 1.280000e+02 : f32
    %824 = vector.broadcast %cst_283 : f32 to vector<16x1xf32>
    %825 = arith.divf %823, %824 : vector<16x1xf32>
    %826 = vector.broadcast %825 : vector<16x1xf32> to vector<16x128xf32>
    %827 = arith.subf %821, %826 : vector<16x128xf32>
    %828 = arith.mulf %827, %827 : vector<16x128xf32>
    %cst_284 = arith.constant dense<0.000000e+00> : vector<16xf32>
    %829 = vector.multi_reduction <add>, %828, %cst_284 [1] : vector<16x128xf32> to vector<16xf32>
    %830 = vector.shape_cast %829 : vector<16xf32> to vector<16x1xf32>
    %cst_285 = arith.constant 1.280000e+02 : f32
    %831 = vector.broadcast %cst_285 : f32 to vector<16x1xf32>
    %832 = arith.divf %830, %831 : vector<16x1xf32>
    %cst_286 = arith.constant 9.99999974E-6 : f32
    %833 = vector.broadcast %cst_286 : f32 to vector<16x1xf32>
    %834 = arith.addf %832, %833 : vector<16x1xf32>
    %835 = math.rsqrt %834 : vector<16x1xf32>
    %836 = vector.broadcast %835 : vector<16x1xf32> to vector<16x128xf32>
    %837 = arith.mulf %827, %836 : vector<16x128xf32>
    %c368 = arith.constant 368 : index
    %c0_287 = arith.constant 0 : index
    %838 = vector.load %arg6[%c368, %c0_287] : memref<456x128xf32, #tpu.memory_space<vmem>>, vector<1x128xf32>
    %839 = vector.broadcast %838 : vector<1x128xf32> to vector<16x128xf32>
    %840 = arith.mulf %837, %839 : vector<16x128xf32>
    %c376 = arith.constant 376 : index
    %c0_288 = arith.constant 0 : index
    %841 = vector.load %arg6[%c376, %c0_288] : memref<456x128xf32, #tpu.memory_space<vmem>>, vector<1x128xf32>
    %842 = vector.broadcast %841 : vector<1x128xf32> to vector<16x128xf32>
    %843 = arith.addf %840, %842 : vector<16x128xf32>
    %844 = arith.truncf %843 : vector<16x128xf32> to vector<16x128xbf16>
    %c3888 = arith.constant 3888 : index
    %c0_289 = arith.constant 0 : index
    %845 = vector.load %arg5[%c3888, %c0_289] : memref<4272x128xbf16, #tpu.memory_space<vmem>>, vector<128x128xbf16>
    %cst_290 = arith.constant dense<0.000000e+00> : vector<16x128xf32>
    %846 = tpu.matmul %844, %845, %cst_290 {dimension_numbers = #tpu.dot_dimension_numbers<[1], [0], [0], [1], [0, 0, 1, 1], [], []>} : vector<16x128xbf16>, vector<128x128xbf16>, vector<16x128xf32> -> vector<16x128xf32>
    %c400 = arith.constant 400 : index
    %c0_291 = arith.constant 0 : index
    %847 = vector.load %arg6[%c400, %c0_291] : memref<456x128xf32, #tpu.memory_space<vmem>>, vector<1x128xf32>
    %848 = vector.broadcast %847 : vector<1x128xf32> to vector<16x128xf32>
    %849 = arith.addf %846, %848 : vector<16x128xf32>
    %cst_292 = arith.constant 0.000000e+00 : f32
    %850 = vector.broadcast %cst_292 : f32 to vector<16x128xf32>
    %851 = arith.maximumf %849, %850 : vector<16x128xf32>
    %852 = arith.truncf %851 : vector<16x128xf32> to vector<16x128xbf16>
    %c4016 = arith.constant 4016 : index
    %c0_293 = arith.constant 0 : index
    %853 = vector.load %arg5[%c4016, %c0_293] : memref<4272x128xbf16, #tpu.memory_space<vmem>>, vector<128x128xbf16>
    %cst_294 = arith.constant dense<0.000000e+00> : vector<16x128xf32>
    %854 = tpu.matmul %852, %853, %cst_294 {dimension_numbers = #tpu.dot_dimension_numbers<[1], [0], [0], [1], [0, 0, 1, 1], [], []>} : vector<16x128xbf16>, vector<128x128xbf16>, vector<16x128xf32> -> vector<16x128xf32>
    %c408 = arith.constant 408 : index
    %c0_295 = arith.constant 0 : index
    %855 = vector.load %arg6[%c408, %c0_295] : memref<456x128xf32, #tpu.memory_space<vmem>>, vector<1x128xf32>
    %856 = vector.broadcast %855 : vector<1x128xf32> to vector<16x128xf32>
    %857 = arith.addf %854, %856 : vector<16x128xf32>
    %858 = arith.addf %843, %857 : vector<16x128xf32>
    %cst_296 = arith.constant dense<0.000000e+00> : vector<16xf32>
    %859 = vector.multi_reduction <add>, %858, %cst_296 [1] : vector<16x128xf32> to vector<16xf32>
    %860 = vector.shape_cast %859 : vector<16xf32> to vector<16x1xf32>
    %cst_297 = arith.constant 1.280000e+02 : f32
    %861 = vector.broadcast %cst_297 : f32 to vector<16x1xf32>
    %862 = arith.divf %860, %861 : vector<16x1xf32>
    %863 = vector.broadcast %862 : vector<16x1xf32> to vector<16x128xf32>
    %864 = arith.subf %858, %863 : vector<16x128xf32>
    %865 = arith.mulf %864, %864 : vector<16x128xf32>
    %cst_298 = arith.constant dense<0.000000e+00> : vector<16xf32>
    %866 = vector.multi_reduction <add>, %865, %cst_298 [1] : vector<16x128xf32> to vector<16xf32>
    %867 = vector.shape_cast %866 : vector<16xf32> to vector<16x1xf32>
    %cst_299 = arith.constant 1.280000e+02 : f32
    %868 = vector.broadcast %cst_299 : f32 to vector<16x1xf32>
    %869 = arith.divf %867, %868 : vector<16x1xf32>
    %cst_300 = arith.constant 9.99999974E-6 : f32
    %870 = vector.broadcast %cst_300 : f32 to vector<16x1xf32>
    %871 = arith.addf %869, %870 : vector<16x1xf32>
    %872 = math.rsqrt %871 : vector<16x1xf32>
    %873 = vector.broadcast %872 : vector<16x1xf32> to vector<16x128xf32>
    %874 = arith.mulf %864, %873 : vector<16x128xf32>
    %c384 = arith.constant 384 : index
    %c0_301 = arith.constant 0 : index
    %875 = vector.load %arg6[%c384, %c0_301] : memref<456x128xf32, #tpu.memory_space<vmem>>, vector<1x128xf32>
    %876 = vector.broadcast %875 : vector<1x128xf32> to vector<16x128xf32>
    %877 = arith.mulf %874, %876 : vector<16x128xf32>
    %c392 = arith.constant 392 : index
    %c0_302 = arith.constant 0 : index
    %878 = vector.load %arg6[%c392, %c0_302] : memref<456x128xf32, #tpu.memory_space<vmem>>, vector<1x128xf32>
    %879 = vector.broadcast %878 : vector<1x128xf32> to vector<16x128xf32>
    %880 = arith.addf %877, %879 : vector<16x128xf32>
    %cst_303 = arith.constant dense<0.000000e+00> : vector<16xf32>
    %881 = vector.multi_reduction <add>, %880, %cst_303 [1] : vector<16x128xf32> to vector<16xf32>
    %882 = vector.shape_cast %881 : vector<16xf32> to vector<16x1xf32>
    %cst_304 = arith.constant 1.280000e+02 : f32
    %883 = vector.broadcast %cst_304 : f32 to vector<16x1xf32>
    %884 = arith.divf %882, %883 : vector<16x1xf32>
    %885 = vector.broadcast %884 : vector<16x1xf32> to vector<16x128xf32>
    %886 = arith.subf %880, %885 : vector<16x128xf32>
    %887 = arith.mulf %886, %886 : vector<16x128xf32>
    %cst_305 = arith.constant dense<0.000000e+00> : vector<16xf32>
    %888 = vector.multi_reduction <add>, %887, %cst_305 [1] : vector<16x128xf32> to vector<16xf32>
    %889 = vector.shape_cast %888 : vector<16xf32> to vector<16x1xf32>
    %cst_306 = arith.constant 1.280000e+02 : f32
    %890 = vector.broadcast %cst_306 : f32 to vector<16x1xf32>
    %891 = arith.divf %889, %890 : vector<16x1xf32>
    %cst_307 = arith.constant 9.99999974E-6 : f32
    %892 = vector.broadcast %cst_307 : f32 to vector<16x1xf32>
    %893 = arith.addf %891, %892 : vector<16x1xf32>
    %894 = math.rsqrt %893 : vector<16x1xf32>
    %895 = vector.broadcast %894 : vector<16x1xf32> to vector<16x128xf32>
    %896 = arith.mulf %886, %895 : vector<16x128xf32>
    %c432_308 = arith.constant 432 : index
    %c0_309 = arith.constant 0 : index
    %897 = vector.load %arg6[%c432_308, %c0_309] : memref<456x128xf32, #tpu.memory_space<vmem>>, vector<1x128xf32>
    %898 = vector.broadcast %897 : vector<1x128xf32> to vector<16x128xf32>
    %899 = arith.mulf %896, %898 : vector<16x128xf32>
    %c440 = arith.constant 440 : index
    %c0_310 = arith.constant 0 : index
    %900 = vector.load %arg6[%c440, %c0_310] : memref<456x128xf32, #tpu.memory_space<vmem>>, vector<1x128xf32>
    %901 = vector.broadcast %900 : vector<1x128xf32> to vector<16x128xf32>
    %902 = arith.addf %899, %901 : vector<16x128xf32>
    %903 = arith.truncf %902 : vector<16x128xf32> to vector<16x128xbf16>
    %c4144 = arith.constant 4144 : index
    %c0_311 = arith.constant 0 : index
    %904 = vector.load %arg5[%c4144, %c0_311] : memref<4272x128xbf16, #tpu.memory_space<vmem>>, vector<128x128xbf16>
    %cst_312 = arith.constant dense<0.000000e+00> : vector<16x128xf32>
    %905 = tpu.matmul %903, %904, %cst_312 {dimension_numbers = #tpu.dot_dimension_numbers<[1], [0], [0], [1], [0, 0, 1, 1], [], []>} : vector<16x128xbf16>, vector<128x128xbf16>, vector<16x128xf32> -> vector<16x128xf32>
    %c448 = arith.constant 448 : index
    %c0_313 = arith.constant 0 : index
    %906 = vector.load %arg6[%c448, %c0_313] : memref<456x128xf32, #tpu.memory_space<vmem>>, vector<1x128xf32>
    %907 = vector.broadcast %906 : vector<1x128xf32> to vector<16x128xf32>
    %908 = arith.addf %905, %907 : vector<16x128xf32>
    %c0_314 = arith.constant 0 : index
    %c0_315 = arith.constant 0 : index
    %909 = vector.load %arg7[%c0_314, %c0_315] : memref<16x128xf32, #tpu.memory_space<vmem>>, vector<16x128xf32>
    tpu.vector_store %arg7[%c0_314, %c0_315], %908 {strides = array<i32>} : memref<16x128xf32, #tpu.memory_space<vmem>>, vector<16x128xf32>,
    return
  }
}

</mosaic_0001>

<llo_original>
// kernel: transformer_forward.1
$region0: #{transformer_forward.1}
  #allocation0 [shape = 'u32[]', space=smem, size = 0x4, offset = 0x4, fixed_abs, tag = 'smem constant byte address 0x4 - core index']
  #allocation1 [shape = 'u32[72,128]{1,0:T(1,128)}', space=vmem, size = 0x9000, scoped, tag = 'internal scratch']
  %s0 = inlined_call_operand.vmem [shape: s32[16,1], index: 0, kind: input, shape index: {}]
  %s1 = inlined_call_operand.vmem [shape: s32[16,1], index: 1, kind: input, shape index: {}]
  %s2 = inlined_call_operand.hbm [shape: f32[16,16], index: 2, kind: input, shape index: {}]
  %s3 = inlined_call_operand.hbm [shape: f32[16,16], index: 3, kind: input, shape index: {}]
  %s4 = inlined_call_operand.hbm [shape: f32[16,16], index: 4, kind: input, shape index: {}]
  %s5 = inlined_call_operand.hbm [shape: bf16[4272,128], index: 5, kind: input, shape index: {}]
  %s6 = inlined_call_operand.hbm [shape: f32[456,128], index: 6, kind: input, shape index: {}]
  %s7 = inlined_call_operand.vmem [shape: f32[16,128], index: 7, kind: output, shape index: {}]
  %s8 = sld [smem:[#allocation0]]
  $region58: #{transformer_forward.1} parent=0
    _
  %s10 = ssub.s32 1, %s8
  %s11 = scalar_select 0, %s10, %s8
  $region1: #{transformer_forward.1} parent=0
    #allocation2 [shape = 'u8[8192]{0}', space=vmem, size = 0x2000, scoped, tag = 'input window, operand 2, single buffered']
    #allocation3 [shape = 's32[1]{0}', space=sflag, size = 0x4, scoped, tag = 'scoped memory for transformer_forward.1']
    #allocation4 [shape = 'u8[8192]{0}', space=vmem, size = 0x2000, scoped, tag = 'input window, operand 3, single buffered']
    #allocation5 [shape = 's32[1]{0}', space=sflag, size = 0x4, scoped, tag = 'scoped memory for transformer_forward.1']
    #allocation6 [shape = 'u8[8192]{0}', space=vmem, size = 0x2000, scoped, tag = 'input window, operand 4, single buffered']
    #allocation7 [shape = 'u8[1093632]{0}', space=vmem, size = 0x10b000, scoped, tag = 'input window, operand 5, single buffered']
    #allocation8 [shape = 's32[1]{0}', space=sflag, size = 0x4, scoped, tag = 'scoped memory for transformer_forward.1']
    #allocation9 [shape = 'u8[233472]{0}', space=vmem, size = 0x39000, scoped, tag = 'input window, operand 6, single buffered']
    %12 = vsyncpa [#allocation3], 0
    %13 = vsyncpa [#allocation5], 0
    %14 = vsyncpa [#allocation8], 0
    // Predicated region
    $region2: #{transformer_forward.1} parent=1 // pred_check
      _
    $region3: #{transformer_forward.1} parent=1 // pred_check_branch
      %16 = sbr.rel (0) target = $region5
    $region4: #{transformer_forward.1} parent=1 // pred_region
      _
    $region5: #{transformer_forward.1} parent=1 // pred_fallthru
      _
    // Predicated region
    $region6: #{transformer_forward.1} parent=1 // pred_check
      _
    $region7: #{transformer_forward.1} parent=1 // pred_check_branch
      %18 = sbr.rel (0) target = $region9
    $region8: #{transformer_forward.1} parent=1 // pred_region
      _
    $region9: #{transformer_forward.1} parent=1 // pred_fallthru
      _
    // Predicated region
    $region10: #{transformer_forward.1} parent=1 // pred_check
      _
    $region11: #{transformer_forward.1} parent=1 // pred_check_branch
      %20 = sbr.rel (0) target = $region13
    $region12: #{transformer_forward.1} parent=1 // pred_region
      %22 = vsyncadd [#allocation3], 0
      %s23 = sshll.u32 %s2, 4
      %s24 = int_to_ptr.hbm [resolvable:$true] %s23
      %s25 = sshll.u32 [#allocation2], 4
      %s26 = int_to_ptr.vmem [resolvable:$true] %s25
      %31 = dma.hbm_to_vmem [thread:$0]  %s24, 256, %s26, [#allocation3], 128, 128, 8
    $region13: #{transformer_forward.1} parent=1 // pred_fallthru
      _
    // Predicated region
    $region14: #{transformer_forward.1} parent=1 // pred_check
      _
    $region15: #{transformer_forward.1} parent=1 // pred_check_branch
      %33 = sbr.rel (0) target = $region17
    $region16: #{transformer_forward.1} parent=1 // pred_region
      %35 = vsyncadd [#allocation5], 0
      %s36 = sshll.u32 %s3, 4
      %s37 = int_to_ptr.hbm [resolvable:$true] %s36
      %s38 = sshll.u32 [#allocation4], 4
      %s39 = int_to_ptr.vmem [resolvable:$true] %s38
      %44 = dma.hbm_to_vmem [thread:$0]  %s37, 256, %s39, [#allocation5], 128, 128, 8
    $region17: #{transformer_forward.1} parent=1 // pred_fallthru
      _
    // Predicated region
    $region18: #{transformer_forward.1} parent=1 // pred_check
      _
    $region19: #{transformer_forward.1} parent=1 // pred_check_branch
      %46 = sbr.rel (0) target = $region21
    $region20: #{transformer_forward.1} parent=1 // pred_region
      %48 = vsyncadd [#allocation5], 0
      %s49 = sshll.u32 %s4, 4
      %s50 = int_to_ptr.hbm [resolvable:$true] %s49
      %s51 = sshll.u32 [#allocation6], 4
      %s52 = int_to_ptr.vmem [resolvable:$true] %s51
      %57 = dma.hbm_to_vmem [thread:$0]  %s50, 256, %s52, [#allocation5], 128, 128, 8
    $region21: #{transformer_forward.1} parent=1 // pred_fallthru
      _
    // Predicated region
    $region22: #{transformer_forward.1} parent=1 // pred_check
      _
    $region23: #{transformer_forward.1} parent=1 // pred_check_branch
      %59 = sbr.rel (0) target = $region25
    $region24: #{transformer_forward.1} parent=1 // pred_region
      %61 = vsyncadd [#allocation8], 0
      %s62 = sshll.u32 %s5, 4
      %s63 = int_to_ptr.hbm [resolvable:$true] %s62
      %s64 = sshll.u32 [#allocation7], 4
      %s65 = int_to_ptr.vmem [resolvable:$true] %s64
      %70 = dma.hbm_to_vmem [thread:$0]  %s63, 34176, %s65, [#allocation8], 64, 64, 4
    $region25: #{transformer_forward.1} parent=1 // pred_fallthru
      _
    // Predicated region
    $region26: #{transformer_forward.1} parent=1 // pred_check
      _
    $region27: #{transformer_forward.1} parent=1 // pred_check_branch
      %72 = sbr.rel (0) target = $region29
    $region28: #{transformer_forward.1} parent=1 // pred_region
      %74 = vsyncadd [#allocation8], 0
      %s75 = sshll.u32 %s6, 4
      %s76 = int_to_ptr.hbm [resolvable:$true] %s75
      %s77 = sshll.u32 [#allocation9], 4
      %s78 = int_to_ptr.vmem [resolvable:$true] %s77
      %83 = dma.hbm_to_vmem [thread:$0]  %s76, 7296, %s78, [#allocation8], 128, 128, 8
    $region29: #{transformer_forward.1} parent=1 // pred_fallthru
      _
    // Predicated region
    $region30: #{transformer_forward.1} parent=1 // pred_check
      _
    $region31: #{transformer_forward.1} parent=1 // pred_check_branch
      %85 = sbr.rel (0) target = $region33
    $region32: #{transformer_forward.1} parent=1 // pred_region
      %87 = dma.done [#allocation3], 256
    $region33: #{transformer_forward.1} parent=1 // pred_fallthru
      _
    // Predicated region
    $region34: #{transformer_forward.1} parent=1 // pred_check
      _
    $region35: #{transformer_forward.1} parent=1 // pred_check_branch
      %89 = sbr.rel (0) target = $region37
    $region36: #{transformer_forward.1} parent=1 // pred_region
      %91 = dma.done [#allocation5], 256
    $region37: #{transformer_forward.1} parent=1 // pred_fallthru
      _
    // Predicated region
    $region38: #{transformer_forward.1} parent=1 // pred_check
      _
    $region39: #{transformer_forward.1} parent=1 // pred_check_branch
      %93 = sbr.rel (0) target = $region41
    $region40: #{transformer_forward.1} parent=1 // pred_region
      %95 = dma.done [#allocation5], 256
    $region41: #{transformer_forward.1} parent=1 // pred_fallthru
      _
    // Predicated region
    $region42: #{transformer_forward.1} parent=1 // pred_check
      _
    $region43: #{transformer_forward.1} parent=1 // pred_check_branch
      %97 = sbr.rel (0) target = $region45
    $region44: #{transformer_forward.1} parent=1 // pred_region
      %99 = dma.done [#allocation8], 34176
    $region45: #{transformer_forward.1} parent=1 // pred_fallthru
      _
    // Predicated region
    $region46: #{transformer_forward.1} parent=1 // pred_check
      _
    $region47: #{transformer_forward.1} parent=1 // pred_check_branch
      %101 = sbr.rel (0) target = $region49
    $region48: #{transformer_forward.1} parent=1 // pred_region
      %103 = dma.done [#allocation8], 7296
    $region49: #{transformer_forward.1} parent=1 // pred_fallthru
      _
    %v105 = vld [vmem:[#allocation2] sm:$0xff]
    %v106 = vld [vmem:[#allocation2 + $0x8] sm:$0xff]
    %v107 = vld [vmem:[#allocation4] sm:$0xff]
    %v108 = vld [vmem:[#allocation4 + $0x8] sm:$0xff]
    %v109 = vld [vmem:[#allocation6] sm:$0xff]
    %v110 = vld [vmem:[#allocation6 + $0x8] sm:$0xff]
    %v111 = vld [vmem:[#allocation7] sm:$0xf]
    %v112 = vld [vmem:[#allocation7 + $0x4] sm:$0xf]
    %v113 = vld [vmem:[#allocation7 + $0x8] sm:$0xf]
    %v114 = vld [vmem:[#allocation7 + $0xc] sm:$0xf]
    %v115 = vld [vmem:[%s0] sm:$0xff]
    %v116 = vld [vmem:[%s0 + $0x8] sm:$0xff]
    %v117 = vlaneseq
    %v118 = vand.u32 %v117, 127
    %119 = vset.pattern.permute.xlu0 0
    %120 = vperm.xlu0 %119, %v115
    %v121 = vpop.permute.xlu0 %120
    %122 = vset.pattern.permute.xlu0 0
    %123 = vperm.xlu0 %122, %v116
    %v124 = vpop.permute.xlu0 %123
    %vm125 = vcmp.eq.s32.totalorder %v121, %v118
    %vm126 = vcmp.eq.s32.totalorder %v124, %v118
    %v127 = vsel %vm125, 1, 0
    %v128 = vsel %vm126, 1, 0
    %v129 = vcvt.s32.f32 %v127
    %v130 = vcvt.s32.f32 %v128
    %v131 = vpack.c.bf16 %v130, %v129
    %v136 = vunpack.c.l.b16 %v111
    %v137 = vunpack.c.l.b16 %v112
    %v138 = vunpack.c.l.b16 %v113
    %v139 = vunpack.c.l.b16 %v114
    %v140 = vpack.c.b16 %v137, %v136
    %v141 = vpack.c.b16 %v139, %v138
    %vm144 = vcmask 261120
    %v146 = vsel %vm144, %v131, 0
    %148 = vmatpush.bf16.msra.mxu0 0
    %149 = vmatpush.bf16.msra.mxu0 0
    %150 = vmatpush.bf16.msra.mxu0 0
    %151 = vmatpush.bf16.msra.mxu0 0
    %152 = vmatpush.bf16.msra.mxu0 0
    %153 = vmatpush.bf16.msra.mxu0 0
    %154 = vmatpush.bf16.msra.mxu0 %v141
    %155 = vmatpush.bf16.msra.mxu0 %v140
    %156 = vmatmul.bf16.gmra.mxu0 %v146
    %v157 = vpop.f32.mrf.mxu0
    %v158 = vadd.f32 0.0, %v157
    %v159 = vpop.f32.mrf.mxu0
    %v160 = vadd.f32 0.0, %v159
    %161 = vdwg.mxu0
    %v162 = vpack.c.bf16 %v160, %v158
    %v163 = vld [vmem:[#allocation7 + $0x18] sm:$0xf]
    %v164 = vld [vmem:[#allocation7 + $0x1c] sm:$0xf]
    %v165 = vld [vmem:[#allocation7 + $0x20] sm:$0xf]
    %v166 = vld [vmem:[#allocation7 + $0x24] sm:$0xf]
    %v167 = vld [vmem:[#allocation7 + $0x28] sm:$0xf]
    %v168 = vld [vmem:[#allocation7 + $0x2c] sm:$0xf]
    %v169 = vld [vmem:[#allocation7 + $0x30] sm:$0xf]
    %v170 = vld [vmem:[#allocation7 + $0x34] sm:$0xf]
    %v171 = vld [vmem:[#allocation7 + $0x38] sm:$0xf]
    %v172 = vld [vmem:[#allocation7 + $0x3c] sm:$0xf]
    %v173 = vld [vmem:[#allocation7 + $0x40] sm:$0xf]
    %v174 = vld [vmem:[#allocation7 + $0x44] sm:$0xf]
    %v175 = vld [vmem:[#allocation7 + $0x48] sm:$0xf]
    %v176 = vld [vmem:[#allocation7 + $0x4c] sm:$0xf]
    %v177 = vld [vmem:[#allocation7 + $0x50] sm:$0xf]
    %v178 = vld [vmem:[#allocation7 + $0x54] sm:$0xf]
    %v179 = vld [vmem:[#allocation9] sm:$0x1]
    %v180 = vperm.slane %v179, 0
    %v197 = vunpack.c.l.b16 %v163
    %v198 = vunpack.c.l.b16 %v164
    %v199 = vunpack.c.l.b16 %v165
    %v200 = vunpack.c.l.b16 %v166
    %v201 = vunpack.c.l.b16 %v167
    %v202 = vunpack.c.l.b16 %v168
    %v203 = vunpack.c.l.b16 %v169
    %v204 = vunpack.c.l.b16 %v170
    %v205 = vunpack.c.l.b16 %v171
    %v206 = vunpack.c.l.b16 %v172
    %v207 = vunpack.c.l.b16 %v173
    %v208 = vunpack.c.l.b16 %v174
    %v209 = vunpack.c.l.b16 %v175
    %v210 = vunpack.c.l.b16 %v176
    %v211 = vunpack.c.l.b16 %v177
    %v212 = vunpack.c.l.b16 %v178
    %v213 = vpack.c.b16 %v198, %v197
    %v214 = vpack.c.b16 %v200, %v199
    %v215 = vpack.c.b16 %v202, %v201
    %v216 = vpack.c.b16 %v204, %v203
    %v217 = vpack.c.b16 %v206, %v205
    %v218 = vpack.c.b16 %v208, %v207
    %v219 = vpack.c.b16 %v210, %v209
    %v220 = vpack.c.b16 %v212, %v211
    %229 = vmatpush.bf16.msra.mxu0 %v220
    %230 = vmatpush.bf16.msra.mxu0 %v219
    %231 = vmatpush.bf16.msra.mxu0 %v218
    %232 = vmatpush.bf16.msra.mxu0 %v217
    %233 = vmatpush.bf16.msra.mxu0 %v216
    %234 = vmatpush.bf16.msra.mxu0 %v215
    %235 = vmatpush.bf16.msra.mxu0 %v214
    %236 = vmatpush.bf16.msra.mxu0 %v213
    %237 = vmatmul.bf16.gmra.mxu0 %v162
    %v238 = vpop.f32.mrf.mxu0
    %v239 = vadd.f32 %v180, %v238
    %v240 = vpop.f32.mrf.mxu0
    %v241 = vadd.f32 %v180, %v240
    %242 = vdwg.mxu0
    %v243 = vld [vmem:[#allocation7 + $0x58] sm:$0xf]
    %v244 = vld [vmem:[#allocation7 + $0x5c] sm:$0xf]
    %v245 = vld [vmem:[#allocation7 + $0x60] sm:$0xf]
    %v246 = vld [vmem:[#allocation7 + $0x64] sm:$0xf]
    %v247 = vld [vmem:[#allocation7 + $0x68] sm:$0xf]
    %v248 = vld [vmem:[#allocation7 + $0x6c] sm:$0xf]
    %v249 = vld [vmem:[#allocation7 + $0x70] sm:$0xf]
    %v250 = vld [vmem:[#allocation7 + $0x74] sm:$0xf]
    %v251 = vld [vmem:[#allocation7 + $0x78] sm:$0xf]
    %v252 = vld [vmem:[#allocation7 + $0x7c] sm:$0xf]
    %v253 = vld [vmem:[#allocation7 + $0x80] sm:$0xf]
    %v254 = vld [vmem:[#allocation7 + $0x84] sm:$0xf]
    %v255 = vld [vmem:[#allocation7 + $0x88] sm:$0xf]
    %v256 = vld [vmem:[#allocation7 + $0x8c] sm:$0xf]
    %v257 = vld [vmem:[#allocation7 + $0x90] sm:$0xf]
    %v258 = vld [vmem:[#allocation7 + $0x94] sm:$0xf]
    %v259 = vld [vmem:[#allocation9 + $0x8] sm:$0x1]
    %v260 = vperm.slane %v259, 0
    %v277 = vunpack.c.l.b16 %v243
    %v278 = vunpack.c.l.b16 %v244
    %v279 = vunpack.c.l.b16 %v245
    %v280 = vunpack.c.l.b16 %v246
    %v281 = vunpack.c.l.b16 %v247
    %v282 = vunpack.c.l.b16 %v248
    %v283 = vunpack.c.l.b16 %v249
    %v284 = vunpack.c.l.b16 %v250
    %v285 = vunpack.c.l.b16 %v251
    %v286 = vunpack.c.l.b16 %v252
    %v287 = vunpack.c.l.b16 %v253
    %v288 = vunpack.c.l.b16 %v254
    %v289 = vunpack.c.l.b16 %v255
    %v290 = vunpack.c.l.b16 %v256
    %v291 = vunpack.c.l.b16 %v257
    %v292 = vunpack.c.l.b16 %v258
    %v293 = vpack.c.b16 %v278, %v277
    %v294 = vpack.c.b16 %v280, %v279
    %v295 = vpack.c.b16 %v282, %v281
    %v296 = vpack.c.b16 %v284, %v283
    %v297 = vpack.c.b16 %v286, %v285
    %v298 = vpack.c.b16 %v288, %v287
    %v299 = vpack.c.b16 %v290, %v289
    %v300 = vpack.c.b16 %v292, %v291
    %309 = vmatpush.bf16.msra.mxu0 %v300
    %310 = vmatpush.bf16.msra.mxu0 %v299
    %311 = vmatpush.bf16.msra.mxu0 %v298
    %312 = vmatpush.bf16.msra.mxu0 %v297
    %313 = vmatpush.bf16.msra.mxu0 %v296
    %314 = vmatpush.bf16.msra.mxu0 %v295
    %315 = vmatpush.bf16.msra.mxu0 %v294
    %316 = vmatpush.bf16.msra.mxu0 %v293
    %317 = vmatmul.bf16.gmra.mxu0 %v162
    %v318 = vpop.f32.mrf.mxu0
    %v319 = vadd.f32 %v260, %v318
    %v320 = vpop.f32.mrf.mxu0
    %v321 = vadd.f32 %v260, %v320
    %322 = vdwg.mxu0
    %v323 = vld [vmem:[#allocation7 + $0x98] sm:$0xf]
    %v324 = vld [vmem:[#allocation7 + $0x9c] sm:$0xf]
    %v325 = vld [vmem:[#allocation7 + $0xa0] sm:$0xf]
    %v326 = vld [vmem:[#allocation7 + $0xa4] sm:$0xf]
    %v327 = vld [vmem:[#allocation7 + $0xa8] sm:$0xf]
    %v328 = vld [vmem:[#allocation7 + $0xac] sm:$0xf]
    %v329 = vld [vmem:[#allocation7 + $0xb0] sm:$0xf]
    %v330 = vld [vmem:[#allocation7 + $0xb4] sm:$0xf]
    %v331 = vld [vmem:[#allocation7 + $0xb8] sm:$0xf]
    %v332 = vld [vmem:[#allocation7 + $0xbc] sm:$0xf]
    %v333 = vld [vmem:[#allocation7 + $0xc0] sm:$0xf]
    %v334 = vld [vmem:[#allocation7 + $0xc4] sm:$0xf]
    %v335 = vld [vmem:[#allocation7 + $0xc8] sm:$0xf]
    %v336 = vld [vmem:[#allocation7 + $0xcc] sm:$0xf]
    %v337 = vld [vmem:[#allocation7 + $0xd0] sm:$0xf]
    %v338 = vld [vmem:[#allocation7 + $0xd4] sm:$0xf]
    %v339 = vld [vmem:[#allocation9 + $0x10] sm:$0x1]
    %v340 = vperm.slane %v339, 0
    %v357 = vunpack.c.l.b16 %v323
    %v358 = vunpack.c.l.b16 %v324
    %v359 = vunpack.c.l.b16 %v325
    %v360 = vunpack.c.l.b16 %v326
    %v361 = vunpack.c.l.b16 %v327
    %v362 = vunpack.c.l.b16 %v328
    %v363 = vunpack.c.l.b16 %v329
    %v364 = vunpack.c.l.b16 %v330
    %v365 = vunpack.c.l.b16 %v331
    %v366 = vunpack.c.l.b16 %v332
    %v367 = vunpack.c.l.b16 %v333
    %v368 = vunpack.c.l.b16 %v334
    %v369 = vunpack.c.l.b16 %v335
    %v370 = vunpack.c.l.b16 %v336
    %v371 = vunpack.c.l.b16 %v337
    %v372 = vunpack.c.l.b16 %v338
    %v373 = vpack.c.b16 %v358, %v357
    %v374 = vpack.c.b16 %v360, %v359
    %v375 = vpack.c.b16 %v362, %v361
    %v376 = vpack.c.b16 %v364, %v363
    %v377 = vpack.c.b16 %v366, %v365
    %v378 = vpack.c.b16 %v368, %v367
    %v379 = vpack.c.b16 %v370, %v369
    %v380 = vpack.c.b16 %v372, %v371
    %389 = vmatpush.bf16.msra.mxu0 %v380
    %390 = vmatpush.bf16.msra.mxu0 %v379
    %391 = vmatpush.bf16.msra.mxu0 %v378
    %392 = vmatpush.bf16.msra.mxu0 %v377
    %393 = vmatpush.bf16.msra.mxu0 %v376
    %394 = vmatpush.bf16.msra.mxu0 %v375
    %395 = vmatpush.bf16.msra.mxu0 %v374
    %396 = vmatpush.bf16.msra.mxu0 %v373
    %397 = vmatmul.bf16.gmra.mxu0 %v162
    %v398 = vpop.f32.mrf.mxu0
    %v399 = vadd.f32 %v340, %v398
    %v400 = vpop.f32.mrf.mxu0
    %v401 = vadd.f32 %v340, %v400
    %402 = vdwg.mxu0
    %vm403 = vcmask 130048
    %v405 = vsel %vm403, %v239, 0
    %v408 = vsel %vm403, %v241, 0
    %v411 = vsel %vm403, %v319, 0
    %v414 = vsel %vm403, %v321, 0
    %416 = vmatpush.xpose.msra.mxu0 0.0
    %417 = vmatpush.xpose.msra.mxu0 0.0
    %418 = vmatpush.xpose.msra.mxu0 0.0
    %419 = vmatpush.xpose.msra.mxu0 0.0
    %420 = vmatpush.xpose.msra.mxu0 0.0
    %421 = vmatpush.xpose.msra.mxu0 0.0
    %422 = vmatpush.xpose.msra.mxu0 0.0
    %423 = vmatpush.xpose.msra.mxu0 0.0
    %424 = vmatpush.xpose.msra.mxu0 0.0
    %425 = vmatpush.xpose.msra.mxu0 0.0
    %426 = vmatpush.xpose.msra.mxu0 0.0
    %427 = vmatpush.xpose.msra.mxu0 0.0
    %428 = vmatpush.xpose.msra.mxu0 0.0
    %429 = vmatpush.xpose.msra.mxu0 0.0
    %430 = vmatpush.xpose.msra.mxu0 %v414
    %431 = vmatpush.xpose.msra.mxu0 %v411
    %432 = vmatmul.f32.gmra.mxu0 %v405
    %v433 = vpop.f32.mrf.mxu0
    %v434 = vadd.f32 %v105, %v433
    %435 = vmatmul.f32.gmra.mxu0 %v408
    %v436 = vpop.f32.mrf.mxu0
    %v437 = vadd.f32 %v106, %v436
    %438 = vdwg.mxu0
    %439 = vrot.lane.b32.xlu0 %v239, 112
    %v440 = vpop.permute.xlu0 %439
    %441 = vrot.lane.b32.xlu0 %v241, 112
    %v442 = vpop.permute.xlu0 %441
    %443 = vrot.lane.b32.xlu0 %v319, 112
    %v444 = vpop.permute.xlu0 %443
    %445 = vrot.lane.b32.xlu0 %v321, 112
    %v446 = vpop.permute.xlu0 %445
    %v447 = vsel %vm403, %v440, 0
    %v449 = vsel %vm403, %v442, 0
    %v451 = vsel %vm403, %v444, 0
    %v453 = vsel %vm403, %v446, 0
    %455 = vmatpush.xpose.msra.mxu0 0.0
    %456 = vmatpush.xpose.msra.mxu0 0.0
    %457 = vmatpush.xpose.msra.mxu0 0.0
    %458 = vmatpush.xpose.msra.mxu0 0.0
    %459 = vmatpush.xpose.msra.mxu0 0.0
    %460 = vmatpush.xpose.msra.mxu0 0.0
    %461 = vmatpush.xpose.msra.mxu0 0.0
    %462 = vmatpush.xpose.msra.mxu0 0.0
    %463 = vmatpush.xpose.msra.mxu0 0.0
    %464 = vmatpush.xpose.msra.mxu0 0.0
    %465 = vmatpush.xpose.msra.mxu0 0.0
    %466 = vmatpush.xpose.msra.mxu0 0.0
    %467 = vmatpush.xpose.msra.mxu0 0.0
    %468 = vmatpush.xpose.msra.mxu0 0.0
    %469 = vmatpush.xpose.msra.mxu0 %v453
    %470 = vmatpush.xpose.msra.mxu0 %v451
    %471 = vmatmul.f32.gmra.mxu0 %v447
    %v472 = vpop.f32.mrf.mxu0
    %v473 = vadd.f32 %v105, %v472
    %474 = vmatmul.f32.gmra.mxu0 %v449
    %v475 = vpop.f32.mrf.mxu0
    %v476 = vadd.f32 %v106, %v475
    %477 = vdwg.mxu0
    %478 = vrot.lane.b32.xlu0 %v239, 96
    %v479 = vpop.permute.xlu0 %478
    %480 = vrot.lane.b32.xlu0 %v241, 96
    %v481 = vpop.permute.xlu0 %480
    %482 = vrot.lane.b32.xlu0 %v319, 96
    %v483 = vpop.permute.xlu0 %482
    %484 = vrot.lane.b32.xlu0 %v321, 96
    %v485 = vpop.permute.xlu0 %484
    %v486 = vsel %vm403, %v479, 0
    %v488 = vsel %vm403, %v481, 0
    %v490 = vsel %vm403, %v483, 0
    %v492 = vsel %vm403, %v485, 0
    %494 = vmatpush.xpose.msra.mxu0 0.0
    %495 = vmatpush.xpose.msra.mxu0 0.0
    %496 = vmatpush.xpose.msra.mxu0 0.0
    %497 = vmatpush.xpose.msra.mxu0 0.0
    %498 = vmatpush.xpose.msra.mxu0 0.0
    %499 = vmatpush.xpose.msra.mxu0 0.0
    %500 = vmatpush.xpose.msra.mxu0 0.0
    %501 = vmatpush.xpose.msra.mxu0 0.0
    %502 = vmatpush.xpose.msra.mxu0 0.0
    %503 = vmatpush.xpose.msra.mxu0 0.0
    %504 = vmatpush.xpose.msra.mxu0 0.0
    %505 = vmatpush.xpose.msra.mxu0 0.0
    %506 = vmatpush.xpose.msra.mxu0 0.0
    %507 = vmatpush.xpose.msra.mxu0 0.0
    %508 = vmatpush.xpose.msra.mxu0 %v492
    %509 = vmatpush.xpose.msra.mxu0 %v490
    %510 = vmatmul.f32.gmra.mxu0 %v486
    %v511 = vpop.f32.mrf.mxu0
    %v512 = vadd.f32 %v105, %v511
    %513 = vmatmul.f32.gmra.mxu0 %v488
    %v514 = vpop.f32.mrf.mxu0
    %v515 = vadd.f32 %v106, %v514
    %516 = vdwg.mxu0
    %517 = vrot.lane.b32.xlu0 %v239, 80
    %v518 = vpop.permute.xlu0 %517
    %519 = vrot.lane.b32.xlu0 %v241, 80
    %v520 = vpop.permute.xlu0 %519
    %521 = vrot.lane.b32.xlu0 %v319, 80
    %v522 = vpop.permute.xlu0 %521
    %523 = vrot.lane.b32.xlu0 %v321, 80
    %v524 = vpop.permute.xlu0 %523
    %v525 = vsel %vm403, %v518, 0
    %v527 = vsel %vm403, %v520, 0
    %v529 = vsel %vm403, %v522, 0
    %v531 = vsel %vm403, %v524, 0
    %533 = vmatpush.xpose.msra.mxu0 0.0
    %534 = vmatpush.xpose.msra.mxu0 0.0
    %535 = vmatpush.xpose.msra.mxu0 0.0
    %536 = vmatpush.xpose.msra.mxu0 0.0
    %537 = vmatpush.xpose.msra.mxu0 0.0
    %538 = vmatpush.xpose.msra.mxu0 0.0
    %539 = vmatpush.xpose.msra.mxu0 0.0
    %540 = vmatpush.xpose.msra.mxu0 0.0
    %541 = vmatpush.xpose.msra.mxu0 0.0
    %542 = vmatpush.xpose.msra.mxu0 0.0
    %543 = vmatpush.xpose.msra.mxu0 0.0
    %544 = vmatpush.xpose.msra.mxu0 0.0
    %545 = vmatpush.xpose.msra.mxu0 0.0
    %546 = vmatpush.xpose.msra.mxu0 0.0
    %547 = vmatpush.xpose.msra.mxu0 %v531
    %548 = vmatpush.xpose.msra.mxu0 %v529
    %549 = vmatmul.f32.gmra.mxu0 %v525
    %v550 = vpop.f32.mrf.mxu0
    %v551 = vadd.f32 %v105, %v550
    %552 = vmatmul.f32.gmra.mxu0 %v527
    %v553 = vpop.f32.mrf.mxu0
    %v554 = vadd.f32 %v106, %v553
    %555 = vdwg.mxu0
    %556 = vrot.lane.b32.xlu0 %v239, 64
    %v557 = vpop.permute.xlu0 %556
    %558 = vrot.lane.b32.xlu0 %v241, 64
    %v559 = vpop.permute.xlu0 %558
    %560 = vrot.lane.b32.xlu0 %v319, 64
    %v561 = vpop.permute.xlu0 %560
    %562 = vrot.lane.b32.xlu0 %v321, 64
    %v563 = vpop.permute.xlu0 %562
    %v564 = vsel %vm403, %v557, 0
    %v566 = vsel %vm403, %v559, 0
    %v568 = vsel %vm403, %v561, 0
    %v570 = vsel %vm403, %v563, 0
    %572 = vmatpush.xpose.msra.mxu0 0.0
    %573 = vmatpush.xpose.msra.mxu0 0.0
    %574 = vmatpush.xpose.msra.mxu0 0.0
    %575 = vmatpush.xpose.msra.mxu0 0.0
    %576 = vmatpush.xpose.msra.mxu0 0.0
    %577 = vmatpush.xpose.msra.mxu0 0.0
    %578 = vmatpush.xpose.msra.mxu0 0.0
    %579 = vmatpush.xpose.msra.mxu0 0.0
    %580 = vmatpush.xpose.msra.mxu0 0.0
    %581 = vmatpush.xpose.msra.mxu0 0.0
    %582 = vmatpush.xpose.msra.mxu0 0.0
    %583 = vmatpush.xpose.msra.mxu0 0.0
    %584 = vmatpush.xpose.msra.mxu0 0.0
    %585 = vmatpush.xpose.msra.mxu0 0.0
    %586 = vmatpush.xpose.msra.mxu0 %v570
    %587 = vmatpush.xpose.msra.mxu0 %v568
    %588 = vmatmul.f32.gmra.mxu0 %v564
    %v589 = vpop.f32.mrf.mxu0
    %v590 = vadd.f32 %v105, %v589
    %591 = vmatmul.f32.gmra.mxu0 %v566
    %v592 = vpop.f32.mrf.mxu0
    %v593 = vadd.f32 %v106, %v592
    %594 = vdwg.mxu0
    %595 = vrot.lane.b32.xlu0 %v239, 48
    %v596 = vpop.permute.xlu0 %595
    %597 = vrot.lane.b32.xlu0 %v241, 48
    %v598 = vpop.permute.xlu0 %597
    %599 = vrot.lane.b32.xlu0 %v319, 48
    %v600 = vpop.permute.xlu0 %599
    %601 = vrot.lane.b32.xlu0 %v321, 48
    %v602 = vpop.permute.xlu0 %601
    %v603 = vsel %vm403, %v596, 0
    %v605 = vsel %vm403, %v598, 0
    %v607 = vsel %vm403, %v600, 0
    %v609 = vsel %vm403, %v602, 0
    %611 = vmatpush.xpose.msra.mxu0 0.0
    %612 = vmatpush.xpose.msra.mxu0 0.0
    %613 = vmatpush.xpose.msra.mxu0 0.0
    %614 = vmatpush.xpose.msra.mxu0 0.0
    %615 = vmatpush.xpose.msra.mxu0 0.0
    %616 = vmatpush.xpose.msra.mxu0 0.0
    %617 = vmatpush.xpose.msra.mxu0 0.0
    %618 = vmatpush.xpose.msra.mxu0 0.0
    %619 = vmatpush.xpose.msra.mxu0 0.0
    %620 = vmatpush.xpose.msra.mxu0 0.0
    %621 = vmatpush.xpose.msra.mxu0 0.0
    %622 = vmatpush.xpose.msra.mxu0 0.0
    %623 = vmatpush.xpose.msra.mxu0 0.0
    %624 = vmatpush.xpose.msra.mxu0 0.0
    %625 = vmatpush.xpose.msra.mxu0 %v609
    %626 = vmatpush.xpose.msra.mxu0 %v607
    %627 = vmatmul.f32.gmra.mxu0 %v603
    %v628 = vpop.f32.mrf.mxu0
    %v629 = vadd.f32 %v105, %v628
    %630 = vmatmul.f32.gmra.mxu0 %v605
    %v631 = vpop.f32.mrf.mxu0
    %v632 = vadd.f32 %v106, %v631
    %633 = vdwg.mxu0
    %634 = vrot.lane.b32.xlu0 %v239, 32
    %v635 = vpop.permute.xlu0 %634
    %636 = vrot.lane.b32.xlu0 %v241, 32
    %v637 = vpop.permute.xlu0 %636
    %638 = vrot.lane.b32.xlu0 %v319, 32
    %v639 = vpop.permute.xlu0 %638
    %640 = vrot.lane.b32.xlu0 %v321, 32
    %v641 = vpop.permute.xlu0 %640
    %v642 = vsel %vm403, %v635, 0
    %v644 = vsel %vm403, %v637, 0
    %v646 = vsel %vm403, %v639, 0
    %v648 = vsel %vm403, %v641, 0
    %650 = vmatpush.xpose.msra.mxu0 0.0
    %651 = vmatpush.xpose.msra.mxu0 0.0
    %652 = vmatpush.xpose.msra.mxu0 0.0
    %653 = vmatpush.xpose.msra.mxu0 0.0
    %654 = vmatpush.xpose.msra.mxu0 0.0
    %655 = vmatpush.xpose.msra.mxu0 0.0
    %656 = vmatpush.xpose.msra.mxu0 0.0
    %657 = vmatpush.xpose.msra.mxu0 0.0
    %658 = vmatpush.xpose.msra.mxu0 0.0
    %659 = vmatpush.xpose.msra.mxu0 0.0
    %660 = vmatpush.xpose.msra.mxu0 0.0
    %661 = vmatpush.xpose.msra.mxu0 0.0
    %662 = vmatpush.xpose.msra.mxu0 0.0
    %663 = vmatpush.xpose.msra.mxu0 0.0
    %664 = vmatpush.xpose.msra.mxu0 %v648
    %665 = vmatpush.xpose.msra.mxu0 %v646
    %666 = vmatmul.f32.gmra.mxu0 %v642
    %v667 = vpop.f32.mrf.mxu0
    %v668 = vadd.f32 %v105, %v667
    %669 = vmatmul.f32.gmra.mxu0 %v644
    %v670 = vpop.f32.mrf.mxu0
    %v671 = vadd.f32 %v106, %v670
    %672 = vdwg.mxu0
    %673 = vrot.lane.b32.xlu0 %v239, 16
    %v674 = vpop.permute.xlu0 %673
    %675 = vrot.lane.b32.xlu0 %v241, 16
    %v676 = vpop.permute.xlu0 %675
    %677 = vrot.lane.b32.xlu0 %v319, 16
    %v678 = vpop.permute.xlu0 %677
    %679 = vrot.lane.b32.xlu0 %v321, 16
    %v680 = vpop.permute.xlu0 %679
    %v681 = vsel %vm403, %v674, 0
    %v683 = vsel %vm403, %v676, 0
    %v685 = vsel %vm403, %v678, 0
    %v687 = vsel %vm403, %v680, 0
    %689 = vmatpush.xpose.msra.mxu0 0.0
    %690 = vmatpush.xpose.msra.mxu0 0.0
    %691 = vmatpush.xpose.msra.mxu0 0.0
    %692 = vmatpush.xpose.msra.mxu0 0.0
    %693 = vmatpush.xpose.msra.mxu0 0.0
    %694 = vmatpush.xpose.msra.mxu0 0.0
    %695 = vmatpush.xpose.msra.mxu0 0.0
    %696 = vmatpush.xpose.msra.mxu0 0.0
    %697 = vmatpush.xpose.msra.mxu0 0.0
    %698 = vmatpush.xpose.msra.mxu0 0.0
    %699 = vmatpush.xpose.msra.mxu0 0.0
    %700 = vmatpush.xpose.msra.mxu0 0.0
    %701 = vmatpush.xpose.msra.mxu0 0.0
    %702 = vmatpush.xpose.msra.mxu0 0.0
    %703 = vmatpush.xpose.msra.mxu0 %v687
    %704 = vmatpush.xpose.msra.mxu0 %v685
    %705 = vmatmul.f32.gmra.mxu0 %v681
    %v706 = vpop.f32.mrf.mxu0
    %v707 = vadd.f32 %v105, %v706
    %708 = vmatmul.f32.gmra.mxu0 %v683
    %v709 = vpop.f32.mrf.mxu0
    %v710 = vadd.f32 %v106, %v709
    %711 = vdwg.mxu0
    %v712 = vsel %vm403, %v434, -inf
    %713 = vmax.xlane.f32.xlu0 %v712
    %v714 = vpop.xlane.xlu0 %713
    %v715 = vsel %vm403, %v437, -inf
    %716 = vmax.xlane.f32.xlu0 %v715
    %v717 = vpop.xlane.xlu0 %716
    %v718 = vsel %vm403, %v473, -inf
    %719 = vmax.xlane.f32.xlu0 %v718
    %v720 = vpop.xlane.xlu0 %719
    %v721 = vsel %vm403, %v476, -inf
    %722 = vmax.xlane.f32.xlu0 %v721
    %v723 = vpop.xlane.xlu0 %722
    %v724 = vsel %vm403, %v512, -inf
    %725 = vmax.xlane.f32.xlu0 %v724
    %v726 = vpop.xlane.xlu0 %725
    %v727 = vsel %vm403, %v515, -inf
    %728 = vmax.xlane.f32.xlu0 %v727
    %v729 = vpop.xlane.xlu0 %728
    %v730 = vsel %vm403, %v551, -inf
    %731 = vmax.xlane.f32.xlu0 %v730
    %v732 = vpop.xlane.xlu0 %731
    %v733 = vsel %vm403, %v554, -inf
    %734 = vmax.xlane.f32.xlu0 %v733
    %v735 = vpop.xlane.xlu0 %734
    %v736 = vsel %vm403, %v590, -inf
    %737 = vmax.xlane.f32.xlu0 %v736
    %v738 = vpop.xlane.xlu0 %737
    %v739 = vsel %vm403, %v593, -inf
    %740 = vmax.xlane.f32.xlu0 %v739
    %v741 = vpop.xlane.xlu0 %740
    %v742 = vsel %vm403, %v629, -inf
    %743 = vmax.xlane.f32.xlu0 %v742
    %v744 = vpop.xlane.xlu0 %743
    %v745 = vsel %vm403, %v632, -inf
    %746 = vmax.xlane.f32.xlu0 %v745
    %v747 = vpop.xlane.xlu0 %746
    %v748 = vsel %vm403, %v668, -inf
    %749 = vmax.xlane.f32.xlu0 %v748
    %v750 = vpop.xlane.xlu0 %749
    %v751 = vsel %vm403, %v671, -inf
    %752 = vmax.xlane.f32.xlu0 %v751
    %v753 = vpop.xlane.xlu0 %752
    %v754 = vsel %vm403, %v707, -inf
    %755 = vmax.xlane.f32.xlu0 %v754
    %v756 = vpop.xlane.xlu0 %755
    %v757 = vsel %vm403, %v710, -inf
    %758 = vmax.xlane.f32.xlu0 %v757
    %v759 = vpop.xlane.xlu0 %758
    %v760 = vsub.f32 %v434, %v714
    %v761 = vsub.f32 %v437, %v717
    %v762 = vsub.f32 %v473, %v720
    %v763 = vsub.f32 %v476, %v723
    %v764 = vsub.f32 %v512, %v726
    %v765 = vsub.f32 %v515, %v729
    %v766 = vsub.f32 %v551, %v732
    %v767 = vsub.f32 %v554, %v735
    %v768 = vsub.f32 %v590, %v738
    %v769 = vsub.f32 %v593, %v741
    %v770 = vsub.f32 %v629, %v744
    %v771 = vsub.f32 %v632, %v747
    %v772 = vsub.f32 %v668, %v750
    %v773 = vsub.f32 %v671, %v753
    %v774 = vsub.f32 %v707, %v756
    %v775 = vsub.f32 %v710, %v759
    %v776 = vmul.f32 %v760, 1.442695
    %v777 = vpow.pop %v776
    %v778 = vmul.f32 %v761, 1.442695
    %v779 = vpow.pop %v778
    %v780 = vmul.f32 %v762, 1.442695
    %v781 = vpow.pop %v780
    %v782 = vmul.f32 %v763, 1.442695
    %v783 = vpow.pop %v782
    %v784 = vmul.f32 %v764, 1.442695
    %v785 = vpow.pop %v784
    %v786 = vmul.f32 %v765, 1.442695
    %v787 = vpow.pop %v786
    %v788 = vmul.f32 %v766, 1.442695
    %v789 = vpow.pop %v788
    %v790 = vmul.f32 %v767, 1.442695
    %v791 = vpow.pop %v790
    %v792 = vmul.f32 %v768, 1.442695
    %v793 = vpow.pop %v792
    %v794 = vmul.f32 %v769, 1.442695
    %v795 = vpow.pop %v794
    %v796 = vmul.f32 %v770, 1.442695
    %v797 = vpow.pop %v796
    %v798 = vmul.f32 %v771, 1.442695
    %v799 = vpow.pop %v798
    %v800 = vmul.f32 %v772, 1.442695
    %v801 = vpow.pop %v800
    %v802 = vmul.f32 %v773, 1.442695
    %v803 = vpow.pop %v802
    %v804 = vmul.f32 %v774, 1.442695
    %v805 = vpow.pop %v804
    %v806 = vmul.f32 %v775, 1.442695
    %v807 = vpow.pop %v806
    %v808 = vsel %vm403, %v777, 0.0
    %809 = vadd.xlane.f32.xlu0 %v808
    %v810 = vpop.xlane.xlu0 %809
    %v811 = vsel %vm403, %v779, 0.0
    %812 = vadd.xlane.f32.xlu0 %v811
    %v813 = vpop.xlane.xlu0 %812
    %v814 = vsel %vm403, %v781, 0.0
    %815 = vadd.xlane.f32.xlu0 %v814
    %v816 = vpop.xlane.xlu0 %815
    %v817 = vsel %vm403, %v783, 0.0
    %818 = vadd.xlane.f32.xlu0 %v817
    %v819 = vpop.xlane.xlu0 %818
    %v820 = vsel %vm403, %v785, 0.0
    %821 = vadd.xlane.f32.xlu0 %v820
    %v822 = vpop.xlane.xlu0 %821
    %v823 = vsel %vm403, %v787, 0.0
    %824 = vadd.xlane.f32.xlu0 %v823
    %v825 = vpop.xlane.xlu0 %824
    %v826 = vsel %vm403, %v789, 0.0
    %827 = vadd.xlane.f32.xlu0 %v826
    %v828 = vpop.xlane.xlu0 %827
    %v829 = vsel %vm403, %v791, 0.0
    %830 = vadd.xlane.f32.xlu0 %v829
    %v831 = vpop.xlane.xlu0 %830
    %v832 = vsel %vm403, %v793, 0.0
    %833 = vadd.xlane.f32.xlu0 %v832
    %v834 = vpop.xlane.xlu0 %833
    %v835 = vsel %vm403, %v795, 0.0
    %836 = vadd.xlane.f32.xlu0 %v835
    %v837 = vpop.xlane.xlu0 %836
    %v838 = vsel %vm403, %v797, 0.0
    %839 = vadd.xlane.f32.xlu0 %v838
    %v840 = vpop.xlane.xlu0 %839
    %v841 = vsel %vm403, %v799, 0.0
    %842 = vadd.xlane.f32.xlu0 %v841
    %v843 = vpop.xlane.xlu0 %842
    %v844 = vsel %vm403, %v801, 0.0
    %845 = vadd.xlane.f32.xlu0 %v844
    %v846 = vpop.xlane.xlu0 %845
    %v847 = vsel %vm403, %v803, 0.0
    %848 = vadd.xlane.f32.xlu0 %v847
    %v849 = vpop.xlane.xlu0 %848
    %v850 = vsel %vm403, %v805, 0.0
    %851 = vadd.xlane.f32.xlu0 %v850
    %v852 = vpop.xlane.xlu0 %851
    %v853 = vsel %vm403, %v807, 0.0
    %854 = vadd.xlane.f32.xlu0 %v853
    %v855 = vpop.xlane.xlu0 %854
    %v856 = vrcp.pop %v810
    %v857 = vrcp.pop %v813
    %v858 = vrcp.pop %v816
    %v859 = vrcp.pop %v819
    %v860 = vrcp.pop %v822
    %v861 = vrcp.pop %v825
    %v862 = vrcp.pop %v828
    %v863 = vrcp.pop %v831
    %v864 = vrcp.pop %v834
    %v865 = vrcp.pop %v837
    %v866 = vrcp.pop %v840
    %v867 = vrcp.pop %v843
    %v868 = vrcp.pop %v846
    %v869 = vrcp.pop %v849
    %v870 = vrcp.pop %v852
    %v871 = vrcp.pop %v855
    %v872 = vmul.f32 %v777, %v856
    %v873 = vmul.f32 %v779, %v857
    %v874 = vmul.f32 %v781, %v858
    %v875 = vmul.f32 %v783, %v859
    %v876 = vmul.f32 %v785, %v860
    %v877 = vmul.f32 %v787, %v861
    %v878 = vmul.f32 %v789, %v862
    %v879 = vmul.f32 %v791, %v863
    %v880 = vmul.f32 %v793, %v864
    %v881 = vmul.f32 %v795, %v865
    %v882 = vmul.f32 %v797, %v866
    %v883 = vmul.f32 %v799, %v867
    %v884 = vmul.f32 %v801, %v868
    %v885 = vmul.f32 %v803, %v869
    %v886 = vmul.f32 %v805, %v870
    %v887 = vmul.f32 %v807, %v871
    %v889 = vsel %vm403, %v872, 0
    %v892 = vsel %vm403, %v873, 0
    %894 = vmatpush.msra.mxu0 0.0
    %895 = vmatpush.msra.mxu0 0.0
    %896 = vmatpush.msra.mxu0 0.0
    %897 = vmatpush.msra.mxu0 0.0
    %898 = vmatpush.msra.mxu0 0.0
    %899 = vmatpush.msra.mxu0 0.0
    %900 = vmatpush.msra.mxu0 0.0
    %901 = vmatpush.msra.mxu0 0.0
    %902 = vmatpush.msra.mxu0 0.0
    %903 = vmatpush.msra.mxu0 0.0
    %904 = vmatpush.msra.mxu0 0.0
    %905 = vmatpush.msra.mxu0 0.0
    %906 = vmatpush.msra.mxu0 0.0
    %907 = vmatpush.msra.mxu0 0.0
    %908 = vmatpush.msra.mxu0 %v401
    %909 = vmatpush.msra.mxu0 %v399
    %910 = vmatmul.f32.gmra.mxu0 %v889
    %v911 = vpop.f32.mrf.mxu0
    %v912 = vadd.f32 0.0, %v911
    %913 = vmatmul.f32.gmra.mxu0 %v892
    %v914 = vpop.f32.mrf.mxu0
    %v915 = vadd.f32 0.0, %v914
    %916 = vdwg.mxu0
    %919 = vrot.lane.b32.xlu0 %v399, 112
    %v920 = vpop.permute.xlu0 %919
    %921 = vrot.lane.b32.xlu0 %v401, 112
    %v922 = vpop.permute.xlu0 %921
    %v926 = vsel %vm403, %v874, 0
    %v929 = vsel %vm403, %v875, 0
    %931 = vmatpush.msra.mxu0 0.0
    %932 = vmatpush.msra.mxu0 0.0
    %933 = vmatpush.msra.mxu0 0.0
    %934 = vmatpush.msra.mxu0 0.0
    %935 = vmatpush.msra.mxu0 0.0
    %936 = vmatpush.msra.mxu0 0.0
    %937 = vmatpush.msra.mxu0 0.0
    %938 = vmatpush.msra.mxu0 0.0
    %939 = vmatpush.msra.mxu0 0.0
    %940 = vmatpush.msra.mxu0 0.0
    %941 = vmatpush.msra.mxu0 0.0
    %942 = vmatpush.msra.mxu0 0.0
    %943 = vmatpush.msra.mxu0 0.0
    %944 = vmatpush.msra.mxu0 0.0
    %945 = vmatpush.msra.mxu0 %v922
    %946 = vmatpush.msra.mxu0 %v920
    %947 = vmatmul.f32.gmra.mxu0 %v926
    %v948 = vpop.f32.mrf.mxu0
    %v949 = vadd.f32 0.0, %v948
    %950 = vmatmul.f32.gmra.mxu0 %v929
    %v951 = vpop.f32.mrf.mxu0
    %v952 = vadd.f32 0.0, %v951
    %953 = vdwg.mxu0
    %954 = vrot.lane.b32.xlu0 %v399, 96
    %v955 = vpop.permute.xlu0 %954
    %956 = vrot.lane.b32.xlu0 %v401, 96
    %v957 = vpop.permute.xlu0 %956
    %v961 = vsel %vm403, %v876, 0
    %v964 = vsel %vm403, %v877, 0
    %966 = vmatpush.msra.mxu0 0.0
    %967 = vmatpush.msra.mxu0 0.0
    %968 = vmatpush.msra.mxu0 0.0
    %969 = vmatpush.msra.mxu0 0.0
    %970 = vmatpush.msra.mxu0 0.0
    %971 = vmatpush.msra.mxu0 0.0
    %972 = vmatpush.msra.mxu0 0.0
    %973 = vmatpush.msra.mxu0 0.0
    %974 = vmatpush.msra.mxu0 0.0
    %975 = vmatpush.msra.mxu0 0.0
    %976 = vmatpush.msra.mxu0 0.0
    %977 = vmatpush.msra.mxu0 0.0
    %978 = vmatpush.msra.mxu0 0.0
    %979 = vmatpush.msra.mxu0 0.0
    %980 = vmatpush.msra.mxu0 %v957
    %981 = vmatpush.msra.mxu0 %v955
    %982 = vmatmul.f32.gmra.mxu0 %v961
    %v983 = vpop.f32.mrf.mxu0
    %v984 = vadd.f32 0.0, %v983
    %985 = vmatmul.f32.gmra.mxu0 %v964
    %v986 = vpop.f32.mrf.mxu0
    %v987 = vadd.f32 0.0, %v986
    %988 = vdwg.mxu0
    %989 = vrot.lane.b32.xlu0 %v399, 80
    %v990 = vpop.permute.xlu0 %989
    %991 = vrot.lane.b32.xlu0 %v401, 80
    %v992 = vpop.permute.xlu0 %991
    %v996 = vsel %vm403, %v878, 0
    %v999 = vsel %vm403, %v879, 0
    %1001 = vmatpush.msra.mxu0 0.0
    %1002 = vmatpush.msra.mxu0 0.0
    %1003 = vmatpush.msra.mxu0 0.0
    %1004 = vmatpush.msra.mxu0 0.0
    %1005 = vmatpush.msra.mxu0 0.0
    %1006 = vmatpush.msra.mxu0 0.0
    %1007 = vmatpush.msra.mxu0 0.0
    %1008 = vmatpush.msra.mxu0 0.0
    %1009 = vmatpush.msra.mxu0 0.0
    %1010 = vmatpush.msra.mxu0 0.0
    %1011 = vmatpush.msra.mxu0 0.0
    %1012 = vmatpush.msra.mxu0 0.0
    %1013 = vmatpush.msra.mxu0 0.0
    %1014 = vmatpush.msra.mxu0 0.0
    %1015 = vmatpush.msra.mxu0 %v992
    %1016 = vmatpush.msra.mxu0 %v990
    %1017 = vmatmul.f32.gmra.mxu0 %v996
    %v1018 = vpop.f32.mrf.mxu0
    %v1019 = vadd.f32 0.0, %v1018
    %1020 = vmatmul.f32.gmra.mxu0 %v999
    %v1021 = vpop.f32.mrf.mxu0
    %v1022 = vadd.f32 0.0, %v1021
    %1023 = vdwg.mxu0
    %1024 = vrot.lane.b32.xlu0 %v399, 64
    %v1025 = vpop.permute.xlu0 %1024
    %1026 = vrot.lane.b32.xlu0 %v401, 64
    %v1027 = vpop.permute.xlu0 %1026
    %v1031 = vsel %vm403, %v880, 0
    %v1034 = vsel %vm403, %v881, 0
    %1036 = vmatpush.msra.mxu0 0.0
    %1037 = vmatpush.msra.mxu0 0.0
    %1038 = vmatpush.msra.mxu0 0.0
    %1039 = vmatpush.msra.mxu0 0.0
    %1040 = vmatpush.msra.mxu0 0.0
    %1041 = vmatpush.msra.mxu0 0.0
    %1042 = vmatpush.msra.mxu0 0.0
    %1043 = vmatpush.msra.mxu0 0.0
    %1044 = vmatpush.msra.mxu0 0.0
    %1045 = vmatpush.msra.mxu0 0.0
    %1046 = vmatpush.msra.mxu0 0.0
    %1047 = vmatpush.msra.mxu0 0.0
    %1048 = vmatpush.msra.mxu0 0.0
    %1049 = vmatpush.msra.mxu0 0.0
    %1050 = vmatpush.msra.mxu0 %v1027
    %1051 = vmatpush.msra.mxu0 %v1025
    %1052 = vmatmul.f32.gmra.mxu0 %v1031
    %v1053 = vpop.f32.mrf.mxu0
    %v1054 = vadd.f32 0.0, %v1053
    %1055 = vmatmul.f32.gmra.mxu0 %v1034
    %v1056 = vpop.f32.mrf.mxu0
    %v1057 = vadd.f32 0.0, %v1056
    %1058 = vdwg.mxu0
    %1059 = vrot.lane.b32.xlu0 %v399, 48
    %v1060 = vpop.permute.xlu0 %1059
    %1061 = vrot.lane.b32.xlu0 %v401, 48
    %v1062 = vpop.permute.xlu0 %1061
    %v1066 = vsel %vm403, %v882, 0
    %v1069 = vsel %vm403, %v883, 0
    %1071 = vmatpush.msra.mxu0 0.0
    %1072 = vmatpush.msra.mxu0 0.0
    %1073 = vmatpush.msra.mxu0 0.0
    %1074 = vmatpush.msra.mxu0 0.0
    %1075 = vmatpush.msra.mxu0 0.0
    %1076 = vmatpush.msra.mxu0 0.0
    %1077 = vmatpush.msra.mxu0 0.0
    %1078 = vmatpush.msra.mxu0 0.0
    %1079 = vmatpush.msra.mxu0 0.0
    %1080 = vmatpush.msra.mxu0 0.0
    %1081 = vmatpush.msra.mxu0 0.0
    %1082 = vmatpush.msra.mxu0 0.0
    %1083 = vmatpush.msra.mxu0 0.0
    %1084 = vmatpush.msra.mxu0 0.0
    %1085 = vmatpush.msra.mxu0 %v1062
    %1086 = vmatpush.msra.mxu0 %v1060
    %1087 = vmatmul.f32.gmra.mxu0 %v1066
    %v1088 = vpop.f32.mrf.mxu0
    %v1089 = vadd.f32 0.0, %v1088
    %1090 = vmatmul.f32.gmra.mxu0 %v1069
    %v1091 = vpop.f32.mrf.mxu0
    %v1092 = vadd.f32 0.0, %v1091
    %1093 = vdwg.mxu0
    %1094 = vrot.lane.b32.xlu0 %v399, 32
    %v1095 = vpop.permute.xlu0 %1094
    %1096 = vrot.lane.b32.xlu0 %v401, 32
    %v1097 = vpop.permute.xlu0 %1096
    %v1101 = vsel %vm403, %v884, 0
    %v1104 = vsel %vm403, %v885, 0
    %1106 = vmatpush.msra.mxu0 0.0
    %1107 = vmatpush.msra.mxu0 0.0
    %1108 = vmatpush.msra.mxu0 0.0
    %1109 = vmatpush.msra.mxu0 0.0
    %1110 = vmatpush.msra.mxu0 0.0
    %1111 = vmatpush.msra.mxu0 0.0
    %1112 = vmatpush.msra.mxu0 0.0
    %1113 = vmatpush.msra.mxu0 0.0
    %1114 = vmatpush.msra.mxu0 0.0
    %1115 = vmatpush.msra.mxu0 0.0
    %1116 = vmatpush.msra.mxu0 0.0
    %1117 = vmatpush.msra.mxu0 0.0
    %1118 = vmatpush.msra.mxu0 0.0
    %1119 = vmatpush.msra.mxu0 0.0
    %1120 = vmatpush.msra.mxu0 %v1097
    %1121 = vmatpush.msra.mxu0 %v1095
    %1122 = vmatmul.f32.gmra.mxu0 %v1101
    %v1123 = vpop.f32.mrf.mxu0
    %v1124 = vadd.f32 0.0, %v1123
    %1125 = vmatmul.f32.gmra.mxu0 %v1104
    %v1126 = vpop.f32.mrf.mxu0
    %v1127 = vadd.f32 0.0, %v1126
    %1128 = vdwg.mxu0
    %1129 = vrot.lane.b32.xlu0 %v399, 16
    %v1130 = vpop.permute.xlu0 %1129
    %1131 = vrot.lane.b32.xlu0 %v401, 16
    %v1132 = vpop.permute.xlu0 %1131
    %v1136 = vsel %vm403, %v886, 0
    %v1139 = vsel %vm403, %v887, 0
    %1141 = vmatpush.msra.mxu0 0.0
    %1142 = vmatpush.msra.mxu0 0.0
    %1143 = vmatpush.msra.mxu0 0.0
    %1144 = vmatpush.msra.mxu0 0.0
    %1145 = vmatpush.msra.mxu0 0.0
    %1146 = vmatpush.msra.mxu0 0.0
    %1147 = vmatpush.msra.mxu0 0.0
    %1148 = vmatpush.msra.mxu0 0.0
    %1149 = vmatpush.msra.mxu0 0.0
    %1150 = vmatpush.msra.mxu0 0.0
    %1151 = vmatpush.msra.mxu0 0.0
    %1152 = vmatpush.msra.mxu0 0.0
    %1153 = vmatpush.msra.mxu0 0.0
    %1154 = vmatpush.msra.mxu0 0.0
    %1155 = vmatpush.msra.mxu0 %v1132
    %1156 = vmatpush.msra.mxu0 %v1130
    %1157 = vmatmul.f32.gmra.mxu0 %v1136
    %v1158 = vpop.f32.mrf.mxu0
    %v1159 = vadd.f32 0.0, %v1158
    %1160 = vmatmul.f32.gmra.mxu0 %v1139
    %v1161 = vpop.f32.mrf.mxu0
    %v1162 = vadd.f32 0.0, %v1161
    %1163 = vdwg.mxu0
    %1166 = vrot.lane.b32.xlu0 %v949, 16
    %v1167 = vpop.permute.xlu0 %1166
    %1168 = vrot.lane.b32.xlu0 %v952, 16
    %v1169 = vpop.permute.xlu0 %1168
    %1174 = vrot.lane.b32.xlu0 %v984, 32
    %v1175 = vpop.permute.xlu0 %1174
    %1176 = vrot.lane.b32.xlu0 %v987, 32
    %v1177 = vpop.permute.xlu0 %1176
    %1182 = vrot.lane.b32.xlu0 %v1019, 48
    %v1183 = vpop.permute.xlu0 %1182
    %1184 = vrot.lane.b32.xlu0 %v1022, 48
    %v1185 = vpop.permute.xlu0 %1184
    %1190 = vrot.lane.b32.xlu0 %v1054, 64
    %v1191 = vpop.permute.xlu0 %1190
    %1192 = vrot.lane.b32.xlu0 %v1057, 64
    %v1193 = vpop.permute.xlu0 %1192
    %1198 = vrot.lane.b32.xlu0 %v1089, 80
    %v1199 = vpop.permute.xlu0 %1198
    %1200 = vrot.lane.b32.xlu0 %v1092, 80
    %v1201 = vpop.permute.xlu0 %1200
    %1206 = vrot.lane.b32.xlu0 %v1124, 96
    %v1207 = vpop.permute.xlu0 %1206
    %1208 = vrot.lane.b32.xlu0 %v1127, 96
    %v1209 = vpop.permute.xlu0 %1208
    %1214 = vrot.lane.b32.xlu0 %v1159, 112
    %v1215 = vpop.permute.xlu0 %1214
    %1216 = vrot.lane.b32.xlu0 %v1162, 112
    %v1217 = vpop.permute.xlu0 %1216
    %v1220 = vsel %vm403, %v912, %v1167
    %v1221 = vsel %vm403, %v915, %v1169
    %v1222 = vsel %vm144, %v1220, %v1175
    %v1223 = vsel %vm144, %v1221, %v1177
    %vm1224 = vcmask 392192
    %v1225 = vsel %vm1224, %v1222, %v1183
    %v1226 = vsel %vm1224, %v1223, %v1185
    %vm1227 = vcmask 523264
    %v1228 = vsel %vm1227, %v1225, %v1191
    %v1229 = vsel %vm1227, %v1226, %v1193
    %vm1230 = vcmask 654336
    %v1231 = vsel %vm1230, %v1228, %v1199
    %v1232 = vsel %vm1230, %v1229, %v1201
    %vm1233 = vcmask 785408
    %v1234 = vsel %vm1233, %v1231, %v1207
    %v1235 = vsel %vm1233, %v1232, %v1209
    %vm1236 = vcmask 916480
    %v1237 = vsel %vm1236, %v1234, %v1215
    %v1238 = vsel %vm1236, %v1235, %v1217
    %v1239 = vpack.c.bf16 %v1238, %v1237
    %v1240 = vld [vmem:[#allocation7 + $0xd8] sm:$0xf]
    %v1241 = vld [vmem:[#allocation7 + $0xdc] sm:$0xf]
    %v1242 = vld [vmem:[#allocation7 + $0xe0] sm:$0xf]
    %v1243 = vld [vmem:[#allocation7 + $0xe4] sm:$0xf]
    %v1244 = vld [vmem:[#allocation7 + $0xe8] sm:$0xf]
    %v1245 = vld [vmem:[#allocation7 + $0xec] sm:$0xf]
    %v1246 = vld [vmem:[#allocation7 + $0xf0] sm:$0xf]
    %v1247 = vld [vmem:[#allocation7 + $0xf4] sm:$0xf]
    %v1248 = vld [vmem:[#allocation7 + $0xf8] sm:$0xf]
    %v1249 = vld [vmem:[#allocation7 + $0xfc] sm:$0xf]
    %v1250 = vld [vmem:[#allocation7 + $0x100] sm:$0xf]
    %v1251 = vld [vmem:[#allocation7 + $0x104] sm:$0xf]
    %v1252 = vld [vmem:[#allocation7 + $0x108] sm:$0xf]
    %v1253 = vld [vmem:[#allocation7 + $0x10c] sm:$0xf]
    %v1254 = vld [vmem:[#allocation7 + $0x110] sm:$0xf]
    %v1255 = vld [vmem:[#allocation7 + $0x114] sm:$0xf]
    %v1256 = vld [vmem:[#allocation9 + $0x18] sm:$0x1]
    %v1257 = vperm.slane %v1256, 0
    %v1274 = vunpack.c.l.b16 %v1240
    %v1275 = vunpack.c.l.b16 %v1241
    %v1276 = vunpack.c.l.b16 %v1242
    %v1277 = vunpack.c.l.b16 %v1243
    %v1278 = vunpack.c.l.b16 %v1244
    %v1279 = vunpack.c.l.b16 %v1245
    %v1280 = vunpack.c.l.b16 %v1246
    %v1281 = vunpack.c.l.b16 %v1247
    %v1282 = vunpack.c.l.b16 %v1248
    %v1283 = vunpack.c.l.b16 %v1249
    %v1284 = vunpack.c.l.b16 %v1250
    %v1285 = vunpack.c.l.b16 %v1251
    %v1286 = vunpack.c.l.b16 %v1252
    %v1287 = vunpack.c.l.b16 %v1253
    %v1288 = vunpack.c.l.b16 %v1254
    %v1289 = vunpack.c.l.b16 %v1255
    %v1290 = vpack.c.b16 %v1275, %v1274
    %v1291 = vpack.c.b16 %v1277, %v1276
    %v1292 = vpack.c.b16 %v1279, %v1278
    %v1293 = vpack.c.b16 %v1281, %v1280
    %v1294 = vpack.c.b16 %v1283, %v1282
    %v1295 = vpack.c.b16 %v1285, %v1284
    %v1296 = vpack.c.b16 %v1287, %v1286
    %v1297 = vpack.c.b16 %v1289, %v1288
    %1306 = vmatpush.bf16.msra.mxu0 %v1297
    %1307 = vmatpush.bf16.msra.mxu0 %v1296
    %1308 = vmatpush.bf16.msra.mxu0 %v1295
    %1309 = vmatpush.bf16.msra.mxu0 %v1294
    %1310 = vmatpush.bf16.msra.mxu0 %v1293
    %1311 = vmatpush.bf16.msra.mxu0 %v1292
    %1312 = vmatpush.bf16.msra.mxu0 %v1291
    %1313 = vmatpush.bf16.msra.mxu0 %v1290
    %1314 = vmatmul.bf16.gmra.mxu0 %v1239
    %v1315 = vpop.f32.mrf.mxu0
    %v1316 = vadd.f32 %v1257, %v1315
    %v1317 = vpop.f32.mrf.mxu0
    %v1318 = vadd.f32 %v1257, %v1317
    %1319 = vdwg.mxu0
    %v1320 = vadd.f32 %v158, %v1316
    %v1321 = vadd.f32 %v160, %v1318
    %1322 = vadd.xlane.f32.xlu0 %v1320
    %v1323 = vpop.xlane.xlu0 %1322
    %1324 = vadd.xlane.f32.xlu0 %v1321
    %v1325 = vpop.xlane.xlu0 %1324
    %v1326 = vrcp.pop 128.0
    %v1327 = vmul.f32 128.0, %v1326
    %v1328 = vsub.f32 1.0, %v1327
    %v1329 = vmul.f32 %v1326, %v1328
    %v1330 = vadd.f32 %v1326, %v1329
    %vm1331 = vweird.f32 %v1326
    %v1332 = vsel %vm1331, %v1326, %v1330
    %v1333 = vmul.f32 %v1323, %v1332
    %v1334 = vmul.f32 %v1325, %v1332
    %v1335 = vsub.f32 %v1320, %v1333
    %v1336 = vsub.f32 %v1321, %v1334
    %v1337 = vmul.f32 %v1335, %v1335
    %v1338 = vmul.f32 %v1336, %v1336
    %1339 = vadd.xlane.f32.xlu0 %v1337
    %v1340 = vpop.xlane.xlu0 %1339
    %1341 = vadd.xlane.f32.xlu0 %v1338
    %v1342 = vpop.xlane.xlu0 %1341
    %v1343 = vmul.f32 %v1340, %v1332
    %v1344 = vmul.f32 %v1342, %v1332
    %v1345 = vadd.f32 %v1343, 1e-05
    %v1346 = vadd.f32 %v1344, 1e-05
    %v1347 = vrsqrt.pop %v1345
    %v1348 = vmul.f32 %v1347, %v1345
    %v1349 = vmul.f32 %v1348, %v1347
    %v1350 = vmul.f32 0.5, %v1349
    %v1351 = vsub.f32 1.5, %v1350
    %v1352 = vmul.f32 %v1347, %v1351
    %vm1353 = vweird.f32 %v1345
    %vm1354 = vweird.f32 %v1347
    %vm1355 = vmor %vm1353, %vm1354
    %v1356 = vsel %vm1355, %v1347, %v1352
    %v1357 = vrsqrt.pop %v1346
    %v1358 = vmul.f32 %v1357, %v1346
    %v1359 = vmul.f32 %v1358, %v1357
    %v1360 = vmul.f32 0.5, %v1359
    %v1361 = vsub.f32 1.5, %v1360
    %v1362 = vmul.f32 %v1357, %v1361
    %vm1363 = vweird.f32 %v1346
    %vm1364 = vweird.f32 %v1357
    %vm1365 = vmor %vm1363, %vm1364
    %v1366 = vsel %vm1365, %v1357, %v1362
    %v1367 = vmul.f32 %v1335, %v1356
    %v1368 = vmul.f32 %v1336, %v1366
    %v1369 = vld [vmem:[#allocation9 + $0x20] sm:$0x1]
    %v1370 = vperm.slane %v1369, 0
    %v1371 = vmul.f32 %v1367, %v1370
    %v1372 = vmul.f32 %v1368, %v1370
    %v1373 = vld [vmem:[#allocation9 + $0x28] sm:$0x1]
    %v1374 = vperm.slane %v1373, 0
    %v1375 = vadd.f32 %v1371, %v1374
    %v1376 = vadd.f32 %v1372, %v1374
    %v1377 = vpack.c.bf16 %v1376, %v1375
    %v1378 = vld [vmem:[#allocation7 + $0x118] sm:$0xf]
    %v1379 = vld [vmem:[#allocation7 + $0x11c] sm:$0xf]
    %v1380 = vld [vmem:[#allocation7 + $0x120] sm:$0xf]
    %v1381 = vld [vmem:[#allocation7 + $0x124] sm:$0xf]
    %v1382 = vld [vmem:[#allocation7 + $0x128] sm:$0xf]
    %v1383 = vld [vmem:[#allocation7 + $0x12c] sm:$0xf]
    %v1384 = vld [vmem:[#allocation7 + $0x130] sm:$0xf]
    %v1385 = vld [vmem:[#allocation7 + $0x134] sm:$0xf]
    %v1386 = vld [vmem:[#allocation7 + $0x138] sm:$0xf]
    %v1387 = vld [vmem:[#allocation7 + $0x13c] sm:$0xf]
    %v1388 = vld [vmem:[#allocation7 + $0x140] sm:$0xf]
    %v1389 = vld [vmem:[#allocation7 + $0x144] sm:$0xf]
    %v1390 = vld [vmem:[#allocation7 + $0x148] sm:$0xf]
    %v1391 = vld [vmem:[#allocation7 + $0x14c] sm:$0xf]
    %v1392 = vld [vmem:[#allocation7 + $0x150] sm:$0xf]
    %v1393 = vld [vmem:[#allocation7 + $0x154] sm:$0xf]
    %v1394 = vld [vmem:[#allocation9 + $0x30] sm:$0x1]
    %v1395 = vperm.slane %v1394, 0
    %v1412 = vunpack.c.l.b16 %v1378
    %v1413 = vunpack.c.l.b16 %v1379
    %v1414 = vunpack.c.l.b16 %v1380
    %v1415 = vunpack.c.l.b16 %v1381
    %v1416 = vunpack.c.l.b16 %v1382
    %v1417 = vunpack.c.l.b16 %v1383
    %v1418 = vunpack.c.l.b16 %v1384
    %v1419 = vunpack.c.l.b16 %v1385
    %v1420 = vunpack.c.l.b16 %v1386
    %v1421 = vunpack.c.l.b16 %v1387
    %v1422 = vunpack.c.l.b16 %v1388
    %v1423 = vunpack.c.l.b16 %v1389
    %v1424 = vunpack.c.l.b16 %v1390
    %v1425 = vunpack.c.l.b16 %v1391
    %v1426 = vunpack.c.l.b16 %v1392
    %v1427 = vunpack.c.l.b16 %v1393
    %v1428 = vpack.c.b16 %v1413, %v1412
    %v1429 = vpack.c.b16 %v1415, %v1414
    %v1430 = vpack.c.b16 %v1417, %v1416
    %v1431 = vpack.c.b16 %v1419, %v1418
    %v1432 = vpack.c.b16 %v1421, %v1420
    %v1433 = vpack.c.b16 %v1423, %v1422
    %v1434 = vpack.c.b16 %v1425, %v1424
    %v1435 = vpack.c.b16 %v1427, %v1426
    %1444 = vmatpush.bf16.msra.mxu0 %v1435
    %1445 = vmatpush.bf16.msra.mxu0 %v1434
    %1446 = vmatpush.bf16.msra.mxu0 %v1433
    %1447 = vmatpush.bf16.msra.mxu0 %v1432
    %1448 = vmatpush.bf16.msra.mxu0 %v1431
    %1449 = vmatpush.bf16.msra.mxu0 %v1430
    %1450 = vmatpush.bf16.msra.mxu0 %v1429
    %1451 = vmatpush.bf16.msra.mxu0 %v1428
    %1452 = vmatmul.bf16.gmra.mxu0 %v1377
    %v1453 = vpop.f32.mrf.mxu0
    %v1454 = vadd.f32 %v1395, %v1453
    %v1455 = vpop.f32.mrf.mxu0
    %v1456 = vadd.f32 %v1395, %v1455
    %1457 = vdwg.mxu0
    %v1458 = vmax.f32 %v1454, 0.0
    %v1459 = vmax.f32 %v1456, 0.0
    %v1460 = vpack.c.bf16 %v1459, %v1458
    %v1461 = vld [vmem:[#allocation7 + $0x158] sm:$0xf]
    %v1462 = vld [vmem:[#allocation7 + $0x15c] sm:$0xf]
    %v1463 = vld [vmem:[#allocation7 + $0x160] sm:$0xf]
    %v1464 = vld [vmem:[#allocation7 + $0x164] sm:$0xf]
    %v1465 = vld [vmem:[#allocation7 + $0x168] sm:$0xf]
    %v1466 = vld [vmem:[#allocation7 + $0x16c] sm:$0xf]
    %v1467 = vld [vmem:[#allocation7 + $0x170] sm:$0xf]
    %v1468 = vld [vmem:[#allocation7 + $0x174] sm:$0xf]
    %v1469 = vld [vmem:[#allocation7 + $0x178] sm:$0xf]
    %v1470 = vld [vmem:[#allocation7 + $0x17c] sm:$0xf]
    %v1471 = vld [vmem:[#allocation7 + $0x180] sm:$0xf]
    %v1472 = vld [vmem:[#allocation7 + $0x184] sm:$0xf]
    %v1473 = vld [vmem:[#allocation7 + $0x188] sm:$0xf]
    %v1474 = vld [vmem:[#allocation7 + $0x18c] sm:$0xf]
    %v1475 = vld [vmem:[#allocation7 + $0x190] sm:$0xf]
    %v1476 = vld [vmem:[#allocation7 + $0x194] sm:$0xf]
    %v1477 = vld [vmem:[#allocation9 + $0x38] sm:$0x1]
    %v1478 = vperm.slane %v1477, 0
    %v1495 = vunpack.c.l.b16 %v1461
    %v1496 = vunpack.c.l.b16 %v1462
    %v1497 = vunpack.c.l.b16 %v1463
    %v1498 = vunpack.c.l.b16 %v1464
    %v1499 = vunpack.c.l.b16 %v1465
    %v1500 = vunpack.c.l.b16 %v1466
    %v1501 = vunpack.c.l.b16 %v1467
    %v1502 = vunpack.c.l.b16 %v1468
    %v1503 = vunpack.c.l.b16 %v1469
    %v1504 = vunpack.c.l.b16 %v1470
    %v1505 = vunpack.c.l.b16 %v1471
    %v1506 = vunpack.c.l.b16 %v1472
    %v1507 = vunpack.c.l.b16 %v1473
    %v1508 = vunpack.c.l.b16 %v1474
    %v1509 = vunpack.c.l.b16 %v1475
    %v1510 = vunpack.c.l.b16 %v1476
    %v1511 = vpack.c.b16 %v1496, %v1495
    %v1512 = vpack.c.b16 %v1498, %v1497
    %v1513 = vpack.c.b16 %v1500, %v1499
    %v1514 = vpack.c.b16 %v1502, %v1501
    %v1515 = vpack.c.b16 %v1504, %v1503
    %v1516 = vpack.c.b16 %v1506, %v1505
    %v1517 = vpack.c.b16 %v1508, %v1507
    %v1518 = vpack.c.b16 %v1510, %v1509
    %1527 = vmatpush.bf16.msra.mxu0 %v1518
    %1528 = vmatpush.bf16.msra.mxu0 %v1517
    %1529 = vmatpush.bf16.msra.mxu0 %v1516
    %1530 = vmatpush.bf16.msra.mxu0 %v1515
    %1531 = vmatpush.bf16.msra.mxu0 %v1514
    %1532 = vmatpush.bf16.msra.mxu0 %v1513
    %1533 = vmatpush.bf16.msra.mxu0 %v1512
    %1534 = vmatpush.bf16.msra.mxu0 %v1511
    %1535 = vmatmul.bf16.gmra.mxu0 %v1460
    %v1536 = vpop.f32.mrf.mxu0
    %v1537 = vadd.f32 %v1478, %v1536
    %v1538 = vpop.f32.mrf.mxu0
    %v1539 = vadd.f32 %v1478, %v1538
    %1540 = vdwg.mxu0
    %v1541 = vadd.f32 %v1375, %v1537
    %v1542 = vadd.f32 %v1376, %v1539
    %1543 = vadd.xlane.f32.xlu0 %v1541
    %v1544 = vpop.xlane.xlu0 %1543
    %1545 = vadd.xlane.f32.xlu0 %v1542
    %v1546 = vpop.xlane.xlu0 %1545
    %v1547 = vmul.f32 %v1544, %v1332
    %v1548 = vmul.f32 %v1546, %v1332
    %v1549 = vsub.f32 %v1541, %v1547
    %v1550 = vsub.f32 %v1542, %v1548
    %v1551 = vmul.f32 %v1549, %v1549
    %v1552 = vmul.f32 %v1550, %v1550
    %1553 = vadd.xlane.f32.xlu0 %v1551
    %v1554 = vpop.xlane.xlu0 %1553
    %1555 = vadd.xlane.f32.xlu0 %v1552
    %v1556 = vpop.xlane.xlu0 %1555
    %v1557 = vmul.f32 %v1554, %v1332
    %v1558 = vmul.f32 %v1556, %v1332
    %v1559 = vadd.f32 %v1557, 1e-05
    %v1560 = vadd.f32 %v1558, 1e-05
    %v1561 = vrsqrt.pop %v1559
    %v1562 = vmul.f32 %v1561, %v1559
    %v1563 = vmul.f32 %v1562, %v1561
    %v1564 = vmul.f32 0.5, %v1563
    %v1565 = vsub.f32 1.5, %v1564
    %v1566 = vmul.f32 %v1561, %v1565
    %vm1567 = vweird.f32 %v1559
    %vm1568 = vweird.f32 %v1561
    %vm1569 = vmor %vm1567, %vm1568
    %v1570 = vsel %vm1569, %v1561, %v1566
    %v1571 = vrsqrt.pop %v1560
    %v1572 = vmul.f32 %v1571, %v1560
    %v1573 = vmul.f32 %v1572, %v1571
    %v1574 = vmul.f32 0.5, %v1573
    %v1575 = vsub.f32 1.5, %v1574
    %v1576 = vmul.f32 %v1571, %v1575
    %vm1577 = vweird.f32 %v1560
    %vm1578 = vweird.f32 %v1571
    %vm1579 = vmor %vm1577, %vm1578
    %v1580 = vsel %vm1579, %v1571, %v1576
    %v1581 = vmul.f32 %v1549, %v1570
    %v1582 = vmul.f32 %v1550, %v1580
    %v1583 = vld [vmem:[#allocation9 + $0x40] sm:$0x1]
    %v1584 = vperm.slane %v1583, 0
    %v1585 = vmul.f32 %v1581, %v1584
    %v1586 = vmul.f32 %v1582, %v1584
    %v1587 = vld [vmem:[#allocation9 + $0x48] sm:$0x1]
    %v1588 = vperm.slane %v1587, 0
    %v1589 = vadd.f32 %v1585, %v1588
    %v1590 = vadd.f32 %v1586, %v1588
    %v1591 = vpack.c.bf16 %v1590, %v1589
    %v1592 = vld [vmem:[#allocation7 + $0x198] sm:$0xf]
    %v1593 = vld [vmem:[#allocation7 + $0x19c] sm:$0xf]
    %v1594 = vld [vmem:[#allocation7 + $0x1a0] sm:$0xf]
    %v1595 = vld [vmem:[#allocation7 + $0x1a4] sm:$0xf]
    %v1596 = vld [vmem:[#allocation7 + $0x1a8] sm:$0xf]
    %v1597 = vld [vmem:[#allocation7 + $0x1ac] sm:$0xf]
    %v1598 = vld [vmem:[#allocation7 + $0x1b0] sm:$0xf]
    %v1599 = vld [vmem:[#allocation7 + $0x1b4] sm:$0xf]
    %v1600 = vld [vmem:[#allocation7 + $0x1b8] sm:$0xf]
    %v1601 = vld [vmem:[#allocation7 + $0x1bc] sm:$0xf]
    %v1602 = vld [vmem:[#allocation7 + $0x1c0] sm:$0xf]
    %v1603 = vld [vmem:[#allocation7 + $0x1c4] sm:$0xf]
    %v1604 = vld [vmem:[#allocation7 + $0x1c8] sm:$0xf]
    %v1605 = vld [vmem:[#allocation7 + $0x1cc] sm:$0xf]
    %v1606 = vld [vmem:[#allocation7 + $0x1d0] sm:$0xf]
    %v1607 = vld [vmem:[#allocation7 + $0x1d4] sm:$0xf]
    %v1608 = vld [vmem:[#allocation9 + $0x50] sm:$0x1]
    %v1609 = vperm.slane %v1608, 0
    %v1626 = vunpack.c.l.b16 %v1592
    %v1627 = vunpack.c.l.b16 %v1593
    %v1628 = vunpack.c.l.b16 %v1594
    %v1629 = vunpack.c.l.b16 %v1595
    %v1630 = vunpack.c.l.b16 %v1596
    %v1631 = vunpack.c.l.b16 %v1597
    %v1632 = vunpack.c.l.b16 %v1598
    %v1633 = vunpack.c.l.b16 %v1599
    %v1634 = vunpack.c.l.b16 %v1600
    %v1635 = vunpack.c.l.b16 %v1601
    %v1636 = vunpack.c.l.b16 %v1602
    %v1637 = vunpack.c.l.b16 %v1603
    %v1638 = vunpack.c.l.b16 %v1604
    %v1639 = vunpack.c.l.b16 %v1605
    %v1640 = vunpack.c.l.b16 %v1606
    %v1641 = vunpack.c.l.b16 %v1607
    %v1642 = vpack.c.b16 %v1627, %v1626
    %v1643 = vpack.c.b16 %v1629, %v1628
    %v1644 = vpack.c.b16 %v1631, %v1630
    %v1645 = vpack.c.b16 %v1633, %v1632
    %v1646 = vpack.c.b16 %v1635, %v1634
    %v1647 = vpack.c.b16 %v1637, %v1636
    %v1648 = vpack.c.b16 %v1639, %v1638
    %v1649 = vpack.c.b16 %v1641, %v1640
    %1658 = vmatpush.bf16.msra.mxu0 %v1649
    %1659 = vmatpush.bf16.msra.mxu0 %v1648
    %1660 = vmatpush.bf16.msra.mxu0 %v1647
    %1661 = vmatpush.bf16.msra.mxu0 %v1646
    %1662 = vmatpush.bf16.msra.mxu0 %v1645
    %1663 = vmatpush.bf16.msra.mxu0 %v1644
    %1664 = vmatpush.bf16.msra.mxu0 %v1643
    %1665 = vmatpush.bf16.msra.mxu0 %v1642
    %1666 = vmatmul.bf16.gmra.mxu0 %v1591
    %v1667 = vpop.f32.mrf.mxu0
    %v1668 = vadd.f32 %v1609, %v1667
    %v1669 = vpop.f32.mrf.mxu0
    %v1670 = vadd.f32 %v1609, %v1669
    %1671 = vdwg.mxu0
    %v1672 = vld [vmem:[#allocation7 + $0x1d8] sm:$0xf]
    %v1673 = vld [vmem:[#allocation7 + $0x1dc] sm:$0xf]
    %v1674 = vld [vmem:[#allocation7 + $0x1e0] sm:$0xf]
    %v1675 = vld [vmem:[#allocation7 + $0x1e4] sm:$0xf]
    %v1676 = vld [vmem:[#allocation7 + $0x1e8] sm:$0xf]
    %v1677 = vld [vmem:[#allocation7 + $0x1ec] sm:$0xf]
    %v1678 = vld [vmem:[#allocation7 + $0x1f0] sm:$0xf]
    %v1679 = vld [vmem:[#allocation7 + $0x1f4] sm:$0xf]
    %v1680 = vld [vmem:[#allocation7 + $0x1f8] sm:$0xf]
    %v1681 = vld [vmem:[#allocation7 + $0x1fc] sm:$0xf]
    %v1682 = vld [vmem:[#allocation7 + $0x200] sm:$0xf]
    %v1683 = vld [vmem:[#allocation7 + $0x204] sm:$0xf]
    %v1684 = vld [vmem:[#allocation7 + $0x208] sm:$0xf]
    %v1685 = vld [vmem:[#allocation7 + $0x20c] sm:$0xf]
    %v1686 = vld [vmem:[#allocation7 + $0x210] sm:$0xf]
    %v1687 = vld [vmem:[#allocation7 + $0x214] sm:$0xf]
    %v1688 = vld [vmem:[#allocation9 + $0x58] sm:$0x1]
    %v1689 = vperm.slane %v1688, 0
    %v1706 = vunpack.c.l.b16 %v1672
    %v1707 = vunpack.c.l.b16 %v1673
    %v1708 = vunpack.c.l.b16 %v1674
    %v1709 = vunpack.c.l.b16 %v1675
    %v1710 = vunpack.c.l.b16 %v1676
    %v1711 = vunpack.c.l.b16 %v1677
    %v1712 = vunpack.c.l.b16 %v1678
    %v1713 = vunpack.c.l.b16 %v1679
    %v1714 = vunpack.c.l.b16 %v1680
    %v1715 = vunpack.c.l.b16 %v1681
    %v1716 = vunpack.c.l.b16 %v1682
    %v1717 = vunpack.c.l.b16 %v1683
    %v1718 = vunpack.c.l.b16 %v1684
    %v1719 = vunpack.c.l.b16 %v1685
    %v1720 = vunpack.c.l.b16 %v1686
    %v1721 = vunpack.c.l.b16 %v1687
    %v1722 = vpack.c.b16 %v1707, %v1706
    %v1723 = vpack.c.b16 %v1709, %v1708
    %v1724 = vpack.c.b16 %v1711, %v1710
    %v1725 = vpack.c.b16 %v1713, %v1712
    %v1726 = vpack.c.b16 %v1715, %v1714
    %v1727 = vpack.c.b16 %v1717, %v1716
    %v1728 = vpack.c.b16 %v1719, %v1718
    %v1729 = vpack.c.b16 %v1721, %v1720
    %1738 = vmatpush.bf16.msra.mxu0 %v1729
    %1739 = vmatpush.bf16.msra.mxu0 %v1728
    %1740 = vmatpush.bf16.msra.mxu0 %v1727
    %1741 = vmatpush.bf16.msra.mxu0 %v1726
    %1742 = vmatpush.bf16.msra.mxu0 %v1725
    %1743 = vmatpush.bf16.msra.mxu0 %v1724
    %1744 = vmatpush.bf16.msra.mxu0 %v1723
    %1745 = vmatpush.bf16.msra.mxu0 %v1722
    %1746 = vmatmul.bf16.gmra.mxu0 %v1591
    %v1747 = vpop.f32.mrf.mxu0
    %v1748 = vadd.f32 %v1689, %v1747
    %v1749 = vpop.f32.mrf.mxu0
    %v1750 = vadd.f32 %v1689, %v1749
    %1751 = vdwg.mxu0
    %v1752 = vld [vmem:[#allocation7 + $0x218] sm:$0xf]
    %v1753 = vld [vmem:[#allocation7 + $0x21c] sm:$0xf]
    %v1754 = vld [vmem:[#allocation7 + $0x220] sm:$0xf]
    %v1755 = vld [vmem:[#allocation7 + $0x224] sm:$0xf]
    %v1756 = vld [vmem:[#allocation7 + $0x228] sm:$0xf]
    %v1757 = vld [vmem:[#allocation7 + $0x22c] sm:$0xf]
    %v1758 = vld [vmem:[#allocation7 + $0x230] sm:$0xf]
    %v1759 = vld [vmem:[#allocation7 + $0x234] sm:$0xf]
    %v1760 = vld [vmem:[#allocation7 + $0x238] sm:$0xf]
    %v1761 = vld [vmem:[#allocation7 + $0x23c] sm:$0xf]
    %v1762 = vld [vmem:[#allocation7 + $0x240] sm:$0xf]
    %v1763 = vld [vmem:[#allocation7 + $0x244] sm:$0xf]
    %v1764 = vld [vmem:[#allocation7 + $0x248] sm:$0xf]
    %v1765 = vld [vmem:[#allocation7 + $0x24c] sm:$0xf]
    %v1766 = vld [vmem:[#allocation7 + $0x250] sm:$0xf]
    %v1767 = vld [vmem:[#allocation7 + $0x254] sm:$0xf]
    %v1768 = vld [vmem:[#allocation9 + $0x60] sm:$0x1]
    %v1769 = vperm.slane %v1768, 0
    %v1786 = vunpack.c.l.b16 %v1752
    %v1787 = vunpack.c.l.b16 %v1753
    %v1788 = vunpack.c.l.b16 %v1754
    %v1789 = vunpack.c.l.b16 %v1755
    %v1790 = vunpack.c.l.b16 %v1756
    %v1791 = vunpack.c.l.b16 %v1757
    %v1792 = vunpack.c.l.b16 %v1758
    %v1793 = vunpack.c.l.b16 %v1759
    %v1794 = vunpack.c.l.b16 %v1760
    %v1795 = vunpack.c.l.b16 %v1761
    %v1796 = vunpack.c.l.b16 %v1762
    %v1797 = vunpack.c.l.b16 %v1763
    %v1798 = vunpack.c.l.b16 %v1764
    %v1799 = vunpack.c.l.b16 %v1765
    %v1800 = vunpack.c.l.b16 %v1766
    %v1801 = vunpack.c.l.b16 %v1767
    %v1802 = vpack.c.b16 %v1787, %v1786
    %v1803 = vpack.c.b16 %v1789, %v1788
    %v1804 = vpack.c.b16 %v1791, %v1790
    %v1805 = vpack.c.b16 %v1793, %v1792
    %v1806 = vpack.c.b16 %v1795, %v1794
    %v1807 = vpack.c.b16 %v1797, %v1796
    %v1808 = vpack.c.b16 %v1799, %v1798
    %v1809 = vpack.c.b16 %v1801, %v1800
    %1818 = vmatpush.bf16.msra.mxu0 %v1809
    %1819 = vmatpush.bf16.msra.mxu0 %v1808
    %1820 = vmatpush.bf16.msra.mxu0 %v1807
    %1821 = vmatpush.bf16.msra.mxu0 %v1806
    %1822 = vmatpush.bf16.msra.mxu0 %v1805
    %1823 = vmatpush.bf16.msra.mxu0 %v1804
    %1824 = vmatpush.bf16.msra.mxu0 %v1803
    %1825 = vmatpush.bf16.msra.mxu0 %v1802
    %1826 = vmatmul.bf16.gmra.mxu0 %v1591
    %v1827 = vpop.f32.mrf.mxu0
    %v1828 = vadd.f32 %v1769, %v1827
    %v1829 = vpop.f32.mrf.mxu0
    %v1830 = vadd.f32 %v1769, %v1829
    %1831 = vdwg.mxu0
    %v1833 = vsel %vm403, %v1668, 0
    %v1836 = vsel %vm403, %v1670, 0
    %v1839 = vsel %vm403, %v1748, 0
    %v1842 = vsel %vm403, %v1750, 0
    %1844 = vmatpush.xpose.msra.mxu0 0.0
    %1845 = vmatpush.xpose.msra.mxu0 0.0
    %1846 = vmatpush.xpose.msra.mxu0 0.0
    %1847 = vmatpush.xpose.msra.mxu0 0.0
    %1848 = vmatpush.xpose.msra.mxu0 0.0
    %1849 = vmatpush.xpose.msra.mxu0 0.0
    %1850 = vmatpush.xpose.msra.mxu0 0.0
    %1851 = vmatpush.xpose.msra.mxu0 0.0
    %1852 = vmatpush.xpose.msra.mxu0 0.0
    %1853 = vmatpush.xpose.msra.mxu0 0.0
    %1854 = vmatpush.xpose.msra.mxu0 0.0
    %1855 = vmatpush.xpose.msra.mxu0 0.0
    %1856 = vmatpush.xpose.msra.mxu0 0.0
    %1857 = vmatpush.xpose.msra.mxu0 0.0
    %1858 = vmatpush.xpose.msra.mxu0 %v1842
    %1859 = vmatpush.xpose.msra.mxu0 %v1839
    %1860 = vmatmul.f32.gmra.mxu0 %v1833
    %v1861 = vpop.f32.mrf.mxu0
    %v1862 = vadd.f32 %v105, %v1861
    %1863 = vmatmul.f32.gmra.mxu0 %v1836
    %v1864 = vpop.f32.mrf.mxu0
    %v1865 = vadd.f32 %v106, %v1864
    %1866 = vdwg.mxu0
    %1867 = vrot.lane.b32.xlu0 %v1668, 112
    %v1868 = vpop.permute.xlu0 %1867
    %1869 = vrot.lane.b32.xlu0 %v1670, 112
    %v1870 = vpop.permute.xlu0 %1869
    %1871 = vrot.lane.b32.xlu0 %v1748, 112
    %v1872 = vpop.permute.xlu0 %1871
    %1873 = vrot.lane.b32.xlu0 %v1750, 112
    %v1874 = vpop.permute.xlu0 %1873
    %v1875 = vsel %vm403, %v1868, 0
    %v1877 = vsel %vm403, %v1870, 0
    %v1879 = vsel %vm403, %v1872, 0
    %v1881 = vsel %vm403, %v1874, 0
    %1883 = vmatpush.xpose.msra.mxu0 0.0
    %1884 = vmatpush.xpose.msra.mxu0 0.0
    %1885 = vmatpush.xpose.msra.mxu0 0.0
    %1886 = vmatpush.xpose.msra.mxu0 0.0
    %1887 = vmatpush.xpose.msra.mxu0 0.0
    %1888 = vmatpush.xpose.msra.mxu0 0.0
    %1889 = vmatpush.xpose.msra.mxu0 0.0
    %1890 = vmatpush.xpose.msra.mxu0 0.0
    %1891 = vmatpush.xpose.msra.mxu0 0.0
    %1892 = vmatpush.xpose.msra.mxu0 0.0
    %1893 = vmatpush.xpose.msra.mxu0 0.0
    %1894 = vmatpush.xpose.msra.mxu0 0.0
    %1895 = vmatpush.xpose.msra.mxu0 0.0
    %1896 = vmatpush.xpose.msra.mxu0 0.0
    %1897 = vmatpush.xpose.msra.mxu0 %v1881
    %1898 = vmatpush.xpose.msra.mxu0 %v1879
    %1899 = vmatmul.f32.gmra.mxu0 %v1875
    %v1900 = vpop.f32.mrf.mxu0
    %v1901 = vadd.f32 %v105, %v1900
    %1902 = vmatmul.f32.gmra.mxu0 %v1877
    %v1903 = vpop.f32.mrf.mxu0
    %v1904 = vadd.f32 %v106, %v1903
    %1905 = vdwg.mxu0
    %1906 = vrot.lane.b32.xlu0 %v1668, 96
    %v1907 = vpop.permute.xlu0 %1906
    %1908 = vrot.lane.b32.xlu0 %v1670, 96
    %v1909 = vpop.permute.xlu0 %1908
    %1910 = vrot.lane.b32.xlu0 %v1748, 96
    %v1911 = vpop.permute.xlu0 %1910
    %1912 = vrot.lane.b32.xlu0 %v1750, 96
    %v1913 = vpop.permute.xlu0 %1912
    %v1914 = vsel %vm403, %v1907, 0
    %v1916 = vsel %vm403, %v1909, 0
    %v1918 = vsel %vm403, %v1911, 0
    %v1920 = vsel %vm403, %v1913, 0
    %1922 = vmatpush.xpose.msra.mxu0 0.0
    %1923 = vmatpush.xpose.msra.mxu0 0.0
    %1924 = vmatpush.xpose.msra.mxu0 0.0
    %1925 = vmatpush.xpose.msra.mxu0 0.0
    %1926 = vmatpush.xpose.msra.mxu0 0.0
    %1927 = vmatpush.xpose.msra.mxu0 0.0
    %1928 = vmatpush.xpose.msra.mxu0 0.0
    %1929 = vmatpush.xpose.msra.mxu0 0.0
    %1930 = vmatpush.xpose.msra.mxu0 0.0
    %1931 = vmatpush.xpose.msra.mxu0 0.0
    %1932 = vmatpush.xpose.msra.mxu0 0.0
    %1933 = vmatpush.xpose.msra.mxu0 0.0
    %1934 = vmatpush.xpose.msra.mxu0 0.0
    %1935 = vmatpush.xpose.msra.mxu0 0.0
    %1936 = vmatpush.xpose.msra.mxu0 %v1920
    %1937 = vmatpush.xpose.msra.mxu0 %v1918
    %1938 = vmatmul.f32.gmra.mxu0 %v1914
    %v1939 = vpop.f32.mrf.mxu0
    %v1940 = vadd.f32 %v105, %v1939
    %1941 = vmatmul.f32.gmra.mxu0 %v1916
    %v1942 = vpop.f32.mrf.mxu0
    %v1943 = vadd.f32 %v106, %v1942
    %1944 = vdwg.mxu0
    %1945 = vrot.lane.b32.xlu0 %v1668, 80
    %v1946 = vpop.permute.xlu0 %1945
    %1947 = vrot.lane.b32.xlu0 %v1670, 80
    %v1948 = vpop.permute.xlu0 %1947
    %1949 = vrot.lane.b32.xlu0 %v1748, 80
    %v1950 = vpop.permute.xlu0 %1949
    %1951 = vrot.lane.b32.xlu0 %v1750, 80
    %v1952 = vpop.permute.xlu0 %1951
    %v1953 = vsel %vm403, %v1946, 0
    %v1955 = vsel %vm403, %v1948, 0
    %v1957 = vsel %vm403, %v1950, 0
    %v1959 = vsel %vm403, %v1952, 0
    %1961 = vmatpush.xpose.msra.mxu0 0.0
    %1962 = vmatpush.xpose.msra.mxu0 0.0
    %1963 = vmatpush.xpose.msra.mxu0 0.0
    %1964 = vmatpush.xpose.msra.mxu0 0.0
    %1965 = vmatpush.xpose.msra.mxu0 0.0
    %1966 = vmatpush.xpose.msra.mxu0 0.0
    %1967 = vmatpush.xpose.msra.mxu0 0.0
    %1968 = vmatpush.xpose.msra.mxu0 0.0
    %1969 = vmatpush.xpose.msra.mxu0 0.0
    %1970 = vmatpush.xpose.msra.mxu0 0.0
    %1971 = vmatpush.xpose.msra.mxu0 0.0
    %1972 = vmatpush.xpose.msra.mxu0 0.0
    %1973 = vmatpush.xpose.msra.mxu0 0.0
    %1974 = vmatpush.xpose.msra.mxu0 0.0
    %1975 = vmatpush.xpose.msra.mxu0 %v1959
    %1976 = vmatpush.xpose.msra.mxu0 %v1957
    %1977 = vmatmul.f32.gmra.mxu0 %v1953
    %v1978 = vpop.f32.mrf.mxu0
    %v1979 = vadd.f32 %v105, %v1978
    %1980 = vmatmul.f32.gmra.mxu0 %v1955
    %v1981 = vpop.f32.mrf.mxu0
    %v1982 = vadd.f32 %v106, %v1981
    %1983 = vdwg.mxu0
    %1984 = vrot.lane.b32.xlu0 %v1668, 64
    %v1985 = vpop.permute.xlu0 %1984
    %1986 = vrot.lane.b32.xlu0 %v1670, 64
    %v1987 = vpop.permute.xlu0 %1986
    %1988 = vrot.lane.b32.xlu0 %v1748, 64
    %v1989 = vpop.permute.xlu0 %1988
    %1990 = vrot.lane.b32.xlu0 %v1750, 64
    %v1991 = vpop.permute.xlu0 %1990
    %v1992 = vsel %vm403, %v1985, 0
    %v1994 = vsel %vm403, %v1987, 0
    %v1996 = vsel %vm403, %v1989, 0
    %v1998 = vsel %vm403, %v1991, 0
    %2000 = vmatpush.xpose.msra.mxu0 0.0
    %2001 = vmatpush.xpose.msra.mxu0 0.0
    %2002 = vmatpush.xpose.msra.mxu0 0.0
    %2003 = vmatpush.xpose.msra.mxu0 0.0
    %2004 = vmatpush.xpose.msra.mxu0 0.0
    %2005 = vmatpush.xpose.msra.mxu0 0.0
    %2006 = vmatpush.xpose.msra.mxu0 0.0
    %2007 = vmatpush.xpose.msra.mxu0 0.0
    %2008 = vmatpush.xpose.msra.mxu0 0.0
    %2009 = vmatpush.xpose.msra.mxu0 0.0
    %2010 = vmatpush.xpose.msra.mxu0 0.0
    %2011 = vmatpush.xpose.msra.mxu0 0.0
    %2012 = vmatpush.xpose.msra.mxu0 0.0
    %2013 = vmatpush.xpose.msra.mxu0 0.0
    %2014 = vmatpush.xpose.msra.mxu0 %v1998
    %2015 = vmatpush.xpose.msra.mxu0 %v1996
    %2016 = vmatmul.f32.gmra.mxu0 %v1992
    %v2017 = vpop.f32.mrf.mxu0
    %v2018 = vadd.f32 %v105, %v2017
    %2019 = vmatmul.f32.gmra.mxu0 %v1994
    %v2020 = vpop.f32.mrf.mxu0
    %v2021 = vadd.f32 %v106, %v2020
    %2022 = vdwg.mxu0
    %2023 = vrot.lane.b32.xlu0 %v1668, 48
    %v2024 = vpop.permute.xlu0 %2023
    %2025 = vrot.lane.b32.xlu0 %v1670, 48
    %v2026 = vpop.permute.xlu0 %2025
    %2027 = vrot.lane.b32.xlu0 %v1748, 48
    %v2028 = vpop.permute.xlu0 %2027
    %2029 = vrot.lane.b32.xlu0 %v1750, 48
    %v2030 = vpop.permute.xlu0 %2029
    %v2031 = vsel %vm403, %v2024, 0
    %v2033 = vsel %vm403, %v2026, 0
    %v2035 = vsel %vm403, %v2028, 0
    %v2037 = vsel %vm403, %v2030, 0
    %2039 = vmatpush.xpose.msra.mxu0 0.0
    %2040 = vmatpush.xpose.msra.mxu0 0.0
    %2041 = vmatpush.xpose.msra.mxu0 0.0
    %2042 = vmatpush.xpose.msra.mxu0 0.0
    %2043 = vmatpush.xpose.msra.mxu0 0.0
    %2044 = vmatpush.xpose.msra.mxu0 0.0
    %2045 = vmatpush.xpose.msra.mxu0 0.0
    %2046 = vmatpush.xpose.msra.mxu0 0.0
    %2047 = vmatpush.xpose.msra.mxu0 0.0
    %2048 = vmatpush.xpose.msra.mxu0 0.0
    %2049 = vmatpush.xpose.msra.mxu0 0.0
    %2050 = vmatpush.xpose.msra.mxu0 0.0
    %2051 = vmatpush.xpose.msra.mxu0 0.0
    %2052 = vmatpush.xpose.msra.mxu0 0.0
    %2053 = vmatpush.xpose.msra.mxu0 %v2037
    %2054 = vmatpush.xpose.msra.mxu0 %v2035
    %2055 = vmatmul.f32.gmra.mxu0 %v2031
    %v2056 = vpop.f32.mrf.mxu0
    %v2057 = vadd.f32 %v105, %v2056
    %2058 = vmatmul.f32.gmra.mxu0 %v2033
    %v2059 = vpop.f32.mrf.mxu0
    %v2060 = vadd.f32 %v106, %v2059
    %2061 = vdwg.mxu0
    %2062 = vrot.lane.b32.xlu0 %v1668, 32
    %v2063 = vpop.permute.xlu0 %2062
    %2064 = vrot.lane.b32.xlu0 %v1670, 32
    %v2065 = vpop.permute.xlu0 %2064
    %2066 = vrot.lane.b32.xlu0 %v1748, 32
    %v2067 = vpop.permute.xlu0 %2066
    %2068 = vrot.lane.b32.xlu0 %v1750, 32
    %v2069 = vpop.permute.xlu0 %2068
    %v2070 = vsel %vm403, %v2063, 0
    %v2072 = vsel %vm403, %v2065, 0
    %v2074 = vsel %vm403, %v2067, 0
    %v2076 = vsel %vm403, %v2069, 0
    %2078 = vmatpush.xpose.msra.mxu0 0.0
    %2079 = vmatpush.xpose.msra.mxu0 0.0
    %2080 = vmatpush.xpose.msra.mxu0 0.0
    %2081 = vmatpush.xpose.msra.mxu0 0.0
    %2082 = vmatpush.xpose.msra.mxu0 0.0
    %2083 = vmatpush.xpose.msra.mxu0 0.0
    %2084 = vmatpush.xpose.msra.mxu0 0.0
    %2085 = vmatpush.xpose.msra.mxu0 0.0
    %2086 = vmatpush.xpose.msra.mxu0 0.0
    %2087 = vmatpush.xpose.msra.mxu0 0.0
    %2088 = vmatpush.xpose.msra.mxu0 0.0
    %2089 = vmatpush.xpose.msra.mxu0 0.0
    %2090 = vmatpush.xpose.msra.mxu0 0.0
    %2091 = vmatpush.xpose.msra.mxu0 0.0
    %2092 = vmatpush.xpose.msra.mxu0 %v2076
    %2093 = vmatpush.xpose.msra.mxu0 %v2074
    %2094 = vmatmul.f32.gmra.mxu0 %v2070
    %v2095 = vpop.f32.mrf.mxu0
    %v2096 = vadd.f32 %v105, %v2095
    %2097 = vmatmul.f32.gmra.mxu0 %v2072
    %v2098 = vpop.f32.mrf.mxu0
    %v2099 = vadd.f32 %v106, %v2098
    %2100 = vdwg.mxu0
    %2101 = vrot.lane.b32.xlu0 %v1668, 16
    %v2102 = vpop.permute.xlu0 %2101
    %2103 = vrot.lane.b32.xlu0 %v1670, 16
    %v2104 = vpop.permute.xlu0 %2103
    %2105 = vrot.lane.b32.xlu0 %v1748, 16
    %v2106 = vpop.permute.xlu0 %2105
    %2107 = vrot.lane.b32.xlu0 %v1750, 16
    %v2108 = vpop.permute.xlu0 %2107
    %v2109 = vsel %vm403, %v2102, 0
    %v2111 = vsel %vm403, %v2104, 0
    %v2113 = vsel %vm403, %v2106, 0
    %v2115 = vsel %vm403, %v2108, 0
    %2117 = vmatpush.xpose.msra.mxu0 0.0
    %2118 = vmatpush.xpose.msra.mxu0 0.0
    %2119 = vmatpush.xpose.msra.mxu0 0.0
    %2120 = vmatpush.xpose.msra.mxu0 0.0
    %2121 = vmatpush.xpose.msra.mxu0 0.0
    %2122 = vmatpush.xpose.msra.mxu0 0.0
    %2123 = vmatpush.xpose.msra.mxu0 0.0
    %2124 = vmatpush.xpose.msra.mxu0 0.0
    %2125 = vmatpush.xpose.msra.mxu0 0.0
    %2126 = vmatpush.xpose.msra.mxu0 0.0
    %2127 = vmatpush.xpose.msra.mxu0 0.0
    %2128 = vmatpush.xpose.msra.mxu0 0.0
    %2129 = vmatpush.xpose.msra.mxu0 0.0
    %2130 = vmatpush.xpose.msra.mxu0 0.0
    %2131 = vmatpush.xpose.msra.mxu0 %v2115
    %2132 = vmatpush.xpose.msra.mxu0 %v2113
    %2133 = vmatmul.f32.gmra.mxu0 %v2109
    %v2134 = vpop.f32.mrf.mxu0
    %v2135 = vadd.f32 %v105, %v2134
    %2136 = vmatmul.f32.gmra.mxu0 %v2111
    %v2137 = vpop.f32.mrf.mxu0
    %v2138 = vadd.f32 %v106, %v2137
    %2139 = vdwg.mxu0
    %v2140 = vsel %vm403, %v1862, -inf
    %2141 = vmax.xlane.f32.xlu0 %v2140
    %v2142 = vpop.xlane.xlu0 %2141
    %v2143 = vsel %vm403, %v1865, -inf
    %2144 = vmax.xlane.f32.xlu0 %v2143
    %v2145 = vpop.xlane.xlu0 %2144
    %v2146 = vsel %vm403, %v1901, -inf
    %2147 = vmax.xlane.f32.xlu0 %v2146
    %v2148 = vpop.xlane.xlu0 %2147
    %v2149 = vsel %vm403, %v1904, -inf
    %2150 = vmax.xlane.f32.xlu0 %v2149
    %v2151 = vpop.xlane.xlu0 %2150
    %v2152 = vsel %vm403, %v1940, -inf
    %2153 = vmax.xlane.f32.xlu0 %v2152
    %v2154 = vpop.xlane.xlu0 %2153
    %v2155 = vsel %vm403, %v1943, -inf
    %2156 = vmax.xlane.f32.xlu0 %v2155
    %v2157 = vpop.xlane.xlu0 %2156
    %v2158 = vsel %vm403, %v1979, -inf
    %2159 = vmax.xlane.f32.xlu0 %v2158
    %v2160 = vpop.xlane.xlu0 %2159
    %v2161 = vsel %vm403, %v1982, -inf
    %2162 = vmax.xlane.f32.xlu0 %v2161
    %v2163 = vpop.xlane.xlu0 %2162
    %v2164 = vsel %vm403, %v2018, -inf
    %2165 = vmax.xlane.f32.xlu0 %v2164
    %v2166 = vpop.xlane.xlu0 %2165
    %v2167 = vsel %vm403, %v2021, -inf
    %2168 = vmax.xlane.f32.xlu0 %v2167
    %v2169 = vpop.xlane.xlu0 %2168
    %v2170 = vsel %vm403, %v2057, -inf
    %2171 = vmax.xlane.f32.xlu0 %v2170
    %v2172 = vpop.xlane.xlu0 %2171
    %v2173 = vsel %vm403, %v2060, -inf
    %2174 = vmax.xlane.f32.xlu0 %v2173
    %v2175 = vpop.xlane.xlu0 %2174
    %v2176 = vsel %vm403, %v2096, -inf
    %2177 = vmax.xlane.f32.xlu0 %v2176
    %v2178 = vpop.xlane.xlu0 %2177
    %v2179 = vsel %vm403, %v2099, -inf
    %2180 = vmax.xlane.f32.xlu0 %v2179
    %v2181 = vpop.xlane.xlu0 %2180
    %v2182 = vsel %vm403, %v2135, -inf
    %2183 = vmax.xlane.f32.xlu0 %v2182
    %v2184 = vpop.xlane.xlu0 %2183
    %v2185 = vsel %vm403, %v2138, -inf
    %2186 = vmax.xlane.f32.xlu0 %v2185
    %v2187 = vpop.xlane.xlu0 %2186
    %v2188 = vsub.f32 %v1862, %v2142
    %v2189 = vsub.f32 %v1865, %v2145
    %v2190 = vsub.f32 %v1901, %v2148
    %v2191 = vsub.f32 %v1904, %v2151
    %v2192 = vsub.f32 %v1940, %v2154
    %v2193 = vsub.f32 %v1943, %v2157
    %v2194 = vsub.f32 %v1979, %v2160
    %v2195 = vsub.f32 %v1982, %v2163
    %v2196 = vsub.f32 %v2018, %v2166
    %v2197 = vsub.f32 %v2021, %v2169
    %v2198 = vsub.f32 %v2057, %v2172
    %v2199 = vsub.f32 %v2060, %v2175
    %v2200 = vsub.f32 %v2096, %v2178
    %v2201 = vsub.f32 %v2099, %v2181
    %v2202 = vsub.f32 %v2135, %v2184
    %v2203 = vsub.f32 %v2138, %v2187
    %v2204 = vmul.f32 %v2188, 1.442695
    %v2205 = vpow.pop %v2204
    %v2206 = vmul.f32 %v2189, 1.442695
    %v2207 = vpow.pop %v2206
    %v2208 = vmul.f32 %v2190, 1.442695
    %v2209 = vpow.pop %v2208
    %v2210 = vmul.f32 %v2191, 1.442695
    %v2211 = vpow.pop %v2210
    %v2212 = vmul.f32 %v2192, 1.442695
    %v2213 = vpow.pop %v2212
    %v2214 = vmul.f32 %v2193, 1.442695
    %v2215 = vpow.pop %v2214
    %v2216 = vmul.f32 %v2194, 1.442695
    %v2217 = vpow.pop %v2216
    %v2218 = vmul.f32 %v2195, 1.442695
    %v2219 = vpow.pop %v2218
    %v2220 = vmul.f32 %v2196, 1.442695
    %v2221 = vpow.pop %v2220
    %v2222 = vmul.f32 %v2197, 1.442695
    %v2223 = vpow.pop %v2222
    %v2224 = vmul.f32 %v2198, 1.442695
    %v2225 = vpow.pop %v2224
    %v2226 = vmul.f32 %v2199, 1.442695
    %v2227 = vpow.pop %v2226
    %v2228 = vmul.f32 %v2200, 1.442695
    %v2229 = vpow.pop %v2228
    %v2230 = vmul.f32 %v2201, 1.442695
    %v2231 = vpow.pop %v2230
    %v2232 = vmul.f32 %v2202, 1.442695
    %v2233 = vpow.pop %v2232
    %v2234 = vmul.f32 %v2203, 1.442695
    %v2235 = vpow.pop %v2234
    %v2236 = vsel %vm403, %v2205, 0.0
    %2237 = vadd.xlane.f32.xlu0 %v2236
    %v2238 = vpop.xlane.xlu0 %2237
    %v2239 = vsel %vm403, %v2207, 0.0
    %2240 = vadd.xlane.f32.xlu0 %v2239
    %v2241 = vpop.xlane.xlu0 %2240
    %v2242 = vsel %vm403, %v2209, 0.0
    %2243 = vadd.xlane.f32.xlu0 %v2242
    %v2244 = vpop.xlane.xlu0 %2243
    %v2245 = vsel %vm403, %v2211, 0.0
    %2246 = vadd.xlane.f32.xlu0 %v2245
    %v2247 = vpop.xlane.xlu0 %2246
    %v2248 = vsel %vm403, %v2213, 0.0
    %2249 = vadd.xlane.f32.xlu0 %v2248
    %v2250 = vpop.xlane.xlu0 %2249
    %v2251 = vsel %vm403, %v2215, 0.0
    %2252 = vadd.xlane.f32.xlu0 %v2251
    %v2253 = vpop.xlane.xlu0 %2252
    %v2254 = vsel %vm403, %v2217, 0.0
    %2255 = vadd.xlane.f32.xlu0 %v2254
    %v2256 = vpop.xlane.xlu0 %2255
    %v2257 = vsel %vm403, %v2219, 0.0
    %2258 = vadd.xlane.f32.xlu0 %v2257
    %v2259 = vpop.xlane.xlu0 %2258
    %v2260 = vsel %vm403, %v2221, 0.0
    %2261 = vadd.xlane.f32.xlu0 %v2260
    %v2262 = vpop.xlane.xlu0 %2261
    %v2263 = vsel %vm403, %v2223, 0.0
    %2264 = vadd.xlane.f32.xlu0 %v2263
    %v2265 = vpop.xlane.xlu0 %2264
    %v2266 = vsel %vm403, %v2225, 0.0
    %2267 = vadd.xlane.f32.xlu0 %v2266
    %v2268 = vpop.xlane.xlu0 %2267
    %v2269 = vsel %vm403, %v2227, 0.0
    %2270 = vadd.xlane.f32.xlu0 %v2269
    %v2271 = vpop.xlane.xlu0 %2270
    %v2272 = vsel %vm403, %v2229, 0.0
    %2273 = vadd.xlane.f32.xlu0 %v2272
    %v2274 = vpop.xlane.xlu0 %2273
    %v2275 = vsel %vm403, %v2231, 0.0
    %2276 = vadd.xlane.f32.xlu0 %v2275
    %v2277 = vpop.xlane.xlu0 %2276
    %v2278 = vsel %vm403, %v2233, 0.0
    %2279 = vadd.xlane.f32.xlu0 %v2278
    %v2280 = vpop.xlane.xlu0 %2279
    %v2281 = vsel %vm403, %v2235, 0.0
    %2282 = vadd.xlane.f32.xlu0 %v2281
    %v2283 = vpop.xlane.xlu0 %2282
    %v2284 = vrcp.pop %v2238
    %v2285 = vrcp.pop %v2241
    %v2286 = vrcp.pop %v2244
    %v2287 = vrcp.pop %v2247
    %v2288 = vrcp.pop %v2250
    %v2289 = vrcp.pop %v2253
    %v2290 = vrcp.pop %v2256
    %v2291 = vrcp.pop %v2259
    %v2292 = vrcp.pop %v2262
    %v2293 = vrcp.pop %v2265
    %v2294 = vrcp.pop %v2268
    %v2295 = vrcp.pop %v2271
    %v2296 = vrcp.pop %v2274
    %v2297 = vrcp.pop %v2277
    %v2298 = vrcp.pop %v2280
    %v2299 = vrcp.pop %v2283
    %v2300 = vmul.f32 %v2205, %v2284
    %v2301 = vmul.f32 %v2207, %v2285
    %v2302 = vmul.f32 %v2209, %v2286
    %v2303 = vmul.f32 %v2211, %v2287
    %v2304 = vmul.f32 %v2213, %v2288
    %v2305 = vmul.f32 %v2215, %v2289
    %v2306 = vmul.f32 %v2217, %v2290
    %v2307 = vmul.f32 %v2219, %v2291
    %v2308 = vmul.f32 %v2221, %v2292
    %v2309 = vmul.f32 %v2223, %v2293
    %v2310 = vmul.f32 %v2225, %v2294
    %v2311 = vmul.f32 %v2227, %v2295
    %v2312 = vmul.f32 %v2229, %v2296
    %v2313 = vmul.f32 %v2231, %v2297
    %v2314 = vmul.f32 %v2233, %v2298
    %v2315 = vmul.f32 %v2235, %v2299
    %v2317 = vsel %vm403, %v2300, 0
    %v2320 = vsel %vm403, %v2301, 0
    %2322 = vmatpush.msra.mxu0 0.0
    %2323 = vmatpush.msra.mxu0 0.0
    %2324 = vmatpush.msra.mxu0 0.0
    %2325 = vmatpush.msra.mxu0 0.0
    %2326 = vmatpush.msra.mxu0 0.0
    %2327 = vmatpush.msra.mxu0 0.0
    %2328 = vmatpush.msra.mxu0 0.0
    %2329 = vmatpush.msra.mxu0 0.0
    %2330 = vmatpush.msra.mxu0 0.0
    %2331 = vmatpush.msra.mxu0 0.0
    %2332 = vmatpush.msra.mxu0 0.0
    %2333 = vmatpush.msra.mxu0 0.0
    %2334 = vmatpush.msra.mxu0 0.0
    %2335 = vmatpush.msra.mxu0 0.0
    %2336 = vmatpush.msra.mxu0 %v1830
    %2337 = vmatpush.msra.mxu0 %v1828
    %2338 = vmatmul.f32.gmra.mxu0 %v2317
    %v2339 = vpop.f32.mrf.mxu0
    %v2340 = vadd.f32 0.0, %v2339
    %2341 = vmatmul.f32.gmra.mxu0 %v2320
    %v2342 = vpop.f32.mrf.mxu0
    %v2343 = vadd.f32 0.0, %v2342
    %2344 = vdwg.mxu0
    %2347 = vrot.lane.b32.xlu0 %v1828, 112
    %v2348 = vpop.permute.xlu0 %2347
    %2349 = vrot.lane.b32.xlu0 %v1830, 112
    %v2350 = vpop.permute.xlu0 %2349
    %v2354 = vsel %vm403, %v2302, 0
    %v2357 = vsel %vm403, %v2303, 0
    %2359 = vmatpush.msra.mxu0 0.0
    %2360 = vmatpush.msra.mxu0 0.0
    %2361 = vmatpush.msra.mxu0 0.0
    %2362 = vmatpush.msra.mxu0 0.0
    %2363 = vmatpush.msra.mxu0 0.0
    %2364 = vmatpush.msra.mxu0 0.0
    %2365 = vmatpush.msra.mxu0 0.0
    %2366 = vmatpush.msra.mxu0 0.0
    %2367 = vmatpush.msra.mxu0 0.0
    %2368 = vmatpush.msra.mxu0 0.0
    %2369 = vmatpush.msra.mxu0 0.0
    %2370 = vmatpush.msra.mxu0 0.0
    %2371 = vmatpush.msra.mxu0 0.0
    %2372 = vmatpush.msra.mxu0 0.0
    %2373 = vmatpush.msra.mxu0 %v2350
    %2374 = vmatpush.msra.mxu0 %v2348
    %2375 = vmatmul.f32.gmra.mxu0 %v2354
    %v2376 = vpop.f32.mrf.mxu0
    %v2377 = vadd.f32 0.0, %v2376
    %2378 = vmatmul.f32.gmra.mxu0 %v2357
    %v2379 = vpop.f32.mrf.mxu0
    %v2380 = vadd.f32 0.0, %v2379
    %2381 = vdwg.mxu0
    %2382 = vrot.lane.b32.xlu0 %v1828, 96
    %v2383 = vpop.permute.xlu0 %2382
    %2384 = vrot.lane.b32.xlu0 %v1830, 96
    %v2385 = vpop.permute.xlu0 %2384
    %v2389 = vsel %vm403, %v2304, 0
    %v2392 = vsel %vm403, %v2305, 0
    %2394 = vmatpush.msra.mxu0 0.0
    %2395 = vmatpush.msra.mxu0 0.0
    %2396 = vmatpush.msra.mxu0 0.0
    %2397 = vmatpush.msra.mxu0 0.0
    %2398 = vmatpush.msra.mxu0 0.0
    %2399 = vmatpush.msra.mxu0 0.0
    %2400 = vmatpush.msra.mxu0 0.0
    %2401 = vmatpush.msra.mxu0 0.0
    %2402 = vmatpush.msra.mxu0 0.0
    %2403 = vmatpush.msra.mxu0 0.0
    %2404 = vmatpush.msra.mxu0 0.0
    %2405 = vmatpush.msra.mxu0 0.0
    %2406 = vmatpush.msra.mxu0 0.0
    %2407 = vmatpush.msra.mxu0 0.0
    %2408 = vmatpush.msra.mxu0 %v2385
    %2409 = vmatpush.msra.mxu0 %v2383
    %2410 = vmatmul.f32.gmra.mxu0 %v2389
    %v2411 = vpop.f32.mrf.mxu0
    %v2412 = vadd.f32 0.0, %v2411
    %2413 = vmatmul.f32.gmra.mxu0 %v2392
    %v2414 = vpop.f32.mrf.mxu0
    %v2415 = vadd.f32 0.0, %v2414
    %2416 = vdwg.mxu0
    %2417 = vrot.lane.b32.xlu0 %v1828, 80
    %v2418 = vpop.permute.xlu0 %2417
    %2419 = vrot.lane.b32.xlu0 %v1830, 80
    %v2420 = vpop.permute.xlu0 %2419
    %v2424 = vsel %vm403, %v2306, 0
    %v2427 = vsel %vm403, %v2307, 0
    %2429 = vmatpush.msra.mxu0 0.0
    %2430 = vmatpush.msra.mxu0 0.0
    %2431 = vmatpush.msra.mxu0 0.0
    %2432 = vmatpush.msra.mxu0 0.0
    %2433 = vmatpush.msra.mxu0 0.0
    %2434 = vmatpush.msra.mxu0 0.0
    %2435 = vmatpush.msra.mxu0 0.0
    %2436 = vmatpush.msra.mxu0 0.0
    %2437 = vmatpush.msra.mxu0 0.0
    %2438 = vmatpush.msra.mxu0 0.0
    %2439 = vmatpush.msra.mxu0 0.0
    %2440 = vmatpush.msra.mxu0 0.0
    %2441 = vmatpush.msra.mxu0 0.0
    %2442 = vmatpush.msra.mxu0 0.0
    %2443 = vmatpush.msra.mxu0 %v2420
    %2444 = vmatpush.msra.mxu0 %v2418
    %2445 = vmatmul.f32.gmra.mxu0 %v2424
    %v2446 = vpop.f32.mrf.mxu0
    %v2447 = vadd.f32 0.0, %v2446
    %2448 = vmatmul.f32.gmra.mxu0 %v2427
    %v2449 = vpop.f32.mrf.mxu0
    %v2450 = vadd.f32 0.0, %v2449
    %2451 = vdwg.mxu0
    %2452 = vrot.lane.b32.xlu0 %v1828, 64
    %v2453 = vpop.permute.xlu0 %2452
    %2454 = vrot.lane.b32.xlu0 %v1830, 64
    %v2455 = vpop.permute.xlu0 %2454
    %v2459 = vsel %vm403, %v2308, 0
    %v2462 = vsel %vm403, %v2309, 0
    %2464 = vmatpush.msra.mxu0 0.0
    %2465 = vmatpush.msra.mxu0 0.0
    %2466 = vmatpush.msra.mxu0 0.0
    %2467 = vmatpush.msra.mxu0 0.0
    %2468 = vmatpush.msra.mxu0 0.0
    %2469 = vmatpush.msra.mxu0 0.0
    %2470 = vmatpush.msra.mxu0 0.0
    %2471 = vmatpush.msra.mxu0 0.0
    %2472 = vmatpush.msra.mxu0 0.0
    %2473 = vmatpush.msra.mxu0 0.0
    %2474 = vmatpush.msra.mxu0 0.0
    %2475 = vmatpush.msra.mxu0 0.0
    %2476 = vmatpush.msra.mxu0 0.0
    %2477 = vmatpush.msra.mxu0 0.0
    %2478 = vmatpush.msra.mxu0 %v2455
    %2479 = vmatpush.msra.mxu0 %v2453
    %2480 = vmatmul.f32.gmra.mxu0 %v2459
    %v2481 = vpop.f32.mrf.mxu0
    %v2482 = vadd.f32 0.0, %v2481
    %2483 = vmatmul.f32.gmra.mxu0 %v2462
    %v2484 = vpop.f32.mrf.mxu0
    %v2485 = vadd.f32 0.0, %v2484
    %2486 = vdwg.mxu0
    %2487 = vrot.lane.b32.xlu0 %v1828, 48
    %v2488 = vpop.permute.xlu0 %2487
    %2489 = vrot.lane.b32.xlu0 %v1830, 48
    %v2490 = vpop.permute.xlu0 %2489
    %v2494 = vsel %vm403, %v2310, 0
    %v2497 = vsel %vm403, %v2311, 0
    %2499 = vmatpush.msra.mxu0 0.0
    %2500 = vmatpush.msra.mxu0 0.0
    %2501 = vmatpush.msra.mxu0 0.0
    %2502 = vmatpush.msra.mxu0 0.0
    %2503 = vmatpush.msra.mxu0 0.0
    %2504 = vmatpush.msra.mxu0 0.0
    %2505 = vmatpush.msra.mxu0 0.0
    %2506 = vmatpush.msra.mxu0 0.0
    %2507 = vmatpush.msra.mxu0 0.0
    %2508 = vmatpush.msra.mxu0 0.0
    %2509 = vmatpush.msra.mxu0 0.0
    %2510 = vmatpush.msra.mxu0 0.0
    %2511 = vmatpush.msra.mxu0 0.0
    %2512 = vmatpush.msra.mxu0 0.0
    %2513 = vmatpush.msra.mxu0 %v2490
    %2514 = vmatpush.msra.mxu0 %v2488
    %2515 = vmatmul.f32.gmra.mxu0 %v2494
    %v2516 = vpop.f32.mrf.mxu0
    %v2517 = vadd.f32 0.0, %v2516
    %2518 = vmatmul.f32.gmra.mxu0 %v2497
    %v2519 = vpop.f32.mrf.mxu0
    %v2520 = vadd.f32 0.0, %v2519
    %2521 = vdwg.mxu0
    %2522 = vrot.lane.b32.xlu0 %v1828, 32
    %v2523 = vpop.permute.xlu0 %2522
    %2524 = vrot.lane.b32.xlu0 %v1830, 32
    %v2525 = vpop.permute.xlu0 %2524
    %v2529 = vsel %vm403, %v2312, 0
    %v2532 = vsel %vm403, %v2313, 0
    %2534 = vmatpush.msra.mxu0 0.0
    %2535 = vmatpush.msra.mxu0 0.0
    %2536 = vmatpush.msra.mxu0 0.0
    %2537 = vmatpush.msra.mxu0 0.0
    %2538 = vmatpush.msra.mxu0 0.0
    %2539 = vmatpush.msra.mxu0 0.0
    %2540 = vmatpush.msra.mxu0 0.0
    %2541 = vmatpush.msra.mxu0 0.0
    %2542 = vmatpush.msra.mxu0 0.0
    %2543 = vmatpush.msra.mxu0 0.0
    %2544 = vmatpush.msra.mxu0 0.0
    %2545 = vmatpush.msra.mxu0 0.0
    %2546 = vmatpush.msra.mxu0 0.0
    %2547 = vmatpush.msra.mxu0 0.0
    %2548 = vmatpush.msra.mxu0 %v2525
    %2549 = vmatpush.msra.mxu0 %v2523
    %2550 = vmatmul.f32.gmra.mxu0 %v2529
    %v2551 = vpop.f32.mrf.mxu0
    %v2552 = vadd.f32 0.0, %v2551
    %2553 = vmatmul.f32.gmra.mxu0 %v2532
    %v2554 = vpop.f32.mrf.mxu0
    %v2555 = vadd.f32 0.0, %v2554
    %2556 = vdwg.mxu0
    %2557 = vrot.lane.b32.xlu0 %v1828, 16
    %v2558 = vpop.permute.xlu0 %2557
    %2559 = vrot.lane.b32.xlu0 %v1830, 16
    %v2560 = vpop.permute.xlu0 %2559
    %v2564 = vsel %vm403, %v2314, 0
    %v2567 = vsel %vm403, %v2315, 0
    %2569 = vmatpush.msra.mxu0 0.0
    %2570 = vmatpush.msra.mxu0 0.0
    %2571 = vmatpush.msra.mxu0 0.0
    %2572 = vmatpush.msra.mxu0 0.0
    %2573 = vmatpush.msra.mxu0 0.0
    %2574 = vmatpush.msra.mxu0 0.0
    %2575 = vmatpush.msra.mxu0 0.0
    %2576 = vmatpush.msra.mxu0 0.0
    %2577 = vmatpush.msra.mxu0 0.0
    %2578 = vmatpush.msra.mxu0 0.0
    %2579 = vmatpush.msra.mxu0 0.0
    %2580 = vmatpush.msra.mxu0 0.0
    %2581 = vmatpush.msra.mxu0 0.0
    %2582 = vmatpush.msra.mxu0 0.0
    %2583 = vmatpush.msra.mxu0 %v2560
    %2584 = vmatpush.msra.mxu0 %v2558
    %2585 = vmatmul.f32.gmra.mxu0 %v2564
    %v2586 = vpop.f32.mrf.mxu0
    %v2587 = vadd.f32 0.0, %v2586
    %2588 = vmatmul.f32.gmra.mxu0 %v2567
    %v2589 = vpop.f32.mrf.mxu0
    %v2590 = vadd.f32 0.0, %v2589
    %2591 = vdwg.mxu0
    %2594 = vrot.lane.b32.xlu0 %v2377, 16
    %v2595 = vpop.permute.xlu0 %2594
    %2596 = vrot.lane.b32.xlu0 %v2380, 16
    %v2597 = vpop.permute.xlu0 %2596
    %2602 = vrot.lane.b32.xlu0 %v2412, 32
    %v2603 = vpop.permute.xlu0 %2602
    %2604 = vrot.lane.b32.xlu0 %v2415, 32
    %v2605 = vpop.permute.xlu0 %2604
    %2610 = vrot.lane.b32.xlu0 %v2447, 48
    %v2611 = vpop.permute.xlu0 %2610
    %2612 = vrot.lane.b32.xlu0 %v2450, 48
    %v2613 = vpop.permute.xlu0 %2612
    %2618 = vrot.lane.b32.xlu0 %v2482, 64
    %v2619 = vpop.permute.xlu0 %2618
    %2620 = vrot.lane.b32.xlu0 %v2485, 64
    %v2621 = vpop.permute.xlu0 %2620
    %2626 = vrot.lane.b32.xlu0 %v2517, 80
    %v2627 = vpop.permute.xlu0 %2626
    %2628 = vrot.lane.b32.xlu0 %v2520, 80
    %v2629 = vpop.permute.xlu0 %2628
    %2634 = vrot.lane.b32.xlu0 %v2552, 96
    %v2635 = vpop.permute.xlu0 %2634
    %2636 = vrot.lane.b32.xlu0 %v2555, 96
    %v2637 = vpop.permute.xlu0 %2636
    %2642 = vrot.lane.b32.xlu0 %v2587, 112
    %v2643 = vpop.permute.xlu0 %2642
    %2644 = vrot.lane.b32.xlu0 %v2590, 112
    %v2645 = vpop.permute.xlu0 %2644
    %v2648 = vsel %vm403, %v2340, %v2595
    %v2649 = vsel %vm403, %v2343, %v2597
    %v2650 = vsel %vm144, %v2648, %v2603
    %v2651 = vsel %vm144, %v2649, %v2605
    %v2652 = vsel %vm1224, %v2650, %v2611
    %v2653 = vsel %vm1224, %v2651, %v2613
    %v2654 = vsel %vm1227, %v2652, %v2619
    %v2655 = vsel %vm1227, %v2653, %v2621
    %v2656 = vsel %vm1230, %v2654, %v2627
    %v2657 = vsel %vm1230, %v2655, %v2629
    %v2658 = vsel %vm1233, %v2656, %v2635
    %v2659 = vsel %vm1233, %v2657, %v2637
    %v2660 = vsel %vm1236, %v2658, %v2643
    %v2661 = vsel %vm1236, %v2659, %v2645
    %v2662 = vpack.c.bf16 %v2661, %v2660
    %v2663 = vld [vmem:[#allocation7 + $0x258] sm:$0xf]
    %v2664 = vld [vmem:[#allocation7 + $0x25c] sm:$0xf]
    %v2665 = vld [vmem:[#allocation7 + $0x260] sm:$0xf]
    %v2666 = vld [vmem:[#allocation7 + $0x264] sm:$0xf]
    %v2667 = vld [vmem:[#allocation7 + $0x268] sm:$0xf]
    %v2668 = vld [vmem:[#allocation7 + $0x26c] sm:$0xf]
    %v2669 = vld [vmem:[#allocation7 + $0x270] sm:$0xf]
    %v2670 = vld [vmem:[#allocation7 + $0x274] sm:$0xf]
    %v2671 = vld [vmem:[#allocation7 + $0x278] sm:$0xf]
    %v2672 = vld [vmem:[#allocation7 + $0x27c] sm:$0xf]
    %v2673 = vld [vmem:[#allocation7 + $0x280] sm:$0xf]
    %v2674 = vld [vmem:[#allocation7 + $0x284] sm:$0xf]
    %v2675 = vld [vmem:[#allocation7 + $0x288] sm:$0xf]
    %v2676 = vld [vmem:[#allocation7 + $0x28c] sm:$0xf]
    %v2677 = vld [vmem:[#allocation7 + $0x290] sm:$0xf]
    %v2678 = vld [vmem:[#allocation7 + $0x294] sm:$0xf]
    %v2679 = vld [vmem:[#allocation9 + $0x68] sm:$0x1]
    %v2680 = vperm.slane %v2679, 0
    %v2697 = vunpack.c.l.b16 %v2663
    %v2698 = vunpack.c.l.b16 %v2664
    %v2699 = vunpack.c.l.b16 %v2665
    %v2700 = vunpack.c.l.b16 %v2666
    %v2701 = vunpack.c.l.b16 %v2667
    %v2702 = vunpack.c.l.b16 %v2668
    %v2703 = vunpack.c.l.b16 %v2669
    %v2704 = vunpack.c.l.b16 %v2670
    %v2705 = vunpack.c.l.b16 %v2671
    %v2706 = vunpack.c.l.b16 %v2672
    %v2707 = vunpack.c.l.b16 %v2673
    %v2708 = vunpack.c.l.b16 %v2674
    %v2709 = vunpack.c.l.b16 %v2675
    %v2710 = vunpack.c.l.b16 %v2676
    %v2711 = vunpack.c.l.b16 %v2677
    %v2712 = vunpack.c.l.b16 %v2678
    %v2713 = vpack.c.b16 %v2698, %v2697
    %v2714 = vpack.c.b16 %v2700, %v2699
    %v2715 = vpack.c.b16 %v2702, %v2701
    %v2716 = vpack.c.b16 %v2704, %v2703
    %v2717 = vpack.c.b16 %v2706, %v2705
    %v2718 = vpack.c.b16 %v2708, %v2707
    %v2719 = vpack.c.b16 %v2710, %v2709
    %v2720 = vpack.c.b16 %v2712, %v2711
    %2729 = vmatpush.bf16.msra.mxu0 %v2720
    %2730 = vmatpush.bf16.msra.mxu0 %v2719
    %2731 = vmatpush.bf16.msra.mxu0 %v2718
    %2732 = vmatpush.bf16.msra.mxu0 %v2717
    %2733 = vmatpush.bf16.msra.mxu0 %v2716
    %2734 = vmatpush.bf16.msra.mxu0 %v2715
    %2735 = vmatpush.bf16.msra.mxu0 %v2714
    %2736 = vmatpush.bf16.msra.mxu0 %v2713
    %2737 = vmatmul.bf16.gmra.mxu0 %v2662
    %v2738 = vpop.f32.mrf.mxu0
    %v2739 = vadd.f32 %v2680, %v2738
    %v2740 = vpop.f32.mrf.mxu0
    %v2741 = vadd.f32 %v2680, %v2740
    %2742 = vdwg.mxu0
    %v2743 = vadd.f32 %v1589, %v2739
    %v2744 = vadd.f32 %v1590, %v2741
    %2745 = vadd.xlane.f32.xlu0 %v2743
    %v2746 = vpop.xlane.xlu0 %2745
    %2747 = vadd.xlane.f32.xlu0 %v2744
    %v2748 = vpop.xlane.xlu0 %2747
    %v2749 = vmul.f32 %v2746, %v1332
    %v2750 = vmul.f32 %v2748, %v1332
    %v2751 = vsub.f32 %v2743, %v2749
    %v2752 = vsub.f32 %v2744, %v2750
    %v2753 = vmul.f32 %v2751, %v2751
    %v2754 = vmul.f32 %v2752, %v2752
    %2755 = vadd.xlane.f32.xlu0 %v2753
    %v2756 = vpop.xlane.xlu0 %2755
    %2757 = vadd.xlane.f32.xlu0 %v2754
    %v2758 = vpop.xlane.xlu0 %2757
    %v2759 = vmul.f32 %v2756, %v1332
    %v2760 = vmul.f32 %v2758, %v1332
    %v2761 = vadd.f32 %v2759, 1e-05
    %v2762 = vadd.f32 %v2760, 1e-05
    %v2763 = vrsqrt.pop %v2761
    %v2764 = vmul.f32 %v2763, %v2761
    %v2765 = vmul.f32 %v2764, %v2763
    %v2766 = vmul.f32 0.5, %v2765
    %v2767 = vsub.f32 1.5, %v2766
    %v2768 = vmul.f32 %v2763, %v2767
    %vm2769 = vweird.f32 %v2761
    %vm2770 = vweird.f32 %v2763
    %vm2771 = vmor %vm2769, %vm2770
    %v2772 = vsel %vm2771, %v2763, %v2768
    %v2773 = vrsqrt.pop %v2762
    %v2774 = vmul.f32 %v2773, %v2762
    %v2775 = vmul.f32 %v2774, %v2773
    %v2776 = vmul.f32 0.5, %v2775
    %v2777 = vsub.f32 1.5, %v2776
    %v2778 = vmul.f32 %v2773, %v2777
    %vm2779 = vweird.f32 %v2762
    %vm2780 = vweird.f32 %v2773
    %vm2781 = vmor %vm2779, %vm2780
    %v2782 = vsel %vm2781, %v2773, %v2778
    %v2783 = vmul.f32 %v2751, %v2772
    %v2784 = vmul.f32 %v2752, %v2782
    %v2785 = vld [vmem:[#allocation9 + $0x70] sm:$0x1]
    %v2786 = vperm.slane %v2785, 0
    %v2787 = vmul.f32 %v2783, %v2786
    %v2788 = vmul.f32 %v2784, %v2786
    %v2789 = vld [vmem:[#allocation9 + $0x78] sm:$0x1]
    %v2790 = vperm.slane %v2789, 0
    %v2791 = vadd.f32 %v2787, %v2790
    %v2792 = vadd.f32 %v2788, %v2790
    %v2793 = vpack.c.bf16 %v2792, %v2791
    %v2794 = vld [vmem:[#allocation7 + $0x298] sm:$0xf]
    %v2795 = vld [vmem:[#allocation7 + $0x29c] sm:$0xf]
    %v2796 = vld [vmem:[#allocation7 + $0x2a0] sm:$0xf]
    %v2797 = vld [vmem:[#allocation7 + $0x2a4] sm:$0xf]
    %v2798 = vld [vmem:[#allocation7 + $0x2a8] sm:$0xf]
    %v2799 = vld [vmem:[#allocation7 + $0x2ac] sm:$0xf]
    %v2800 = vld [vmem:[#allocation7 + $0x2b0] sm:$0xf]
    %v2801 = vld [vmem:[#allocation7 + $0x2b4] sm:$0xf]
    %v2802 = vld [vmem:[#allocation7 + $0x2b8] sm:$0xf]
    %v2803 = vld [vmem:[#allocation7 + $0x2bc] sm:$0xf]
    %v2804 = vld [vmem:[#allocation7 + $0x2c0] sm:$0xf]
    %v2805 = vld [vmem:[#allocation7 + $0x2c4] sm:$0xf]
    %v2806 = vld [vmem:[#allocation7 + $0x2c8] sm:$0xf]
    %v2807 = vld [vmem:[#allocation7 + $0x2cc] sm:$0xf]
    %v2808 = vld [vmem:[#allocation7 + $0x2d0] sm:$0xf]
    %v2809 = vld [vmem:[#allocation7 + $0x2d4] sm:$0xf]
    %v2810 = vld [vmem:[#allocation9 + $0x80] sm:$0x1]
    %v2811 = vperm.slane %v2810, 0
    %v2828 = vunpack.c.l.b16 %v2794
    %v2829 = vunpack.c.l.b16 %v2795
    %v2830 = vunpack.c.l.b16 %v2796
    %v2831 = vunpack.c.l.b16 %v2797
    %v2832 = vunpack.c.l.b16 %v2798
    %v2833 = vunpack.c.l.b16 %v2799
    %v2834 = vunpack.c.l.b16 %v2800
    %v2835 = vunpack.c.l.b16 %v2801
    %v2836 = vunpack.c.l.b16 %v2802
    %v2837 = vunpack.c.l.b16 %v2803
    %v2838 = vunpack.c.l.b16 %v2804
    %v2839 = vunpack.c.l.b16 %v2805
    %v2840 = vunpack.c.l.b16 %v2806
    %v2841 = vunpack.c.l.b16 %v2807
    %v2842 = vunpack.c.l.b16 %v2808
    %v2843 = vunpack.c.l.b16 %v2809
    %v2844 = vpack.c.b16 %v2829, %v2828
    %v2845 = vpack.c.b16 %v2831, %v2830
    %v2846 = vpack.c.b16 %v2833, %v2832
    %v2847 = vpack.c.b16 %v2835, %v2834
    %v2848 = vpack.c.b16 %v2837, %v2836
    %v2849 = vpack.c.b16 %v2839, %v2838
    %v2850 = vpack.c.b16 %v2841, %v2840
    %v2851 = vpack.c.b16 %v2843, %v2842
    %2860 = vmatpush.bf16.msra.mxu0 %v2851
    %2861 = vmatpush.bf16.msra.mxu0 %v2850
    %2862 = vmatpush.bf16.msra.mxu0 %v2849
    %2863 = vmatpush.bf16.msra.mxu0 %v2848
    %2864 = vmatpush.bf16.msra.mxu0 %v2847
    %2865 = vmatpush.bf16.msra.mxu0 %v2846
    %2866 = vmatpush.bf16.msra.mxu0 %v2845
    %2867 = vmatpush.bf16.msra.mxu0 %v2844
    %2868 = vmatmul.bf16.gmra.mxu0 %v2793
    %v2869 = vpop.f32.mrf.mxu0
    %v2870 = vadd.f32 %v2811, %v2869
    %v2871 = vpop.f32.mrf.mxu0
    %v2872 = vadd.f32 %v2811, %v2871
    %2873 = vdwg.mxu0
    %v2874 = vmax.f32 %v2870, 0.0
    %v2875 = vmax.f32 %v2872, 0.0
    %v2876 = vpack.c.bf16 %v2875, %v2874
    %v2877 = vld [vmem:[#allocation7 + $0x2d8] sm:$0xf]
    %v2878 = vld [vmem:[#allocation7 + $0x2dc] sm:$0xf]
    %v2879 = vld [vmem:[#allocation7 + $0x2e0] sm:$0xf]
    %v2880 = vld [vmem:[#allocation7 + $0x2e4] sm:$0xf]
    %v2881 = vld [vmem:[#allocation7 + $0x2e8] sm:$0xf]
    %v2882 = vld [vmem:[#allocation7 + $0x2ec] sm:$0xf]
    %v2883 = vld [vmem:[#allocation7 + $0x2f0] sm:$0xf]
    %v2884 = vld [vmem:[#allocation7 + $0x2f4] sm:$0xf]
    %v2885 = vld [vmem:[#allocation7 + $0x2f8] sm:$0xf]
    %v2886 = vld [vmem:[#allocation7 + $0x2fc] sm:$0xf]
    %v2887 = vld [vmem:[#allocation7 + $0x300] sm:$0xf]
    %v2888 = vld [vmem:[#allocation7 + $0x304] sm:$0xf]
    %v2889 = vld [vmem:[#allocation7 + $0x308] sm:$0xf]
    %v2890 = vld [vmem:[#allocation7 + $0x30c] sm:$0xf]
    %v2891 = vld [vmem:[#allocation7 + $0x310] sm:$0xf]
    %v2892 = vld [vmem:[#allocation7 + $0x314] sm:$0xf]
    %v2893 = vld [vmem:[#allocation9 + $0x88] sm:$0x1]
    %v2894 = vperm.slane %v2893, 0
    %v2911 = vunpack.c.l.b16 %v2877
    %v2912 = vunpack.c.l.b16 %v2878
    %v2913 = vunpack.c.l.b16 %v2879
    %v2914 = vunpack.c.l.b16 %v2880
    %v2915 = vunpack.c.l.b16 %v2881
    %v2916 = vunpack.c.l.b16 %v2882
    %v2917 = vunpack.c.l.b16 %v2883
    %v2918 = vunpack.c.l.b16 %v2884
    %v2919 = vunpack.c.l.b16 %v2885
    %v2920 = vunpack.c.l.b16 %v2886
    %v2921 = vunpack.c.l.b16 %v2887
    %v2922 = vunpack.c.l.b16 %v2888
    %v2923 = vunpack.c.l.b16 %v2889
    %v2924 = vunpack.c.l.b16 %v2890
    %v2925 = vunpack.c.l.b16 %v2891
    %v2926 = vunpack.c.l.b16 %v2892
    %v2927 = vpack.c.b16 %v2912, %v2911
    %v2928 = vpack.c.b16 %v2914, %v2913
    %v2929 = vpack.c.b16 %v2916, %v2915
    %v2930 = vpack.c.b16 %v2918, %v2917
    %v2931 = vpack.c.b16 %v2920, %v2919
    %v2932 = vpack.c.b16 %v2922, %v2921
    %v2933 = vpack.c.b16 %v2924, %v2923
    %v2934 = vpack.c.b16 %v2926, %v2925
    %2943 = vmatpush.bf16.msra.mxu0 %v2934
    %2944 = vmatpush.bf16.msra.mxu0 %v2933
    %2945 = vmatpush.bf16.msra.mxu0 %v2932
    %2946 = vmatpush.bf16.msra.mxu0 %v2931
    %2947 = vmatpush.bf16.msra.mxu0 %v2930
    %2948 = vmatpush.bf16.msra.mxu0 %v2929
    %2949 = vmatpush.bf16.msra.mxu0 %v2928
    %2950 = vmatpush.bf16.msra.mxu0 %v2927
    %2951 = vmatmul.bf16.gmra.mxu0 %v2876
    %v2952 = vpop.f32.mrf.mxu0
    %v2953 = vadd.f32 %v2894, %v2952
    %v2954 = vpop.f32.mrf.mxu0
    %v2955 = vadd.f32 %v2894, %v2954
    %2956 = vdwg.mxu0
    %v2957 = vadd.f32 %v2791, %v2953
    %v2958 = vadd.f32 %v2792, %v2955
    %2959 = vadd.xlane.f32.xlu0 %v2957
    %v2960 = vpop.xlane.xlu0 %2959
    %2961 = vadd.xlane.f32.xlu0 %v2958
    %v2962 = vpop.xlane.xlu0 %2961
    %v2963 = vmul.f32 %v2960, %v1332
    %v2964 = vmul.f32 %v2962, %v1332
    %v2965 = vsub.f32 %v2957, %v2963
    %v2966 = vsub.f32 %v2958, %v2964
    %v2967 = vmul.f32 %v2965, %v2965
    %v2968 = vmul.f32 %v2966, %v2966
    %2969 = vadd.xlane.f32.xlu0 %v2967
    %v2970 = vpop.xlane.xlu0 %2969
    %2971 = vadd.xlane.f32.xlu0 %v2968
    %v2972 = vpop.xlane.xlu0 %2971
    %v2973 = vmul.f32 %v2970, %v1332
    %v2974 = vmul.f32 %v2972, %v1332
    %v2975 = vadd.f32 %v2973, 1e-05
    %v2976 = vadd.f32 %v2974, 1e-05
    %v2977 = vrsqrt.pop %v2975
    %v2978 = vmul.f32 %v2977, %v2975
    %v2979 = vmul.f32 %v2978, %v2977
    %v2980 = vmul.f32 0.5, %v2979
    %v2981 = vsub.f32 1.5, %v2980
    %v2982 = vmul.f32 %v2977, %v2981
    %vm2983 = vweird.f32 %v2975
    %vm2984 = vweird.f32 %v2977
    %vm2985 = vmor %vm2983, %vm2984
    %v2986 = vsel %vm2985, %v2977, %v2982
    %v2987 = vrsqrt.pop %v2976
    %v2988 = vmul.f32 %v2987, %v2976
    %v2989 = vmul.f32 %v2988, %v2987
    %v2990 = vmul.f32 0.5, %v2989
    %v2991 = vsub.f32 1.5, %v2990
    %v2992 = vmul.f32 %v2987, %v2991
    %vm2993 = vweird.f32 %v2976
    %vm2994 = vweird.f32 %v2987
    %vm2995 = vmor %vm2993, %vm2994
    %v2996 = vsel %vm2995, %v2987, %v2992
    %v2997 = vmul.f32 %v2965, %v2986
    %v2998 = vmul.f32 %v2966, %v2996
    %v2999 = vld [vmem:[#allocation9 + $0x90] sm:$0x1]
    %v3000 = vperm.slane %v2999, 0
    %v3001 = vmul.f32 %v2997, %v3000
    %v3002 = vmul.f32 %v2998, %v3000
    %v3003 = vld [vmem:[#allocation9 + $0x98] sm:$0x1]
    %v3004 = vperm.slane %v3003, 0
    %v3005 = vadd.f32 %v3001, %v3004
    %v3006 = vadd.f32 %v3002, %v3004
    %3007 = vadd.xlane.f32.xlu0 %v3005
    %v3008 = vpop.xlane.xlu0 %3007
    %3009 = vadd.xlane.f32.xlu0 %v3006
    %v3010 = vpop.xlane.xlu0 %3009
    %v3011 = vmul.f32 %v3008, %v1332
    %v3012 = vmul.f32 %v3010, %v1332
    %v3013 = vsub.f32 %v3005, %v3011
    %v3014 = vsub.f32 %v3006, %v3012
    %v3015 = vmul.f32 %v3013, %v3013
    %v3016 = vmul.f32 %v3014, %v3014
    %3017 = vadd.xlane.f32.xlu0 %v3015
    %v3018 = vpop.xlane.xlu0 %3017
    %3019 = vadd.xlane.f32.xlu0 %v3016
    %v3020 = vpop.xlane.xlu0 %3019
    %v3021 = vmul.f32 %v3018, %v1332
    %v3022 = vmul.f32 %v3020, %v1332
    %v3023 = vadd.f32 %v3021, 1e-05
    %v3024 = vadd.f32 %v3022, 1e-05
    %v3025 = vrsqrt.pop %v3023
    %v3026 = vmul.f32 %v3025, %v3023
    %v3027 = vmul.f32 %v3026, %v3025
    %v3028 = vmul.f32 0.5, %v3027
    %v3029 = vsub.f32 1.5, %v3028
    %v3030 = vmul.f32 %v3025, %v3029
    %vm3031 = vweird.f32 %v3023
    %vm3032 = vweird.f32 %v3025
    %vm3033 = vmor %vm3031, %vm3032
    %v3034 = vsel %vm3033, %v3025, %v3030
    %v3035 = vrsqrt.pop %v3024
    %v3036 = vmul.f32 %v3035, %v3024
    %v3037 = vmul.f32 %v3036, %v3035
    %v3038 = vmul.f32 0.5, %v3037
    %v3039 = vsub.f32 1.5, %v3038
    %v3040 = vmul.f32 %v3035, %v3039
    %vm3041 = vweird.f32 %v3024
    %vm3042 = vweird.f32 %v3035
    %vm3043 = vmor %vm3041, %vm3042
    %v3044 = vsel %vm3043, %v3035, %v3040
    %v3045 = vmul.f32 %v3013, %v3034
    %v3046 = vmul.f32 %v3014, %v3044
    %v3047 = vld [vmem:[#allocation9 + $0x1a0] sm:$0x1]
    %v3048 = vperm.slane %v3047, 0
    %v3049 = vmul.f32 %v3045, %v3048
    %v3050 = vmul.f32 %v3046, %v3048
    %v3051 = vld [vmem:[#allocation9 + $0x1a8] sm:$0x1]
    %v3052 = vperm.slane %v3051, 0
    %v3053 = vadd.f32 %v3049, %v3052
    %v3054 = vadd.f32 %v3050, %v3052
    %v3055 = vld [vmem:[#allocation7 + $0x10] sm:$0xf]
    %v3056 = vld [vmem:[#allocation7 + $0x14] sm:$0xf]
    %v3057 = vld [vmem:[%s1] sm:$0xff]
    %v3058 = vld [vmem:[%s1 + $0x8] sm:$0xff]
    %3059 = vset.pattern.permute.xlu0 0
    %3060 = vperm.xlu0 %3059, %v3057
    %v3061 = vpop.permute.xlu0 %3060
    %3062 = vset.pattern.permute.xlu0 0
    %3063 = vperm.xlu0 %3062, %v3058
    %v3064 = vpop.permute.xlu0 %3063
    %vm3065 = vcmp.eq.s32.totalorder %v3061, %v118
    %vm3066 = vcmp.eq.s32.totalorder %v3064, %v118
    %v3067 = vsel %vm3065, 1, 0
    %v3068 = vsel %vm3066, 1, 0
    %v3069 = vcvt.s32.f32 %v3067
    %v3070 = vcvt.s32.f32 %v3068
    %v3071 = vpack.c.bf16 %v3070, %v3069
    %v3074 = vunpack.c.l.b16 %v3055
    %v3075 = vunpack.c.l.b16 %v3056
    %v3076 = vpack.c.b16 %v3075, %v3074
    %v3079 = vsel %vm403, %v3071, 0
    %3081 = vmatpush.bf16.msra.mxu0 0
    %3082 = vmatpush.bf16.msra.mxu0 0
    %3083 = vmatpush.bf16.msra.mxu0 0
    %3084 = vmatpush.bf16.msra.mxu0 0
    %3085 = vmatpush.bf16.msra.mxu0 0
    %3086 = vmatpush.bf16.msra.mxu0 0
    %3087 = vmatpush.bf16.msra.mxu0 0
    %3088 = vmatpush.bf16.msra.mxu0 %v3076
    %3089 = vmatmul.bf16.gmra.mxu0 %v3079
    %v3090 = vpop.f32.mrf.mxu0
    %v3091 = vadd.f32 0.0, %v3090
    %v3092 = vpop.f32.mrf.mxu0
    %v3093 = vadd.f32 0.0, %v3092
    %3094 = vdwg.mxu0
    %v3095 = vpack.c.bf16 %v3093, %v3091
    %v3096 = vld [vmem:[#allocation7 + $0x318] sm:$0xf]
    %v3097 = vld [vmem:[#allocation7 + $0x31c] sm:$0xf]
    %v3098 = vld [vmem:[#allocation7 + $0x320] sm:$0xf]
    %v3099 = vld [vmem:[#allocation7 + $0x324] sm:$0xf]
    %v3100 = vld [vmem:[#allocation7 + $0x328] sm:$0xf]
    %v3101 = vld [vmem:[#allocation7 + $0x32c] sm:$0xf]
    %v3102 = vld [vmem:[#allocation7 + $0x330] sm:$0xf]
    %v3103 = vld [vmem:[#allocation7 + $0x334] sm:$0xf]
    %v3104 = vld [vmem:[#allocation7 + $0x338] sm:$0xf]
    %v3105 = vld [vmem:[#allocation7 + $0x33c] sm:$0xf]
    %v3106 = vld [vmem:[#allocation7 + $0x340] sm:$0xf]
    %v3107 = vld [vmem:[#allocation7 + $0x344] sm:$0xf]
    %v3108 = vld [vmem:[#allocation7 + $0x348] sm:$0xf]
    %v3109 = vld [vmem:[#allocation7 + $0x34c] sm:$0xf]
    %v3110 = vld [vmem:[#allocation7 + $0x350] sm:$0xf]
    %v3111 = vld [vmem:[#allocation7 + $0x354] sm:$0xf]
    %v3112 = vld [vmem:[#allocation9 + $0xa0] sm:$0x1]
    %v3113 = vperm.slane %v3112, 0
    %v3130 = vunpack.c.l.b16 %v3096
    %v3131 = vunpack.c.l.b16 %v3097
    %v3132 = vunpack.c.l.b16 %v3098
    %v3133 = vunpack.c.l.b16 %v3099
    %v3134 = vunpack.c.l.b16 %v3100
    %v3135 = vunpack.c.l.b16 %v3101
    %v3136 = vunpack.c.l.b16 %v3102
    %v3137 = vunpack.c.l.b16 %v3103
    %v3138 = vunpack.c.l.b16 %v3104
    %v3139 = vunpack.c.l.b16 %v3105
    %v3140 = vunpack.c.l.b16 %v3106
    %v3141 = vunpack.c.l.b16 %v3107
    %v3142 = vunpack.c.l.b16 %v3108
    %v3143 = vunpack.c.l.b16 %v3109
    %v3144 = vunpack.c.l.b16 %v3110
    %v3145 = vunpack.c.l.b16 %v3111
    %v3146 = vpack.c.b16 %v3131, %v3130
    %v3147 = vpack.c.b16 %v3133, %v3132
    %v3148 = vpack.c.b16 %v3135, %v3134
    %v3149 = vpack.c.b16 %v3137, %v3136
    %v3150 = vpack.c.b16 %v3139, %v3138
    %v3151 = vpack.c.b16 %v3141, %v3140
    %v3152 = vpack.c.b16 %v3143, %v3142
    %v3153 = vpack.c.b16 %v3145, %v3144
    %3162 = vmatpush.bf16.msra.mxu0 %v3153
    %3163 = vmatpush.bf16.msra.mxu0 %v3152
    %3164 = vmatpush.bf16.msra.mxu0 %v3151
    %3165 = vmatpush.bf16.msra.mxu0 %v3150
    %3166 = vmatpush.bf16.msra.mxu0 %v3149
    %3167 = vmatpush.bf16.msra.mxu0 %v3148
    %3168 = vmatpush.bf16.msra.mxu0 %v3147
    %3169 = vmatpush.bf16.msra.mxu0 %v3146
    %3170 = vmatmul.bf16.gmra.mxu0 %v3095
    %v3171 = vpop.f32.mrf.mxu0
    %v3172 = vadd.f32 %v3113, %v3171
    %v3173 = vpop.f32.mrf.mxu0
    %v3174 = vadd.f32 %v3113, %v3173
    %3175 = vdwg.mxu0
    %v3176 = vld [vmem:[#allocation7 + $0x358] sm:$0xf]
    %v3177 = vld [vmem:[#allocation7 + $0x35c] sm:$0xf]
    %v3178 = vld [vmem:[#allocation7 + $0x360] sm:$0xf]
    %v3179 = vld [vmem:[#allocation7 + $0x364] sm:$0xf]
    %v3180 = vld [vmem:[#allocation7 + $0x368] sm:$0xf]
    %v3181 = vld [vmem:[#allocation7 + $0x36c] sm:$0xf]
    %v3182 = vld [vmem:[#allocation7 + $0x370] sm:$0xf]
    %v3183 = vld [vmem:[#allocation7 + $0x374] sm:$0xf]
    %v3184 = vld [vmem:[#allocation7 + $0x378] sm:$0xf]
    %v3185 = vld [vmem:[#allocation7 + $0x37c] sm:$0xf]
    %v3186 = vld [vmem:[#allocation7 + $0x380] sm:$0xf]
    %v3187 = vld [vmem:[#allocation7 + $0x384] sm:$0xf]
    %v3188 = vld [vmem:[#allocation7 + $0x388] sm:$0xf]
    %v3189 = vld [vmem:[#allocation7 + $0x38c] sm:$0xf]
    %v3190 = vld [vmem:[#allocation7 + $0x390] sm:$0xf]
    %v3191 = vld [vmem:[#allocation7 + $0x394] sm:$0xf]
    %v3192 = vld [vmem:[#allocation9 + $0xa8] sm:$0x1]
    %v3193 = vperm.slane %v3192, 0
    %v3210 = vunpack.c.l.b16 %v3176
    %v3211 = vunpack.c.l.b16 %v3177
    %v3212 = vunpack.c.l.b16 %v3178
    %v3213 = vunpack.c.l.b16 %v3179
    %v3214 = vunpack.c.l.b16 %v3180
    %v3215 = vunpack.c.l.b16 %v3181
    %v3216 = vunpack.c.l.b16 %v3182
    %v3217 = vunpack.c.l.b16 %v3183
    %v3218 = vunpack.c.l.b16 %v3184
    %v3219 = vunpack.c.l.b16 %v3185
    %v3220 = vunpack.c.l.b16 %v3186
    %v3221 = vunpack.c.l.b16 %v3187
    %v3222 = vunpack.c.l.b16 %v3188
    %v3223 = vunpack.c.l.b16 %v3189
    %v3224 = vunpack.c.l.b16 %v3190
    %v3225 = vunpack.c.l.b16 %v3191
    %v3226 = vpack.c.b16 %v3211, %v3210
    %v3227 = vpack.c.b16 %v3213, %v3212
    %v3228 = vpack.c.b16 %v3215, %v3214
    %v3229 = vpack.c.b16 %v3217, %v3216
    %v3230 = vpack.c.b16 %v3219, %v3218
    %v3231 = vpack.c.b16 %v3221, %v3220
    %v3232 = vpack.c.b16 %v3223, %v3222
    %v3233 = vpack.c.b16 %v3225, %v3224
    %3242 = vmatpush.bf16.msra.mxu0 %v3233
    %3243 = vmatpush.bf16.msra.mxu0 %v3232
    %3244 = vmatpush.bf16.msra.mxu0 %v3231
    %3245 = vmatpush.bf16.msra.mxu0 %v3230
    %3246 = vmatpush.bf16.msra.mxu0 %v3229
    %3247 = vmatpush.bf16.msra.mxu0 %v3228
    %3248 = vmatpush.bf16.msra.mxu0 %v3227
    %3249 = vmatpush.bf16.msra.mxu0 %v3226
    %3250 = vmatmul.bf16.gmra.mxu0 %v3095
    %v3251 = vpop.f32.mrf.mxu0
    %v3252 = vadd.f32 %v3193, %v3251
    %v3253 = vpop.f32.mrf.mxu0
    %v3254 = vadd.f32 %v3193, %v3253
    %3255 = vdwg.mxu0
    %v3256 = vld [vmem:[#allocation7 + $0x398] sm:$0xf]
    %v3257 = vld [vmem:[#allocation7 + $0x39c] sm:$0xf]
    %v3258 = vld [vmem:[#allocation7 + $0x3a0] sm:$0xf]
    %v3259 = vld [vmem:[#allocation7 + $0x3a4] sm:$0xf]
    %v3260 = vld [vmem:[#allocation7 + $0x3a8] sm:$0xf]
    %v3261 = vld [vmem:[#allocation7 + $0x3ac] sm:$0xf]
    %v3262 = vld [vmem:[#allocation7 + $0x3b0] sm:$0xf]
    %v3263 = vld [vmem:[#allocation7 + $0x3b4] sm:$0xf]
    %v3264 = vld [vmem:[#allocation7 + $0x3b8] sm:$0xf]
    %v3265 = vld [vmem:[#allocation7 + $0x3bc] sm:$0xf]
    %v3266 = vld [vmem:[#allocation7 + $0x3c0] sm:$0xf]
    %v3267 = vld [vmem:[#allocation7 + $0x3c4] sm:$0xf]
    %v3268 = vld [vmem:[#allocation7 + $0x3c8] sm:$0xf]
    %v3269 = vld [vmem:[#allocation7 + $0x3cc] sm:$0xf]
    %v3270 = vld [vmem:[#allocation7 + $0x3d0] sm:$0xf]
    %v3271 = vld [vmem:[#allocation7 + $0x3d4] sm:$0xf]
    %v3272 = vld [vmem:[#allocation9 + $0xb0] sm:$0x1]
    %v3273 = vperm.slane %v3272, 0
    %v3290 = vunpack.c.l.b16 %v3256
    %v3291 = vunpack.c.l.b16 %v3257
    %v3292 = vunpack.c.l.b16 %v3258
    %v3293 = vunpack.c.l.b16 %v3259
    %v3294 = vunpack.c.l.b16 %v3260
    %v3295 = vunpack.c.l.b16 %v3261
    %v3296 = vunpack.c.l.b16 %v3262
    %v3297 = vunpack.c.l.b16 %v3263
    %v3298 = vunpack.c.l.b16 %v3264
    %v3299 = vunpack.c.l.b16 %v3265
    %v3300 = vunpack.c.l.b16 %v3266
    %v3301 = vunpack.c.l.b16 %v3267
    %v3302 = vunpack.c.l.b16 %v3268
    %v3303 = vunpack.c.l.b16 %v3269
    %v3304 = vunpack.c.l.b16 %v3270
    %v3305 = vunpack.c.l.b16 %v3271
    %v3306 = vpack.c.b16 %v3291, %v3290
    %v3307 = vpack.c.b16 %v3293, %v3292
    %v3308 = vpack.c.b16 %v3295, %v3294
    %v3309 = vpack.c.b16 %v3297, %v3296
    %v3310 = vpack.c.b16 %v3299, %v3298
    %v3311 = vpack.c.b16 %v3301, %v3300
    %v3312 = vpack.c.b16 %v3303, %v3302
    %v3313 = vpack.c.b16 %v3305, %v3304
    %3322 = vmatpush.bf16.msra.mxu0 %v3313
    %3323 = vmatpush.bf16.msra.mxu0 %v3312
    %3324 = vmatpush.bf16.msra.mxu0 %v3311
    %3325 = vmatpush.bf16.msra.mxu0 %v3310
    %3326 = vmatpush.bf16.msra.mxu0 %v3309
    %3327 = vmatpush.bf16.msra.mxu0 %v3308
    %3328 = vmatpush.bf16.msra.mxu0 %v3307
    %3329 = vmatpush.bf16.msra.mxu0 %v3306
    %3330 = vmatmul.bf16.gmra.mxu0 %v3095
    %v3331 = vpop.f32.mrf.mxu0
    %v3332 = vadd.f32 %v3273, %v3331
    %v3333 = vpop.f32.mrf.mxu0
    %v3334 = vadd.f32 %v3273, %v3333
    %3335 = vdwg.mxu0
    %v3337 = vsel %vm403, %v3172, 0
    %v3340 = vsel %vm403, %v3174, 0
    %v3343 = vsel %vm403, %v3252, 0
    %v3346 = vsel %vm403, %v3254, 0
    %3348 = vmatpush.xpose.msra.mxu0 0.0
    %3349 = vmatpush.xpose.msra.mxu0 0.0
    %3350 = vmatpush.xpose.msra.mxu0 0.0
    %3351 = vmatpush.xpose.msra.mxu0 0.0
    %3352 = vmatpush.xpose.msra.mxu0 0.0
    %3353 = vmatpush.xpose.msra.mxu0 0.0
    %3354 = vmatpush.xpose.msra.mxu0 0.0
    %3355 = vmatpush.xpose.msra.mxu0 0.0
    %3356 = vmatpush.xpose.msra.mxu0 0.0
    %3357 = vmatpush.xpose.msra.mxu0 0.0
    %3358 = vmatpush.xpose.msra.mxu0 0.0
    %3359 = vmatpush.xpose.msra.mxu0 0.0
    %3360 = vmatpush.xpose.msra.mxu0 0.0
    %3361 = vmatpush.xpose.msra.mxu0 0.0
    %3362 = vmatpush.xpose.msra.mxu0 %v3346
    %3363 = vmatpush.xpose.msra.mxu0 %v3343
    %3364 = vmatmul.f32.gmra.mxu0 %v3337
    %v3365 = vpop.f32.mrf.mxu0
    %v3366 = vadd.f32 %v107, %v3365
    %3367 = vmatmul.f32.gmra.mxu0 %v3340
    %v3368 = vpop.f32.mrf.mxu0
    %v3369 = vadd.f32 %v108, %v3368
    %3370 = vdwg.mxu0
    %3371 = vrot.lane.b32.xlu0 %v3172, 112
    %v3372 = vpop.permute.xlu0 %3371
    %3373 = vrot.lane.b32.xlu0 %v3174, 112
    %v3374 = vpop.permute.xlu0 %3373
    %3375 = vrot.lane.b32.xlu0 %v3252, 112
    %v3376 = vpop.permute.xlu0 %3375
    %3377 = vrot.lane.b32.xlu0 %v3254, 112
    %v3378 = vpop.permute.xlu0 %3377
    %v3379 = vsel %vm403, %v3372, 0
    %v3381 = vsel %vm403, %v3374, 0
    %v3383 = vsel %vm403, %v3376, 0
    %v3385 = vsel %vm403, %v3378, 0
    %3387 = vmatpush.xpose.msra.mxu0 0.0
    %3388 = vmatpush.xpose.msra.mxu0 0.0
    %3389 = vmatpush.xpose.msra.mxu0 0.0
    %3390 = vmatpush.xpose.msra.mxu0 0.0
    %3391 = vmatpush.xpose.msra.mxu0 0.0
    %3392 = vmatpush.xpose.msra.mxu0 0.0
    %3393 = vmatpush.xpose.msra.mxu0 0.0
    %3394 = vmatpush.xpose.msra.mxu0 0.0
    %3395 = vmatpush.xpose.msra.mxu0 0.0
    %3396 = vmatpush.xpose.msra.mxu0 0.0
    %3397 = vmatpush.xpose.msra.mxu0 0.0
    %3398 = vmatpush.xpose.msra.mxu0 0.0
    %3399 = vmatpush.xpose.msra.mxu0 0.0
    %3400 = vmatpush.xpose.msra.mxu0 0.0
    %3401 = vmatpush.xpose.msra.mxu0 %v3385
    %3402 = vmatpush.xpose.msra.mxu0 %v3383
    %3403 = vmatmul.f32.gmra.mxu0 %v3379
    %v3404 = vpop.f32.mrf.mxu0
    %v3405 = vadd.f32 %v107, %v3404
    %3406 = vmatmul.f32.gmra.mxu0 %v3381
    %v3407 = vpop.f32.mrf.mxu0
    %v3408 = vadd.f32 %v108, %v3407
    %3409 = vdwg.mxu0
    %3410 = vrot.lane.b32.xlu0 %v3172, 96
    %v3411 = vpop.permute.xlu0 %3410
    %3412 = vrot.lane.b32.xlu0 %v3174, 96
    %v3413 = vpop.permute.xlu0 %3412
    %3414 = vrot.lane.b32.xlu0 %v3252, 96
    %v3415 = vpop.permute.xlu0 %3414
    %3416 = vrot.lane.b32.xlu0 %v3254, 96
    %v3417 = vpop.permute.xlu0 %3416
    %v3418 = vsel %vm403, %v3411, 0
    %v3420 = vsel %vm403, %v3413, 0
    %v3422 = vsel %vm403, %v3415, 0
    %v3424 = vsel %vm403, %v3417, 0
    %3426 = vmatpush.xpose.msra.mxu0 0.0
    %3427 = vmatpush.xpose.msra.mxu0 0.0
    %3428 = vmatpush.xpose.msra.mxu0 0.0
    %3429 = vmatpush.xpose.msra.mxu0 0.0
    %3430 = vmatpush.xpose.msra.mxu0 0.0
    %3431 = vmatpush.xpose.msra.mxu0 0.0
    %3432 = vmatpush.xpose.msra.mxu0 0.0
    %3433 = vmatpush.xpose.msra.mxu0 0.0
    %3434 = vmatpush.xpose.msra.mxu0 0.0
    %3435 = vmatpush.xpose.msra.mxu0 0.0
    %3436 = vmatpush.xpose.msra.mxu0 0.0
    %3437 = vmatpush.xpose.msra.mxu0 0.0
    %3438 = vmatpush.xpose.msra.mxu0 0.0
    %3439 = vmatpush.xpose.msra.mxu0 0.0
    %3440 = vmatpush.xpose.msra.mxu0 %v3424
    %3441 = vmatpush.xpose.msra.mxu0 %v3422
    %3442 = vmatmul.f32.gmra.mxu0 %v3418
    %v3443 = vpop.f32.mrf.mxu0
    %v3444 = vadd.f32 %v107, %v3443
    %3445 = vmatmul.f32.gmra.mxu0 %v3420
    %v3446 = vpop.f32.mrf.mxu0
    %v3447 = vadd.f32 %v108, %v3446
    %3448 = vdwg.mxu0
    %3449 = vrot.lane.b32.xlu0 %v3172, 80
    %v3450 = vpop.permute.xlu0 %3449
    %3451 = vrot.lane.b32.xlu0 %v3174, 80
    %v3452 = vpop.permute.xlu0 %3451
    %3453 = vrot.lane.b32.xlu0 %v3252, 80
    %v3454 = vpop.permute.xlu0 %3453
    %3455 = vrot.lane.b32.xlu0 %v3254, 80
    %v3456 = vpop.permute.xlu0 %3455
    %v3457 = vsel %vm403, %v3450, 0
    %v3459 = vsel %vm403, %v3452, 0
    %v3461 = vsel %vm403, %v3454, 0
    %v3463 = vsel %vm403, %v3456, 0
    %3465 = vmatpush.xpose.msra.mxu0 0.0
    %3466 = vmatpush.xpose.msra.mxu0 0.0
    %3467 = vmatpush.xpose.msra.mxu0 0.0
    %3468 = vmatpush.xpose.msra.mxu0 0.0
    %3469 = vmatpush.xpose.msra.mxu0 0.0
    %3470 = vmatpush.xpose.msra.mxu0 0.0
    %3471 = vmatpush.xpose.msra.mxu0 0.0
    %3472 = vmatpush.xpose.msra.mxu0 0.0
    %3473 = vmatpush.xpose.msra.mxu0 0.0
    %3474 = vmatpush.xpose.msra.mxu0 0.0
    %3475 = vmatpush.xpose.msra.mxu0 0.0
    %3476 = vmatpush.xpose.msra.mxu0 0.0
    %3477 = vmatpush.xpose.msra.mxu0 0.0
    %3478 = vmatpush.xpose.msra.mxu0 0.0
    %3479 = vmatpush.xpose.msra.mxu0 %v3463
    %3480 = vmatpush.xpose.msra.mxu0 %v3461
    %3481 = vmatmul.f32.gmra.mxu0 %v3457
    %v3482 = vpop.f32.mrf.mxu0
    %v3483 = vadd.f32 %v107, %v3482
    %3484 = vmatmul.f32.gmra.mxu0 %v3459
    %v3485 = vpop.f32.mrf.mxu0
    %v3486 = vadd.f32 %v108, %v3485
    %3487 = vdwg.mxu0
    %3488 = vrot.lane.b32.xlu0 %v3172, 64
    %v3489 = vpop.permute.xlu0 %3488
    %3490 = vrot.lane.b32.xlu0 %v3174, 64
    %v3491 = vpop.permute.xlu0 %3490
    %3492 = vrot.lane.b32.xlu0 %v3252, 64
    %v3493 = vpop.permute.xlu0 %3492
    %3494 = vrot.lane.b32.xlu0 %v3254, 64
    %v3495 = vpop.permute.xlu0 %3494
    %v3496 = vsel %vm403, %v3489, 0
    %v3498 = vsel %vm403, %v3491, 0
    %v3500 = vsel %vm403, %v3493, 0
    %v3502 = vsel %vm403, %v3495, 0
    %3504 = vmatpush.xpose.msra.mxu0 0.0
    %3505 = vmatpush.xpose.msra.mxu0 0.0
    %3506 = vmatpush.xpose.msra.mxu0 0.0
    %3507 = vmatpush.xpose.msra.mxu0 0.0
    %3508 = vmatpush.xpose.msra.mxu0 0.0
    %3509 = vmatpush.xpose.msra.mxu0 0.0
    %3510 = vmatpush.xpose.msra.mxu0 0.0
    %3511 = vmatpush.xpose.msra.mxu0 0.0
    %3512 = vmatpush.xpose.msra.mxu0 0.0
    %3513 = vmatpush.xpose.msra.mxu0 0.0
    %3514 = vmatpush.xpose.msra.mxu0 0.0
    %3515 = vmatpush.xpose.msra.mxu0 0.0
    %3516 = vmatpush.xpose.msra.mxu0 0.0
    %3517 = vmatpush.xpose.msra.mxu0 0.0
    %3518 = vmatpush.xpose.msra.mxu0 %v3502
    %3519 = vmatpush.xpose.msra.mxu0 %v3500
    %3520 = vmatmul.f32.gmra.mxu0 %v3496
    %v3521 = vpop.f32.mrf.mxu0
    %v3522 = vadd.f32 %v107, %v3521
    %3523 = vmatmul.f32.gmra.mxu0 %v3498
    %v3524 = vpop.f32.mrf.mxu0
    %v3525 = vadd.f32 %v108, %v3524
    %3526 = vdwg.mxu0
    %3527 = vrot.lane.b32.xlu0 %v3172, 48
    %v3528 = vpop.permute.xlu0 %3527
    %3529 = vrot.lane.b32.xlu0 %v3174, 48
    %v3530 = vpop.permute.xlu0 %3529
    %3531 = vrot.lane.b32.xlu0 %v3252, 48
    %v3532 = vpop.permute.xlu0 %3531
    %3533 = vrot.lane.b32.xlu0 %v3254, 48
    %v3534 = vpop.permute.xlu0 %3533
    %v3535 = vsel %vm403, %v3528, 0
    %v3537 = vsel %vm403, %v3530, 0
    %v3539 = vsel %vm403, %v3532, 0
    %v3541 = vsel %vm403, %v3534, 0
    %3543 = vmatpush.xpose.msra.mxu0 0.0
    %3544 = vmatpush.xpose.msra.mxu0 0.0
    %3545 = vmatpush.xpose.msra.mxu0 0.0
    %3546 = vmatpush.xpose.msra.mxu0 0.0
    %3547 = vmatpush.xpose.msra.mxu0 0.0
    %3548 = vmatpush.xpose.msra.mxu0 0.0
    %3549 = vmatpush.xpose.msra.mxu0 0.0
    %3550 = vmatpush.xpose.msra.mxu0 0.0
    %3551 = vmatpush.xpose.msra.mxu0 0.0
    %3552 = vmatpush.xpose.msra.mxu0 0.0
    %3553 = vmatpush.xpose.msra.mxu0 0.0
    %3554 = vmatpush.xpose.msra.mxu0 0.0
    %3555 = vmatpush.xpose.msra.mxu0 0.0
    %3556 = vmatpush.xpose.msra.mxu0 0.0
    %3557 = vmatpush.xpose.msra.mxu0 %v3541
    %3558 = vmatpush.xpose.msra.mxu0 %v3539
    %3559 = vmatmul.f32.gmra.mxu0 %v3535
    %v3560 = vpop.f32.mrf.mxu0
    %v3561 = vadd.f32 %v107, %v3560
    %3562 = vmatmul.f32.gmra.mxu0 %v3537
    %v3563 = vpop.f32.mrf.mxu0
    %v3564 = vadd.f32 %v108, %v3563
    %3565 = vdwg.mxu0
    %3566 = vrot.lane.b32.xlu0 %v3172, 32
    %v3567 = vpop.permute.xlu0 %3566
    %3568 = vrot.lane.b32.xlu0 %v3174, 32
    %v3569 = vpop.permute.xlu0 %3568
    %3570 = vrot.lane.b32.xlu0 %v3252, 32
    %v3571 = vpop.permute.xlu0 %3570
    %3572 = vrot.lane.b32.xlu0 %v3254, 32
    %v3573 = vpop.permute.xlu0 %3572
    %v3574 = vsel %vm403, %v3567, 0
    %v3576 = vsel %vm403, %v3569, 0
    %v3578 = vsel %vm403, %v3571, 0
    %v3580 = vsel %vm403, %v3573, 0
    %3582 = vmatpush.xpose.msra.mxu0 0.0
    %3583 = vmatpush.xpose.msra.mxu0 0.0
    %3584 = vmatpush.xpose.msra.mxu0 0.0
    %3585 = vmatpush.xpose.msra.mxu0 0.0
    %3586 = vmatpush.xpose.msra.mxu0 0.0
    %3587 = vmatpush.xpose.msra.mxu0 0.0
    %3588 = vmatpush.xpose.msra.mxu0 0.0
    %3589 = vmatpush.xpose.msra.mxu0 0.0
    %3590 = vmatpush.xpose.msra.mxu0 0.0
    %3591 = vmatpush.xpose.msra.mxu0 0.0
    %3592 = vmatpush.xpose.msra.mxu0 0.0
    %3593 = vmatpush.xpose.msra.mxu0 0.0
    %3594 = vmatpush.xpose.msra.mxu0 0.0
    %3595 = vmatpush.xpose.msra.mxu0 0.0
    %3596 = vmatpush.xpose.msra.mxu0 %v3580
    %3597 = vmatpush.xpose.msra.mxu0 %v3578
    %3598 = vmatmul.f32.gmra.mxu0 %v3574
    %v3599 = vpop.f32.mrf.mxu0
    %v3600 = vadd.f32 %v107, %v3599
    %3601 = vmatmul.f32.gmra.mxu0 %v3576
    %v3602 = vpop.f32.mrf.mxu0
    %v3603 = vadd.f32 %v108, %v3602
    %3604 = vdwg.mxu0
    %3605 = vrot.lane.b32.xlu0 %v3172, 16
    %v3606 = vpop.permute.xlu0 %3605
    %3607 = vrot.lane.b32.xlu0 %v3174, 16
    %v3608 = vpop.permute.xlu0 %3607
    %3609 = vrot.lane.b32.xlu0 %v3252, 16
    %v3610 = vpop.permute.xlu0 %3609
    %3611 = vrot.lane.b32.xlu0 %v3254, 16
    %v3612 = vpop.permute.xlu0 %3611
    %v3613 = vsel %vm403, %v3606, 0
    %v3615 = vsel %vm403, %v3608, 0
    %v3617 = vsel %vm403, %v3610, 0
    %v3619 = vsel %vm403, %v3612, 0
    %3621 = vmatpush.xpose.msra.mxu0 0.0
    %3622 = vmatpush.xpose.msra.mxu0 0.0
    %3623 = vmatpush.xpose.msra.mxu0 0.0
    %3624 = vmatpush.xpose.msra.mxu0 0.0
    %3625 = vmatpush.xpose.msra.mxu0 0.0
    %3626 = vmatpush.xpose.msra.mxu0 0.0
    %3627 = vmatpush.xpose.msra.mxu0 0.0
    %3628 = vmatpush.xpose.msra.mxu0 0.0
    %3629 = vmatpush.xpose.msra.mxu0 0.0
    %3630 = vmatpush.xpose.msra.mxu0 0.0
    %3631 = vmatpush.xpose.msra.mxu0 0.0
    %3632 = vmatpush.xpose.msra.mxu0 0.0
    %3633 = vmatpush.xpose.msra.mxu0 0.0
    %3634 = vmatpush.xpose.msra.mxu0 0.0
    %3635 = vmatpush.xpose.msra.mxu0 %v3619
    %3636 = vmatpush.xpose.msra.mxu0 %v3617
    %3637 = vmatmul.f32.gmra.mxu0 %v3613
    %v3638 = vpop.f32.mrf.mxu0
    %v3639 = vadd.f32 %v107, %v3638
    %3640 = vmatmul.f32.gmra.mxu0 %v3615
    %v3641 = vpop.f32.mrf.mxu0
    %v3642 = vadd.f32 %v108, %v3641
    %3643 = vdwg.mxu0
    %v3644 = vsel %vm403, %v3366, -inf
    %3645 = vmax.xlane.f32.xlu0 %v3644
    %v3646 = vpop.xlane.xlu0 %3645
    %v3647 = vsel %vm403, %v3369, -inf
    %3648 = vmax.xlane.f32.xlu0 %v3647
    %v3649 = vpop.xlane.xlu0 %3648
    %v3650 = vsel %vm403, %v3405, -inf
    %3651 = vmax.xlane.f32.xlu0 %v3650
    %v3652 = vpop.xlane.xlu0 %3651
    %v3653 = vsel %vm403, %v3408, -inf
    %3654 = vmax.xlane.f32.xlu0 %v3653
    %v3655 = vpop.xlane.xlu0 %3654
    %v3656 = vsel %vm403, %v3444, -inf
    %3657 = vmax.xlane.f32.xlu0 %v3656
    %v3658 = vpop.xlane.xlu0 %3657
    %v3659 = vsel %vm403, %v3447, -inf
    %3660 = vmax.xlane.f32.xlu0 %v3659
    %v3661 = vpop.xlane.xlu0 %3660
    %v3662 = vsel %vm403, %v3483, -inf
    %3663 = vmax.xlane.f32.xlu0 %v3662
    %v3664 = vpop.xlane.xlu0 %3663
    %v3665 = vsel %vm403, %v3486, -inf
    %3666 = vmax.xlane.f32.xlu0 %v3665
    %v3667 = vpop.xlane.xlu0 %3666
    %v3668 = vsel %vm403, %v3522, -inf
    %3669 = vmax.xlane.f32.xlu0 %v3668
    %v3670 = vpop.xlane.xlu0 %3669
    %v3671 = vsel %vm403, %v3525, -inf
    %3672 = vmax.xlane.f32.xlu0 %v3671
    %v3673 = vpop.xlane.xlu0 %3672
    %v3674 = vsel %vm403, %v3561, -inf
    %3675 = vmax.xlane.f32.xlu0 %v3674
    %v3676 = vpop.xlane.xlu0 %3675
    %v3677 = vsel %vm403, %v3564, -inf
    %3678 = vmax.xlane.f32.xlu0 %v3677
    %v3679 = vpop.xlane.xlu0 %3678
    %v3680 = vsel %vm403, %v3600, -inf
    %3681 = vmax.xlane.f32.xlu0 %v3680
    %v3682 = vpop.xlane.xlu0 %3681
    %v3683 = vsel %vm403, %v3603, -inf
    %3684 = vmax.xlane.f32.xlu0 %v3683
    %v3685 = vpop.xlane.xlu0 %3684
    %v3686 = vsel %vm403, %v3639, -inf
    %3687 = vmax.xlane.f32.xlu0 %v3686
    %v3688 = vpop.xlane.xlu0 %3687
    %v3689 = vsel %vm403, %v3642, -inf
    %3690 = vmax.xlane.f32.xlu0 %v3689
    %v3691 = vpop.xlane.xlu0 %3690
    %v3692 = vsub.f32 %v3366, %v3646
    %v3693 = vsub.f32 %v3369, %v3649
    %v3694 = vsub.f32 %v3405, %v3652
    %v3695 = vsub.f32 %v3408, %v3655
    %v3696 = vsub.f32 %v3444, %v3658
    %v3697 = vsub.f32 %v3447, %v3661
    %v3698 = vsub.f32 %v3483, %v3664
    %v3699 = vsub.f32 %v3486, %v3667
    %v3700 = vsub.f32 %v3522, %v3670
    %v3701 = vsub.f32 %v3525, %v3673
    %v3702 = vsub.f32 %v3561, %v3676
    %v3703 = vsub.f32 %v3564, %v3679
    %v3704 = vsub.f32 %v3600, %v3682
    %v3705 = vsub.f32 %v3603, %v3685
    %v3706 = vsub.f32 %v3639, %v3688
    %v3707 = vsub.f32 %v3642, %v3691
    %v3708 = vmul.f32 %v3692, 1.442695
    %v3709 = vpow.pop %v3708
    %v3710 = vmul.f32 %v3693, 1.442695
    %v3711 = vpow.pop %v3710
    %v3712 = vmul.f32 %v3694, 1.442695
    %v3713 = vpow.pop %v3712
    %v3714 = vmul.f32 %v3695, 1.442695
    %v3715 = vpow.pop %v3714
    %v3716 = vmul.f32 %v3696, 1.442695
    %v3717 = vpow.pop %v3716
    %v3718 = vmul.f32 %v3697, 1.442695
    %v3719 = vpow.pop %v3718
    %v3720 = vmul.f32 %v3698, 1.442695
    %v3721 = vpow.pop %v3720
    %v3722 = vmul.f32 %v3699, 1.442695
    %v3723 = vpow.pop %v3722
    %v3724 = vmul.f32 %v3700, 1.442695
    %v3725 = vpow.pop %v3724
    %v3726 = vmul.f32 %v3701, 1.442695
    %v3727 = vpow.pop %v3726
    %v3728 = vmul.f32 %v3702, 1.442695
    %v3729 = vpow.pop %v3728
    %v3730 = vmul.f32 %v3703, 1.442695
    %v3731 = vpow.pop %v3730
    %v3732 = vmul.f32 %v3704, 1.442695
    %v3733 = vpow.pop %v3732
    %v3734 = vmul.f32 %v3705, 1.442695
    %v3735 = vpow.pop %v3734
    %v3736 = vmul.f32 %v3706, 1.442695
    %v3737 = vpow.pop %v3736
    %v3738 = vmul.f32 %v3707, 1.442695
    %v3739 = vpow.pop %v3738
    %v3740 = vsel %vm403, %v3709, 0.0
    %3741 = vadd.xlane.f32.xlu0 %v3740
    %v3742 = vpop.xlane.xlu0 %3741
    %v3743 = vsel %vm403, %v3711, 0.0
    %3744 = vadd.xlane.f32.xlu0 %v3743
    %v3745 = vpop.xlane.xlu0 %3744
    %v3746 = vsel %vm403, %v3713, 0.0
    %3747 = vadd.xlane.f32.xlu0 %v3746
    %v3748 = vpop.xlane.xlu0 %3747
    %v3749 = vsel %vm403, %v3715, 0.0
    %3750 = vadd.xlane.f32.xlu0 %v3749
    %v3751 = vpop.xlane.xlu0 %3750
    %v3752 = vsel %vm403, %v3717, 0.0
    %3753 = vadd.xlane.f32.xlu0 %v3752
    %v3754 = vpop.xlane.xlu0 %3753
    %v3755 = vsel %vm403, %v3719, 0.0
    %3756 = vadd.xlane.f32.xlu0 %v3755
    %v3757 = vpop.xlane.xlu0 %3756
    %v3758 = vsel %vm403, %v3721, 0.0
    %3759 = vadd.xlane.f32.xlu0 %v3758
    %v3760 = vpop.xlane.xlu0 %3759
    %v3761 = vsel %vm403, %v3723, 0.0
    %3762 = vadd.xlane.f32.xlu0 %v3761
    %v3763 = vpop.xlane.xlu0 %3762
    %v3764 = vsel %vm403, %v3725, 0.0
    %3765 = vadd.xlane.f32.xlu0 %v3764
    %v3766 = vpop.xlane.xlu0 %3765
    %v3767 = vsel %vm403, %v3727, 0.0
    %3768 = vadd.xlane.f32.xlu0 %v3767
    %v3769 = vpop.xlane.xlu0 %3768
    %v3770 = vsel %vm403, %v3729, 0.0
    %3771 = vadd.xlane.f32.xlu0 %v3770
    %v3772 = vpop.xlane.xlu0 %3771
    %v3773 = vsel %vm403, %v3731, 0.0
    %3774 = vadd.xlane.f32.xlu0 %v3773
    %v3775 = vpop.xlane.xlu0 %3774
    %v3776 = vsel %vm403, %v3733, 0.0
    %3777 = vadd.xlane.f32.xlu0 %v3776
    %v3778 = vpop.xlane.xlu0 %3777
    %v3779 = vsel %vm403, %v3735, 0.0
    %3780 = vadd.xlane.f32.xlu0 %v3779
    %v3781 = vpop.xlane.xlu0 %3780
    %v3782 = vsel %vm403, %v3737, 0.0
    %3783 = vadd.xlane.f32.xlu0 %v3782
    %v3784 = vpop.xlane.xlu0 %3783
    %v3785 = vsel %vm403, %v3739, 0.0
    %3786 = vadd.xlane.f32.xlu0 %v3785
    %v3787 = vpop.xlane.xlu0 %3786
    %v3788 = vrcp.pop %v3742
    %v3789 = vrcp.pop %v3745
    %v3790 = vrcp.pop %v3748
    %v3791 = vrcp.pop %v3751
    %v3792 = vrcp.pop %v3754
    %v3793 = vrcp.pop %v3757
    %v3794 = vrcp.pop %v3760
    %v3795 = vrcp.pop %v3763
    %v3796 = vrcp.pop %v3766
    %v3797 = vrcp.pop %v3769
    %v3798 = vrcp.pop %v3772
    %v3799 = vrcp.pop %v3775
    %v3800 = vrcp.pop %v3778
    %v3801 = vrcp.pop %v3781
    %v3802 = vrcp.pop %v3784
    %v3803 = vrcp.pop %v3787
    %v3804 = vmul.f32 %v3709, %v3788
    %v3805 = vmul.f32 %v3711, %v3789
    %v3806 = vmul.f32 %v3713, %v3790
    %v3807 = vmul.f32 %v3715, %v3791
    %v3808 = vmul.f32 %v3717, %v3792
    %v3809 = vmul.f32 %v3719, %v3793
    %v3810 = vmul.f32 %v3721, %v3794
    %v3811 = vmul.f32 %v3723, %v3795
    %v3812 = vmul.f32 %v3725, %v3796
    %v3813 = vmul.f32 %v3727, %v3797
    %v3814 = vmul.f32 %v3729, %v3798
    %v3815 = vmul.f32 %v3731, %v3799
    %v3816 = vmul.f32 %v3733, %v3800
    %v3817 = vmul.f32 %v3735, %v3801
    %v3818 = vmul.f32 %v3737, %v3802
    %v3819 = vmul.f32 %v3739, %v3803
    %v3821 = vsel %vm403, %v3804, 0
    %v3824 = vsel %vm403, %v3805, 0
    %3826 = vmatpush.msra.mxu0 0.0
    %3827 = vmatpush.msra.mxu0 0.0
    %3828 = vmatpush.msra.mxu0 0.0
    %3829 = vmatpush.msra.mxu0 0.0
    %3830 = vmatpush.msra.mxu0 0.0
    %3831 = vmatpush.msra.mxu0 0.0
    %3832 = vmatpush.msra.mxu0 0.0
    %3833 = vmatpush.msra.mxu0 0.0
    %3834 = vmatpush.msra.mxu0 0.0
    %3835 = vmatpush.msra.mxu0 0.0
    %3836 = vmatpush.msra.mxu0 0.0
    %3837 = vmatpush.msra.mxu0 0.0
    %3838 = vmatpush.msra.mxu0 0.0
    %3839 = vmatpush.msra.mxu0 0.0
    %3840 = vmatpush.msra.mxu0 %v3334
    %3841 = vmatpush.msra.mxu0 %v3332
    %3842 = vmatmul.f32.gmra.mxu0 %v3821
    %v3843 = vpop.f32.mrf.mxu0
    %v3844 = vadd.f32 0.0, %v3843
    %3845 = vmatmul.f32.gmra.mxu0 %v3824
    %v3846 = vpop.f32.mrf.mxu0
    %v3847 = vadd.f32 0.0, %v3846
    %3848 = vdwg.mxu0
    %3851 = vrot.lane.b32.xlu0 %v3332, 112
    %v3852 = vpop.permute.xlu0 %3851
    %3853 = vrot.lane.b32.xlu0 %v3334, 112
    %v3854 = vpop.permute.xlu0 %3853
    %v3858 = vsel %vm403, %v3806, 0
    %v3861 = vsel %vm403, %v3807, 0
    %3863 = vmatpush.msra.mxu0 0.0
    %3864 = vmatpush.msra.mxu0 0.0
    %3865 = vmatpush.msra.mxu0 0.0
    %3866 = vmatpush.msra.mxu0 0.0
    %3867 = vmatpush.msra.mxu0 0.0
    %3868 = vmatpush.msra.mxu0 0.0
    %3869 = vmatpush.msra.mxu0 0.0
    %3870 = vmatpush.msra.mxu0 0.0
    %3871 = vmatpush.msra.mxu0 0.0
    %3872 = vmatpush.msra.mxu0 0.0
    %3873 = vmatpush.msra.mxu0 0.0
    %3874 = vmatpush.msra.mxu0 0.0
    %3875 = vmatpush.msra.mxu0 0.0
    %3876 = vmatpush.msra.mxu0 0.0
    %3877 = vmatpush.msra.mxu0 %v3854
    %3878 = vmatpush.msra.mxu0 %v3852
    %3879 = vmatmul.f32.gmra.mxu0 %v3858
    %v3880 = vpop.f32.mrf.mxu0
    %v3881 = vadd.f32 0.0, %v3880
    %3882 = vmatmul.f32.gmra.mxu0 %v3861
    %v3883 = vpop.f32.mrf.mxu0
    %v3884 = vadd.f32 0.0, %v3883
    %3885 = vdwg.mxu0
    %3886 = vrot.lane.b32.xlu0 %v3332, 96
    %v3887 = vpop.permute.xlu0 %3886
    %3888 = vrot.lane.b32.xlu0 %v3334, 96
    %v3889 = vpop.permute.xlu0 %3888
    %v3893 = vsel %vm403, %v3808, 0
    %v3896 = vsel %vm403, %v3809, 0
    %3898 = vmatpush.msra.mxu0 0.0
    %3899 = vmatpush.msra.mxu0 0.0
    %3900 = vmatpush.msra.mxu0 0.0
    %3901 = vmatpush.msra.mxu0 0.0
    %3902 = vmatpush.msra.mxu0 0.0
    %3903 = vmatpush.msra.mxu0 0.0
    %3904 = vmatpush.msra.mxu0 0.0
    %3905 = vmatpush.msra.mxu0 0.0
    %3906 = vmatpush.msra.mxu0 0.0
    %3907 = vmatpush.msra.mxu0 0.0
    %3908 = vmatpush.msra.mxu0 0.0
    %3909 = vmatpush.msra.mxu0 0.0
    %3910 = vmatpush.msra.mxu0 0.0
    %3911 = vmatpush.msra.mxu0 0.0
    %3912 = vmatpush.msra.mxu0 %v3889
    %3913 = vmatpush.msra.mxu0 %v3887
    %3914 = vmatmul.f32.gmra.mxu0 %v3893
    %v3915 = vpop.f32.mrf.mxu0
    %v3916 = vadd.f32 0.0, %v3915
    %3917 = vmatmul.f32.gmra.mxu0 %v3896
    %v3918 = vpop.f32.mrf.mxu0
    %v3919 = vadd.f32 0.0, %v3918
    %3920 = vdwg.mxu0
    %3921 = vrot.lane.b32.xlu0 %v3332, 80
    %v3922 = vpop.permute.xlu0 %3921
    %3923 = vrot.lane.b32.xlu0 %v3334, 80
    %v3924 = vpop.permute.xlu0 %3923
    %v3928 = vsel %vm403, %v3810, 0
    %v3931 = vsel %vm403, %v3811, 0
    %3933 = vmatpush.msra.mxu0 0.0
    %3934 = vmatpush.msra.mxu0 0.0
    %3935 = vmatpush.msra.mxu0 0.0
    %3936 = vmatpush.msra.mxu0 0.0
    %3937 = vmatpush.msra.mxu0 0.0
    %3938 = vmatpush.msra.mxu0 0.0
    %3939 = vmatpush.msra.mxu0 0.0
    %3940 = vmatpush.msra.mxu0 0.0
    %3941 = vmatpush.msra.mxu0 0.0
    %3942 = vmatpush.msra.mxu0 0.0
    %3943 = vmatpush.msra.mxu0 0.0
    %3944 = vmatpush.msra.mxu0 0.0
    %3945 = vmatpush.msra.mxu0 0.0
    %3946 = vmatpush.msra.mxu0 0.0
    %3947 = vmatpush.msra.mxu0 %v3924
    %3948 = vmatpush.msra.mxu0 %v3922
    %3949 = vmatmul.f32.gmra.mxu0 %v3928
    %v3950 = vpop.f32.mrf.mxu0
    %v3951 = vadd.f32 0.0, %v3950
    %3952 = vmatmul.f32.gmra.mxu0 %v3931
    %v3953 = vpop.f32.mrf.mxu0
    %v3954 = vadd.f32 0.0, %v3953
    %3955 = vdwg.mxu0
    %3956 = vrot.lane.b32.xlu0 %v3332, 64
    %v3957 = vpop.permute.xlu0 %3956
    %3958 = vrot.lane.b32.xlu0 %v3334, 64
    %v3959 = vpop.permute.xlu0 %3958
    %v3963 = vsel %vm403, %v3812, 0
    %v3966 = vsel %vm403, %v3813, 0
    %3968 = vmatpush.msra.mxu0 0.0
    %3969 = vmatpush.msra.mxu0 0.0
    %3970 = vmatpush.msra.mxu0 0.0
    %3971 = vmatpush.msra.mxu0 0.0
    %3972 = vmatpush.msra.mxu0 0.0
    %3973 = vmatpush.msra.mxu0 0.0
    %3974 = vmatpush.msra.mxu0 0.0
    %3975 = vmatpush.msra.mxu0 0.0
    %3976 = vmatpush.msra.mxu0 0.0
    %3977 = vmatpush.msra.mxu0 0.0
    %3978 = vmatpush.msra.mxu0 0.0
    %3979 = vmatpush.msra.mxu0 0.0
    %3980 = vmatpush.msra.mxu0 0.0
    %3981 = vmatpush.msra.mxu0 0.0
    %3982 = vmatpush.msra.mxu0 %v3959
    %3983 = vmatpush.msra.mxu0 %v3957
    %3984 = vmatmul.f32.gmra.mxu0 %v3963
    %v3985 = vpop.f32.mrf.mxu0
    %v3986 = vadd.f32 0.0, %v3985
    %3987 = vmatmul.f32.gmra.mxu0 %v3966
    %v3988 = vpop.f32.mrf.mxu0
    %v3989 = vadd.f32 0.0, %v3988
    %3990 = vdwg.mxu0
    %3991 = vrot.lane.b32.xlu0 %v3332, 48
    %v3992 = vpop.permute.xlu0 %3991
    %3993 = vrot.lane.b32.xlu0 %v3334, 48
    %v3994 = vpop.permute.xlu0 %3993
    %v3998 = vsel %vm403, %v3814, 0
    %v4001 = vsel %vm403, %v3815, 0
    %4003 = vmatpush.msra.mxu0 0.0
    %4004 = vmatpush.msra.mxu0 0.0
    %4005 = vmatpush.msra.mxu0 0.0
    %4006 = vmatpush.msra.mxu0 0.0
    %4007 = vmatpush.msra.mxu0 0.0
    %4008 = vmatpush.msra.mxu0 0.0
    %4009 = vmatpush.msra.mxu0 0.0
    %4010 = vmatpush.msra.mxu0 0.0
    %4011 = vmatpush.msra.mxu0 0.0
    %4012 = vmatpush.msra.mxu0 0.0
    %4013 = vmatpush.msra.mxu0 0.0
    %4014 = vmatpush.msra.mxu0 0.0
    %4015 = vmatpush.msra.mxu0 0.0
    %4016 = vmatpush.msra.mxu0 0.0
    %4017 = vmatpush.msra.mxu0 %v3994
    %4018 = vmatpush.msra.mxu0 %v3992
    %4019 = vmatmul.f32.gmra.mxu0 %v3998
    %v4020 = vpop.f32.mrf.mxu0
    %v4021 = vadd.f32 0.0, %v4020
    %4022 = vmatmul.f32.gmra.mxu0 %v4001
    %v4023 = vpop.f32.mrf.mxu0
    %v4024 = vadd.f32 0.0, %v4023
    %4025 = vdwg.mxu0
    %4026 = vrot.lane.b32.xlu0 %v3332, 32
    %v4027 = vpop.permute.xlu0 %4026
    %4028 = vrot.lane.b32.xlu0 %v3334, 32
    %v4029 = vpop.permute.xlu0 %4028
    %v4033 = vsel %vm403, %v3816, 0
    %v4036 = vsel %vm403, %v3817, 0
    %4038 = vmatpush.msra.mxu0 0.0
    %4039 = vmatpush.msra.mxu0 0.0
    %4040 = vmatpush.msra.mxu0 0.0
    %4041 = vmatpush.msra.mxu0 0.0
    %4042 = vmatpush.msra.mxu0 0.0
    %4043 = vmatpush.msra.mxu0 0.0
    %4044 = vmatpush.msra.mxu0 0.0
    %4045 = vmatpush.msra.mxu0 0.0
    %4046 = vmatpush.msra.mxu0 0.0
    %4047 = vmatpush.msra.mxu0 0.0
    %4048 = vmatpush.msra.mxu0 0.0
    %4049 = vmatpush.msra.mxu0 0.0
    %4050 = vmatpush.msra.mxu0 0.0
    %4051 = vmatpush.msra.mxu0 0.0
    %4052 = vmatpush.msra.mxu0 %v4029
    %4053 = vmatpush.msra.mxu0 %v4027
    %4054 = vmatmul.f32.gmra.mxu0 %v4033
    %v4055 = vpop.f32.mrf.mxu0
    %v4056 = vadd.f32 0.0, %v4055
    %4057 = vmatmul.f32.gmra.mxu0 %v4036
    %v4058 = vpop.f32.mrf.mxu0
    %v4059 = vadd.f32 0.0, %v4058
    %4060 = vdwg.mxu0
    %4061 = vrot.lane.b32.xlu0 %v3332, 16
    %v4062 = vpop.permute.xlu0 %4061
    %4063 = vrot.lane.b32.xlu0 %v3334, 16
    %v4064 = vpop.permute.xlu0 %4063
    %v4068 = vsel %vm403, %v3818, 0
    %v4071 = vsel %vm403, %v3819, 0
    %4073 = vmatpush.msra.mxu0 0.0
    %4074 = vmatpush.msra.mxu0 0.0
    %4075 = vmatpush.msra.mxu0 0.0
    %4076 = vmatpush.msra.mxu0 0.0
    %4077 = vmatpush.msra.mxu0 0.0
    %4078 = vmatpush.msra.mxu0 0.0
    %4079 = vmatpush.msra.mxu0 0.0
    %4080 = vmatpush.msra.mxu0 0.0
    %4081 = vmatpush.msra.mxu0 0.0
    %4082 = vmatpush.msra.mxu0 0.0
    %4083 = vmatpush.msra.mxu0 0.0
    %4084 = vmatpush.msra.mxu0 0.0
    %4085 = vmatpush.msra.mxu0 0.0
    %4086 = vmatpush.msra.mxu0 0.0
    %4087 = vmatpush.msra.mxu0 %v4064
    %4088 = vmatpush.msra.mxu0 %v4062
    %4089 = vmatmul.f32.gmra.mxu0 %v4068
    %v4090 = vpop.f32.mrf.mxu0
    %v4091 = vadd.f32 0.0, %v4090
    %4092 = vmatmul.f32.gmra.mxu0 %v4071
    %v4093 = vpop.f32.mrf.mxu0
    %v4094 = vadd.f32 0.0, %v4093
    %4095 = vdwg.mxu0
    %4098 = vrot.lane.b32.xlu0 %v3881, 16
    %v4099 = vpop.permute.xlu0 %4098
    %4100 = vrot.lane.b32.xlu0 %v3884, 16
    %v4101 = vpop.permute.xlu0 %4100
    %4106 = vrot.lane.b32.xlu0 %v3916, 32
    %v4107 = vpop.permute.xlu0 %4106
    %4108 = vrot.lane.b32.xlu0 %v3919, 32
    %v4109 = vpop.permute.xlu0 %4108
    %4114 = vrot.lane.b32.xlu0 %v3951, 48
    %v4115 = vpop.permute.xlu0 %4114
    %4116 = vrot.lane.b32.xlu0 %v3954, 48
    %v4117 = vpop.permute.xlu0 %4116
    %4122 = vrot.lane.b32.xlu0 %v3986, 64
    %v4123 = vpop.permute.xlu0 %4122
    %4124 = vrot.lane.b32.xlu0 %v3989, 64
    %v4125 = vpop.permute.xlu0 %4124
    %4130 = vrot.lane.b32.xlu0 %v4021, 80
    %v4131 = vpop.permute.xlu0 %4130
    %4132 = vrot.lane.b32.xlu0 %v4024, 80
    %v4133 = vpop.permute.xlu0 %4132
    %4138 = vrot.lane.b32.xlu0 %v4056, 96
    %v4139 = vpop.permute.xlu0 %4138
    %4140 = vrot.lane.b32.xlu0 %v4059, 96
    %v4141 = vpop.permute.xlu0 %4140
    %4146 = vrot.lane.b32.xlu0 %v4091, 112
    %v4147 = vpop.permute.xlu0 %4146
    %4148 = vrot.lane.b32.xlu0 %v4094, 112
    %v4149 = vpop.permute.xlu0 %4148
    %v4152 = vsel %vm403, %v3844, %v4099
    %v4153 = vsel %vm403, %v3847, %v4101
    %v4154 = vsel %vm144, %v4152, %v4107
    %v4155 = vsel %vm144, %v4153, %v4109
    %v4156 = vsel %vm1224, %v4154, %v4115
    %v4157 = vsel %vm1224, %v4155, %v4117
    %v4158 = vsel %vm1227, %v4156, %v4123
    %v4159 = vsel %vm1227, %v4157, %v4125
    %v4160 = vsel %vm1230, %v4158, %v4131
    %v4161 = vsel %vm1230, %v4159, %v4133
    %v4162 = vsel %vm1233, %v4160, %v4139
    %v4163 = vsel %vm1233, %v4161, %v4141
    %v4164 = vsel %vm1236, %v4162, %v4147
    %v4165 = vsel %vm1236, %v4163, %v4149
    %v4166 = vpack.c.bf16 %v4165, %v4164
    %v4167 = vld [vmem:[#allocation7 + $0x3d8] sm:$0xf]
    %v4168 = vld [vmem:[#allocation7 + $0x3dc] sm:$0xf]
    %v4169 = vld [vmem:[#allocation7 + $0x3e0] sm:$0xf]
    %v4170 = vld [vmem:[#allocation7 + $0x3e4] sm:$0xf]
    %v4171 = vld [vmem:[#allocation7 + $0x3e8] sm:$0xf]
    %v4172 = vld [vmem:[#allocation7 + $0x3ec] sm:$0xf]
    %v4173 = vld [vmem:[#allocation7 + $0x3f0] sm:$0xf]
    %v4174 = vld [vmem:[#allocation7 + $0x3f4] sm:$0xf]
    %v4175 = vld [vmem:[#allocation7 + $0x3f8] sm:$0xf]
    %v4176 = vld [vmem:[#allocation7 + $0x3fc] sm:$0xf]
    %v4177 = vld [vmem:[#allocation7 + $0x400] sm:$0xf]
    %v4178 = vld [vmem:[#allocation7 + $0x404] sm:$0xf]
    %v4179 = vld [vmem:[#allocation7 + $0x408] sm:$0xf]
    %v4180 = vld [vmem:[#allocation7 + $0x40c] sm:$0xf]
    %v4181 = vld [vmem:[#allocation7 + $0x410] sm:$0xf]
    %v4182 = vld [vmem:[#allocation7 + $0x414] sm:$0xf]
    %v4183 = vld [vmem:[#allocation9 + $0xb8] sm:$0x1]
    %v4184 = vperm.slane %v4183, 0
    %v4201 = vunpack.c.l.b16 %v4167
    %v4202 = vunpack.c.l.b16 %v4168
    %v4203 = vunpack.c.l.b16 %v4169
    %v4204 = vunpack.c.l.b16 %v4170
    %v4205 = vunpack.c.l.b16 %v4171
    %v4206 = vunpack.c.l.b16 %v4172
    %v4207 = vunpack.c.l.b16 %v4173
    %v4208 = vunpack.c.l.b16 %v4174
    %v4209 = vunpack.c.l.b16 %v4175
    %v4210 = vunpack.c.l.b16 %v4176
    %v4211 = vunpack.c.l.b16 %v4177
    %v4212 = vunpack.c.l.b16 %v4178
    %v4213 = vunpack.c.l.b16 %v4179
    %v4214 = vunpack.c.l.b16 %v4180
    %v4215 = vunpack.c.l.b16 %v4181
    %v4216 = vunpack.c.l.b16 %v4182
    %v4217 = vpack.c.b16 %v4202, %v4201
    %v4218 = vpack.c.b16 %v4204, %v4203
    %v4219 = vpack.c.b16 %v4206, %v4205
    %v4220 = vpack.c.b16 %v4208, %v4207
    %v4221 = vpack.c.b16 %v4210, %v4209
    %v4222 = vpack.c.b16 %v4212, %v4211
    %v4223 = vpack.c.b16 %v4214, %v4213
    %v4224 = vpack.c.b16 %v4216, %v4215
    %4233 = vmatpush.bf16.msra.mxu0 %v4224
    %4234 = vmatpush.bf16.msra.mxu0 %v4223
    %4235 = vmatpush.bf16.msra.mxu0 %v4222
    %4236 = vmatpush.bf16.msra.mxu0 %v4221
    %4237 = vmatpush.bf16.msra.mxu0 %v4220
    %4238 = vmatpush.bf16.msra.mxu0 %v4219
    %4239 = vmatpush.bf16.msra.mxu0 %v4218
    %4240 = vmatpush.bf16.msra.mxu0 %v4217
    %4241 = vmatmul.bf16.gmra.mxu0 %v4166
    %v4242 = vpop.f32.mrf.mxu0
    %v4243 = vadd.f32 %v4184, %v4242
    %v4244 = vpop.f32.mrf.mxu0
    %v4245 = vadd.f32 %v4184, %v4244
    %4246 = vdwg.mxu0
    %v4247 = vadd.f32 %v3091, %v4243
    %v4248 = vadd.f32 %v3093, %v4245
    %4249 = vadd.xlane.f32.xlu0 %v4247
    %v4250 = vpop.xlane.xlu0 %4249
    %4251 = vadd.xlane.f32.xlu0 %v4248
    %v4252 = vpop.xlane.xlu0 %4251
    %v4253 = vmul.f32 %v4250, %v1332
    %v4254 = vmul.f32 %v4252, %v1332
    %v4255 = vsub.f32 %v4247, %v4253
    %v4256 = vsub.f32 %v4248, %v4254
    %v4257 = vmul.f32 %v4255, %v4255
    %v4258 = vmul.f32 %v4256, %v4256
    %4259 = vadd.xlane.f32.xlu0 %v4257
    %v4260 = vpop.xlane.xlu0 %4259
    %4261 = vadd.xlane.f32.xlu0 %v4258
    %v4262 = vpop.xlane.xlu0 %4261
    %v4263 = vmul.f32 %v4260, %v1332
    %v4264 = vmul.f32 %v4262, %v1332
    %v4265 = vadd.f32 %v4263, 1e-05
    %v4266 = vadd.f32 %v4264, 1e-05
    %v4267 = vrsqrt.pop %v4265
    %v4268 = vmul.f32 %v4267, %v4265
    %v4269 = vmul.f32 %v4268, %v4267
    %v4270 = vmul.f32 0.5, %v4269
    %v4271 = vsub.f32 1.5, %v4270
    %v4272 = vmul.f32 %v4267, %v4271
    %vm4273 = vweird.f32 %v4265
    %vm4274 = vweird.f32 %v4267
    %vm4275 = vmor %vm4273, %vm4274
    %v4276 = vsel %vm4275, %v4267, %v4272
    %v4277 = vrsqrt.pop %v4266
    %v4278 = vmul.f32 %v4277, %v4266
    %v4279 = vmul.f32 %v4278, %v4277
    %v4280 = vmul.f32 0.5, %v4279
    %v4281 = vsub.f32 1.5, %v4280
    %v4282 = vmul.f32 %v4277, %v4281
    %vm4283 = vweird.f32 %v4266
    %vm4284 = vweird.f32 %v4277
    %vm4285 = vmor %vm4283, %vm4284
    %v4286 = vsel %vm4285, %v4277, %v4282
    %v4287 = vmul.f32 %v4255, %v4276
    %v4288 = vmul.f32 %v4256, %v4286
    %v4289 = vld [vmem:[#allocation9 + $0xe0] sm:$0x1]
    %v4290 = vperm.slane %v4289, 0
    %v4291 = vmul.f32 %v4287, %v4290
    %v4292 = vmul.f32 %v4288, %v4290
    %v4293 = vld [vmem:[#allocation9 + $0xe8] sm:$0x1]
    %v4294 = vperm.slane %v4293, 0
    %v4295 = vadd.f32 %v4291, %v4294
    %v4296 = vadd.f32 %v4292, %v4294
    %v4297 = vpack.c.bf16 %v4296, %v4295
    %v4298 = vld [vmem:[#allocation7 + $0x418] sm:$0xf]
    %v4299 = vld [vmem:[#allocation7 + $0x41c] sm:$0xf]
    %v4300 = vld [vmem:[#allocation7 + $0x420] sm:$0xf]
    %v4301 = vld [vmem:[#allocation7 + $0x424] sm:$0xf]
    %v4302 = vld [vmem:[#allocation7 + $0x428] sm:$0xf]
    %v4303 = vld [vmem:[#allocation7 + $0x42c] sm:$0xf]
    %v4304 = vld [vmem:[#allocation7 + $0x430] sm:$0xf]
    %v4305 = vld [vmem:[#allocation7 + $0x434] sm:$0xf]
    %v4306 = vld [vmem:[#allocation7 + $0x438] sm:$0xf]
    %v4307 = vld [vmem:[#allocation7 + $0x43c] sm:$0xf]
    %v4308 = vld [vmem:[#allocation7 + $0x440] sm:$0xf]
    %v4309 = vld [vmem:[#allocation7 + $0x444] sm:$0xf]
    %v4310 = vld [vmem:[#allocation7 + $0x448] sm:$0xf]
    %v4311 = vld [vmem:[#allocation7 + $0x44c] sm:$0xf]
    %v4312 = vld [vmem:[#allocation7 + $0x450] sm:$0xf]
    %v4313 = vld [vmem:[#allocation7 + $0x454] sm:$0xf]
    %v4314 = vld [vmem:[#allocation9 + $0xc0] sm:$0x1]
    %v4315 = vperm.slane %v4314, 0
    %v4332 = vunpack.c.l.b16 %v4298
    %v4333 = vunpack.c.l.b16 %v4299
    %v4334 = vunpack.c.l.b16 %v4300
    %v4335 = vunpack.c.l.b16 %v4301
    %v4336 = vunpack.c.l.b16 %v4302
    %v4337 = vunpack.c.l.b16 %v4303
    %v4338 = vunpack.c.l.b16 %v4304
    %v4339 = vunpack.c.l.b16 %v4305
    %v4340 = vunpack.c.l.b16 %v4306
    %v4341 = vunpack.c.l.b16 %v4307
    %v4342 = vunpack.c.l.b16 %v4308
    %v4343 = vunpack.c.l.b16 %v4309
    %v4344 = vunpack.c.l.b16 %v4310
    %v4345 = vunpack.c.l.b16 %v4311
    %v4346 = vunpack.c.l.b16 %v4312
    %v4347 = vunpack.c.l.b16 %v4313
    %v4348 = vpack.c.b16 %v4333, %v4332
    %v4349 = vpack.c.b16 %v4335, %v4334
    %v4350 = vpack.c.b16 %v4337, %v4336
    %v4351 = vpack.c.b16 %v4339, %v4338
    %v4352 = vpack.c.b16 %v4341, %v4340
    %v4353 = vpack.c.b16 %v4343, %v4342
    %v4354 = vpack.c.b16 %v4345, %v4344
    %v4355 = vpack.c.b16 %v4347, %v4346
    %4364 = vmatpush.bf16.msra.mxu0 %v4355
    %4365 = vmatpush.bf16.msra.mxu0 %v4354
    %4366 = vmatpush.bf16.msra.mxu0 %v4353
    %4367 = vmatpush.bf16.msra.mxu0 %v4352
    %4368 = vmatpush.bf16.msra.mxu0 %v4351
    %4369 = vmatpush.bf16.msra.mxu0 %v4350
    %4370 = vmatpush.bf16.msra.mxu0 %v4349
    %4371 = vmatpush.bf16.msra.mxu0 %v4348
    %4372 = vmatmul.bf16.gmra.mxu0 %v4297
    %v4373 = vpop.f32.mrf.mxu0
    %v4374 = vadd.f32 %v4315, %v4373
    %v4375 = vpop.f32.mrf.mxu0
    %v4376 = vadd.f32 %v4315, %v4375
    %4377 = vdwg.mxu0
    %v4378 = vpack.c.bf16 %v3054, %v3053
    %v4379 = vld [vmem:[#allocation7 + $0x458] sm:$0xf]
    %v4380 = vld [vmem:[#allocation7 + $0x45c] sm:$0xf]
    %v4381 = vld [vmem:[#allocation7 + $0x460] sm:$0xf]
    %v4382 = vld [vmem:[#allocation7 + $0x464] sm:$0xf]
    %v4383 = vld [vmem:[#allocation7 + $0x468] sm:$0xf]
    %v4384 = vld [vmem:[#allocation7 + $0x46c] sm:$0xf]
    %v4385 = vld [vmem:[#allocation7 + $0x470] sm:$0xf]
    %v4386 = vld [vmem:[#allocation7 + $0x474] sm:$0xf]
    %v4387 = vld [vmem:[#allocation7 + $0x478] sm:$0xf]
    %v4388 = vld [vmem:[#allocation7 + $0x47c] sm:$0xf]
    %v4389 = vld [vmem:[#allocation7 + $0x480] sm:$0xf]
    %v4390 = vld [vmem:[#allocation7 + $0x484] sm:$0xf]
    %v4391 = vld [vmem:[#allocation7 + $0x488] sm:$0xf]
    %v4392 = vld [vmem:[#allocation7 + $0x48c] sm:$0xf]
    %v4393 = vld [vmem:[#allocation7 + $0x490] sm:$0xf]
    %v4394 = vld [vmem:[#allocation7 + $0x494] sm:$0xf]
    %v4395 = vld [vmem:[#allocation9 + $0xc8] sm:$0x1]
    %v4396 = vperm.slane %v4395, 0
    %v4413 = vunpack.c.l.b16 %v4379
    %v4414 = vunpack.c.l.b16 %v4380
    %v4415 = vunpack.c.l.b16 %v4381
    %v4416 = vunpack.c.l.b16 %v4382
    %v4417 = vunpack.c.l.b16 %v4383
    %v4418 = vunpack.c.l.b16 %v4384
    %v4419 = vunpack.c.l.b16 %v4385
    %v4420 = vunpack.c.l.b16 %v4386
    %v4421 = vunpack.c.l.b16 %v4387
    %v4422 = vunpack.c.l.b16 %v4388
    %v4423 = vunpack.c.l.b16 %v4389
    %v4424 = vunpack.c.l.b16 %v4390
    %v4425 = vunpack.c.l.b16 %v4391
    %v4426 = vunpack.c.l.b16 %v4392
    %v4427 = vunpack.c.l.b16 %v4393
    %v4428 = vunpack.c.l.b16 %v4394
    %v4429 = vpack.c.b16 %v4414, %v4413
    %v4430 = vpack.c.b16 %v4416, %v4415
    %v4431 = vpack.c.b16 %v4418, %v4417
    %v4432 = vpack.c.b16 %v4420, %v4419
    %v4433 = vpack.c.b16 %v4422, %v4421
    %v4434 = vpack.c.b16 %v4424, %v4423
    %v4435 = vpack.c.b16 %v4426, %v4425
    %v4436 = vpack.c.b16 %v4428, %v4427
    %4445 = vmatpush.bf16.msra.mxu0 %v4436
    %4446 = vmatpush.bf16.msra.mxu0 %v4435
    %4447 = vmatpush.bf16.msra.mxu0 %v4434
    %4448 = vmatpush.bf16.msra.mxu0 %v4433
    %4449 = vmatpush.bf16.msra.mxu0 %v4432
    %4450 = vmatpush.bf16.msra.mxu0 %v4431
    %4451 = vmatpush.bf16.msra.mxu0 %v4430
    %4452 = vmatpush.bf16.msra.mxu0 %v4429
    %4453 = vmatmul.bf16.gmra.mxu0 %v4378
    %v4454 = vpop.f32.mrf.mxu0
    %v4455 = vadd.f32 %v4396, %v4454
    %v4456 = vpop.f32.mrf.mxu0
    %v4457 = vadd.f32 %v4396, %v4456
    %4458 = vdwg.mxu0
    %v4459 = vld [vmem:[#allocation7 + $0x498] sm:$0xf]
    %v4460 = vld [vmem:[#allocation7 + $0x49c] sm:$0xf]
    %v4461 = vld [vmem:[#allocation7 + $0x4a0] sm:$0xf]
    %v4462 = vld [vmem:[#allocation7 + $0x4a4] sm:$0xf]
    %v4463 = vld [vmem:[#allocation7 + $0x4a8] sm:$0xf]
    %v4464 = vld [vmem:[#allocation7 + $0x4ac] sm:$0xf]
    %v4465 = vld [vmem:[#allocation7 + $0x4b0] sm:$0xf]
    %v4466 = vld [vmem:[#allocation7 + $0x4b4] sm:$0xf]
    %v4467 = vld [vmem:[#allocation7 + $0x4b8] sm:$0xf]
    %v4468 = vld [vmem:[#allocation7 + $0x4bc] sm:$0xf]
    %v4469 = vld [vmem:[#allocation7 + $0x4c0] sm:$0xf]
    %v4470 = vld [vmem:[#allocation7 + $0x4c4] sm:$0xf]
    %v4471 = vld [vmem:[#allocation7 + $0x4c8] sm:$0xf]
    %v4472 = vld [vmem:[#allocation7 + $0x4cc] sm:$0xf]
    %v4473 = vld [vmem:[#allocation7 + $0x4d0] sm:$0xf]
    %v4474 = vld [vmem:[#allocation7 + $0x4d4] sm:$0xf]
    %v4475 = vld [vmem:[#allocation9 + $0xd0] sm:$0x1]
    %v4476 = vperm.slane %v4475, 0
    %v4493 = vunpack.c.l.b16 %v4459
    %v4494 = vunpack.c.l.b16 %v4460
    %v4495 = vunpack.c.l.b16 %v4461
    %v4496 = vunpack.c.l.b16 %v4462
    %v4497 = vunpack.c.l.b16 %v4463
    %v4498 = vunpack.c.l.b16 %v4464
    %v4499 = vunpack.c.l.b16 %v4465
    %v4500 = vunpack.c.l.b16 %v4466
    %v4501 = vunpack.c.l.b16 %v4467
    %v4502 = vunpack.c.l.b16 %v4468
    %v4503 = vunpack.c.l.b16 %v4469
    %v4504 = vunpack.c.l.b16 %v4470
    %v4505 = vunpack.c.l.b16 %v4471
    %v4506 = vunpack.c.l.b16 %v4472
    %v4507 = vunpack.c.l.b16 %v4473
    %v4508 = vunpack.c.l.b16 %v4474
    %v4509 = vpack.c.b16 %v4494, %v4493
    %v4510 = vpack.c.b16 %v4496, %v4495
    %v4511 = vpack.c.b16 %v4498, %v4497
    %v4512 = vpack.c.b16 %v4500, %v4499
    %v4513 = vpack.c.b16 %v4502, %v4501
    %v4514 = vpack.c.b16 %v4504, %v4503
    %v4515 = vpack.c.b16 %v4506, %v4505
    %v4516 = vpack.c.b16 %v4508, %v4507
    %4525 = vmatpush.bf16.msra.mxu0 %v4516
    %4526 = vmatpush.bf16.msra.mxu0 %v4515
    %4527 = vmatpush.bf16.msra.mxu0 %v4514
    %4528 = vmatpush.bf16.msra.mxu0 %v4513
    %4529 = vmatpush.bf16.msra.mxu0 %v4512
    %4530 = vmatpush.bf16.msra.mxu0 %v4511
    %4531 = vmatpush.bf16.msra.mxu0 %v4510
    %4532 = vmatpush.bf16.msra.mxu0 %v4509
    %4533 = vmatmul.bf16.gmra.mxu0 %v4378
    %v4534 = vpop.f32.mrf.mxu0
    %v4535 = vadd.f32 %v4476, %v4534
    %v4536 = vpop.f32.mrf.mxu0
    %v4537 = vadd.f32 %v4476, %v4536
    %4538 = vdwg.mxu0
    %v4540 = vsel %vm403, %v4374, 0
    %v4543 = vsel %vm403, %v4376, 0
    %v4546 = vsel %vm403, %v4455, 0
    %v4549 = vsel %vm403, %v4457, 0
    %4551 = vmatpush.xpose.msra.mxu0 0.0
    %4552 = vmatpush.xpose.msra.mxu0 0.0
    %4553 = vmatpush.xpose.msra.mxu0 0.0
    %4554 = vmatpush.xpose.msra.mxu0 0.0
    %4555 = vmatpush.xpose.msra.mxu0 0.0
    %4556 = vmatpush.xpose.msra.mxu0 0.0
    %4557 = vmatpush.xpose.msra.mxu0 0.0
    %4558 = vmatpush.xpose.msra.mxu0 0.0
    %4559 = vmatpush.xpose.msra.mxu0 0.0
    %4560 = vmatpush.xpose.msra.mxu0 0.0
    %4561 = vmatpush.xpose.msra.mxu0 0.0
    %4562 = vmatpush.xpose.msra.mxu0 0.0
    %4563 = vmatpush.xpose.msra.mxu0 0.0
    %4564 = vmatpush.xpose.msra.mxu0 0.0
    %4565 = vmatpush.xpose.msra.mxu0 %v4549
    %4566 = vmatpush.xpose.msra.mxu0 %v4546
    %4567 = vmatmul.f32.gmra.mxu0 %v4540
    %v4568 = vpop.f32.mrf.mxu0
    %v4569 = vadd.f32 %v109, %v4568
    %4570 = vmatmul.f32.gmra.mxu0 %v4543
    %v4571 = vpop.f32.mrf.mxu0
    %v4572 = vadd.f32 %v110, %v4571
    %4573 = vdwg.mxu0
    %4574 = vrot.lane.b32.xlu0 %v4374, 112
    %v4575 = vpop.permute.xlu0 %4574
    %4576 = vrot.lane.b32.xlu0 %v4376, 112
    %v4577 = vpop.permute.xlu0 %4576
    %4578 = vrot.lane.b32.xlu0 %v4455, 112
    %v4579 = vpop.permute.xlu0 %4578
    %4580 = vrot.lane.b32.xlu0 %v4457, 112
    %v4581 = vpop.permute.xlu0 %4580
    %v4582 = vsel %vm403, %v4575, 0
    %v4584 = vsel %vm403, %v4577, 0
    %v4586 = vsel %vm403, %v4579, 0
    %v4588 = vsel %vm403, %v4581, 0
    %4590 = vmatpush.xpose.msra.mxu0 0.0
    %4591 = vmatpush.xpose.msra.mxu0 0.0
    %4592 = vmatpush.xpose.msra.mxu0 0.0
    %4593 = vmatpush.xpose.msra.mxu0 0.0
    %4594 = vmatpush.xpose.msra.mxu0 0.0
    %4595 = vmatpush.xpose.msra.mxu0 0.0
    %4596 = vmatpush.xpose.msra.mxu0 0.0
    %4597 = vmatpush.xpose.msra.mxu0 0.0
    %4598 = vmatpush.xpose.msra.mxu0 0.0
    %4599 = vmatpush.xpose.msra.mxu0 0.0
    %4600 = vmatpush.xpose.msra.mxu0 0.0
    %4601 = vmatpush.xpose.msra.mxu0 0.0
    %4602 = vmatpush.xpose.msra.mxu0 0.0
    %4603 = vmatpush.xpose.msra.mxu0 0.0
    %4604 = vmatpush.xpose.msra.mxu0 %v4588
    %4605 = vmatpush.xpose.msra.mxu0 %v4586
    %4606 = vmatmul.f32.gmra.mxu0 %v4582
    %v4607 = vpop.f32.mrf.mxu0
    %v4608 = vadd.f32 %v109, %v4607
    %4609 = vmatmul.f32.gmra.mxu0 %v4584
    %v4610 = vpop.f32.mrf.mxu0
    %v4611 = vadd.f32 %v110, %v4610
    %4612 = vdwg.mxu0
    %4613 = vrot.lane.b32.xlu0 %v4374, 96
    %v4614 = vpop.permute.xlu0 %4613
    %4615 = vrot.lane.b32.xlu0 %v4376, 96
    %v4616 = vpop.permute.xlu0 %4615
    %4617 = vrot.lane.b32.xlu0 %v4455, 96
    %v4618 = vpop.permute.xlu0 %4617
    %4619 = vrot.lane.b32.xlu0 %v4457, 96
    %v4620 = vpop.permute.xlu0 %4619
    %v4621 = vsel %vm403, %v4614, 0
    %v4623 = vsel %vm403, %v4616, 0
    %v4625 = vsel %vm403, %v4618, 0
    %v4627 = vsel %vm403, %v4620, 0
    %4629 = vmatpush.xpose.msra.mxu0 0.0
    %4630 = vmatpush.xpose.msra.mxu0 0.0
    %4631 = vmatpush.xpose.msra.mxu0 0.0
    %4632 = vmatpush.xpose.msra.mxu0 0.0
    %4633 = vmatpush.xpose.msra.mxu0 0.0
    %4634 = vmatpush.xpose.msra.mxu0 0.0
    %4635 = vmatpush.xpose.msra.mxu0 0.0
    %4636 = vmatpush.xpose.msra.mxu0 0.0
    %4637 = vmatpush.xpose.msra.mxu0 0.0
    %4638 = vmatpush.xpose.msra.mxu0 0.0
    %4639 = vmatpush.xpose.msra.mxu0 0.0
    %4640 = vmatpush.xpose.msra.mxu0 0.0
    %4641 = vmatpush.xpose.msra.mxu0 0.0
    %4642 = vmatpush.xpose.msra.mxu0 0.0
    %4643 = vmatpush.xpose.msra.mxu0 %v4627
    %4644 = vmatpush.xpose.msra.mxu0 %v4625
    %4645 = vmatmul.f32.gmra.mxu0 %v4621
    %v4646 = vpop.f32.mrf.mxu0
    %v4647 = vadd.f32 %v109, %v4646
    %4648 = vmatmul.f32.gmra.mxu0 %v4623
    %v4649 = vpop.f32.mrf.mxu0
    %v4650 = vadd.f32 %v110, %v4649
    %4651 = vdwg.mxu0
    %4652 = vrot.lane.b32.xlu0 %v4374, 80
    %v4653 = vpop.permute.xlu0 %4652
    %4654 = vrot.lane.b32.xlu0 %v4376, 80
    %v4655 = vpop.permute.xlu0 %4654
    %4656 = vrot.lane.b32.xlu0 %v4455, 80
    %v4657 = vpop.permute.xlu0 %4656
    %4658 = vrot.lane.b32.xlu0 %v4457, 80
    %v4659 = vpop.permute.xlu0 %4658
    %v4660 = vsel %vm403, %v4653, 0
    %v4662 = vsel %vm403, %v4655, 0
    %v4664 = vsel %vm403, %v4657, 0
    %v4666 = vsel %vm403, %v4659, 0
    %4668 = vmatpush.xpose.msra.mxu0 0.0
    %4669 = vmatpush.xpose.msra.mxu0 0.0
    %4670 = vmatpush.xpose.msra.mxu0 0.0
    %4671 = vmatpush.xpose.msra.mxu0 0.0
    %4672 = vmatpush.xpose.msra.mxu0 0.0
    %4673 = vmatpush.xpose.msra.mxu0 0.0
    %4674 = vmatpush.xpose.msra.mxu0 0.0
    %4675 = vmatpush.xpose.msra.mxu0 0.0
    %4676 = vmatpush.xpose.msra.mxu0 0.0
    %4677 = vmatpush.xpose.msra.mxu0 0.0
    %4678 = vmatpush.xpose.msra.mxu0 0.0
    %4679 = vmatpush.xpose.msra.mxu0 0.0
    %4680 = vmatpush.xpose.msra.mxu0 0.0
    %4681 = vmatpush.xpose.msra.mxu0 0.0
    %4682 = vmatpush.xpose.msra.mxu0 %v4666
    %4683 = vmatpush.xpose.msra.mxu0 %v4664
    %4684 = vmatmul.f32.gmra.mxu0 %v4660
    %v4685 = vpop.f32.mrf.mxu0
    %v4686 = vadd.f32 %v109, %v4685
    %4687 = vmatmul.f32.gmra.mxu0 %v4662
    %v4688 = vpop.f32.mrf.mxu0
    %v4689 = vadd.f32 %v110, %v4688
    %4690 = vdwg.mxu0
    %4691 = vrot.lane.b32.xlu0 %v4374, 64
    %v4692 = vpop.permute.xlu0 %4691
    %4693 = vrot.lane.b32.xlu0 %v4376, 64
    %v4694 = vpop.permute.xlu0 %4693
    %4695 = vrot.lane.b32.xlu0 %v4455, 64
    %v4696 = vpop.permute.xlu0 %4695
    %4697 = vrot.lane.b32.xlu0 %v4457, 64
    %v4698 = vpop.permute.xlu0 %4697
    %v4699 = vsel %vm403, %v4692, 0
    %v4701 = vsel %vm403, %v4694, 0
    %v4703 = vsel %vm403, %v4696, 0
    %v4705 = vsel %vm403, %v4698, 0
    %4707 = vmatpush.xpose.msra.mxu0 0.0
    %4708 = vmatpush.xpose.msra.mxu0 0.0
    %4709 = vmatpush.xpose.msra.mxu0 0.0
    %4710 = vmatpush.xpose.msra.mxu0 0.0
    %4711 = vmatpush.xpose.msra.mxu0 0.0
    %4712 = vmatpush.xpose.msra.mxu0 0.0
    %4713 = vmatpush.xpose.msra.mxu0 0.0
    %4714 = vmatpush.xpose.msra.mxu0 0.0
    %4715 = vmatpush.xpose.msra.mxu0 0.0
    %4716 = vmatpush.xpose.msra.mxu0 0.0
    %4717 = vmatpush.xpose.msra.mxu0 0.0
    %4718 = vmatpush.xpose.msra.mxu0 0.0
    %4719 = vmatpush.xpose.msra.mxu0 0.0
    %4720 = vmatpush.xpose.msra.mxu0 0.0
    %4721 = vmatpush.xpose.msra.mxu0 %v4705
    %4722 = vmatpush.xpose.msra.mxu0 %v4703
    %4723 = vmatmul.f32.gmra.mxu0 %v4699
    %v4724 = vpop.f32.mrf.mxu0
    %v4725 = vadd.f32 %v109, %v4724
    %4726 = vmatmul.f32.gmra.mxu0 %v4701
    %v4727 = vpop.f32.mrf.mxu0
    %v4728 = vadd.f32 %v110, %v4727
    %4729 = vdwg.mxu0
    %4730 = vrot.lane.b32.xlu0 %v4374, 48
    %v4731 = vpop.permute.xlu0 %4730
    %4732 = vrot.lane.b32.xlu0 %v4376, 48
    %v4733 = vpop.permute.xlu0 %4732
    %4734 = vrot.lane.b32.xlu0 %v4455, 48
    %v4735 = vpop.permute.xlu0 %4734
    %4736 = vrot.lane.b32.xlu0 %v4457, 48
    %v4737 = vpop.permute.xlu0 %4736
    %v4738 = vsel %vm403, %v4731, 0
    %v4740 = vsel %vm403, %v4733, 0
    %v4742 = vsel %vm403, %v4735, 0
    %v4744 = vsel %vm403, %v4737, 0
    %4746 = vmatpush.xpose.msra.mxu0 0.0
    %4747 = vmatpush.xpose.msra.mxu0 0.0
    %4748 = vmatpush.xpose.msra.mxu0 0.0
    %4749 = vmatpush.xpose.msra.mxu0 0.0
    %4750 = vmatpush.xpose.msra.mxu0 0.0
    %4751 = vmatpush.xpose.msra.mxu0 0.0
    %4752 = vmatpush.xpose.msra.mxu0 0.0
    %4753 = vmatpush.xpose.msra.mxu0 0.0
    %4754 = vmatpush.xpose.msra.mxu0 0.0
    %4755 = vmatpush.xpose.msra.mxu0 0.0
    %4756 = vmatpush.xpose.msra.mxu0 0.0
    %4757 = vmatpush.xpose.msra.mxu0 0.0
    %4758 = vmatpush.xpose.msra.mxu0 0.0
    %4759 = vmatpush.xpose.msra.mxu0 0.0
    %4760 = vmatpush.xpose.msra.mxu0 %v4744
    %4761 = vmatpush.xpose.msra.mxu0 %v4742
    %4762 = vmatmul.f32.gmra.mxu0 %v4738
    %v4763 = vpop.f32.mrf.mxu0
    %v4764 = vadd.f32 %v109, %v4763
    %4765 = vmatmul.f32.gmra.mxu0 %v4740
    %v4766 = vpop.f32.mrf.mxu0
    %v4767 = vadd.f32 %v110, %v4766
    %4768 = vdwg.mxu0
    %4769 = vrot.lane.b32.xlu0 %v4374, 32
    %v4770 = vpop.permute.xlu0 %4769
    %4771 = vrot.lane.b32.xlu0 %v4376, 32
    %v4772 = vpop.permute.xlu0 %4771
    %4773 = vrot.lane.b32.xlu0 %v4455, 32
    %v4774 = vpop.permute.xlu0 %4773
    %4775 = vrot.lane.b32.xlu0 %v4457, 32
    %v4776 = vpop.permute.xlu0 %4775
    %v4777 = vsel %vm403, %v4770, 0
    %v4779 = vsel %vm403, %v4772, 0
    %v4781 = vsel %vm403, %v4774, 0
    %v4783 = vsel %vm403, %v4776, 0
    %4785 = vmatpush.xpose.msra.mxu0 0.0
    %4786 = vmatpush.xpose.msra.mxu0 0.0
    %4787 = vmatpush.xpose.msra.mxu0 0.0
    %4788 = vmatpush.xpose.msra.mxu0 0.0
    %4789 = vmatpush.xpose.msra.mxu0 0.0
    %4790 = vmatpush.xpose.msra.mxu0 0.0
    %4791 = vmatpush.xpose.msra.mxu0 0.0
    %4792 = vmatpush.xpose.msra.mxu0 0.0
    %4793 = vmatpush.xpose.msra.mxu0 0.0
    %4794 = vmatpush.xpose.msra.mxu0 0.0
    %4795 = vmatpush.xpose.msra.mxu0 0.0
    %4796 = vmatpush.xpose.msra.mxu0 0.0
    %4797 = vmatpush.xpose.msra.mxu0 0.0
    %4798 = vmatpush.xpose.msra.mxu0 0.0
    %4799 = vmatpush.xpose.msra.mxu0 %v4783
    %4800 = vmatpush.xpose.msra.mxu0 %v4781
    %4801 = vmatmul.f32.gmra.mxu0 %v4777
    %v4802 = vpop.f32.mrf.mxu0
    %v4803 = vadd.f32 %v109, %v4802
    %4804 = vmatmul.f32.gmra.mxu0 %v4779
    %v4805 = vpop.f32.mrf.mxu0
    %v4806 = vadd.f32 %v110, %v4805
    %4807 = vdwg.mxu0
    %4808 = vrot.lane.b32.xlu0 %v4374, 16
    %v4809 = vpop.permute.xlu0 %4808
    %4810 = vrot.lane.b32.xlu0 %v4376, 16
    %v4811 = vpop.permute.xlu0 %4810
    %4812 = vrot.lane.b32.xlu0 %v4455, 16
    %v4813 = vpop.permute.xlu0 %4812
    %4814 = vrot.lane.b32.xlu0 %v4457, 16
    %v4815 = vpop.permute.xlu0 %4814
    %v4816 = vsel %vm403, %v4809, 0
    %v4818 = vsel %vm403, %v4811, 0
    %v4820 = vsel %vm403, %v4813, 0
    %v4822 = vsel %vm403, %v4815, 0
    %4824 = vmatpush.xpose.msra.mxu0 0.0
    %4825 = vmatpush.xpose.msra.mxu0 0.0
    %4826 = vmatpush.xpose.msra.mxu0 0.0
    %4827 = vmatpush.xpose.msra.mxu0 0.0
    %4828 = vmatpush.xpose.msra.mxu0 0.0
    %4829 = vmatpush.xpose.msra.mxu0 0.0
    %4830 = vmatpush.xpose.msra.mxu0 0.0
    %4831 = vmatpush.xpose.msra.mxu0 0.0
    %4832 = vmatpush.xpose.msra.mxu0 0.0
    %4833 = vmatpush.xpose.msra.mxu0 0.0
    %4834 = vmatpush.xpose.msra.mxu0 0.0
    %4835 = vmatpush.xpose.msra.mxu0 0.0
    %4836 = vmatpush.xpose.msra.mxu0 0.0
    %4837 = vmatpush.xpose.msra.mxu0 0.0
    %4838 = vmatpush.xpose.msra.mxu0 %v4822
    %4839 = vmatpush.xpose.msra.mxu0 %v4820
    %4840 = vmatmul.f32.gmra.mxu0 %v4816
    %v4841 = vpop.f32.mrf.mxu0
    %v4842 = vadd.f32 %v109, %v4841
    %4843 = vmatmul.f32.gmra.mxu0 %v4818
    %v4844 = vpop.f32.mrf.mxu0
    %v4845 = vadd.f32 %v110, %v4844
    %4846 = vdwg.mxu0
    %v4847 = vsel %vm403, %v4569, -inf
    %4848 = vmax.xlane.f32.xlu0 %v4847
    %v4849 = vpop.xlane.xlu0 %4848
    %v4850 = vsel %vm403, %v4572, -inf
    %4851 = vmax.xlane.f32.xlu0 %v4850
    %v4852 = vpop.xlane.xlu0 %4851
    %v4853 = vsel %vm403, %v4608, -inf
    %4854 = vmax.xlane.f32.xlu0 %v4853
    %v4855 = vpop.xlane.xlu0 %4854
    %v4856 = vsel %vm403, %v4611, -inf
    %4857 = vmax.xlane.f32.xlu0 %v4856
    %v4858 = vpop.xlane.xlu0 %4857
    %v4859 = vsel %vm403, %v4647, -inf
    %4860 = vmax.xlane.f32.xlu0 %v4859
    %v4861 = vpop.xlane.xlu0 %4860
    %v4862 = vsel %vm403, %v4650, -inf
    %4863 = vmax.xlane.f32.xlu0 %v4862
    %v4864 = vpop.xlane.xlu0 %4863
    %v4865 = vsel %vm403, %v4686, -inf
    %4866 = vmax.xlane.f32.xlu0 %v4865
    %v4867 = vpop.xlane.xlu0 %4866
    %v4868 = vsel %vm403, %v4689, -inf
    %4869 = vmax.xlane.f32.xlu0 %v4868
    %v4870 = vpop.xlane.xlu0 %4869
    %v4871 = vsel %vm403, %v4725, -inf
    %4872 = vmax.xlane.f32.xlu0 %v4871
    %v4873 = vpop.xlane.xlu0 %4872
    %v4874 = vsel %vm403, %v4728, -inf
    %4875 = vmax.xlane.f32.xlu0 %v4874
    %v4876 = vpop.xlane.xlu0 %4875
    %v4877 = vsel %vm403, %v4764, -inf
    %4878 = vmax.xlane.f32.xlu0 %v4877
    %v4879 = vpop.xlane.xlu0 %4878
    %v4880 = vsel %vm403, %v4767, -inf
    %4881 = vmax.xlane.f32.xlu0 %v4880
    %v4882 = vpop.xlane.xlu0 %4881
    %v4883 = vsel %vm403, %v4803, -inf
    %4884 = vmax.xlane.f32.xlu0 %v4883
    %v4885 = vpop.xlane.xlu0 %4884
    %v4886 = vsel %vm403, %v4806, -inf
    %4887 = vmax.xlane.f32.xlu0 %v4886
    %v4888 = vpop.xlane.xlu0 %4887
    %v4889 = vsel %vm403, %v4842, -inf
    %4890 = vmax.xlane.f32.xlu0 %v4889
    %v4891 = vpop.xlane.xlu0 %4890
    %v4892 = vsel %vm403, %v4845, -inf
    %4893 = vmax.xlane.f32.xlu0 %v4892
    %v4894 = vpop.xlane.xlu0 %4893
    %v4895 = vsub.f32 %v4569, %v4849
    %v4896 = vsub.f32 %v4572, %v4852
    %v4897 = vsub.f32 %v4608, %v4855
    %v4898 = vsub.f32 %v4611, %v4858
    %v4899 = vsub.f32 %v4647, %v4861
    %v4900 = vsub.f32 %v4650, %v4864
    %v4901 = vsub.f32 %v4686, %v4867
    %v4902 = vsub.f32 %v4689, %v4870
    %v4903 = vsub.f32 %v4725, %v4873
    %v4904 = vsub.f32 %v4728, %v4876
    %v4905 = vsub.f32 %v4764, %v4879
    %v4906 = vsub.f32 %v4767, %v4882
    %v4907 = vsub.f32 %v4803, %v4885
    %v4908 = vsub.f32 %v4806, %v4888
    %v4909 = vsub.f32 %v4842, %v4891
    %v4910 = vsub.f32 %v4845, %v4894
    %v4911 = vmul.f32 %v4895, 1.442695
    %v4912 = vpow.pop %v4911
    %v4913 = vmul.f32 %v4896, 1.442695
    %v4914 = vpow.pop %v4913
    %v4915 = vmul.f32 %v4897, 1.442695
    %v4916 = vpow.pop %v4915
    %v4917 = vmul.f32 %v4898, 1.442695
    %v4918 = vpow.pop %v4917
    %v4919 = vmul.f32 %v4899, 1.442695
    %v4920 = vpow.pop %v4919
    %v4921 = vmul.f32 %v4900, 1.442695
    %v4922 = vpow.pop %v4921
    %v4923 = vmul.f32 %v4901, 1.442695
    %v4924 = vpow.pop %v4923
    %v4925 = vmul.f32 %v4902, 1.442695
    %v4926 = vpow.pop %v4925
    %v4927 = vmul.f32 %v4903, 1.442695
    %v4928 = vpow.pop %v4927
    %v4929 = vmul.f32 %v4904, 1.442695
    %v4930 = vpow.pop %v4929
    %v4931 = vmul.f32 %v4905, 1.442695
    %v4932 = vpow.pop %v4931
    %v4933 = vmul.f32 %v4906, 1.442695
    %v4934 = vpow.pop %v4933
    %v4935 = vmul.f32 %v4907, 1.442695
    %v4936 = vpow.pop %v4935
    %v4937 = vmul.f32 %v4908, 1.442695
    %v4938 = vpow.pop %v4937
    %v4939 = vmul.f32 %v4909, 1.442695
    %v4940 = vpow.pop %v4939
    %v4941 = vmul.f32 %v4910, 1.442695
    %v4942 = vpow.pop %v4941
    %v4943 = vsel %vm403, %v4912, 0.0
    %4944 = vadd.xlane.f32.xlu0 %v4943
    %v4945 = vpop.xlane.xlu0 %4944
    %v4946 = vsel %vm403, %v4914, 0.0
    %4947 = vadd.xlane.f32.xlu0 %v4946
    %v4948 = vpop.xlane.xlu0 %4947
    %v4949 = vsel %vm403, %v4916, 0.0
    %4950 = vadd.xlane.f32.xlu0 %v4949
    %v4951 = vpop.xlane.xlu0 %4950
    %v4952 = vsel %vm403, %v4918, 0.0
    %4953 = vadd.xlane.f32.xlu0 %v4952
    %v4954 = vpop.xlane.xlu0 %4953
    %v4955 = vsel %vm403, %v4920, 0.0
    %4956 = vadd.xlane.f32.xlu0 %v4955
    %v4957 = vpop.xlane.xlu0 %4956
    %v4958 = vsel %vm403, %v4922, 0.0
    %4959 = vadd.xlane.f32.xlu0 %v4958
    %v4960 = vpop.xlane.xlu0 %4959
    %v4961 = vsel %vm403, %v4924, 0.0
    %4962 = vadd.xlane.f32.xlu0 %v4961
    %v4963 = vpop.xlane.xlu0 %4962
    %v4964 = vsel %vm403, %v4926, 0.0
    %4965 = vadd.xlane.f32.xlu0 %v4964
    %v4966 = vpop.xlane.xlu0 %4965
    %v4967 = vsel %vm403, %v4928, 0.0
    %4968 = vadd.xlane.f32.xlu0 %v4967
    %v4969 = vpop.xlane.xlu0 %4968
    %v4970 = vsel %vm403, %v4930, 0.0
    %4971 = vadd.xlane.f32.xlu0 %v4970
    %v4972 = vpop.xlane.xlu0 %4971
    %v4973 = vsel %vm403, %v4932, 0.0
    %4974 = vadd.xlane.f32.xlu0 %v4973
    %v4975 = vpop.xlane.xlu0 %4974
    %v4976 = vsel %vm403, %v4934, 0.0
    %4977 = vadd.xlane.f32.xlu0 %v4976
    %v4978 = vpop.xlane.xlu0 %4977
    %v4979 = vsel %vm403, %v4936, 0.0
    %4980 = vadd.xlane.f32.xlu0 %v4979
    %v4981 = vpop.xlane.xlu0 %4980
    %v4982 = vsel %vm403, %v4938, 0.0
    %4983 = vadd.xlane.f32.xlu0 %v4982
    %v4984 = vpop.xlane.xlu0 %4983
    %v4985 = vsel %vm403, %v4940, 0.0
    %4986 = vadd.xlane.f32.xlu0 %v4985
    %v4987 = vpop.xlane.xlu0 %4986
    %v4988 = vsel %vm403, %v4942, 0.0
    %4989 = vadd.xlane.f32.xlu0 %v4988
    %v4990 = vpop.xlane.xlu0 %4989
    %v4991 = vrcp.pop %v4945
    %v4992 = vrcp.pop %v4948
    %v4993 = vrcp.pop %v4951
    %v4994 = vrcp.pop %v4954
    %v4995 = vrcp.pop %v4957
    %v4996 = vrcp.pop %v4960
    %v4997 = vrcp.pop %v4963
    %v4998 = vrcp.pop %v4966
    %v4999 = vrcp.pop %v4969
    %v5000 = vrcp.pop %v4972
    %v5001 = vrcp.pop %v4975
    %v5002 = vrcp.pop %v4978
    %v5003 = vrcp.pop %v4981
    %v5004 = vrcp.pop %v4984
    %v5005 = vrcp.pop %v4987
    %v5006 = vrcp.pop %v4990
    %v5007 = vmul.f32 %v4912, %v4991
    %v5008 = vmul.f32 %v4914, %v4992
    %v5009 = vmul.f32 %v4916, %v4993
    %v5010 = vmul.f32 %v4918, %v4994
    %v5011 = vmul.f32 %v4920, %v4995
    %v5012 = vmul.f32 %v4922, %v4996
    %v5013 = vmul.f32 %v4924, %v4997
    %v5014 = vmul.f32 %v4926, %v4998
    %v5015 = vmul.f32 %v4928, %v4999
    %v5016 = vmul.f32 %v4930, %v5000
    %v5017 = vmul.f32 %v4932, %v5001
    %v5018 = vmul.f32 %v4934, %v5002
    %v5019 = vmul.f32 %v4936, %v5003
    %v5020 = vmul.f32 %v4938, %v5004
    %v5021 = vmul.f32 %v4940, %v5005
    %v5022 = vmul.f32 %v4942, %v5006
    %v5024 = vsel %vm403, %v5007, 0
    %v5027 = vsel %vm403, %v5008, 0
    %5029 = vmatpush.msra.mxu0 0.0
    %5030 = vmatpush.msra.mxu0 0.0
    %5031 = vmatpush.msra.mxu0 0.0
    %5032 = vmatpush.msra.mxu0 0.0
    %5033 = vmatpush.msra.mxu0 0.0
    %5034 = vmatpush.msra.mxu0 0.0
    %5035 = vmatpush.msra.mxu0 0.0
    %5036 = vmatpush.msra.mxu0 0.0
    %5037 = vmatpush.msra.mxu0 0.0
    %5038 = vmatpush.msra.mxu0 0.0
    %5039 = vmatpush.msra.mxu0 0.0
    %5040 = vmatpush.msra.mxu0 0.0
    %5041 = vmatpush.msra.mxu0 0.0
    %5042 = vmatpush.msra.mxu0 0.0
    %5043 = vmatpush.msra.mxu0 %v4537
    %5044 = vmatpush.msra.mxu0 %v4535
    %5045 = vmatmul.f32.gmra.mxu0 %v5024
    %v5046 = vpop.f32.mrf.mxu0
    %v5047 = vadd.f32 0.0, %v5046
    %5048 = vmatmul.f32.gmra.mxu0 %v5027
    %v5049 = vpop.f32.mrf.mxu0
    %v5050 = vadd.f32 0.0, %v5049
    %5051 = vdwg.mxu0
    %5054 = vrot.lane.b32.xlu0 %v4535, 112
    %v5055 = vpop.permute.xlu0 %5054
    %5056 = vrot.lane.b32.xlu0 %v4537, 112
    %v5057 = vpop.permute.xlu0 %5056
    %v5061 = vsel %vm403, %v5009, 0
    %v5064 = vsel %vm403, %v5010, 0
    %5066 = vmatpush.msra.mxu0 0.0
    %5067 = vmatpush.msra.mxu0 0.0
    %5068 = vmatpush.msra.mxu0 0.0
    %5069 = vmatpush.msra.mxu0 0.0
    %5070 = vmatpush.msra.mxu0 0.0
    %5071 = vmatpush.msra.mxu0 0.0
    %5072 = vmatpush.msra.mxu0 0.0
    %5073 = vmatpush.msra.mxu0 0.0
    %5074 = vmatpush.msra.mxu0 0.0
    %5075 = vmatpush.msra.mxu0 0.0
    %5076 = vmatpush.msra.mxu0 0.0
    %5077 = vmatpush.msra.mxu0 0.0
    %5078 = vmatpush.msra.mxu0 0.0
    %5079 = vmatpush.msra.mxu0 0.0
    %5080 = vmatpush.msra.mxu0 %v5057
    %5081 = vmatpush.msra.mxu0 %v5055
    %5082 = vmatmul.f32.gmra.mxu0 %v5061
    %v5083 = vpop.f32.mrf.mxu0
    %v5084 = vadd.f32 0.0, %v5083
    %5085 = vmatmul.f32.gmra.mxu0 %v5064
    %v5086 = vpop.f32.mrf.mxu0
    %v5087 = vadd.f32 0.0, %v5086
    %5088 = vdwg.mxu0
    %5089 = vrot.lane.b32.xlu0 %v4535, 96
    %v5090 = vpop.permute.xlu0 %5089
    %5091 = vrot.lane.b32.xlu0 %v4537, 96
    %v5092 = vpop.permute.xlu0 %5091
    %v5096 = vsel %vm403, %v5011, 0
    %v5099 = vsel %vm403, %v5012, 0
    %5101 = vmatpush.msra.mxu0 0.0
    %5102 = vmatpush.msra.mxu0 0.0
    %5103 = vmatpush.msra.mxu0 0.0
    %5104 = vmatpush.msra.mxu0 0.0
    %5105 = vmatpush.msra.mxu0 0.0
    %5106 = vmatpush.msra.mxu0 0.0
    %5107 = vmatpush.msra.mxu0 0.0
    %5108 = vmatpush.msra.mxu0 0.0
    %5109 = vmatpush.msra.mxu0 0.0
    %5110 = vmatpush.msra.mxu0 0.0
    %5111 = vmatpush.msra.mxu0 0.0
    %5112 = vmatpush.msra.mxu0 0.0
    %5113 = vmatpush.msra.mxu0 0.0
    %5114 = vmatpush.msra.mxu0 0.0
    %5115 = vmatpush.msra.mxu0 %v5092
    %5116 = vmatpush.msra.mxu0 %v5090
    %5117 = vmatmul.f32.gmra.mxu0 %v5096
    %v5118 = vpop.f32.mrf.mxu0
    %v5119 = vadd.f32 0.0, %v5118
    %5120 = vmatmul.f32.gmra.mxu0 %v5099
    %v5121 = vpop.f32.mrf.mxu0
    %v5122 = vadd.f32 0.0, %v5121
    %5123 = vdwg.mxu0
    %5124 = vrot.lane.b32.xlu0 %v4535, 80
    %v5125 = vpop.permute.xlu0 %5124
    %5126 = vrot.lane.b32.xlu0 %v4537, 80
    %v5127 = vpop.permute.xlu0 %5126
    %v5131 = vsel %vm403, %v5013, 0
    %v5134 = vsel %vm403, %v5014, 0
    %5136 = vmatpush.msra.mxu0 0.0
    %5137 = vmatpush.msra.mxu0 0.0
    %5138 = vmatpush.msra.mxu0 0.0
    %5139 = vmatpush.msra.mxu0 0.0
    %5140 = vmatpush.msra.mxu0 0.0
    %5141 = vmatpush.msra.mxu0 0.0
    %5142 = vmatpush.msra.mxu0 0.0
    %5143 = vmatpush.msra.mxu0 0.0
    %5144 = vmatpush.msra.mxu0 0.0
    %5145 = vmatpush.msra.mxu0 0.0
    %5146 = vmatpush.msra.mxu0 0.0
    %5147 = vmatpush.msra.mxu0 0.0
    %5148 = vmatpush.msra.mxu0 0.0
    %5149 = vmatpush.msra.mxu0 0.0
    %5150 = vmatpush.msra.mxu0 %v5127
    %5151 = vmatpush.msra.mxu0 %v5125
    %5152 = vmatmul.f32.gmra.mxu0 %v5131
    %v5153 = vpop.f32.mrf.mxu0
    %v5154 = vadd.f32 0.0, %v5153
    %5155 = vmatmul.f32.gmra.mxu0 %v5134
    %v5156 = vpop.f32.mrf.mxu0
    %v5157 = vadd.f32 0.0, %v5156
    %5158 = vdwg.mxu0
    %5159 = vrot.lane.b32.xlu0 %v4535, 64
    %v5160 = vpop.permute.xlu0 %5159
    %5161 = vrot.lane.b32.xlu0 %v4537, 64
    %v5162 = vpop.permute.xlu0 %5161
    %v5166 = vsel %vm403, %v5015, 0
    %v5169 = vsel %vm403, %v5016, 0
    %5171 = vmatpush.msra.mxu0 0.0
    %5172 = vmatpush.msra.mxu0 0.0
    %5173 = vmatpush.msra.mxu0 0.0
    %5174 = vmatpush.msra.mxu0 0.0
    %5175 = vmatpush.msra.mxu0 0.0
    %5176 = vmatpush.msra.mxu0 0.0
    %5177 = vmatpush.msra.mxu0 0.0
    %5178 = vmatpush.msra.mxu0 0.0
    %5179 = vmatpush.msra.mxu0 0.0
    %5180 = vmatpush.msra.mxu0 0.0
    %5181 = vmatpush.msra.mxu0 0.0
    %5182 = vmatpush.msra.mxu0 0.0
    %5183 = vmatpush.msra.mxu0 0.0
    %5184 = vmatpush.msra.mxu0 0.0
    %5185 = vmatpush.msra.mxu0 %v5162
    %5186 = vmatpush.msra.mxu0 %v5160
    %5187 = vmatmul.f32.gmra.mxu0 %v5166
    %v5188 = vpop.f32.mrf.mxu0
    %v5189 = vadd.f32 0.0, %v5188
    %5190 = vmatmul.f32.gmra.mxu0 %v5169
    %v5191 = vpop.f32.mrf.mxu0
    %v5192 = vadd.f32 0.0, %v5191
    %5193 = vdwg.mxu0
    %5194 = vrot.lane.b32.xlu0 %v4535, 48
    %v5195 = vpop.permute.xlu0 %5194
    %5196 = vrot.lane.b32.xlu0 %v4537, 48
    %v5197 = vpop.permute.xlu0 %5196
    %v5201 = vsel %vm403, %v5017, 0
    %v5204 = vsel %vm403, %v5018, 0
    %5206 = vmatpush.msra.mxu0 0.0
    %5207 = vmatpush.msra.mxu0 0.0
    %5208 = vmatpush.msra.mxu0 0.0
    %5209 = vmatpush.msra.mxu0 0.0
    %5210 = vmatpush.msra.mxu0 0.0
    %5211 = vmatpush.msra.mxu0 0.0
    %5212 = vmatpush.msra.mxu0 0.0
    %5213 = vmatpush.msra.mxu0 0.0
    %5214 = vmatpush.msra.mxu0 0.0
    %5215 = vmatpush.msra.mxu0 0.0
    %5216 = vmatpush.msra.mxu0 0.0
    %5217 = vmatpush.msra.mxu0 0.0
    %5218 = vmatpush.msra.mxu0 0.0
    %5219 = vmatpush.msra.mxu0 0.0
    %5220 = vmatpush.msra.mxu0 %v5197
    %5221 = vmatpush.msra.mxu0 %v5195
    %5222 = vmatmul.f32.gmra.mxu0 %v5201
    %v5223 = vpop.f32.mrf.mxu0
    %v5224 = vadd.f32 0.0, %v5223
    %5225 = vmatmul.f32.gmra.mxu0 %v5204
    %v5226 = vpop.f32.mrf.mxu0
    %v5227 = vadd.f32 0.0, %v5226
    %5228 = vdwg.mxu0
    %5229 = vrot.lane.b32.xlu0 %v4535, 32
    %v5230 = vpop.permute.xlu0 %5229
    %5231 = vrot.lane.b32.xlu0 %v4537, 32
    %v5232 = vpop.permute.xlu0 %5231
    %v5236 = vsel %vm403, %v5019, 0
    %v5239 = vsel %vm403, %v5020, 0
    %5241 = vmatpush.msra.mxu0 0.0
    %5242 = vmatpush.msra.mxu0 0.0
    %5243 = vmatpush.msra.mxu0 0.0
    %5244 = vmatpush.msra.mxu0 0.0
    %5245 = vmatpush.msra.mxu0 0.0
    %5246 = vmatpush.msra.mxu0 0.0
    %5247 = vmatpush.msra.mxu0 0.0
    %5248 = vmatpush.msra.mxu0 0.0
    %5249 = vmatpush.msra.mxu0 0.0
    %5250 = vmatpush.msra.mxu0 0.0
    %5251 = vmatpush.msra.mxu0 0.0
    %5252 = vmatpush.msra.mxu0 0.0
    %5253 = vmatpush.msra.mxu0 0.0
    %5254 = vmatpush.msra.mxu0 0.0
    %5255 = vmatpush.msra.mxu0 %v5232
    %5256 = vmatpush.msra.mxu0 %v5230
    %5257 = vmatmul.f32.gmra.mxu0 %v5236
    %v5258 = vpop.f32.mrf.mxu0
    %v5259 = vadd.f32 0.0, %v5258
    %5260 = vmatmul.f32.gmra.mxu0 %v5239
    %v5261 = vpop.f32.mrf.mxu0
    %v5262 = vadd.f32 0.0, %v5261
    %5263 = vdwg.mxu0
    %5264 = vrot.lane.b32.xlu0 %v4535, 16
    %v5265 = vpop.permute.xlu0 %5264
    %5266 = vrot.lane.b32.xlu0 %v4537, 16
    %v5267 = vpop.permute.xlu0 %5266
    %v5271 = vsel %vm403, %v5021, 0
    %v5274 = vsel %vm403, %v5022, 0
    %5276 = vmatpush.msra.mxu0 0.0
    %5277 = vmatpush.msra.mxu0 0.0
    %5278 = vmatpush.msra.mxu0 0.0
    %5279 = vmatpush.msra.mxu0 0.0
    %5280 = vmatpush.msra.mxu0 0.0
    %5281 = vmatpush.msra.mxu0 0.0
    %5282 = vmatpush.msra.mxu0 0.0
    %5283 = vmatpush.msra.mxu0 0.0
    %5284 = vmatpush.msra.mxu0 0.0
    %5285 = vmatpush.msra.mxu0 0.0
    %5286 = vmatpush.msra.mxu0 0.0
    %5287 = vmatpush.msra.mxu0 0.0
    %5288 = vmatpush.msra.mxu0 0.0
    %5289 = vmatpush.msra.mxu0 0.0
    %5290 = vmatpush.msra.mxu0 %v5267
    %5291 = vmatpush.msra.mxu0 %v5265
    %5292 = vmatmul.f32.gmra.mxu0 %v5271
    %v5293 = vpop.f32.mrf.mxu0
    %v5294 = vadd.f32 0.0, %v5293
    %5295 = vmatmul.f32.gmra.mxu0 %v5274
    %v5296 = vpop.f32.mrf.mxu0
    %v5297 = vadd.f32 0.0, %v5296
    %5298 = vdwg.mxu0
    %5301 = vrot.lane.b32.xlu0 %v5084, 16
    %v5302 = vpop.permute.xlu0 %5301
    %5303 = vrot.lane.b32.xlu0 %v5087, 16
    %v5304 = vpop.permute.xlu0 %5303
    %5309 = vrot.lane.b32.xlu0 %v5119, 32
    %v5310 = vpop.permute.xlu0 %5309
    %5311 = vrot.lane.b32.xlu0 %v5122, 32
    %v5312 = vpop.permute.xlu0 %5311
    %5317 = vrot.lane.b32.xlu0 %v5154, 48
    %v5318 = vpop.permute.xlu0 %5317
    %5319 = vrot.lane.b32.xlu0 %v5157, 48
    %v5320 = vpop.permute.xlu0 %5319
    %5325 = vrot.lane.b32.xlu0 %v5189, 64
    %v5326 = vpop.permute.xlu0 %5325
    %5327 = vrot.lane.b32.xlu0 %v5192, 64
    %v5328 = vpop.permute.xlu0 %5327
    %5333 = vrot.lane.b32.xlu0 %v5224, 80
    %v5334 = vpop.permute.xlu0 %5333
    %5335 = vrot.lane.b32.xlu0 %v5227, 80
    %v5336 = vpop.permute.xlu0 %5335
    %5341 = vrot.lane.b32.xlu0 %v5259, 96
    %v5342 = vpop.permute.xlu0 %5341
    %5343 = vrot.lane.b32.xlu0 %v5262, 96
    %v5344 = vpop.permute.xlu0 %5343
    %5349 = vrot.lane.b32.xlu0 %v5294, 112
    %v5350 = vpop.permute.xlu0 %5349
    %5351 = vrot.lane.b32.xlu0 %v5297, 112
    %v5352 = vpop.permute.xlu0 %5351
    %v5355 = vsel %vm403, %v5047, %v5302
    %v5356 = vsel %vm403, %v5050, %v5304
    %v5357 = vsel %vm144, %v5355, %v5310
    %v5358 = vsel %vm144, %v5356, %v5312
    %v5359 = vsel %vm1224, %v5357, %v5318
    %v5360 = vsel %vm1224, %v5358, %v5320
    %v5361 = vsel %vm1227, %v5359, %v5326
    %v5362 = vsel %vm1227, %v5360, %v5328
    %v5363 = vsel %vm1230, %v5361, %v5334
    %v5364 = vsel %vm1230, %v5362, %v5336
    %v5365 = vsel %vm1233, %v5363, %v5342
    %v5366 = vsel %vm1233, %v5364, %v5344
    %v5367 = vsel %vm1236, %v5365, %v5350
    %v5368 = vsel %vm1236, %v5366, %v5352
    %v5369 = vpack.c.bf16 %v5368, %v5367
    %v5370 = vld [vmem:[#allocation7 + $0x4d8] sm:$0xf]
    %v5371 = vld [vmem:[#allocation7 + $0x4dc] sm:$0xf]
    %v5372 = vld [vmem:[#allocation7 + $0x4e0] sm:$0xf]
    %v5373 = vld [vmem:[#allocation7 + $0x4e4] sm:$0xf]
    %v5374 = vld [vmem:[#allocation7 + $0x4e8] sm:$0xf]
    %v5375 = vld [vmem:[#allocation7 + $0x4ec] sm:$0xf]
    %v5376 = vld [vmem:[#allocation7 + $0x4f0] sm:$0xf]
    %v5377 = vld [vmem:[#allocation7 + $0x4f4] sm:$0xf]
    %v5378 = vld [vmem:[#allocation7 + $0x4f8] sm:$0xf]
    %v5379 = vld [vmem:[#allocation7 + $0x4fc] sm:$0xf]
    %v5380 = vld [vmem:[#allocation7 + $0x500] sm:$0xf]
    %v5381 = vld [vmem:[#allocation7 + $0x504] sm:$0xf]
    %v5382 = vld [vmem:[#allocation7 + $0x508] sm:$0xf]
    %v5383 = vld [vmem:[#allocation7 + $0x50c] sm:$0xf]
    %v5384 = vld [vmem:[#allocation7 + $0x510] sm:$0xf]
    %v5385 = vld [vmem:[#allocation7 + $0x514] sm:$0xf]
    %v5386 = vld [vmem:[#allocation9 + $0xd8] sm:$0x1]
    %v5387 = vperm.slane %v5386, 0
    %v5404 = vunpack.c.l.b16 %v5370
    %v5405 = vunpack.c.l.b16 %v5371
    %v5406 = vunpack.c.l.b16 %v5372
    %v5407 = vunpack.c.l.b16 %v5373
    %v5408 = vunpack.c.l.b16 %v5374
    %v5409 = vunpack.c.l.b16 %v5375
    %v5410 = vunpack.c.l.b16 %v5376
    %v5411 = vunpack.c.l.b16 %v5377
    %v5412 = vunpack.c.l.b16 %v5378
    %v5413 = vunpack.c.l.b16 %v5379
    %v5414 = vunpack.c.l.b16 %v5380
    %v5415 = vunpack.c.l.b16 %v5381
    %v5416 = vunpack.c.l.b16 %v5382
    %v5417 = vunpack.c.l.b16 %v5383
    %v5418 = vunpack.c.l.b16 %v5384
    %v5419 = vunpack.c.l.b16 %v5385
    %v5420 = vpack.c.b16 %v5405, %v5404
    %v5421 = vpack.c.b16 %v5407, %v5406
    %v5422 = vpack.c.b16 %v5409, %v5408
    %v5423 = vpack.c.b16 %v5411, %v5410
    %v5424 = vpack.c.b16 %v5413, %v5412
    %v5425 = vpack.c.b16 %v5415, %v5414
    %v5426 = vpack.c.b16 %v5417, %v5416
    %v5427 = vpack.c.b16 %v5419, %v5418
    %5436 = vmatpush.bf16.msra.mxu0 %v5427
    %5437 = vmatpush.bf16.msra.mxu0 %v5426
    %5438 = vmatpush.bf16.msra.mxu0 %v5425
    %5439 = vmatpush.bf16.msra.mxu0 %v5424
    %5440 = vmatpush.bf16.msra.mxu0 %v5423
    %5441 = vmatpush.bf16.msra.mxu0 %v5422
    %5442 = vmatpush.bf16.msra.mxu0 %v5421
    %5443 = vmatpush.bf16.msra.mxu0 %v5420
    %5444 = vmatmul.bf16.gmra.mxu0 %v5369
    %v5445 = vpop.f32.mrf.mxu0
    %v5446 = vadd.f32 %v5387, %v5445
    %v5447 = vpop.f32.mrf.mxu0
    %v5448 = vadd.f32 %v5387, %v5447
    %5449 = vdwg.mxu0
    %v5450 = vadd.f32 %v4295, %v5446
    %v5451 = vadd.f32 %v4296, %v5448
    %5452 = vadd.xlane.f32.xlu0 %v5450
    %v5453 = vpop.xlane.xlu0 %5452
    %5454 = vadd.xlane.f32.xlu0 %v5451
    %v5455 = vpop.xlane.xlu0 %5454
    %v5456 = vmul.f32 %v5453, %v1332
    %v5457 = vmul.f32 %v5455, %v1332
    %v5458 = vsub.f32 %v5450, %v5456
    %v5459 = vsub.f32 %v5451, %v5457
    %v5460 = vmul.f32 %v5458, %v5458
    %v5461 = vmul.f32 %v5459, %v5459
    %5462 = vadd.xlane.f32.xlu0 %v5460
    %v5463 = vpop.xlane.xlu0 %5462
    %5464 = vadd.xlane.f32.xlu0 %v5461
    %v5465 = vpop.xlane.xlu0 %5464
    %v5466 = vmul.f32 %v5463, %v1332
    %v5467 = vmul.f32 %v5465, %v1332
    %v5468 = vadd.f32 %v5466, 1e-05
    %v5469 = vadd.f32 %v5467, 1e-05
    %v5470 = vrsqrt.pop %v5468
    %v5471 = vmul.f32 %v5470, %v5468
    %v5472 = vmul.f32 %v5471, %v5470
    %v5473 = vmul.f32 0.5, %v5472
    %v5474 = vsub.f32 1.5, %v5473
    %v5475 = vmul.f32 %v5470, %v5474
    %vm5476 = vweird.f32 %v5468
    %vm5477 = vweird.f32 %v5470
    %vm5478 = vmor %vm5476, %vm5477
    %v5479 = vsel %vm5478, %v5470, %v5475
    %v5480 = vrsqrt.pop %v5469
    %v5481 = vmul.f32 %v5480, %v5469
    %v5482 = vmul.f32 %v5481, %v5480
    %v5483 = vmul.f32 0.5, %v5482
    %v5484 = vsub.f32 1.5, %v5483
    %v5485 = vmul.f32 %v5480, %v5484
    %vm5486 = vweird.f32 %v5469
    %vm5487 = vweird.f32 %v5480
    %vm5488 = vmor %vm5486, %vm5487
    %v5489 = vsel %vm5488, %v5480, %v5485
    %v5490 = vmul.f32 %v5458, %v5479
    %v5491 = vmul.f32 %v5459, %v5489
    %v5492 = vld [vmem:[#allocation9 + $0xf0] sm:$0x1]
    %v5493 = vperm.slane %v5492, 0
    %v5494 = vmul.f32 %v5490, %v5493
    %v5495 = vmul.f32 %v5491, %v5493
    %v5496 = vld [vmem:[#allocation9 + $0xf8] sm:$0x1]
    %v5497 = vperm.slane %v5496, 0
    %v5498 = vadd.f32 %v5494, %v5497
    %v5499 = vadd.f32 %v5495, %v5497
    %v5500 = vpack.c.bf16 %v5499, %v5498
    %v5501 = vld [vmem:[#allocation7 + $0x518] sm:$0xf]
    %v5502 = vld [vmem:[#allocation7 + $0x51c] sm:$0xf]
    %v5503 = vld [vmem:[#allocation7 + $0x520] sm:$0xf]
    %v5504 = vld [vmem:[#allocation7 + $0x524] sm:$0xf]
    %v5505 = vld [vmem:[#allocation7 + $0x528] sm:$0xf]
    %v5506 = vld [vmem:[#allocation7 + $0x52c] sm:$0xf]
    %v5507 = vld [vmem:[#allocation7 + $0x530] sm:$0xf]
    %v5508 = vld [vmem:[#allocation7 + $0x534] sm:$0xf]
    %v5509 = vld [vmem:[#allocation7 + $0x538] sm:$0xf]
    %v5510 = vld [vmem:[#allocation7 + $0x53c] sm:$0xf]
    %v5511 = vld [vmem:[#allocation7 + $0x540] sm:$0xf]
    %v5512 = vld [vmem:[#allocation7 + $0x544] sm:$0xf]
    %v5513 = vld [vmem:[#allocation7 + $0x548] sm:$0xf]
    %v5514 = vld [vmem:[#allocation7 + $0x54c] sm:$0xf]
    %v5515 = vld [vmem:[#allocation7 + $0x550] sm:$0xf]
    %v5516 = vld [vmem:[#allocation7 + $0x554] sm:$0xf]
    %v5517 = vld [vmem:[#allocation9 + $0x110] sm:$0x1]
    %v5518 = vperm.slane %v5517, 0
    %v5535 = vunpack.c.l.b16 %v5501
    %v5536 = vunpack.c.l.b16 %v5502
    %v5537 = vunpack.c.l.b16 %v5503
    %v5538 = vunpack.c.l.b16 %v5504
    %v5539 = vunpack.c.l.b16 %v5505
    %v5540 = vunpack.c.l.b16 %v5506
    %v5541 = vunpack.c.l.b16 %v5507
    %v5542 = vunpack.c.l.b16 %v5508
    %v5543 = vunpack.c.l.b16 %v5509
    %v5544 = vunpack.c.l.b16 %v5510
    %v5545 = vunpack.c.l.b16 %v5511
    %v5546 = vunpack.c.l.b16 %v5512
    %v5547 = vunpack.c.l.b16 %v5513
    %v5548 = vunpack.c.l.b16 %v5514
    %v5549 = vunpack.c.l.b16 %v5515
    %v5550 = vunpack.c.l.b16 %v5516
    %v5551 = vpack.c.b16 %v5536, %v5535
    %v5552 = vpack.c.b16 %v5538, %v5537
    %v5553 = vpack.c.b16 %v5540, %v5539
    %v5554 = vpack.c.b16 %v5542, %v5541
    %v5555 = vpack.c.b16 %v5544, %v5543
    %v5556 = vpack.c.b16 %v5546, %v5545
    %v5557 = vpack.c.b16 %v5548, %v5547
    %v5558 = vpack.c.b16 %v5550, %v5549
    %5567 = vmatpush.bf16.msra.mxu0 %v5558
    %5568 = vmatpush.bf16.msra.mxu0 %v5557
    %5569 = vmatpush.bf16.msra.mxu0 %v5556
    %5570 = vmatpush.bf16.msra.mxu0 %v5555
    %5571 = vmatpush.bf16.msra.mxu0 %v5554
    %5572 = vmatpush.bf16.msra.mxu0 %v5553
    %5573 = vmatpush.bf16.msra.mxu0 %v5552
    %5574 = vmatpush.bf16.msra.mxu0 %v5551
    %5575 = vmatmul.bf16.gmra.mxu0 %v5500
    %v5576 = vpop.f32.mrf.mxu0
    %v5577 = vadd.f32 %v5518, %v5576
    %v5578 = vpop.f32.mrf.mxu0
    %v5579 = vadd.f32 %v5518, %v5578
    %5580 = vdwg.mxu0
    %v5581 = vmax.f32 %v5577, 0.0
    %v5582 = vmax.f32 %v5579, 0.0
    %v5583 = vpack.c.bf16 %v5582, %v5581
    %v5584 = vld [vmem:[#allocation7 + $0x558] sm:$0xf]
    %v5585 = vld [vmem:[#allocation7 + $0x55c] sm:$0xf]
    %v5586 = vld [vmem:[#allocation7 + $0x560] sm:$0xf]
    %v5587 = vld [vmem:[#allocation7 + $0x564] sm:$0xf]
    %v5588 = vld [vmem:[#allocation7 + $0x568] sm:$0xf]
    %v5589 = vld [vmem:[#allocation7 + $0x56c] sm:$0xf]
    %v5590 = vld [vmem:[#allocation7 + $0x570] sm:$0xf]
    %v5591 = vld [vmem:[#allocation7 + $0x574] sm:$0xf]
    %v5592 = vld [vmem:[#allocation7 + $0x578] sm:$0xf]
    %v5593 = vld [vmem:[#allocation7 + $0x57c] sm:$0xf]
    %v5594 = vld [vmem:[#allocation7 + $0x580] sm:$0xf]
    %v5595 = vld [vmem:[#allocation7 + $0x584] sm:$0xf]
    %v5596 = vld [vmem:[#allocation7 + $0x588] sm:$0xf]
    %v5597 = vld [vmem:[#allocation7 + $0x58c] sm:$0xf]
    %v5598 = vld [vmem:[#allocation7 + $0x590] sm:$0xf]
    %v5599 = vld [vmem:[#allocation7 + $0x594] sm:$0xf]
    %v5600 = vld [vmem:[#allocation9 + $0x118] sm:$0x1]
    %v5601 = vperm.slane %v5600, 0
    %v5618 = vunpack.c.l.b16 %v5584
    %v5619 = vunpack.c.l.b16 %v5585
    %v5620 = vunpack.c.l.b16 %v5586
    %v5621 = vunpack.c.l.b16 %v5587
    %v5622 = vunpack.c.l.b16 %v5588
    %v5623 = vunpack.c.l.b16 %v5589
    %v5624 = vunpack.c.l.b16 %v5590
    %v5625 = vunpack.c.l.b16 %v5591
    %v5626 = vunpack.c.l.b16 %v5592
    %v5627 = vunpack.c.l.b16 %v5593
    %v5628 = vunpack.c.l.b16 %v5594
    %v5629 = vunpack.c.l.b16 %v5595
    %v5630 = vunpack.c.l.b16 %v5596
    %v5631 = vunpack.c.l.b16 %v5597
    %v5632 = vunpack.c.l.b16 %v5598
    %v5633 = vunpack.c.l.b16 %v5599
    %v5634 = vpack.c.b16 %v5619, %v5618
    %v5635 = vpack.c.b16 %v5621, %v5620
    %v5636 = vpack.c.b16 %v5623, %v5622
    %v5637 = vpack.c.b16 %v5625, %v5624
    %v5638 = vpack.c.b16 %v5627, %v5626
    %v5639 = vpack.c.b16 %v5629, %v5628
    %v5640 = vpack.c.b16 %v5631, %v5630
    %v5641 = vpack.c.b16 %v5633, %v5632
    %5650 = vmatpush.bf16.msra.mxu0 %v5641
    %5651 = vmatpush.bf16.msra.mxu0 %v5640
    %5652 = vmatpush.bf16.msra.mxu0 %v5639
    %5653 = vmatpush.bf16.msra.mxu0 %v5638
    %5654 = vmatpush.bf16.msra.mxu0 %v5637
    %5655 = vmatpush.bf16.msra.mxu0 %v5636
    %5656 = vmatpush.bf16.msra.mxu0 %v5635
    %5657 = vmatpush.bf16.msra.mxu0 %v5634
    %5658 = vmatmul.bf16.gmra.mxu0 %v5583
    %v5659 = vpop.f32.mrf.mxu0
    %v5660 = vadd.f32 %v5601, %v5659
    %v5661 = vpop.f32.mrf.mxu0
    %v5662 = vadd.f32 %v5601, %v5661
    %5663 = vdwg.mxu0
    %v5664 = vadd.f32 %v5498, %v5660
    %v5665 = vadd.f32 %v5499, %v5662
    %5666 = vadd.xlane.f32.xlu0 %v5664
    %v5667 = vpop.xlane.xlu0 %5666
    %5668 = vadd.xlane.f32.xlu0 %v5665
    %v5669 = vpop.xlane.xlu0 %5668
    %v5670 = vmul.f32 %v5667, %v1332
    %v5671 = vmul.f32 %v5669, %v1332
    %v5672 = vsub.f32 %v5664, %v5670
    %v5673 = vsub.f32 %v5665, %v5671
    %v5674 = vmul.f32 %v5672, %v5672
    %v5675 = vmul.f32 %v5673, %v5673
    %5676 = vadd.xlane.f32.xlu0 %v5674
    %v5677 = vpop.xlane.xlu0 %5676
    %5678 = vadd.xlane.f32.xlu0 %v5675
    %v5679 = vpop.xlane.xlu0 %5678
    %v5680 = vmul.f32 %v5677, %v1332
    %v5681 = vmul.f32 %v5679, %v1332
    %v5682 = vadd.f32 %v5680, 1e-05
    %v5683 = vadd.f32 %v5681, 1e-05
    %v5684 = vrsqrt.pop %v5682
    %v5685 = vmul.f32 %v5684, %v5682
    %v5686 = vmul.f32 %v5685, %v5684
    %v5687 = vmul.f32 0.5, %v5686
    %v5688 = vsub.f32 1.5, %v5687
    %v5689 = vmul.f32 %v5684, %v5688
    %vm5690 = vweird.f32 %v5682
    %vm5691 = vweird.f32 %v5684
    %vm5692 = vmor %vm5690, %vm5691
    %v5693 = vsel %vm5692, %v5684, %v5689
    %v5694 = vrsqrt.pop %v5683
    %v5695 = vmul.f32 %v5694, %v5683
    %v5696 = vmul.f32 %v5695, %v5694
    %v5697 = vmul.f32 0.5, %v5696
    %v5698 = vsub.f32 1.5, %v5697
    %v5699 = vmul.f32 %v5694, %v5698
    %vm5700 = vweird.f32 %v5683
    %vm5701 = vweird.f32 %v5694
    %vm5702 = vmor %vm5700, %vm5701
    %v5703 = vsel %vm5702, %v5694, %v5699
    %v5704 = vmul.f32 %v5672, %v5693
    %v5705 = vmul.f32 %v5673, %v5703
    %v5706 = vld [vmem:[#allocation9 + $0x100] sm:$0x1]
    %v5707 = vperm.slane %v5706, 0
    %v5708 = vmul.f32 %v5704, %v5707
    %v5709 = vmul.f32 %v5705, %v5707
    %v5710 = vld [vmem:[#allocation9 + $0x108] sm:$0x1]
    %v5711 = vperm.slane %v5710, 0
    %v5712 = vadd.f32 %v5708, %v5711
    %v5713 = vadd.f32 %v5709, %v5711
    %v5714 = vpack.c.bf16 %v5713, %v5712
    %v5715 = vld [vmem:[#allocation7 + $0x598] sm:$0xf]
    %v5716 = vld [vmem:[#allocation7 + $0x59c] sm:$0xf]
    %v5717 = vld [vmem:[#allocation7 + $0x5a0] sm:$0xf]
    %v5718 = vld [vmem:[#allocation7 + $0x5a4] sm:$0xf]
    %v5719 = vld [vmem:[#allocation7 + $0x5a8] sm:$0xf]
    %v5720 = vld [vmem:[#allocation7 + $0x5ac] sm:$0xf]
    %v5721 = vld [vmem:[#allocation7 + $0x5b0] sm:$0xf]
    %v5722 = vld [vmem:[#allocation7 + $0x5b4] sm:$0xf]
    %v5723 = vld [vmem:[#allocation7 + $0x5b8] sm:$0xf]
    %v5724 = vld [vmem:[#allocation7 + $0x5bc] sm:$0xf]
    %v5725 = vld [vmem:[#allocation7 + $0x5c0] sm:$0xf]
    %v5726 = vld [vmem:[#allocation7 + $0x5c4] sm:$0xf]
    %v5727 = vld [vmem:[#allocation7 + $0x5c8] sm:$0xf]
    %v5728 = vld [vmem:[#allocation7 + $0x5cc] sm:$0xf]
    %v5729 = vld [vmem:[#allocation7 + $0x5d0] sm:$0xf]
    %v5730 = vld [vmem:[#allocation7 + $0x5d4] sm:$0xf]
    %v5731 = vld [vmem:[#allocation9 + $0x120] sm:$0x1]
    %v5732 = vperm.slane %v5731, 0
    %v5749 = vunpack.c.l.b16 %v5715
    %v5750 = vunpack.c.l.b16 %v5716
    %v5751 = vunpack.c.l.b16 %v5717
    %v5752 = vunpack.c.l.b16 %v5718
    %v5753 = vunpack.c.l.b16 %v5719
    %v5754 = vunpack.c.l.b16 %v5720
    %v5755 = vunpack.c.l.b16 %v5721
    %v5756 = vunpack.c.l.b16 %v5722
    %v5757 = vunpack.c.l.b16 %v5723
    %v5758 = vunpack.c.l.b16 %v5724
    %v5759 = vunpack.c.l.b16 %v5725
    %v5760 = vunpack.c.l.b16 %v5726
    %v5761 = vunpack.c.l.b16 %v5727
    %v5762 = vunpack.c.l.b16 %v5728
    %v5763 = vunpack.c.l.b16 %v5729
    %v5764 = vunpack.c.l.b16 %v5730
    %v5765 = vpack.c.b16 %v5750, %v5749
    %v5766 = vpack.c.b16 %v5752, %v5751
    %v5767 = vpack.c.b16 %v5754, %v5753
    %v5768 = vpack.c.b16 %v5756, %v5755
    %v5769 = vpack.c.b16 %v5758, %v5757
    %v5770 = vpack.c.b16 %v5760, %v5759
    %v5771 = vpack.c.b16 %v5762, %v5761
    %v5772 = vpack.c.b16 %v5764, %v5763
    %5781 = vmatpush.bf16.msra.mxu0 %v5772
    %5782 = vmatpush.bf16.msra.mxu0 %v5771
    %5783 = vmatpush.bf16.msra.mxu0 %v5770
    %5784 = vmatpush.bf16.msra.mxu0 %v5769
    %5785 = vmatpush.bf16.msra.mxu0 %v5768
    %5786 = vmatpush.bf16.msra.mxu0 %v5767
    %5787 = vmatpush.bf16.msra.mxu0 %v5766
    %5788 = vmatpush.bf16.msra.mxu0 %v5765
    %5789 = vmatmul.bf16.gmra.mxu0 %v5714
    %v5790 = vpop.f32.mrf.mxu0
    %v5791 = vadd.f32 %v5732, %v5790
    %v5792 = vpop.f32.mrf.mxu0
    %v5793 = vadd.f32 %v5732, %v5792
    %5794 = vdwg.mxu0
    %v5795 = vld [vmem:[#allocation7 + $0x5d8] sm:$0xf]
    %v5796 = vld [vmem:[#allocation7 + $0x5dc] sm:$0xf]
    %v5797 = vld [vmem:[#allocation7 + $0x5e0] sm:$0xf]
    %v5798 = vld [vmem:[#allocation7 + $0x5e4] sm:$0xf]
    %v5799 = vld [vmem:[#allocation7 + $0x5e8] sm:$0xf]
    %v5800 = vld [vmem:[#allocation7 + $0x5ec] sm:$0xf]
    %v5801 = vld [vmem:[#allocation7 + $0x5f0] sm:$0xf]
    %v5802 = vld [vmem:[#allocation7 + $0x5f4] sm:$0xf]
    %v5803 = vld [vmem:[#allocation7 + $0x5f8] sm:$0xf]
    %v5804 = vld [vmem:[#allocation7 + $0x5fc] sm:$0xf]
    %v5805 = vld [vmem:[#allocation7 + $0x600] sm:$0xf]
    %v5806 = vld [vmem:[#allocation7 + $0x604] sm:$0xf]
    %v5807 = vld [vmem:[#allocation7 + $0x608] sm:$0xf]
    %v5808 = vld [vmem:[#allocation7 + $0x60c] sm:$0xf]
    %v5809 = vld [vmem:[#allocation7 + $0x610] sm:$0xf]
    %v5810 = vld [vmem:[#allocation7 + $0x614] sm:$0xf]
    %v5811 = vld [vmem:[#allocation9 + $0x128] sm:$0x1]
    %v5812 = vperm.slane %v5811, 0
    %v5829 = vunpack.c.l.b16 %v5795
    %v5830 = vunpack.c.l.b16 %v5796
    %v5831 = vunpack.c.l.b16 %v5797
    %v5832 = vunpack.c.l.b16 %v5798
    %v5833 = vunpack.c.l.b16 %v5799
    %v5834 = vunpack.c.l.b16 %v5800
    %v5835 = vunpack.c.l.b16 %v5801
    %v5836 = vunpack.c.l.b16 %v5802
    %v5837 = vunpack.c.l.b16 %v5803
    %v5838 = vunpack.c.l.b16 %v5804
    %v5839 = vunpack.c.l.b16 %v5805
    %v5840 = vunpack.c.l.b16 %v5806
    %v5841 = vunpack.c.l.b16 %v5807
    %v5842 = vunpack.c.l.b16 %v5808
    %v5843 = vunpack.c.l.b16 %v5809
    %v5844 = vunpack.c.l.b16 %v5810
    %v5845 = vpack.c.b16 %v5830, %v5829
    %v5846 = vpack.c.b16 %v5832, %v5831
    %v5847 = vpack.c.b16 %v5834, %v5833
    %v5848 = vpack.c.b16 %v5836, %v5835
    %v5849 = vpack.c.b16 %v5838, %v5837
    %v5850 = vpack.c.b16 %v5840, %v5839
    %v5851 = vpack.c.b16 %v5842, %v5841
    %v5852 = vpack.c.b16 %v5844, %v5843
    %5861 = vmatpush.bf16.msra.mxu0 %v5852
    %5862 = vmatpush.bf16.msra.mxu0 %v5851
    %5863 = vmatpush.bf16.msra.mxu0 %v5850
    %5864 = vmatpush.bf16.msra.mxu0 %v5849
    %5865 = vmatpush.bf16.msra.mxu0 %v5848
    %5866 = vmatpush.bf16.msra.mxu0 %v5847
    %5867 = vmatpush.bf16.msra.mxu0 %v5846
    %5868 = vmatpush.bf16.msra.mxu0 %v5845
    %5869 = vmatmul.bf16.gmra.mxu0 %v5714
    %v5870 = vpop.f32.mrf.mxu0
    %v5871 = vadd.f32 %v5812, %v5870
    %v5872 = vpop.f32.mrf.mxu0
    %v5873 = vadd.f32 %v5812, %v5872
    %5874 = vdwg.mxu0
    %v5875 = vld [vmem:[#allocation7 + $0x618] sm:$0xf]
    %v5876 = vld [vmem:[#allocation7 + $0x61c] sm:$0xf]
    %v5877 = vld [vmem:[#allocation7 + $0x620] sm:$0xf]
    %v5878 = vld [vmem:[#allocation7 + $0x624] sm:$0xf]
    %v5879 = vld [vmem:[#allocation7 + $0x628] sm:$0xf]
    %v5880 = vld [vmem:[#allocation7 + $0x62c] sm:$0xf]
    %v5881 = vld [vmem:[#allocation7 + $0x630] sm:$0xf]
    %v5882 = vld [vmem:[#allocation7 + $0x634] sm:$0xf]
    %v5883 = vld [vmem:[#allocation7 + $0x638] sm:$0xf]
    %v5884 = vld [vmem:[#allocation7 + $0x63c] sm:$0xf]
    %v5885 = vld [vmem:[#allocation7 + $0x640] sm:$0xf]
    %v5886 = vld [vmem:[#allocation7 + $0x644] sm:$0xf]
    %v5887 = vld [vmem:[#allocation7 + $0x648] sm:$0xf]
    %v5888 = vld [vmem:[#allocation7 + $0x64c] sm:$0xf]
    %v5889 = vld [vmem:[#allocation7 + $0x650] sm:$0xf]
    %v5890 = vld [vmem:[#allocation7 + $0x654] sm:$0xf]
    %v5891 = vld [vmem:[#allocation9 + $0x130] sm:$0x1]
    %v5892 = vperm.slane %v5891, 0
    %v5909 = vunpack.c.l.b16 %v5875
    %v5910 = vunpack.c.l.b16 %v5876
    %v5911 = vunpack.c.l.b16 %v5877
    %v5912 = vunpack.c.l.b16 %v5878
    %v5913 = vunpack.c.l.b16 %v5879
    %v5914 = vunpack.c.l.b16 %v5880
    %v5915 = vunpack.c.l.b16 %v5881
    %v5916 = vunpack.c.l.b16 %v5882
    %v5917 = vunpack.c.l.b16 %v5883
    %v5918 = vunpack.c.l.b16 %v5884
    %v5919 = vunpack.c.l.b16 %v5885
    %v5920 = vunpack.c.l.b16 %v5886
    %v5921 = vunpack.c.l.b16 %v5887
    %v5922 = vunpack.c.l.b16 %v5888
    %v5923 = vunpack.c.l.b16 %v5889
    %v5924 = vunpack.c.l.b16 %v5890
    %v5925 = vpack.c.b16 %v5910, %v5909
    %v5926 = vpack.c.b16 %v5912, %v5911
    %v5927 = vpack.c.b16 %v5914, %v5913
    %v5928 = vpack.c.b16 %v5916, %v5915
    %v5929 = vpack.c.b16 %v5918, %v5917
    %v5930 = vpack.c.b16 %v5920, %v5919
    %v5931 = vpack.c.b16 %v5922, %v5921
    %v5932 = vpack.c.b16 %v5924, %v5923
    %5941 = vmatpush.bf16.msra.mxu0 %v5932
    %5942 = vmatpush.bf16.msra.mxu0 %v5931
    %5943 = vmatpush.bf16.msra.mxu0 %v5930
    %5944 = vmatpush.bf16.msra.mxu0 %v5929
    %5945 = vmatpush.bf16.msra.mxu0 %v5928
    %5946 = vmatpush.bf16.msra.mxu0 %v5927
    %5947 = vmatpush.bf16.msra.mxu0 %v5926
    %5948 = vmatpush.bf16.msra.mxu0 %v5925
    %5949 = vmatmul.bf16.gmra.mxu0 %v5714
    %v5950 = vpop.f32.mrf.mxu0
    %v5951 = vadd.f32 %v5892, %v5950
    %v5952 = vpop.f32.mrf.mxu0
    %v5953 = vadd.f32 %v5892, %v5952
    %5954 = vdwg.mxu0
    %v5956 = vsel %vm403, %v5791, 0
    %v5959 = vsel %vm403, %v5793, 0
    %v5962 = vsel %vm403, %v5871, 0
    %v5965 = vsel %vm403, %v5873, 0
    %5967 = vmatpush.xpose.msra.mxu0 0.0
    %5968 = vmatpush.xpose.msra.mxu0 0.0
    %5969 = vmatpush.xpose.msra.mxu0 0.0
    %5970 = vmatpush.xpose.msra.mxu0 0.0
    %5971 = vmatpush.xpose.msra.mxu0 0.0
    %5972 = vmatpush.xpose.msra.mxu0 0.0
    %5973 = vmatpush.xpose.msra.mxu0 0.0
    %5974 = vmatpush.xpose.msra.mxu0 0.0
    %5975 = vmatpush.xpose.msra.mxu0 0.0
    %5976 = vmatpush.xpose.msra.mxu0 0.0
    %5977 = vmatpush.xpose.msra.mxu0 0.0
    %5978 = vmatpush.xpose.msra.mxu0 0.0
    %5979 = vmatpush.xpose.msra.mxu0 0.0
    %5980 = vmatpush.xpose.msra.mxu0 0.0
    %5981 = vmatpush.xpose.msra.mxu0 %v5965
    %5982 = vmatpush.xpose.msra.mxu0 %v5962
    %5983 = vmatmul.f32.gmra.mxu0 %v5956
    %v5984 = vpop.f32.mrf.mxu0
    %v5985 = vadd.f32 %v107, %v5984
    %5986 = vmatmul.f32.gmra.mxu0 %v5959
    %v5987 = vpop.f32.mrf.mxu0
    %v5988 = vadd.f32 %v108, %v5987
    %5989 = vdwg.mxu0
    %5990 = vrot.lane.b32.xlu0 %v5791, 112
    %v5991 = vpop.permute.xlu0 %5990
    %5992 = vrot.lane.b32.xlu0 %v5793, 112
    %v5993 = vpop.permute.xlu0 %5992
    %5994 = vrot.lane.b32.xlu0 %v5871, 112
    %v5995 = vpop.permute.xlu0 %5994
    %5996 = vrot.lane.b32.xlu0 %v5873, 112
    %v5997 = vpop.permute.xlu0 %5996
    %v5998 = vsel %vm403, %v5991, 0
    %v6000 = vsel %vm403, %v5993, 0
    %v6002 = vsel %vm403, %v5995, 0
    %v6004 = vsel %vm403, %v5997, 0
    %6006 = vmatpush.xpose.msra.mxu0 0.0
    %6007 = vmatpush.xpose.msra.mxu0 0.0
    %6008 = vmatpush.xpose.msra.mxu0 0.0
    %6009 = vmatpush.xpose.msra.mxu0 0.0
    %6010 = vmatpush.xpose.msra.mxu0 0.0
    %6011 = vmatpush.xpose.msra.mxu0 0.0
    %6012 = vmatpush.xpose.msra.mxu0 0.0
    %6013 = vmatpush.xpose.msra.mxu0 0.0
    %6014 = vmatpush.xpose.msra.mxu0 0.0
    %6015 = vmatpush.xpose.msra.mxu0 0.0
    %6016 = vmatpush.xpose.msra.mxu0 0.0
    %6017 = vmatpush.xpose.msra.mxu0 0.0
    %6018 = vmatpush.xpose.msra.mxu0 0.0
    %6019 = vmatpush.xpose.msra.mxu0 0.0
    %6020 = vmatpush.xpose.msra.mxu0 %v6004
    %6021 = vmatpush.xpose.msra.mxu0 %v6002
    %6022 = vmatmul.f32.gmra.mxu0 %v5998
    %v6023 = vpop.f32.mrf.mxu0
    %v6024 = vadd.f32 %v107, %v6023
    %6025 = vmatmul.f32.gmra.mxu0 %v6000
    %v6026 = vpop.f32.mrf.mxu0
    %v6027 = vadd.f32 %v108, %v6026
    %6028 = vdwg.mxu0
    %6029 = vrot.lane.b32.xlu0 %v5791, 96
    %v6030 = vpop.permute.xlu0 %6029
    %6031 = vrot.lane.b32.xlu0 %v5793, 96
    %v6032 = vpop.permute.xlu0 %6031
    %6033 = vrot.lane.b32.xlu0 %v5871, 96
    %v6034 = vpop.permute.xlu0 %6033
    %6035 = vrot.lane.b32.xlu0 %v5873, 96
    %v6036 = vpop.permute.xlu0 %6035
    %v6037 = vsel %vm403, %v6030, 0
    %v6039 = vsel %vm403, %v6032, 0
    %v6041 = vsel %vm403, %v6034, 0
    %v6043 = vsel %vm403, %v6036, 0
    %6045 = vmatpush.xpose.msra.mxu0 0.0
    %6046 = vmatpush.xpose.msra.mxu0 0.0
    %6047 = vmatpush.xpose.msra.mxu0 0.0
    %6048 = vmatpush.xpose.msra.mxu0 0.0
    %6049 = vmatpush.xpose.msra.mxu0 0.0
    %6050 = vmatpush.xpose.msra.mxu0 0.0
    %6051 = vmatpush.xpose.msra.mxu0 0.0
    %6052 = vmatpush.xpose.msra.mxu0 0.0
    %6053 = vmatpush.xpose.msra.mxu0 0.0
    %6054 = vmatpush.xpose.msra.mxu0 0.0
    %6055 = vmatpush.xpose.msra.mxu0 0.0
    %6056 = vmatpush.xpose.msra.mxu0 0.0
    %6057 = vmatpush.xpose.msra.mxu0 0.0
    %6058 = vmatpush.xpose.msra.mxu0 0.0
    %6059 = vmatpush.xpose.msra.mxu0 %v6043
    %6060 = vmatpush.xpose.msra.mxu0 %v6041
    %6061 = vmatmul.f32.gmra.mxu0 %v6037
    %v6062 = vpop.f32.mrf.mxu0
    %v6063 = vadd.f32 %v107, %v6062
    %6064 = vmatmul.f32.gmra.mxu0 %v6039
    %v6065 = vpop.f32.mrf.mxu0
    %v6066 = vadd.f32 %v108, %v6065
    %6067 = vdwg.mxu0
    %6068 = vrot.lane.b32.xlu0 %v5791, 80
    %v6069 = vpop.permute.xlu0 %6068
    %6070 = vrot.lane.b32.xlu0 %v5793, 80
    %v6071 = vpop.permute.xlu0 %6070
    %6072 = vrot.lane.b32.xlu0 %v5871, 80
    %v6073 = vpop.permute.xlu0 %6072
    %6074 = vrot.lane.b32.xlu0 %v5873, 80
    %v6075 = vpop.permute.xlu0 %6074
    %v6076 = vsel %vm403, %v6069, 0
    %v6078 = vsel %vm403, %v6071, 0
    %v6080 = vsel %vm403, %v6073, 0
    %v6082 = vsel %vm403, %v6075, 0
    %6084 = vmatpush.xpose.msra.mxu0 0.0
    %6085 = vmatpush.xpose.msra.mxu0 0.0
    %6086 = vmatpush.xpose.msra.mxu0 0.0
    %6087 = vmatpush.xpose.msra.mxu0 0.0
    %6088 = vmatpush.xpose.msra.mxu0 0.0
    %6089 = vmatpush.xpose.msra.mxu0 0.0
    %6090 = vmatpush.xpose.msra.mxu0 0.0
    %6091 = vmatpush.xpose.msra.mxu0 0.0
    %6092 = vmatpush.xpose.msra.mxu0 0.0
    %6093 = vmatpush.xpose.msra.mxu0 0.0
    %6094 = vmatpush.xpose.msra.mxu0 0.0
    %6095 = vmatpush.xpose.msra.mxu0 0.0
    %6096 = vmatpush.xpose.msra.mxu0 0.0
    %6097 = vmatpush.xpose.msra.mxu0 0.0
    %6098 = vmatpush.xpose.msra.mxu0 %v6082
    %6099 = vmatpush.xpose.msra.mxu0 %v6080
    %6100 = vmatmul.f32.gmra.mxu0 %v6076
    %v6101 = vpop.f32.mrf.mxu0
    %v6102 = vadd.f32 %v107, %v6101
    %6103 = vmatmul.f32.gmra.mxu0 %v6078
    %v6104 = vpop.f32.mrf.mxu0
    %v6105 = vadd.f32 %v108, %v6104
    %6106 = vdwg.mxu0
    %6107 = vrot.lane.b32.xlu0 %v5791, 64
    %v6108 = vpop.permute.xlu0 %6107
    %6109 = vrot.lane.b32.xlu0 %v5793, 64
    %v6110 = vpop.permute.xlu0 %6109
    %6111 = vrot.lane.b32.xlu0 %v5871, 64
    %v6112 = vpop.permute.xlu0 %6111
    %6113 = vrot.lane.b32.xlu0 %v5873, 64
    %v6114 = vpop.permute.xlu0 %6113
    %v6115 = vsel %vm403, %v6108, 0
    %v6117 = vsel %vm403, %v6110, 0
    %v6119 = vsel %vm403, %v6112, 0
    %v6121 = vsel %vm403, %v6114, 0
    %6123 = vmatpush.xpose.msra.mxu0 0.0
    %6124 = vmatpush.xpose.msra.mxu0 0.0
    %6125 = vmatpush.xpose.msra.mxu0 0.0
    %6126 = vmatpush.xpose.msra.mxu0 0.0
    %6127 = vmatpush.xpose.msra.mxu0 0.0
    %6128 = vmatpush.xpose.msra.mxu0 0.0
    %6129 = vmatpush.xpose.msra.mxu0 0.0
    %6130 = vmatpush.xpose.msra.mxu0 0.0
    %6131 = vmatpush.xpose.msra.mxu0 0.0
    %6132 = vmatpush.xpose.msra.mxu0 0.0
    %6133 = vmatpush.xpose.msra.mxu0 0.0
    %6134 = vmatpush.xpose.msra.mxu0 0.0
    %6135 = vmatpush.xpose.msra.mxu0 0.0
    %6136 = vmatpush.xpose.msra.mxu0 0.0
    %6137 = vmatpush.xpose.msra.mxu0 %v6121
    %6138 = vmatpush.xpose.msra.mxu0 %v6119
    %6139 = vmatmul.f32.gmra.mxu0 %v6115
    %v6140 = vpop.f32.mrf.mxu0
    %v6141 = vadd.f32 %v107, %v6140
    %6142 = vmatmul.f32.gmra.mxu0 %v6117
    %v6143 = vpop.f32.mrf.mxu0
    %v6144 = vadd.f32 %v108, %v6143
    %6145 = vdwg.mxu0
    %6146 = vrot.lane.b32.xlu0 %v5791, 48
    %v6147 = vpop.permute.xlu0 %6146
    %6148 = vrot.lane.b32.xlu0 %v5793, 48
    %v6149 = vpop.permute.xlu0 %6148
    %6150 = vrot.lane.b32.xlu0 %v5871, 48
    %v6151 = vpop.permute.xlu0 %6150
    %6152 = vrot.lane.b32.xlu0 %v5873, 48
    %v6153 = vpop.permute.xlu0 %6152
    %v6154 = vsel %vm403, %v6147, 0
    %v6156 = vsel %vm403, %v6149, 0
    %v6158 = vsel %vm403, %v6151, 0
    %v6160 = vsel %vm403, %v6153, 0
    %6162 = vmatpush.xpose.msra.mxu0 0.0
    %6163 = vmatpush.xpose.msra.mxu0 0.0
    %6164 = vmatpush.xpose.msra.mxu0 0.0
    %6165 = vmatpush.xpose.msra.mxu0 0.0
    %6166 = vmatpush.xpose.msra.mxu0 0.0
    %6167 = vmatpush.xpose.msra.mxu0 0.0
    %6168 = vmatpush.xpose.msra.mxu0 0.0
    %6169 = vmatpush.xpose.msra.mxu0 0.0
    %6170 = vmatpush.xpose.msra.mxu0 0.0
    %6171 = vmatpush.xpose.msra.mxu0 0.0
    %6172 = vmatpush.xpose.msra.mxu0 0.0
    %6173 = vmatpush.xpose.msra.mxu0 0.0
    %6174 = vmatpush.xpose.msra.mxu0 0.0
    %6175 = vmatpush.xpose.msra.mxu0 0.0
    %6176 = vmatpush.xpose.msra.mxu0 %v6160
    %6177 = vmatpush.xpose.msra.mxu0 %v6158
    %6178 = vmatmul.f32.gmra.mxu0 %v6154
    %v6179 = vpop.f32.mrf.mxu0
    %v6180 = vadd.f32 %v107, %v6179
    %6181 = vmatmul.f32.gmra.mxu0 %v6156
    %v6182 = vpop.f32.mrf.mxu0
    %v6183 = vadd.f32 %v108, %v6182
    %6184 = vdwg.mxu0
    %6185 = vrot.lane.b32.xlu0 %v5791, 32
    %v6186 = vpop.permute.xlu0 %6185
    %6187 = vrot.lane.b32.xlu0 %v5793, 32
    %v6188 = vpop.permute.xlu0 %6187
    %6189 = vrot.lane.b32.xlu0 %v5871, 32
    %v6190 = vpop.permute.xlu0 %6189
    %6191 = vrot.lane.b32.xlu0 %v5873, 32
    %v6192 = vpop.permute.xlu0 %6191
    %v6193 = vsel %vm403, %v6186, 0
    %v6195 = vsel %vm403, %v6188, 0
    %v6197 = vsel %vm403, %v6190, 0
    %v6199 = vsel %vm403, %v6192, 0
    %6201 = vmatpush.xpose.msra.mxu0 0.0
    %6202 = vmatpush.xpose.msra.mxu0 0.0
    %6203 = vmatpush.xpose.msra.mxu0 0.0
    %6204 = vmatpush.xpose.msra.mxu0 0.0
    %6205 = vmatpush.xpose.msra.mxu0 0.0
    %6206 = vmatpush.xpose.msra.mxu0 0.0
    %6207 = vmatpush.xpose.msra.mxu0 0.0
    %6208 = vmatpush.xpose.msra.mxu0 0.0
    %6209 = vmatpush.xpose.msra.mxu0 0.0
    %6210 = vmatpush.xpose.msra.mxu0 0.0
    %6211 = vmatpush.xpose.msra.mxu0 0.0
    %6212 = vmatpush.xpose.msra.mxu0 0.0
    %6213 = vmatpush.xpose.msra.mxu0 0.0
    %6214 = vmatpush.xpose.msra.mxu0 0.0
    %6215 = vmatpush.xpose.msra.mxu0 %v6199
    %6216 = vmatpush.xpose.msra.mxu0 %v6197
    %6217 = vmatmul.f32.gmra.mxu0 %v6193
    %v6218 = vpop.f32.mrf.mxu0
    %v6219 = vadd.f32 %v107, %v6218
    %6220 = vmatmul.f32.gmra.mxu0 %v6195
    %v6221 = vpop.f32.mrf.mxu0
    %v6222 = vadd.f32 %v108, %v6221
    %6223 = vdwg.mxu0
    %6224 = vrot.lane.b32.xlu0 %v5791, 16
    %v6225 = vpop.permute.xlu0 %6224
    %6226 = vrot.lane.b32.xlu0 %v5793, 16
    %v6227 = vpop.permute.xlu0 %6226
    %6228 = vrot.lane.b32.xlu0 %v5871, 16
    %v6229 = vpop.permute.xlu0 %6228
    %6230 = vrot.lane.b32.xlu0 %v5873, 16
    %v6231 = vpop.permute.xlu0 %6230
    %v6232 = vsel %vm403, %v6225, 0
    %v6234 = vsel %vm403, %v6227, 0
    %v6236 = vsel %vm403, %v6229, 0
    %v6238 = vsel %vm403, %v6231, 0
    %6240 = vmatpush.xpose.msra.mxu0 0.0
    %6241 = vmatpush.xpose.msra.mxu0 0.0
    %6242 = vmatpush.xpose.msra.mxu0 0.0
    %6243 = vmatpush.xpose.msra.mxu0 0.0
    %6244 = vmatpush.xpose.msra.mxu0 0.0
    %6245 = vmatpush.xpose.msra.mxu0 0.0
    %6246 = vmatpush.xpose.msra.mxu0 0.0
    %6247 = vmatpush.xpose.msra.mxu0 0.0
    %6248 = vmatpush.xpose.msra.mxu0 0.0
    %6249 = vmatpush.xpose.msra.mxu0 0.0
    %6250 = vmatpush.xpose.msra.mxu0 0.0
    %6251 = vmatpush.xpose.msra.mxu0 0.0
    %6252 = vmatpush.xpose.msra.mxu0 0.0
    %6253 = vmatpush.xpose.msra.mxu0 0.0
    %6254 = vmatpush.xpose.msra.mxu0 %v6238
    %6255 = vmatpush.xpose.msra.mxu0 %v6236
    %6256 = vmatmul.f32.gmra.mxu0 %v6232
    %v6257 = vpop.f32.mrf.mxu0
    %v6258 = vadd.f32 %v107, %v6257
    %6259 = vmatmul.f32.gmra.mxu0 %v6234
    %v6260 = vpop.f32.mrf.mxu0
    %v6261 = vadd.f32 %v108, %v6260
    %6262 = vdwg.mxu0
    %v6263 = vsel %vm403, %v5985, -inf
    %6264 = vmax.xlane.f32.xlu0 %v6263
    %v6265 = vpop.xlane.xlu0 %6264
    %v6266 = vsel %vm403, %v5988, -inf
    %6267 = vmax.xlane.f32.xlu0 %v6266
    %v6268 = vpop.xlane.xlu0 %6267
    %v6269 = vsel %vm403, %v6024, -inf
    %6270 = vmax.xlane.f32.xlu0 %v6269
    %v6271 = vpop.xlane.xlu0 %6270
    %v6272 = vsel %vm403, %v6027, -inf
    %6273 = vmax.xlane.f32.xlu0 %v6272
    %v6274 = vpop.xlane.xlu0 %6273
    %v6275 = vsel %vm403, %v6063, -inf
    %6276 = vmax.xlane.f32.xlu0 %v6275
    %v6277 = vpop.xlane.xlu0 %6276
    %v6278 = vsel %vm403, %v6066, -inf
    %6279 = vmax.xlane.f32.xlu0 %v6278
    %v6280 = vpop.xlane.xlu0 %6279
    %v6281 = vsel %vm403, %v6102, -inf
    %6282 = vmax.xlane.f32.xlu0 %v6281
    %v6283 = vpop.xlane.xlu0 %6282
    %v6284 = vsel %vm403, %v6105, -inf
    %6285 = vmax.xlane.f32.xlu0 %v6284
    %v6286 = vpop.xlane.xlu0 %6285
    %v6287 = vsel %vm403, %v6141, -inf
    %6288 = vmax.xlane.f32.xlu0 %v6287
    %v6289 = vpop.xlane.xlu0 %6288
    %v6290 = vsel %vm403, %v6144, -inf
    %6291 = vmax.xlane.f32.xlu0 %v6290
    %v6292 = vpop.xlane.xlu0 %6291
    %v6293 = vsel %vm403, %v6180, -inf
    %6294 = vmax.xlane.f32.xlu0 %v6293
    %v6295 = vpop.xlane.xlu0 %6294
    %v6296 = vsel %vm403, %v6183, -inf
    %6297 = vmax.xlane.f32.xlu0 %v6296
    %v6298 = vpop.xlane.xlu0 %6297
    %v6299 = vsel %vm403, %v6219, -inf
    %6300 = vmax.xlane.f32.xlu0 %v6299
    %v6301 = vpop.xlane.xlu0 %6300
    %v6302 = vsel %vm403, %v6222, -inf
    %6303 = vmax.xlane.f32.xlu0 %v6302
    %v6304 = vpop.xlane.xlu0 %6303
    %v6305 = vsel %vm403, %v6258, -inf
    %6306 = vmax.xlane.f32.xlu0 %v6305
    %v6307 = vpop.xlane.xlu0 %6306
    %v6308 = vsel %vm403, %v6261, -inf
    %6309 = vmax.xlane.f32.xlu0 %v6308
    %v6310 = vpop.xlane.xlu0 %6309
    %v6311 = vsub.f32 %v5985, %v6265
    %v6312 = vsub.f32 %v5988, %v6268
    %v6313 = vsub.f32 %v6024, %v6271
    %v6314 = vsub.f32 %v6027, %v6274
    %v6315 = vsub.f32 %v6063, %v6277
    %v6316 = vsub.f32 %v6066, %v6280
    %v6317 = vsub.f32 %v6102, %v6283
    %v6318 = vsub.f32 %v6105, %v6286
    %v6319 = vsub.f32 %v6141, %v6289
    %v6320 = vsub.f32 %v6144, %v6292
    %v6321 = vsub.f32 %v6180, %v6295
    %v6322 = vsub.f32 %v6183, %v6298
    %v6323 = vsub.f32 %v6219, %v6301
    %v6324 = vsub.f32 %v6222, %v6304
    %v6325 = vsub.f32 %v6258, %v6307
    %v6326 = vsub.f32 %v6261, %v6310
    %v6327 = vmul.f32 %v6311, 1.442695
    %v6328 = vpow.pop %v6327
    %v6329 = vmul.f32 %v6312, 1.442695
    %v6330 = vpow.pop %v6329
    %v6331 = vmul.f32 %v6313, 1.442695
    %v6332 = vpow.pop %v6331
    %v6333 = vmul.f32 %v6314, 1.442695
    %v6334 = vpow.pop %v6333
    %v6335 = vmul.f32 %v6315, 1.442695
    %v6336 = vpow.pop %v6335
    %v6337 = vmul.f32 %v6316, 1.442695
    %v6338 = vpow.pop %v6337
    %v6339 = vmul.f32 %v6317, 1.442695
    %v6340 = vpow.pop %v6339
    %v6341 = vmul.f32 %v6318, 1.442695
    %v6342 = vpow.pop %v6341
    %v6343 = vmul.f32 %v6319, 1.442695
    %v6344 = vpow.pop %v6343
    %v6345 = vmul.f32 %v6320, 1.442695
    %v6346 = vpow.pop %v6345
    %v6347 = vmul.f32 %v6321, 1.442695
    %v6348 = vpow.pop %v6347
    %v6349 = vmul.f32 %v6322, 1.442695
    %v6350 = vpow.pop %v6349
    %v6351 = vmul.f32 %v6323, 1.442695
    %v6352 = vpow.pop %v6351
    %v6353 = vmul.f32 %v6324, 1.442695
    %v6354 = vpow.pop %v6353
    %v6355 = vmul.f32 %v6325, 1.442695
    %v6356 = vpow.pop %v6355
    %v6357 = vmul.f32 %v6326, 1.442695
    %v6358 = vpow.pop %v6357
    %v6359 = vsel %vm403, %v6328, 0.0
    %6360 = vadd.xlane.f32.xlu0 %v6359
    %v6361 = vpop.xlane.xlu0 %6360
    %v6362 = vsel %vm403, %v6330, 0.0
    %6363 = vadd.xlane.f32.xlu0 %v6362
    %v6364 = vpop.xlane.xlu0 %6363
    %v6365 = vsel %vm403, %v6332, 0.0
    %6366 = vadd.xlane.f32.xlu0 %v6365
    %v6367 = vpop.xlane.xlu0 %6366
    %v6368 = vsel %vm403, %v6334, 0.0
    %6369 = vadd.xlane.f32.xlu0 %v6368
    %v6370 = vpop.xlane.xlu0 %6369
    %v6371 = vsel %vm403, %v6336, 0.0
    %6372 = vadd.xlane.f32.xlu0 %v6371
    %v6373 = vpop.xlane.xlu0 %6372
    %v6374 = vsel %vm403, %v6338, 0.0
    %6375 = vadd.xlane.f32.xlu0 %v6374
    %v6376 = vpop.xlane.xlu0 %6375
    %v6377 = vsel %vm403, %v6340, 0.0
    %6378 = vadd.xlane.f32.xlu0 %v6377
    %v6379 = vpop.xlane.xlu0 %6378
    %v6380 = vsel %vm403, %v6342, 0.0
    %6381 = vadd.xlane.f32.xlu0 %v6380
    %v6382 = vpop.xlane.xlu0 %6381
    %v6383 = vsel %vm403, %v6344, 0.0
    %6384 = vadd.xlane.f32.xlu0 %v6383
    %v6385 = vpop.xlane.xlu0 %6384
    %v6386 = vsel %vm403, %v6346, 0.0
    %6387 = vadd.xlane.f32.xlu0 %v6386
    %v6388 = vpop.xlane.xlu0 %6387
    %v6389 = vsel %vm403, %v6348, 0.0
    %6390 = vadd.xlane.f32.xlu0 %v6389
    %v6391 = vpop.xlane.xlu0 %6390
    %v6392 = vsel %vm403, %v6350, 0.0
    %6393 = vadd.xlane.f32.xlu0 %v6392
    %v6394 = vpop.xlane.xlu0 %6393
    %v6395 = vsel %vm403, %v6352, 0.0
    %6396 = vadd.xlane.f32.xlu0 %v6395
    %v6397 = vpop.xlane.xlu0 %6396
    %v6398 = vsel %vm403, %v6354, 0.0
    %6399 = vadd.xlane.f32.xlu0 %v6398
    %v6400 = vpop.xlane.xlu0 %6399
    %v6401 = vsel %vm403, %v6356, 0.0
    %6402 = vadd.xlane.f32.xlu0 %v6401
    %v6403 = vpop.xlane.xlu0 %6402
    %v6404 = vsel %vm403, %v6358, 0.0
    %6405 = vadd.xlane.f32.xlu0 %v6404
    %v6406 = vpop.xlane.xlu0 %6405
    %v6407 = vrcp.pop %v6361
    %v6408 = vrcp.pop %v6364
    %v6409 = vrcp.pop %v6367
    %v6410 = vrcp.pop %v6370
    %v6411 = vrcp.pop %v6373
    %v6412 = vrcp.pop %v6376
    %v6413 = vrcp.pop %v6379
    %v6414 = vrcp.pop %v6382
    %v6415 = vrcp.pop %v6385
    %v6416 = vrcp.pop %v6388
    %v6417 = vrcp.pop %v6391
    %v6418 = vrcp.pop %v6394
    %v6419 = vrcp.pop %v6397
    %v6420 = vrcp.pop %v6400
    %v6421 = vrcp.pop %v6403
    %v6422 = vrcp.pop %v6406
    %v6423 = vmul.f32 %v6328, %v6407
    %v6424 = vmul.f32 %v6330, %v6408
    %v6425 = vmul.f32 %v6332, %v6409
    %v6426 = vmul.f32 %v6334, %v6410
    %v6427 = vmul.f32 %v6336, %v6411
    %v6428 = vmul.f32 %v6338, %v6412
    %v6429 = vmul.f32 %v6340, %v6413
    %v6430 = vmul.f32 %v6342, %v6414
    %v6431 = vmul.f32 %v6344, %v6415
    %v6432 = vmul.f32 %v6346, %v6416
    %v6433 = vmul.f32 %v6348, %v6417
    %v6434 = vmul.f32 %v6350, %v6418
    %v6435 = vmul.f32 %v6352, %v6419
    %v6436 = vmul.f32 %v6354, %v6420
    %v6437 = vmul.f32 %v6356, %v6421
    %v6438 = vmul.f32 %v6358, %v6422
    %v6440 = vsel %vm403, %v6423, 0
    %v6443 = vsel %vm403, %v6424, 0
    %6445 = vmatpush.msra.mxu0 0.0
    %6446 = vmatpush.msra.mxu0 0.0
    %6447 = vmatpush.msra.mxu0 0.0
    %6448 = vmatpush.msra.mxu0 0.0
    %6449 = vmatpush.msra.mxu0 0.0
    %6450 = vmatpush.msra.mxu0 0.0
    %6451 = vmatpush.msra.mxu0 0.0
    %6452 = vmatpush.msra.mxu0 0.0
    %6453 = vmatpush.msra.mxu0 0.0
    %6454 = vmatpush.msra.mxu0 0.0
    %6455 = vmatpush.msra.mxu0 0.0
    %6456 = vmatpush.msra.mxu0 0.0
    %6457 = vmatpush.msra.mxu0 0.0
    %6458 = vmatpush.msra.mxu0 0.0
    %6459 = vmatpush.msra.mxu0 %v5953
    %6460 = vmatpush.msra.mxu0 %v5951
    %6461 = vmatmul.f32.gmra.mxu0 %v6440
    %v6462 = vpop.f32.mrf.mxu0
    %v6463 = vadd.f32 0.0, %v6462
    %6464 = vmatmul.f32.gmra.mxu0 %v6443
    %v6465 = vpop.f32.mrf.mxu0
    %v6466 = vadd.f32 0.0, %v6465
    %6467 = vdwg.mxu0
    %6470 = vrot.lane.b32.xlu0 %v5951, 112
    %v6471 = vpop.permute.xlu0 %6470
    %6472 = vrot.lane.b32.xlu0 %v5953, 112
    %v6473 = vpop.permute.xlu0 %6472
    %v6477 = vsel %vm403, %v6425, 0
    %v6480 = vsel %vm403, %v6426, 0
    %6482 = vmatpush.msra.mxu0 0.0
    %6483 = vmatpush.msra.mxu0 0.0
    %6484 = vmatpush.msra.mxu0 0.0
    %6485 = vmatpush.msra.mxu0 0.0
    %6486 = vmatpush.msra.mxu0 0.0
    %6487 = vmatpush.msra.mxu0 0.0
    %6488 = vmatpush.msra.mxu0 0.0
    %6489 = vmatpush.msra.mxu0 0.0
    %6490 = vmatpush.msra.mxu0 0.0
    %6491 = vmatpush.msra.mxu0 0.0
    %6492 = vmatpush.msra.mxu0 0.0
    %6493 = vmatpush.msra.mxu0 0.0
    %6494 = vmatpush.msra.mxu0 0.0
    %6495 = vmatpush.msra.mxu0 0.0
    %6496 = vmatpush.msra.mxu0 %v6473
    %6497 = vmatpush.msra.mxu0 %v6471
    %6498 = vmatmul.f32.gmra.mxu0 %v6477
    %v6499 = vpop.f32.mrf.mxu0
    %v6500 = vadd.f32 0.0, %v6499
    %6501 = vmatmul.f32.gmra.mxu0 %v6480
    %v6502 = vpop.f32.mrf.mxu0
    %v6503 = vadd.f32 0.0, %v6502
    %6504 = vdwg.mxu0
    %6505 = vrot.lane.b32.xlu0 %v5951, 96
    %v6506 = vpop.permute.xlu0 %6505
    %6507 = vrot.lane.b32.xlu0 %v5953, 96
    %v6508 = vpop.permute.xlu0 %6507
    %v6512 = vsel %vm403, %v6427, 0
    %v6515 = vsel %vm403, %v6428, 0
    %6517 = vmatpush.msra.mxu0 0.0
    %6518 = vmatpush.msra.mxu0 0.0
    %6519 = vmatpush.msra.mxu0 0.0
    %6520 = vmatpush.msra.mxu0 0.0
    %6521 = vmatpush.msra.mxu0 0.0
    %6522 = vmatpush.msra.mxu0 0.0
    %6523 = vmatpush.msra.mxu0 0.0
    %6524 = vmatpush.msra.mxu0 0.0
    %6525 = vmatpush.msra.mxu0 0.0
    %6526 = vmatpush.msra.mxu0 0.0
    %6527 = vmatpush.msra.mxu0 0.0
    %6528 = vmatpush.msra.mxu0 0.0
    %6529 = vmatpush.msra.mxu0 0.0
    %6530 = vmatpush.msra.mxu0 0.0
    %6531 = vmatpush.msra.mxu0 %v6508
    %6532 = vmatpush.msra.mxu0 %v6506
    %6533 = vmatmul.f32.gmra.mxu0 %v6512
    %v6534 = vpop.f32.mrf.mxu0
    %v6535 = vadd.f32 0.0, %v6534
    %6536 = vmatmul.f32.gmra.mxu0 %v6515
    %v6537 = vpop.f32.mrf.mxu0
    %v6538 = vadd.f32 0.0, %v6537
    %6539 = vdwg.mxu0
    %6540 = vrot.lane.b32.xlu0 %v5951, 80
    %v6541 = vpop.permute.xlu0 %6540
    %6542 = vrot.lane.b32.xlu0 %v5953, 80
    %v6543 = vpop.permute.xlu0 %6542
    %v6547 = vsel %vm403, %v6429, 0
    %v6550 = vsel %vm403, %v6430, 0
    %6552 = vmatpush.msra.mxu0 0.0
    %6553 = vmatpush.msra.mxu0 0.0
    %6554 = vmatpush.msra.mxu0 0.0
    %6555 = vmatpush.msra.mxu0 0.0
    %6556 = vmatpush.msra.mxu0 0.0
    %6557 = vmatpush.msra.mxu0 0.0
    %6558 = vmatpush.msra.mxu0 0.0
    %6559 = vmatpush.msra.mxu0 0.0
    %6560 = vmatpush.msra.mxu0 0.0
    %6561 = vmatpush.msra.mxu0 0.0
    %6562 = vmatpush.msra.mxu0 0.0
    %6563 = vmatpush.msra.mxu0 0.0
    %6564 = vmatpush.msra.mxu0 0.0
    %6565 = vmatpush.msra.mxu0 0.0
    %6566 = vmatpush.msra.mxu0 %v6543
    %6567 = vmatpush.msra.mxu0 %v6541
    %6568 = vmatmul.f32.gmra.mxu0 %v6547
    %v6569 = vpop.f32.mrf.mxu0
    %v6570 = vadd.f32 0.0, %v6569
    %6571 = vmatmul.f32.gmra.mxu0 %v6550
    %v6572 = vpop.f32.mrf.mxu0
    %v6573 = vadd.f32 0.0, %v6572
    %6574 = vdwg.mxu0
    %6575 = vrot.lane.b32.xlu0 %v5951, 64
    %v6576 = vpop.permute.xlu0 %6575
    %6577 = vrot.lane.b32.xlu0 %v5953, 64
    %v6578 = vpop.permute.xlu0 %6577
    %v6582 = vsel %vm403, %v6431, 0
    %v6585 = vsel %vm403, %v6432, 0
    %6587 = vmatpush.msra.mxu0 0.0
    %6588 = vmatpush.msra.mxu0 0.0
    %6589 = vmatpush.msra.mxu0 0.0
    %6590 = vmatpush.msra.mxu0 0.0
    %6591 = vmatpush.msra.mxu0 0.0
    %6592 = vmatpush.msra.mxu0 0.0
    %6593 = vmatpush.msra.mxu0 0.0
    %6594 = vmatpush.msra.mxu0 0.0
    %6595 = vmatpush.msra.mxu0 0.0
    %6596 = vmatpush.msra.mxu0 0.0
    %6597 = vmatpush.msra.mxu0 0.0
    %6598 = vmatpush.msra.mxu0 0.0
    %6599 = vmatpush.msra.mxu0 0.0
    %6600 = vmatpush.msra.mxu0 0.0
    %6601 = vmatpush.msra.mxu0 %v6578
    %6602 = vmatpush.msra.mxu0 %v6576
    %6603 = vmatmul.f32.gmra.mxu0 %v6582
    %v6604 = vpop.f32.mrf.mxu0
    %v6605 = vadd.f32 0.0, %v6604
    %6606 = vmatmul.f32.gmra.mxu0 %v6585
    %v6607 = vpop.f32.mrf.mxu0
    %v6608 = vadd.f32 0.0, %v6607
    %6609 = vdwg.mxu0
    %6610 = vrot.lane.b32.xlu0 %v5951, 48
    %v6611 = vpop.permute.xlu0 %6610
    %6612 = vrot.lane.b32.xlu0 %v5953, 48
    %v6613 = vpop.permute.xlu0 %6612
    %v6617 = vsel %vm403, %v6433, 0
    %v6620 = vsel %vm403, %v6434, 0
    %6622 = vmatpush.msra.mxu0 0.0
    %6623 = vmatpush.msra.mxu0 0.0
    %6624 = vmatpush.msra.mxu0 0.0
    %6625 = vmatpush.msra.mxu0 0.0
    %6626 = vmatpush.msra.mxu0 0.0
    %6627 = vmatpush.msra.mxu0 0.0
    %6628 = vmatpush.msra.mxu0 0.0
    %6629 = vmatpush.msra.mxu0 0.0
    %6630 = vmatpush.msra.mxu0 0.0
    %6631 = vmatpush.msra.mxu0 0.0
    %6632 = vmatpush.msra.mxu0 0.0
    %6633 = vmatpush.msra.mxu0 0.0
    %6634 = vmatpush.msra.mxu0 0.0
    %6635 = vmatpush.msra.mxu0 0.0
    %6636 = vmatpush.msra.mxu0 %v6613
    %6637 = vmatpush.msra.mxu0 %v6611
    %6638 = vmatmul.f32.gmra.mxu0 %v6617
    %v6639 = vpop.f32.mrf.mxu0
    %v6640 = vadd.f32 0.0, %v6639
    %6641 = vmatmul.f32.gmra.mxu0 %v6620
    %v6642 = vpop.f32.mrf.mxu0
    %v6643 = vadd.f32 0.0, %v6642
    %6644 = vdwg.mxu0
    %6645 = vrot.lane.b32.xlu0 %v5951, 32
    %v6646 = vpop.permute.xlu0 %6645
    %6647 = vrot.lane.b32.xlu0 %v5953, 32
    %v6648 = vpop.permute.xlu0 %6647
    %v6652 = vsel %vm403, %v6435, 0
    %v6655 = vsel %vm403, %v6436, 0
    %6657 = vmatpush.msra.mxu0 0.0
    %6658 = vmatpush.msra.mxu0 0.0
    %6659 = vmatpush.msra.mxu0 0.0
    %6660 = vmatpush.msra.mxu0 0.0
    %6661 = vmatpush.msra.mxu0 0.0
    %6662 = vmatpush.msra.mxu0 0.0
    %6663 = vmatpush.msra.mxu0 0.0
    %6664 = vmatpush.msra.mxu0 0.0
    %6665 = vmatpush.msra.mxu0 0.0
    %6666 = vmatpush.msra.mxu0 0.0
    %6667 = vmatpush.msra.mxu0 0.0
    %6668 = vmatpush.msra.mxu0 0.0
    %6669 = vmatpush.msra.mxu0 0.0
    %6670 = vmatpush.msra.mxu0 0.0
    %6671 = vmatpush.msra.mxu0 %v6648
    %6672 = vmatpush.msra.mxu0 %v6646
    %6673 = vmatmul.f32.gmra.mxu0 %v6652
    %v6674 = vpop.f32.mrf.mxu0
    %v6675 = vadd.f32 0.0, %v6674
    %6676 = vmatmul.f32.gmra.mxu0 %v6655
    %v6677 = vpop.f32.mrf.mxu0
    %v6678 = vadd.f32 0.0, %v6677
    %6679 = vdwg.mxu0
    %6680 = vrot.lane.b32.xlu0 %v5951, 16
    %v6681 = vpop.permute.xlu0 %6680
    %6682 = vrot.lane.b32.xlu0 %v5953, 16
    %v6683 = vpop.permute.xlu0 %6682
    %v6687 = vsel %vm403, %v6437, 0
    %v6690 = vsel %vm403, %v6438, 0
    %6692 = vmatpush.msra.mxu0 0.0
    %6693 = vmatpush.msra.mxu0 0.0
    %6694 = vmatpush.msra.mxu0 0.0
    %6695 = vmatpush.msra.mxu0 0.0
    %6696 = vmatpush.msra.mxu0 0.0
    %6697 = vmatpush.msra.mxu0 0.0
    %6698 = vmatpush.msra.mxu0 0.0
    %6699 = vmatpush.msra.mxu0 0.0
    %6700 = vmatpush.msra.mxu0 0.0
    %6701 = vmatpush.msra.mxu0 0.0
    %6702 = vmatpush.msra.mxu0 0.0
    %6703 = vmatpush.msra.mxu0 0.0
    %6704 = vmatpush.msra.mxu0 0.0
    %6705 = vmatpush.msra.mxu0 0.0
    %6706 = vmatpush.msra.mxu0 %v6683
    %6707 = vmatpush.msra.mxu0 %v6681
    %6708 = vmatmul.f32.gmra.mxu0 %v6687
    %v6709 = vpop.f32.mrf.mxu0
    %v6710 = vadd.f32 0.0, %v6709
    %6711 = vmatmul.f32.gmra.mxu0 %v6690
    %v6712 = vpop.f32.mrf.mxu0
    %v6713 = vadd.f32 0.0, %v6712
    %6714 = vdwg.mxu0
    %6717 = vrot.lane.b32.xlu0 %v6500, 16
    %v6718 = vpop.permute.xlu0 %6717
    %6719 = vrot.lane.b32.xlu0 %v6503, 16
    %v6720 = vpop.permute.xlu0 %6719
    %6725 = vrot.lane.b32.xlu0 %v6535, 32
    %v6726 = vpop.permute.xlu0 %6725
    %6727 = vrot.lane.b32.xlu0 %v6538, 32
    %v6728 = vpop.permute.xlu0 %6727
    %6733 = vrot.lane.b32.xlu0 %v6570, 48
    %v6734 = vpop.permute.xlu0 %6733
    %6735 = vrot.lane.b32.xlu0 %v6573, 48
    %v6736 = vpop.permute.xlu0 %6735
    %6741 = vrot.lane.b32.xlu0 %v6605, 64
    %v6742 = vpop.permute.xlu0 %6741
    %6743 = vrot.lane.b32.xlu0 %v6608, 64
    %v6744 = vpop.permute.xlu0 %6743
    %6749 = vrot.lane.b32.xlu0 %v6640, 80
    %v6750 = vpop.permute.xlu0 %6749
    %6751 = vrot.lane.b32.xlu0 %v6643, 80
    %v6752 = vpop.permute.xlu0 %6751
    %6757 = vrot.lane.b32.xlu0 %v6675, 96
    %v6758 = vpop.permute.xlu0 %6757
    %6759 = vrot.lane.b32.xlu0 %v6678, 96
    %v6760 = vpop.permute.xlu0 %6759
    %6765 = vrot.lane.b32.xlu0 %v6710, 112
    %v6766 = vpop.permute.xlu0 %6765
    %6767 = vrot.lane.b32.xlu0 %v6713, 112
    %v6768 = vpop.permute.xlu0 %6767
    %v6771 = vsel %vm403, %v6463, %v6718
    %v6772 = vsel %vm403, %v6466, %v6720
    %v6773 = vsel %vm144, %v6771, %v6726
    %v6774 = vsel %vm144, %v6772, %v6728
    %v6775 = vsel %vm1224, %v6773, %v6734
    %v6776 = vsel %vm1224, %v6774, %v6736
    %v6777 = vsel %vm1227, %v6775, %v6742
    %v6778 = vsel %vm1227, %v6776, %v6744
    %v6779 = vsel %vm1230, %v6777, %v6750
    %v6780 = vsel %vm1230, %v6778, %v6752
    %v6781 = vsel %vm1233, %v6779, %v6758
    %v6782 = vsel %vm1233, %v6780, %v6760
    %v6783 = vsel %vm1236, %v6781, %v6766
    %v6784 = vsel %vm1236, %v6782, %v6768
    %v6785 = vpack.c.bf16 %v6784, %v6783
    %v6786 = vld [vmem:[#allocation7 + $0x658] sm:$0xf]
    %v6787 = vld [vmem:[#allocation7 + $0x65c] sm:$0xf]
    %v6788 = vld [vmem:[#allocation7 + $0x660] sm:$0xf]
    %v6789 = vld [vmem:[#allocation7 + $0x664] sm:$0xf]
    %v6790 = vld [vmem:[#allocation7 + $0x668] sm:$0xf]
    %v6791 = vld [vmem:[#allocation7 + $0x66c] sm:$0xf]
    %v6792 = vld [vmem:[#allocation7 + $0x670] sm:$0xf]
    %v6793 = vld [vmem:[#allocation7 + $0x674] sm:$0xf]
    %v6794 = vld [vmem:[#allocation7 + $0x678] sm:$0xf]
    %v6795 = vld [vmem:[#allocation7 + $0x67c] sm:$0xf]
    %v6796 = vld [vmem:[#allocation7 + $0x680] sm:$0xf]
    %v6797 = vld [vmem:[#allocation7 + $0x684] sm:$0xf]
    %v6798 = vld [vmem:[#allocation7 + $0x688] sm:$0xf]
    %v6799 = vld [vmem:[#allocation7 + $0x68c] sm:$0xf]
    %v6800 = vld [vmem:[#allocation7 + $0x690] sm:$0xf]
    %v6801 = vld [vmem:[#allocation7 + $0x694] sm:$0xf]
    %v6802 = vld [vmem:[#allocation9 + $0x138] sm:$0x1]
    %v6803 = vperm.slane %v6802, 0
    %v6820 = vunpack.c.l.b16 %v6786
    %v6821 = vunpack.c.l.b16 %v6787
    %v6822 = vunpack.c.l.b16 %v6788
    %v6823 = vunpack.c.l.b16 %v6789
    %v6824 = vunpack.c.l.b16 %v6790
    %v6825 = vunpack.c.l.b16 %v6791
    %v6826 = vunpack.c.l.b16 %v6792
    %v6827 = vunpack.c.l.b16 %v6793
    %v6828 = vunpack.c.l.b16 %v6794
    %v6829 = vunpack.c.l.b16 %v6795
    %v6830 = vunpack.c.l.b16 %v6796
    %v6831 = vunpack.c.l.b16 %v6797
    %v6832 = vunpack.c.l.b16 %v6798
    %v6833 = vunpack.c.l.b16 %v6799
    %v6834 = vunpack.c.l.b16 %v6800
    %v6835 = vunpack.c.l.b16 %v6801
    %v6836 = vpack.c.b16 %v6821, %v6820
    %v6837 = vpack.c.b16 %v6823, %v6822
    %v6838 = vpack.c.b16 %v6825, %v6824
    %v6839 = vpack.c.b16 %v6827, %v6826
    %v6840 = vpack.c.b16 %v6829, %v6828
    %v6841 = vpack.c.b16 %v6831, %v6830
    %v6842 = vpack.c.b16 %v6833, %v6832
    %v6843 = vpack.c.b16 %v6835, %v6834
    %6852 = vmatpush.bf16.msra.mxu0 %v6843
    %6853 = vmatpush.bf16.msra.mxu0 %v6842
    %6854 = vmatpush.bf16.msra.mxu0 %v6841
    %6855 = vmatpush.bf16.msra.mxu0 %v6840
    %6856 = vmatpush.bf16.msra.mxu0 %v6839
    %6857 = vmatpush.bf16.msra.mxu0 %v6838
    %6858 = vmatpush.bf16.msra.mxu0 %v6837
    %6859 = vmatpush.bf16.msra.mxu0 %v6836
    %6860 = vmatmul.bf16.gmra.mxu0 %v6785
    %v6861 = vpop.f32.mrf.mxu0
    %v6862 = vadd.f32 %v6803, %v6861
    %v6863 = vpop.f32.mrf.mxu0
    %v6864 = vadd.f32 %v6803, %v6863
    %6865 = vdwg.mxu0
    %v6866 = vadd.f32 %v5712, %v6862
    %v6867 = vadd.f32 %v5713, %v6864
    %6868 = vadd.xlane.f32.xlu0 %v6866
    %v6869 = vpop.xlane.xlu0 %6868
    %6870 = vadd.xlane.f32.xlu0 %v6867
    %v6871 = vpop.xlane.xlu0 %6870
    %v6872 = vmul.f32 %v6869, %v1332
    %v6873 = vmul.f32 %v6871, %v1332
    %v6874 = vsub.f32 %v6866, %v6872
    %v6875 = vsub.f32 %v6867, %v6873
    %v6876 = vmul.f32 %v6874, %v6874
    %v6877 = vmul.f32 %v6875, %v6875
    %6878 = vadd.xlane.f32.xlu0 %v6876
    %v6879 = vpop.xlane.xlu0 %6878
    %6880 = vadd.xlane.f32.xlu0 %v6877
    %v6881 = vpop.xlane.xlu0 %6880
    %v6882 = vmul.f32 %v6879, %v1332
    %v6883 = vmul.f32 %v6881, %v1332
    %v6884 = vadd.f32 %v6882, 1e-05
    %v6885 = vadd.f32 %v6883, 1e-05
    %v6886 = vrsqrt.pop %v6884
    %v6887 = vmul.f32 %v6886, %v6884
    %v6888 = vmul.f32 %v6887, %v6886
    %v6889 = vmul.f32 0.5, %v6888
    %v6890 = vsub.f32 1.5, %v6889
    %v6891 = vmul.f32 %v6886, %v6890
    %vm6892 = vweird.f32 %v6884
    %vm6893 = vweird.f32 %v6886
    %vm6894 = vmor %vm6892, %vm6893
    %v6895 = vsel %vm6894, %v6886, %v6891
    %v6896 = vrsqrt.pop %v6885
    %v6897 = vmul.f32 %v6896, %v6885
    %v6898 = vmul.f32 %v6897, %v6896
    %v6899 = vmul.f32 0.5, %v6898
    %v6900 = vsub.f32 1.5, %v6899
    %v6901 = vmul.f32 %v6896, %v6900
    %vm6902 = vweird.f32 %v6885
    %vm6903 = vweird.f32 %v6896
    %vm6904 = vmor %vm6902, %vm6903
    %v6905 = vsel %vm6904, %v6896, %v6901
    %v6906 = vmul.f32 %v6874, %v6895
    %v6907 = vmul.f32 %v6875, %v6905
    %v6908 = vld [vmem:[#allocation9 + $0x160] sm:$0x1]
    %v6909 = vperm.slane %v6908, 0
    %v6910 = vmul.f32 %v6906, %v6909
    %v6911 = vmul.f32 %v6907, %v6909
    %v6912 = vld [vmem:[#allocation9 + $0x168] sm:$0x1]
    %v6913 = vperm.slane %v6912, 0
    %v6914 = vadd.f32 %v6910, %v6913
    %v6915 = vadd.f32 %v6911, %v6913
    %v6916 = vpack.c.bf16 %v6915, %v6914
    %v6917 = vld [vmem:[#allocation7 + $0x698] sm:$0xf]
    %v6918 = vld [vmem:[#allocation7 + $0x69c] sm:$0xf]
    %v6919 = vld [vmem:[#allocation7 + $0x6a0] sm:$0xf]
    %v6920 = vld [vmem:[#allocation7 + $0x6a4] sm:$0xf]
    %v6921 = vld [vmem:[#allocation7 + $0x6a8] sm:$0xf]
    %v6922 = vld [vmem:[#allocation7 + $0x6ac] sm:$0xf]
    %v6923 = vld [vmem:[#allocation7 + $0x6b0] sm:$0xf]
    %v6924 = vld [vmem:[#allocation7 + $0x6b4] sm:$0xf]
    %v6925 = vld [vmem:[#allocation7 + $0x6b8] sm:$0xf]
    %v6926 = vld [vmem:[#allocation7 + $0x6bc] sm:$0xf]
    %v6927 = vld [vmem:[#allocation7 + $0x6c0] sm:$0xf]
    %v6928 = vld [vmem:[#allocation7 + $0x6c4] sm:$0xf]
    %v6929 = vld [vmem:[#allocation7 + $0x6c8] sm:$0xf]
    %v6930 = vld [vmem:[#allocation7 + $0x6cc] sm:$0xf]
    %v6931 = vld [vmem:[#allocation7 + $0x6d0] sm:$0xf]
    %v6932 = vld [vmem:[#allocation7 + $0x6d4] sm:$0xf]
    %v6933 = vld [vmem:[#allocation9 + $0x140] sm:$0x1]
    %v6934 = vperm.slane %v6933, 0
    %v6951 = vunpack.c.l.b16 %v6917
    %v6952 = vunpack.c.l.b16 %v6918
    %v6953 = vunpack.c.l.b16 %v6919
    %v6954 = vunpack.c.l.b16 %v6920
    %v6955 = vunpack.c.l.b16 %v6921
    %v6956 = vunpack.c.l.b16 %v6922
    %v6957 = vunpack.c.l.b16 %v6923
    %v6958 = vunpack.c.l.b16 %v6924
    %v6959 = vunpack.c.l.b16 %v6925
    %v6960 = vunpack.c.l.b16 %v6926
    %v6961 = vunpack.c.l.b16 %v6927
    %v6962 = vunpack.c.l.b16 %v6928
    %v6963 = vunpack.c.l.b16 %v6929
    %v6964 = vunpack.c.l.b16 %v6930
    %v6965 = vunpack.c.l.b16 %v6931
    %v6966 = vunpack.c.l.b16 %v6932
    %v6967 = vpack.c.b16 %v6952, %v6951
    %v6968 = vpack.c.b16 %v6954, %v6953
    %v6969 = vpack.c.b16 %v6956, %v6955
    %v6970 = vpack.c.b16 %v6958, %v6957
    %v6971 = vpack.c.b16 %v6960, %v6959
    %v6972 = vpack.c.b16 %v6962, %v6961
    %v6973 = vpack.c.b16 %v6964, %v6963
    %v6974 = vpack.c.b16 %v6966, %v6965
    %6983 = vmatpush.bf16.msra.mxu0 %v6974
    %6984 = vmatpush.bf16.msra.mxu0 %v6973
    %6985 = vmatpush.bf16.msra.mxu0 %v6972
    %6986 = vmatpush.bf16.msra.mxu0 %v6971
    %6987 = vmatpush.bf16.msra.mxu0 %v6970
    %6988 = vmatpush.bf16.msra.mxu0 %v6969
    %6989 = vmatpush.bf16.msra.mxu0 %v6968
    %6990 = vmatpush.bf16.msra.mxu0 %v6967
    %6991 = vmatmul.bf16.gmra.mxu0 %v6916
    %v6992 = vpop.f32.mrf.mxu0
    %v6993 = vadd.f32 %v6934, %v6992
    %v6994 = vpop.f32.mrf.mxu0
    %v6995 = vadd.f32 %v6934, %v6994
    %6996 = vdwg.mxu0
    %v6997 = vld [vmem:[#allocation7 + $0x6d8] sm:$0xf]
    %v6998 = vld [vmem:[#allocation7 + $0x6dc] sm:$0xf]
    %v6999 = vld [vmem:[#allocation7 + $0x6e0] sm:$0xf]
    %v7000 = vld [vmem:[#allocation7 + $0x6e4] sm:$0xf]
    %v7001 = vld [vmem:[#allocation7 + $0x6e8] sm:$0xf]
    %v7002 = vld [vmem:[#allocation7 + $0x6ec] sm:$0xf]
    %v7003 = vld [vmem:[#allocation7 + $0x6f0] sm:$0xf]
    %v7004 = vld [vmem:[#allocation7 + $0x6f4] sm:$0xf]
    %v7005 = vld [vmem:[#allocation7 + $0x6f8] sm:$0xf]
    %v7006 = vld [vmem:[#allocation7 + $0x6fc] sm:$0xf]
    %v7007 = vld [vmem:[#allocation7 + $0x700] sm:$0xf]
    %v7008 = vld [vmem:[#allocation7 + $0x704] sm:$0xf]
    %v7009 = vld [vmem:[#allocation7 + $0x708] sm:$0xf]
    %v7010 = vld [vmem:[#allocation7 + $0x70c] sm:$0xf]
    %v7011 = vld [vmem:[#allocation7 + $0x710] sm:$0xf]
    %v7012 = vld [vmem:[#allocation7 + $0x714] sm:$0xf]
    %v7013 = vld [vmem:[#allocation9 + $0x148] sm:$0x1]
    %v7014 = vperm.slane %v7013, 0
    %v7031 = vunpack.c.l.b16 %v6997
    %v7032 = vunpack.c.l.b16 %v6998
    %v7033 = vunpack.c.l.b16 %v6999
    %v7034 = vunpack.c.l.b16 %v7000
    %v7035 = vunpack.c.l.b16 %v7001
    %v7036 = vunpack.c.l.b16 %v7002
    %v7037 = vunpack.c.l.b16 %v7003
    %v7038 = vunpack.c.l.b16 %v7004
    %v7039 = vunpack.c.l.b16 %v7005
    %v7040 = vunpack.c.l.b16 %v7006
    %v7041 = vunpack.c.l.b16 %v7007
    %v7042 = vunpack.c.l.b16 %v7008
    %v7043 = vunpack.c.l.b16 %v7009
    %v7044 = vunpack.c.l.b16 %v7010
    %v7045 = vunpack.c.l.b16 %v7011
    %v7046 = vunpack.c.l.b16 %v7012
    %v7047 = vpack.c.b16 %v7032, %v7031
    %v7048 = vpack.c.b16 %v7034, %v7033
    %v7049 = vpack.c.b16 %v7036, %v7035
    %v7050 = vpack.c.b16 %v7038, %v7037
    %v7051 = vpack.c.b16 %v7040, %v7039
    %v7052 = vpack.c.b16 %v7042, %v7041
    %v7053 = vpack.c.b16 %v7044, %v7043
    %v7054 = vpack.c.b16 %v7046, %v7045
    %7063 = vmatpush.bf16.msra.mxu0 %v7054
    %7064 = vmatpush.bf16.msra.mxu0 %v7053
    %7065 = vmatpush.bf16.msra.mxu0 %v7052
    %7066 = vmatpush.bf16.msra.mxu0 %v7051
    %7067 = vmatpush.bf16.msra.mxu0 %v7050
    %7068 = vmatpush.bf16.msra.mxu0 %v7049
    %7069 = vmatpush.bf16.msra.mxu0 %v7048
    %7070 = vmatpush.bf16.msra.mxu0 %v7047
    %7071 = vmatmul.bf16.gmra.mxu0 %v4378
    %v7072 = vpop.f32.mrf.mxu0
    %v7073 = vadd.f32 %v7014, %v7072
    %v7074 = vpop.f32.mrf.mxu0
    %v7075 = vadd.f32 %v7014, %v7074
    %7076 = vdwg.mxu0
    %v7077 = vld [vmem:[#allocation7 + $0x718] sm:$0xf]
    %v7078 = vld [vmem:[#allocation7 + $0x71c] sm:$0xf]
    %v7079 = vld [vmem:[#allocation7 + $0x720] sm:$0xf]
    %v7080 = vld [vmem:[#allocation7 + $0x724] sm:$0xf]
    %v7081 = vld [vmem:[#allocation7 + $0x728] sm:$0xf]
    %v7082 = vld [vmem:[#allocation7 + $0x72c] sm:$0xf]
    %v7083 = vld [vmem:[#allocation7 + $0x730] sm:$0xf]
    %v7084 = vld [vmem:[#allocation7 + $0x734] sm:$0xf]
    %v7085 = vld [vmem:[#allocation7 + $0x738] sm:$0xf]
    %v7086 = vld [vmem:[#allocation7 + $0x73c] sm:$0xf]
    %v7087 = vld [vmem:[#allocation7 + $0x740] sm:$0xf]
    %v7088 = vld [vmem:[#allocation7 + $0x744] sm:$0xf]
    %v7089 = vld [vmem:[#allocation7 + $0x748] sm:$0xf]
    %v7090 = vld [vmem:[#allocation7 + $0x74c] sm:$0xf]
    %v7091 = vld [vmem:[#allocation7 + $0x750] sm:$0xf]
    %v7092 = vld [vmem:[#allocation7 + $0x754] sm:$0xf]
    %v7093 = vld [vmem:[#allocation9 + $0x150] sm:$0x1]
    %v7094 = vperm.slane %v7093, 0
    %v7111 = vunpack.c.l.b16 %v7077
    %v7112 = vunpack.c.l.b16 %v7078
    %v7113 = vunpack.c.l.b16 %v7079
    %v7114 = vunpack.c.l.b16 %v7080
    %v7115 = vunpack.c.l.b16 %v7081
    %v7116 = vunpack.c.l.b16 %v7082
    %v7117 = vunpack.c.l.b16 %v7083
    %v7118 = vunpack.c.l.b16 %v7084
    %v7119 = vunpack.c.l.b16 %v7085
    %v7120 = vunpack.c.l.b16 %v7086
    %v7121 = vunpack.c.l.b16 %v7087
    %v7122 = vunpack.c.l.b16 %v7088
    %v7123 = vunpack.c.l.b16 %v7089
    %v7124 = vunpack.c.l.b16 %v7090
    %v7125 = vunpack.c.l.b16 %v7091
    %v7126 = vunpack.c.l.b16 %v7092
    %v7127 = vpack.c.b16 %v7112, %v7111
    %v7128 = vpack.c.b16 %v7114, %v7113
    %v7129 = vpack.c.b16 %v7116, %v7115
    %v7130 = vpack.c.b16 %v7118, %v7117
    %v7131 = vpack.c.b16 %v7120, %v7119
    %v7132 = vpack.c.b16 %v7122, %v7121
    %v7133 = vpack.c.b16 %v7124, %v7123
    %v7134 = vpack.c.b16 %v7126, %v7125
    %7143 = vmatpush.bf16.msra.mxu0 %v7134
    %7144 = vmatpush.bf16.msra.mxu0 %v7133
    %7145 = vmatpush.bf16.msra.mxu0 %v7132
    %7146 = vmatpush.bf16.msra.mxu0 %v7131
    %7147 = vmatpush.bf16.msra.mxu0 %v7130
    %7148 = vmatpush.bf16.msra.mxu0 %v7129
    %7149 = vmatpush.bf16.msra.mxu0 %v7128
    %7150 = vmatpush.bf16.msra.mxu0 %v7127
    %7151 = vmatmul.bf16.gmra.mxu0 %v4378
    %v7152 = vpop.f32.mrf.mxu0
    %v7153 = vadd.f32 %v7094, %v7152
    %v7154 = vpop.f32.mrf.mxu0
    %v7155 = vadd.f32 %v7094, %v7154
    %7156 = vdwg.mxu0
    %v7158 = vsel %vm403, %v6993, 0
    %v7161 = vsel %vm403, %v6995, 0
    %v7164 = vsel %vm403, %v7073, 0
    %v7167 = vsel %vm403, %v7075, 0
    %7169 = vmatpush.xpose.msra.mxu0 0.0
    %7170 = vmatpush.xpose.msra.mxu0 0.0
    %7171 = vmatpush.xpose.msra.mxu0 0.0
    %7172 = vmatpush.xpose.msra.mxu0 0.0
    %7173 = vmatpush.xpose.msra.mxu0 0.0
    %7174 = vmatpush.xpose.msra.mxu0 0.0
    %7175 = vmatpush.xpose.msra.mxu0 0.0
    %7176 = vmatpush.xpose.msra.mxu0 0.0
    %7177 = vmatpush.xpose.msra.mxu0 0.0
    %7178 = vmatpush.xpose.msra.mxu0 0.0
    %7179 = vmatpush.xpose.msra.mxu0 0.0
    %7180 = vmatpush.xpose.msra.mxu0 0.0
    %7181 = vmatpush.xpose.msra.mxu0 0.0
    %7182 = vmatpush.xpose.msra.mxu0 0.0
    %7183 = vmatpush.xpose.msra.mxu0 %v7167
    %7184 = vmatpush.xpose.msra.mxu0 %v7164
    %7185 = vmatmul.f32.gmra.mxu0 %v7158
    %v7186 = vpop.f32.mrf.mxu0
    %v7187 = vadd.f32 %v109, %v7186
    %7188 = vmatmul.f32.gmra.mxu0 %v7161
    %v7189 = vpop.f32.mrf.mxu0
    %v7190 = vadd.f32 %v110, %v7189
    %7191 = vdwg.mxu0
    %7192 = vrot.lane.b32.xlu0 %v6993, 112
    %v7193 = vpop.permute.xlu0 %7192
    %7194 = vrot.lane.b32.xlu0 %v6995, 112
    %v7195 = vpop.permute.xlu0 %7194
    %7196 = vrot.lane.b32.xlu0 %v7073, 112
    %v7197 = vpop.permute.xlu0 %7196
    %7198 = vrot.lane.b32.xlu0 %v7075, 112
    %v7199 = vpop.permute.xlu0 %7198
    %v7200 = vsel %vm403, %v7193, 0
    %v7202 = vsel %vm403, %v7195, 0
    %v7204 = vsel %vm403, %v7197, 0
    %v7206 = vsel %vm403, %v7199, 0
    %7208 = vmatpush.xpose.msra.mxu0 0.0
    %7209 = vmatpush.xpose.msra.mxu0 0.0
    %7210 = vmatpush.xpose.msra.mxu0 0.0
    %7211 = vmatpush.xpose.msra.mxu0 0.0
    %7212 = vmatpush.xpose.msra.mxu0 0.0
    %7213 = vmatpush.xpose.msra.mxu0 0.0
    %7214 = vmatpush.xpose.msra.mxu0 0.0
    %7215 = vmatpush.xpose.msra.mxu0 0.0
    %7216 = vmatpush.xpose.msra.mxu0 0.0
    %7217 = vmatpush.xpose.msra.mxu0 0.0
    %7218 = vmatpush.xpose.msra.mxu0 0.0
    %7219 = vmatpush.xpose.msra.mxu0 0.0
    %7220 = vmatpush.xpose.msra.mxu0 0.0
    %7221 = vmatpush.xpose.msra.mxu0 0.0
    %7222 = vmatpush.xpose.msra.mxu0 %v7206
    %7223 = vmatpush.xpose.msra.mxu0 %v7204
    %7224 = vmatmul.f32.gmra.mxu0 %v7200
    %v7225 = vpop.f32.mrf.mxu0
    %v7226 = vadd.f32 %v109, %v7225
    %7227 = vmatmul.f32.gmra.mxu0 %v7202
    %v7228 = vpop.f32.mrf.mxu0
    %v7229 = vadd.f32 %v110, %v7228
    %7230 = vdwg.mxu0
    %7231 = vrot.lane.b32.xlu0 %v6993, 96
    %v7232 = vpop.permute.xlu0 %7231
    %7233 = vrot.lane.b32.xlu0 %v6995, 96
    %v7234 = vpop.permute.xlu0 %7233
    %7235 = vrot.lane.b32.xlu0 %v7073, 96
    %v7236 = vpop.permute.xlu0 %7235
    %7237 = vrot.lane.b32.xlu0 %v7075, 96
    %v7238 = vpop.permute.xlu0 %7237
    %v7239 = vsel %vm403, %v7232, 0
    %v7241 = vsel %vm403, %v7234, 0
    %v7243 = vsel %vm403, %v7236, 0
    %v7245 = vsel %vm403, %v7238, 0
    %7247 = vmatpush.xpose.msra.mxu0 0.0
    %7248 = vmatpush.xpose.msra.mxu0 0.0
    %7249 = vmatpush.xpose.msra.mxu0 0.0
    %7250 = vmatpush.xpose.msra.mxu0 0.0
    %7251 = vmatpush.xpose.msra.mxu0 0.0
    %7252 = vmatpush.xpose.msra.mxu0 0.0
    %7253 = vmatpush.xpose.msra.mxu0 0.0
    %7254 = vmatpush.xpose.msra.mxu0 0.0
    %7255 = vmatpush.xpose.msra.mxu0 0.0
    %7256 = vmatpush.xpose.msra.mxu0 0.0
    %7257 = vmatpush.xpose.msra.mxu0 0.0
    %7258 = vmatpush.xpose.msra.mxu0 0.0
    %7259 = vmatpush.xpose.msra.mxu0 0.0
    %7260 = vmatpush.xpose.msra.mxu0 0.0
    %7261 = vmatpush.xpose.msra.mxu0 %v7245
    %7262 = vmatpush.xpose.msra.mxu0 %v7243
    %7263 = vmatmul.f32.gmra.mxu0 %v7239
    %v7264 = vpop.f32.mrf.mxu0
    %v7265 = vadd.f32 %v109, %v7264
    %7266 = vmatmul.f32.gmra.mxu0 %v7241
    %v7267 = vpop.f32.mrf.mxu0
    %v7268 = vadd.f32 %v110, %v7267
    %7269 = vdwg.mxu0
    %7270 = vrot.lane.b32.xlu0 %v6993, 80
    %v7271 = vpop.permute.xlu0 %7270
    %7272 = vrot.lane.b32.xlu0 %v6995, 80
    %v7273 = vpop.permute.xlu0 %7272
    %7274 = vrot.lane.b32.xlu0 %v7073, 80
    %v7275 = vpop.permute.xlu0 %7274
    %7276 = vrot.lane.b32.xlu0 %v7075, 80
    %v7277 = vpop.permute.xlu0 %7276
    %v7278 = vsel %vm403, %v7271, 0
    %v7280 = vsel %vm403, %v7273, 0
    %v7282 = vsel %vm403, %v7275, 0
    %v7284 = vsel %vm403, %v7277, 0
    %7286 = vmatpush.xpose.msra.mxu0 0.0
    %7287 = vmatpush.xpose.msra.mxu0 0.0
    %7288 = vmatpush.xpose.msra.mxu0 0.0
    %7289 = vmatpush.xpose.msra.mxu0 0.0
    %7290 = vmatpush.xpose.msra.mxu0 0.0
    %7291 = vmatpush.xpose.msra.mxu0 0.0
    %7292 = vmatpush.xpose.msra.mxu0 0.0
    %7293 = vmatpush.xpose.msra.mxu0 0.0
    %7294 = vmatpush.xpose.msra.mxu0 0.0
    %7295 = vmatpush.xpose.msra.mxu0 0.0
    %7296 = vmatpush.xpose.msra.mxu0 0.0
    %7297 = vmatpush.xpose.msra.mxu0 0.0
    %7298 = vmatpush.xpose.msra.mxu0 0.0
    %7299 = vmatpush.xpose.msra.mxu0 0.0
    %7300 = vmatpush.xpose.msra.mxu0 %v7284
    %7301 = vmatpush.xpose.msra.mxu0 %v7282
    %7302 = vmatmul.f32.gmra.mxu0 %v7278
    %v7303 = vpop.f32.mrf.mxu0
    %v7304 = vadd.f32 %v109, %v7303
    %7305 = vmatmul.f32.gmra.mxu0 %v7280
    %v7306 = vpop.f32.mrf.mxu0
    %v7307 = vadd.f32 %v110, %v7306
    %7308 = vdwg.mxu0
    %7309 = vrot.lane.b32.xlu0 %v6993, 64
    %v7310 = vpop.permute.xlu0 %7309
    %7311 = vrot.lane.b32.xlu0 %v6995, 64
    %v7312 = vpop.permute.xlu0 %7311
    %7313 = vrot.lane.b32.xlu0 %v7073, 64
    %v7314 = vpop.permute.xlu0 %7313
    %7315 = vrot.lane.b32.xlu0 %v7075, 64
    %v7316 = vpop.permute.xlu0 %7315
    %v7317 = vsel %vm403, %v7310, 0
    %v7319 = vsel %vm403, %v7312, 0
    %v7321 = vsel %vm403, %v7314, 0
    %v7323 = vsel %vm403, %v7316, 0
    %7325 = vmatpush.xpose.msra.mxu0 0.0
    %7326 = vmatpush.xpose.msra.mxu0 0.0
    %7327 = vmatpush.xpose.msra.mxu0 0.0
    %7328 = vmatpush.xpose.msra.mxu0 0.0
    %7329 = vmatpush.xpose.msra.mxu0 0.0
    %7330 = vmatpush.xpose.msra.mxu0 0.0
    %7331 = vmatpush.xpose.msra.mxu0 0.0
    %7332 = vmatpush.xpose.msra.mxu0 0.0
    %7333 = vmatpush.xpose.msra.mxu0 0.0
    %7334 = vmatpush.xpose.msra.mxu0 0.0
    %7335 = vmatpush.xpose.msra.mxu0 0.0
    %7336 = vmatpush.xpose.msra.mxu0 0.0
    %7337 = vmatpush.xpose.msra.mxu0 0.0
    %7338 = vmatpush.xpose.msra.mxu0 0.0
    %7339 = vmatpush.xpose.msra.mxu0 %v7323
    %7340 = vmatpush.xpose.msra.mxu0 %v7321
    %7341 = vmatmul.f32.gmra.mxu0 %v7317
    %v7342 = vpop.f32.mrf.mxu0
    %v7343 = vadd.f32 %v109, %v7342
    %7344 = vmatmul.f32.gmra.mxu0 %v7319
    %v7345 = vpop.f32.mrf.mxu0
    %v7346 = vadd.f32 %v110, %v7345
    %7347 = vdwg.mxu0
    %7348 = vrot.lane.b32.xlu0 %v6993, 48
    %v7349 = vpop.permute.xlu0 %7348
    %7350 = vrot.lane.b32.xlu0 %v6995, 48
    %v7351 = vpop.permute.xlu0 %7350
    %7352 = vrot.lane.b32.xlu0 %v7073, 48
    %v7353 = vpop.permute.xlu0 %7352
    %7354 = vrot.lane.b32.xlu0 %v7075, 48
    %v7355 = vpop.permute.xlu0 %7354
    %v7356 = vsel %vm403, %v7349, 0
    %v7358 = vsel %vm403, %v7351, 0
    %v7360 = vsel %vm403, %v7353, 0
    %v7362 = vsel %vm403, %v7355, 0
    %7364 = vmatpush.xpose.msra.mxu0 0.0
    %7365 = vmatpush.xpose.msra.mxu0 0.0
    %7366 = vmatpush.xpose.msra.mxu0 0.0
    %7367 = vmatpush.xpose.msra.mxu0 0.0
    %7368 = vmatpush.xpose.msra.mxu0 0.0
    %7369 = vmatpush.xpose.msra.mxu0 0.0
    %7370 = vmatpush.xpose.msra.mxu0 0.0
    %7371 = vmatpush.xpose.msra.mxu0 0.0
    %7372 = vmatpush.xpose.msra.mxu0 0.0
    %7373 = vmatpush.xpose.msra.mxu0 0.0
    %7374 = vmatpush.xpose.msra.mxu0 0.0
    %7375 = vmatpush.xpose.msra.mxu0 0.0
    %7376 = vmatpush.xpose.msra.mxu0 0.0
    %7377 = vmatpush.xpose.msra.mxu0 0.0
    %7378 = vmatpush.xpose.msra.mxu0 %v7362
    %7379 = vmatpush.xpose.msra.mxu0 %v7360
    %7380 = vmatmul.f32.gmra.mxu0 %v7356
    %v7381 = vpop.f32.mrf.mxu0
    %v7382 = vadd.f32 %v109, %v7381
    %7383 = vmatmul.f32.gmra.mxu0 %v7358
    %v7384 = vpop.f32.mrf.mxu0
    %v7385 = vadd.f32 %v110, %v7384
    %7386 = vdwg.mxu0
    %7387 = vrot.lane.b32.xlu0 %v6993, 32
    %v7388 = vpop.permute.xlu0 %7387
    %7389 = vrot.lane.b32.xlu0 %v6995, 32
    %v7390 = vpop.permute.xlu0 %7389
    %7391 = vrot.lane.b32.xlu0 %v7073, 32
    %v7392 = vpop.permute.xlu0 %7391
    %7393 = vrot.lane.b32.xlu0 %v7075, 32
    %v7394 = vpop.permute.xlu0 %7393
    %v7395 = vsel %vm403, %v7388, 0
    %v7397 = vsel %vm403, %v7390, 0
    %v7399 = vsel %vm403, %v7392, 0
    %v7401 = vsel %vm403, %v7394, 0
    %7403 = vmatpush.xpose.msra.mxu0 0.0
    %7404 = vmatpush.xpose.msra.mxu0 0.0
    %7405 = vmatpush.xpose.msra.mxu0 0.0
    %7406 = vmatpush.xpose.msra.mxu0 0.0
    %7407 = vmatpush.xpose.msra.mxu0 0.0
    %7408 = vmatpush.xpose.msra.mxu0 0.0
    %7409 = vmatpush.xpose.msra.mxu0 0.0
    %7410 = vmatpush.xpose.msra.mxu0 0.0
    %7411 = vmatpush.xpose.msra.mxu0 0.0
    %7412 = vmatpush.xpose.msra.mxu0 0.0
    %7413 = vmatpush.xpose.msra.mxu0 0.0
    %7414 = vmatpush.xpose.msra.mxu0 0.0
    %7415 = vmatpush.xpose.msra.mxu0 0.0
    %7416 = vmatpush.xpose.msra.mxu0 0.0
    %7417 = vmatpush.xpose.msra.mxu0 %v7401
    %7418 = vmatpush.xpose.msra.mxu0 %v7399
    %7419 = vmatmul.f32.gmra.mxu0 %v7395
    %v7420 = vpop.f32.mrf.mxu0
    %v7421 = vadd.f32 %v109, %v7420
    %7422 = vmatmul.f32.gmra.mxu0 %v7397
    %v7423 = vpop.f32.mrf.mxu0
    %v7424 = vadd.f32 %v110, %v7423
    %7425 = vdwg.mxu0
    %7426 = vrot.lane.b32.xlu0 %v6993, 16
    %v7427 = vpop.permute.xlu0 %7426
    %7428 = vrot.lane.b32.xlu0 %v6995, 16
    %v7429 = vpop.permute.xlu0 %7428
    %7430 = vrot.lane.b32.xlu0 %v7073, 16
    %v7431 = vpop.permute.xlu0 %7430
    %7432 = vrot.lane.b32.xlu0 %v7075, 16
    %v7433 = vpop.permute.xlu0 %7432
    %v7434 = vsel %vm403, %v7427, 0
    %v7436 = vsel %vm403, %v7429, 0
    %v7438 = vsel %vm403, %v7431, 0
    %v7440 = vsel %vm403, %v7433, 0
    %7442 = vmatpush.xpose.msra.mxu0 0.0
    %7443 = vmatpush.xpose.msra.mxu0 0.0
    %7444 = vmatpush.xpose.msra.mxu0 0.0
    %7445 = vmatpush.xpose.msra.mxu0 0.0
    %7446 = vmatpush.xpose.msra.mxu0 0.0
    %7447 = vmatpush.xpose.msra.mxu0 0.0
    %7448 = vmatpush.xpose.msra.mxu0 0.0
    %7449 = vmatpush.xpose.msra.mxu0 0.0
    %7450 = vmatpush.xpose.msra.mxu0 0.0
    %7451 = vmatpush.xpose.msra.mxu0 0.0
    %7452 = vmatpush.xpose.msra.mxu0 0.0
    %7453 = vmatpush.xpose.msra.mxu0 0.0
    %7454 = vmatpush.xpose.msra.mxu0 0.0
    %7455 = vmatpush.xpose.msra.mxu0 0.0
    %7456 = vmatpush.xpose.msra.mxu0 %v7440
    %7457 = vmatpush.xpose.msra.mxu0 %v7438
    %7458 = vmatmul.f32.gmra.mxu0 %v7434
    %v7459 = vpop.f32.mrf.mxu0
    %v7460 = vadd.f32 %v109, %v7459
    %7461 = vmatmul.f32.gmra.mxu0 %v7436
    %v7462 = vpop.f32.mrf.mxu0
    %v7463 = vadd.f32 %v110, %v7462
    %7464 = vdwg.mxu0
    %v7465 = vsel %vm403, %v7187, -inf
    %7466 = vmax.xlane.f32.xlu0 %v7465
    %v7467 = vpop.xlane.xlu0 %7466
    %v7468 = vsel %vm403, %v7190, -inf
    %7469 = vmax.xlane.f32.xlu0 %v7468
    %v7470 = vpop.xlane.xlu0 %7469
    %v7471 = vsel %vm403, %v7226, -inf
    %7472 = vmax.xlane.f32.xlu0 %v7471
    %v7473 = vpop.xlane.xlu0 %7472
    %v7474 = vsel %vm403, %v7229, -inf
    %7475 = vmax.xlane.f32.xlu0 %v7474
    %v7476 = vpop.xlane.xlu0 %7475
    %v7477 = vsel %vm403, %v7265, -inf
    %7478 = vmax.xlane.f32.xlu0 %v7477
    %v7479 = vpop.xlane.xlu0 %7478
    %v7480 = vsel %vm403, %v7268, -inf
    %7481 = vmax.xlane.f32.xlu0 %v7480
    %v7482 = vpop.xlane.xlu0 %7481
    %v7483 = vsel %vm403, %v7304, -inf
    %7484 = vmax.xlane.f32.xlu0 %v7483
    %v7485 = vpop.xlane.xlu0 %7484
    %v7486 = vsel %vm403, %v7307, -inf
    %7487 = vmax.xlane.f32.xlu0 %v7486
    %v7488 = vpop.xlane.xlu0 %7487
    %v7489 = vsel %vm403, %v7343, -inf
    %7490 = vmax.xlane.f32.xlu0 %v7489
    %v7491 = vpop.xlane.xlu0 %7490
    %v7492 = vsel %vm403, %v7346, -inf
    %7493 = vmax.xlane.f32.xlu0 %v7492
    %v7494 = vpop.xlane.xlu0 %7493
    %v7495 = vsel %vm403, %v7382, -inf
    %7496 = vmax.xlane.f32.xlu0 %v7495
    %v7497 = vpop.xlane.xlu0 %7496
    %v7498 = vsel %vm403, %v7385, -inf
    %7499 = vmax.xlane.f32.xlu0 %v7498
    %v7500 = vpop.xlane.xlu0 %7499
    %v7501 = vsel %vm403, %v7421, -inf
    %7502 = vmax.xlane.f32.xlu0 %v7501
    %v7503 = vpop.xlane.xlu0 %7502
    %v7504 = vsel %vm403, %v7424, -inf
    %7505 = vmax.xlane.f32.xlu0 %v7504
    %v7506 = vpop.xlane.xlu0 %7505
    %v7507 = vsel %vm403, %v7460, -inf
    %7508 = vmax.xlane.f32.xlu0 %v7507
    %v7509 = vpop.xlane.xlu0 %7508
    %v7510 = vsel %vm403, %v7463, -inf
    %7511 = vmax.xlane.f32.xlu0 %v7510
    %v7512 = vpop.xlane.xlu0 %7511
    %v7513 = vsub.f32 %v7187, %v7467
    %v7514 = vsub.f32 %v7190, %v7470
    %v7515 = vsub.f32 %v7226, %v7473
    %v7516 = vsub.f32 %v7229, %v7476
    %v7517 = vsub.f32 %v7265, %v7479
    %v7518 = vsub.f32 %v7268, %v7482
    %v7519 = vsub.f32 %v7304, %v7485
    %v7520 = vsub.f32 %v7307, %v7488
    %v7521 = vsub.f32 %v7343, %v7491
    %v7522 = vsub.f32 %v7346, %v7494
    %v7523 = vsub.f32 %v7382, %v7497
    %v7524 = vsub.f32 %v7385, %v7500
    %v7525 = vsub.f32 %v7421, %v7503
    %v7526 = vsub.f32 %v7424, %v7506
    %v7527 = vsub.f32 %v7460, %v7509
    %v7528 = vsub.f32 %v7463, %v7512
    %v7529 = vmul.f32 %v7513, 1.442695
    %v7530 = vpow.pop %v7529
    %v7531 = vmul.f32 %v7514, 1.442695
    %v7532 = vpow.pop %v7531
    %v7533 = vmul.f32 %v7515, 1.442695
    %v7534 = vpow.pop %v7533
    %v7535 = vmul.f32 %v7516, 1.442695
    %v7536 = vpow.pop %v7535
    %v7537 = vmul.f32 %v7517, 1.442695
    %v7538 = vpow.pop %v7537
    %v7539 = vmul.f32 %v7518, 1.442695
    %v7540 = vpow.pop %v7539
    %v7541 = vmul.f32 %v7519, 1.442695
    %v7542 = vpow.pop %v7541
    %v7543 = vmul.f32 %v7520, 1.442695
    %v7544 = vpow.pop %v7543
    %v7545 = vmul.f32 %v7521, 1.442695
    %v7546 = vpow.pop %v7545
    %v7547 = vmul.f32 %v7522, 1.442695
    %v7548 = vpow.pop %v7547
    %v7549 = vmul.f32 %v7523, 1.442695
    %v7550 = vpow.pop %v7549
    %v7551 = vmul.f32 %v7524, 1.442695
    %v7552 = vpow.pop %v7551
    %v7553 = vmul.f32 %v7525, 1.442695
    %v7554 = vpow.pop %v7553
    %v7555 = vmul.f32 %v7526, 1.442695
    %v7556 = vpow.pop %v7555
    %v7557 = vmul.f32 %v7527, 1.442695
    %v7558 = vpow.pop %v7557
    %v7559 = vmul.f32 %v7528, 1.442695
    %v7560 = vpow.pop %v7559
    %v7561 = vsel %vm403, %v7530, 0.0
    %7562 = vadd.xlane.f32.xlu0 %v7561
    %v7563 = vpop.xlane.xlu0 %7562
    %v7564 = vsel %vm403, %v7532, 0.0
    %7565 = vadd.xlane.f32.xlu0 %v7564
    %v7566 = vpop.xlane.xlu0 %7565
    %v7567 = vsel %vm403, %v7534, 0.0
    %7568 = vadd.xlane.f32.xlu0 %v7567
    %v7569 = vpop.xlane.xlu0 %7568
    %v7570 = vsel %vm403, %v7536, 0.0
    %7571 = vadd.xlane.f32.xlu0 %v7570
    %v7572 = vpop.xlane.xlu0 %7571
    %v7573 = vsel %vm403, %v7538, 0.0
    %7574 = vadd.xlane.f32.xlu0 %v7573
    %v7575 = vpop.xlane.xlu0 %7574
    %v7576 = vsel %vm403, %v7540, 0.0
    %7577 = vadd.xlane.f32.xlu0 %v7576
    %v7578 = vpop.xlane.xlu0 %7577
    %v7579 = vsel %vm403, %v7542, 0.0
    %7580 = vadd.xlane.f32.xlu0 %v7579
    %v7581 = vpop.xlane.xlu0 %7580
    %v7582 = vsel %vm403, %v7544, 0.0
    %7583 = vadd.xlane.f32.xlu0 %v7582
    %v7584 = vpop.xlane.xlu0 %7583
    %v7585 = vsel %vm403, %v7546, 0.0
    %7586 = vadd.xlane.f32.xlu0 %v7585
    %v7587 = vpop.xlane.xlu0 %7586
    %v7588 = vsel %vm403, %v7548, 0.0
    %7589 = vadd.xlane.f32.xlu0 %v7588
    %v7590 = vpop.xlane.xlu0 %7589
    %v7591 = vsel %vm403, %v7550, 0.0
    %7592 = vadd.xlane.f32.xlu0 %v7591
    %v7593 = vpop.xlane.xlu0 %7592
    %v7594 = vsel %vm403, %v7552, 0.0
    %7595 = vadd.xlane.f32.xlu0 %v7594
    %v7596 = vpop.xlane.xlu0 %7595
    %v7597 = vsel %vm403, %v7554, 0.0
    %7598 = vadd.xlane.f32.xlu0 %v7597
    %v7599 = vpop.xlane.xlu0 %7598
    %v7600 = vsel %vm403, %v7556, 0.0
    %7601 = vadd.xlane.f32.xlu0 %v7600
    %v7602 = vpop.xlane.xlu0 %7601
    %v7603 = vsel %vm403, %v7558, 0.0
    %7604 = vadd.xlane.f32.xlu0 %v7603
    %v7605 = vpop.xlane.xlu0 %7604
    %v7606 = vsel %vm403, %v7560, 0.0
    %7607 = vadd.xlane.f32.xlu0 %v7606
    %v7608 = vpop.xlane.xlu0 %7607
    %v7609 = vrcp.pop %v7563
    %v7610 = vrcp.pop %v7566
    %v7611 = vrcp.pop %v7569
    %v7612 = vrcp.pop %v7572
    %v7613 = vrcp.pop %v7575
    %v7614 = vrcp.pop %v7578
    %v7615 = vrcp.pop %v7581
    %v7616 = vrcp.pop %v7584
    %v7617 = vrcp.pop %v7587
    %v7618 = vrcp.pop %v7590
    %v7619 = vrcp.pop %v7593
    %v7620 = vrcp.pop %v7596
    %v7621 = vrcp.pop %v7599
    %v7622 = vrcp.pop %v7602
    %v7623 = vrcp.pop %v7605
    %v7624 = vrcp.pop %v7608
    %v7625 = vmul.f32 %v7530, %v7609
    %v7626 = vmul.f32 %v7532, %v7610
    %v7627 = vmul.f32 %v7534, %v7611
    %v7628 = vmul.f32 %v7536, %v7612
    %v7629 = vmul.f32 %v7538, %v7613
    %v7630 = vmul.f32 %v7540, %v7614
    %v7631 = vmul.f32 %v7542, %v7615
    %v7632 = vmul.f32 %v7544, %v7616
    %v7633 = vmul.f32 %v7546, %v7617
    %v7634 = vmul.f32 %v7548, %v7618
    %v7635 = vmul.f32 %v7550, %v7619
    %v7636 = vmul.f32 %v7552, %v7620
    %v7637 = vmul.f32 %v7554, %v7621
    %v7638 = vmul.f32 %v7556, %v7622
    %v7639 = vmul.f32 %v7558, %v7623
    %v7640 = vmul.f32 %v7560, %v7624
    %v7642 = vsel %vm403, %v7625, 0
    %v7645 = vsel %vm403, %v7626, 0
    %7647 = vmatpush.msra.mxu0 0.0
    %7648 = vmatpush.msra.mxu0 0.0
    %7649 = vmatpush.msra.mxu0 0.0
    %7650 = vmatpush.msra.mxu0 0.0
    %7651 = vmatpush.msra.mxu0 0.0
    %7652 = vmatpush.msra.mxu0 0.0
    %7653 = vmatpush.msra.mxu0 0.0
    %7654 = vmatpush.msra.mxu0 0.0
    %7655 = vmatpush.msra.mxu0 0.0
    %7656 = vmatpush.msra.mxu0 0.0
    %7657 = vmatpush.msra.mxu0 0.0
    %7658 = vmatpush.msra.mxu0 0.0
    %7659 = vmatpush.msra.mxu0 0.0
    %7660 = vmatpush.msra.mxu0 0.0
    %7661 = vmatpush.msra.mxu0 %v7155
    %7662 = vmatpush.msra.mxu0 %v7153
    %7663 = vmatmul.f32.gmra.mxu0 %v7642
    %v7664 = vpop.f32.mrf.mxu0
    %v7665 = vadd.f32 0.0, %v7664
    %7666 = vmatmul.f32.gmra.mxu0 %v7645
    %v7667 = vpop.f32.mrf.mxu0
    %v7668 = vadd.f32 0.0, %v7667
    %7669 = vdwg.mxu0
    %7672 = vrot.lane.b32.xlu0 %v7153, 112
    %v7673 = vpop.permute.xlu0 %7672
    %7674 = vrot.lane.b32.xlu0 %v7155, 112
    %v7675 = vpop.permute.xlu0 %7674
    %v7679 = vsel %vm403, %v7627, 0
    %v7682 = vsel %vm403, %v7628, 0
    %7684 = vmatpush.msra.mxu0 0.0
    %7685 = vmatpush.msra.mxu0 0.0
    %7686 = vmatpush.msra.mxu0 0.0
    %7687 = vmatpush.msra.mxu0 0.0
    %7688 = vmatpush.msra.mxu0 0.0
    %7689 = vmatpush.msra.mxu0 0.0
    %7690 = vmatpush.msra.mxu0 0.0
    %7691 = vmatpush.msra.mxu0 0.0
    %7692 = vmatpush.msra.mxu0 0.0
    %7693 = vmatpush.msra.mxu0 0.0
    %7694 = vmatpush.msra.mxu0 0.0
    %7695 = vmatpush.msra.mxu0 0.0
    %7696 = vmatpush.msra.mxu0 0.0
    %7697 = vmatpush.msra.mxu0 0.0
    %7698 = vmatpush.msra.mxu0 %v7675
    %7699 = vmatpush.msra.mxu0 %v7673
    %7700 = vmatmul.f32.gmra.mxu0 %v7679
    %v7701 = vpop.f32.mrf.mxu0
    %v7702 = vadd.f32 0.0, %v7701
    %7703 = vmatmul.f32.gmra.mxu0 %v7682
    %v7704 = vpop.f32.mrf.mxu0
    %v7705 = vadd.f32 0.0, %v7704
    %7706 = vdwg.mxu0
    %7707 = vrot.lane.b32.xlu0 %v7153, 96
    %v7708 = vpop.permute.xlu0 %7707
    %7709 = vrot.lane.b32.xlu0 %v7155, 96
    %v7710 = vpop.permute.xlu0 %7709
    %v7714 = vsel %vm403, %v7629, 0
    %v7717 = vsel %vm403, %v7630, 0
    %7719 = vmatpush.msra.mxu0 0.0
    %7720 = vmatpush.msra.mxu0 0.0
    %7721 = vmatpush.msra.mxu0 0.0
    %7722 = vmatpush.msra.mxu0 0.0
    %7723 = vmatpush.msra.mxu0 0.0
    %7724 = vmatpush.msra.mxu0 0.0
    %7725 = vmatpush.msra.mxu0 0.0
    %7726 = vmatpush.msra.mxu0 0.0
    %7727 = vmatpush.msra.mxu0 0.0
    %7728 = vmatpush.msra.mxu0 0.0
    %7729 = vmatpush.msra.mxu0 0.0
    %7730 = vmatpush.msra.mxu0 0.0
    %7731 = vmatpush.msra.mxu0 0.0
    %7732 = vmatpush.msra.mxu0 0.0
    %7733 = vmatpush.msra.mxu0 %v7710
    %7734 = vmatpush.msra.mxu0 %v7708
    %7735 = vmatmul.f32.gmra.mxu0 %v7714
    %v7736 = vpop.f32.mrf.mxu0
    %v7737 = vadd.f32 0.0, %v7736
    %7738 = vmatmul.f32.gmra.mxu0 %v7717
    %v7739 = vpop.f32.mrf.mxu0
    %v7740 = vadd.f32 0.0, %v7739
    %7741 = vdwg.mxu0
    %7742 = vrot.lane.b32.xlu0 %v7153, 80
    %v7743 = vpop.permute.xlu0 %7742
    %7744 = vrot.lane.b32.xlu0 %v7155, 80
    %v7745 = vpop.permute.xlu0 %7744
    %v7749 = vsel %vm403, %v7631, 0
    %v7752 = vsel %vm403, %v7632, 0
    %7754 = vmatpush.msra.mxu0 0.0
    %7755 = vmatpush.msra.mxu0 0.0
    %7756 = vmatpush.msra.mxu0 0.0
    %7757 = vmatpush.msra.mxu0 0.0
    %7758 = vmatpush.msra.mxu0 0.0
    %7759 = vmatpush.msra.mxu0 0.0
    %7760 = vmatpush.msra.mxu0 0.0
    %7761 = vmatpush.msra.mxu0 0.0
    %7762 = vmatpush.msra.mxu0 0.0
    %7763 = vmatpush.msra.mxu0 0.0
    %7764 = vmatpush.msra.mxu0 0.0
    %7765 = vmatpush.msra.mxu0 0.0
    %7766 = vmatpush.msra.mxu0 0.0
    %7767 = vmatpush.msra.mxu0 0.0
    %7768 = vmatpush.msra.mxu0 %v7745
    %7769 = vmatpush.msra.mxu0 %v7743
    %7770 = vmatmul.f32.gmra.mxu0 %v7749
    %v7771 = vpop.f32.mrf.mxu0
    %v7772 = vadd.f32 0.0, %v7771
    %7773 = vmatmul.f32.gmra.mxu0 %v7752
    %v7774 = vpop.f32.mrf.mxu0
    %v7775 = vadd.f32 0.0, %v7774
    %7776 = vdwg.mxu0
    %7777 = vrot.lane.b32.xlu0 %v7153, 64
    %v7778 = vpop.permute.xlu0 %7777
    %7779 = vrot.lane.b32.xlu0 %v7155, 64
    %v7780 = vpop.permute.xlu0 %7779
    %v7784 = vsel %vm403, %v7633, 0
    %v7787 = vsel %vm403, %v7634, 0
    %7789 = vmatpush.msra.mxu0 0.0
    %7790 = vmatpush.msra.mxu0 0.0
    %7791 = vmatpush.msra.mxu0 0.0
    %7792 = vmatpush.msra.mxu0 0.0
    %7793 = vmatpush.msra.mxu0 0.0
    %7794 = vmatpush.msra.mxu0 0.0
    %7795 = vmatpush.msra.mxu0 0.0
    %7796 = vmatpush.msra.mxu0 0.0
    %7797 = vmatpush.msra.mxu0 0.0
    %7798 = vmatpush.msra.mxu0 0.0
    %7799 = vmatpush.msra.mxu0 0.0
    %7800 = vmatpush.msra.mxu0 0.0
    %7801 = vmatpush.msra.mxu0 0.0
    %7802 = vmatpush.msra.mxu0 0.0
    %7803 = vmatpush.msra.mxu0 %v7780
    %7804 = vmatpush.msra.mxu0 %v7778
    %7805 = vmatmul.f32.gmra.mxu0 %v7784
    %v7806 = vpop.f32.mrf.mxu0
    %v7807 = vadd.f32 0.0, %v7806
    %7808 = vmatmul.f32.gmra.mxu0 %v7787
    %v7809 = vpop.f32.mrf.mxu0
    %v7810 = vadd.f32 0.0, %v7809
    %7811 = vdwg.mxu0
    %7812 = vrot.lane.b32.xlu0 %v7153, 48
    %v7813 = vpop.permute.xlu0 %7812
    %7814 = vrot.lane.b32.xlu0 %v7155, 48
    %v7815 = vpop.permute.xlu0 %7814
    %v7819 = vsel %vm403, %v7635, 0
    %v7822 = vsel %vm403, %v7636, 0
    %7824 = vmatpush.msra.mxu0 0.0
    %7825 = vmatpush.msra.mxu0 0.0
    %7826 = vmatpush.msra.mxu0 0.0
    %7827 = vmatpush.msra.mxu0 0.0
    %7828 = vmatpush.msra.mxu0 0.0
    %7829 = vmatpush.msra.mxu0 0.0
    %7830 = vmatpush.msra.mxu0 0.0
    %7831 = vmatpush.msra.mxu0 0.0
    %7832 = vmatpush.msra.mxu0 0.0
    %7833 = vmatpush.msra.mxu0 0.0
    %7834 = vmatpush.msra.mxu0 0.0
    %7835 = vmatpush.msra.mxu0 0.0
    %7836 = vmatpush.msra.mxu0 0.0
    %7837 = vmatpush.msra.mxu0 0.0
    %7838 = vmatpush.msra.mxu0 %v7815
    %7839 = vmatpush.msra.mxu0 %v7813
    %7840 = vmatmul.f32.gmra.mxu0 %v7819
    %v7841 = vpop.f32.mrf.mxu0
    %v7842 = vadd.f32 0.0, %v7841
    %7843 = vmatmul.f32.gmra.mxu0 %v7822
    %v7844 = vpop.f32.mrf.mxu0
    %v7845 = vadd.f32 0.0, %v7844
    %7846 = vdwg.mxu0
    %7847 = vrot.lane.b32.xlu0 %v7153, 32
    %v7848 = vpop.permute.xlu0 %7847
    %7849 = vrot.lane.b32.xlu0 %v7155, 32
    %v7850 = vpop.permute.xlu0 %7849
    %v7854 = vsel %vm403, %v7637, 0
    %v7857 = vsel %vm403, %v7638, 0
    %7859 = vmatpush.msra.mxu0 0.0
    %7860 = vmatpush.msra.mxu0 0.0
    %7861 = vmatpush.msra.mxu0 0.0
    %7862 = vmatpush.msra.mxu0 0.0
    %7863 = vmatpush.msra.mxu0 0.0
    %7864 = vmatpush.msra.mxu0 0.0
    %7865 = vmatpush.msra.mxu0 0.0
    %7866 = vmatpush.msra.mxu0 0.0
    %7867 = vmatpush.msra.mxu0 0.0
    %7868 = vmatpush.msra.mxu0 0.0
    %7869 = vmatpush.msra.mxu0 0.0
    %7870 = vmatpush.msra.mxu0 0.0
    %7871 = vmatpush.msra.mxu0 0.0
    %7872 = vmatpush.msra.mxu0 0.0
    %7873 = vmatpush.msra.mxu0 %v7850
    %7874 = vmatpush.msra.mxu0 %v7848
    %7875 = vmatmul.f32.gmra.mxu0 %v7854
    %v7876 = vpop.f32.mrf.mxu0
    %v7877 = vadd.f32 0.0, %v7876
    %7878 = vmatmul.f32.gmra.mxu0 %v7857
    %v7879 = vpop.f32.mrf.mxu0
    %v7880 = vadd.f32 0.0, %v7879
    %7881 = vdwg.mxu0
    %7882 = vrot.lane.b32.xlu0 %v7153, 16
    %v7883 = vpop.permute.xlu0 %7882
    %7884 = vrot.lane.b32.xlu0 %v7155, 16
    %v7885 = vpop.permute.xlu0 %7884
    %v7889 = vsel %vm403, %v7639, 0
    %v7892 = vsel %vm403, %v7640, 0
    %7894 = vmatpush.msra.mxu0 0.0
    %7895 = vmatpush.msra.mxu0 0.0
    %7896 = vmatpush.msra.mxu0 0.0
    %7897 = vmatpush.msra.mxu0 0.0
    %7898 = vmatpush.msra.mxu0 0.0
    %7899 = vmatpush.msra.mxu0 0.0
    %7900 = vmatpush.msra.mxu0 0.0
    %7901 = vmatpush.msra.mxu0 0.0
    %7902 = vmatpush.msra.mxu0 0.0
    %7903 = vmatpush.msra.mxu0 0.0
    %7904 = vmatpush.msra.mxu0 0.0
    %7905 = vmatpush.msra.mxu0 0.0
    %7906 = vmatpush.msra.mxu0 0.0
    %7907 = vmatpush.msra.mxu0 0.0
    %7908 = vmatpush.msra.mxu0 %v7885
    %7909 = vmatpush.msra.mxu0 %v7883
    %7910 = vmatmul.f32.gmra.mxu0 %v7889
    %v7911 = vpop.f32.mrf.mxu0
    %v7912 = vadd.f32 0.0, %v7911
    %7913 = vmatmul.f32.gmra.mxu0 %v7892
    %v7914 = vpop.f32.mrf.mxu0
    %v7915 = vadd.f32 0.0, %v7914
    %7916 = vdwg.mxu0
    %7919 = vrot.lane.b32.xlu0 %v7702, 16
    %v7920 = vpop.permute.xlu0 %7919
    %7921 = vrot.lane.b32.xlu0 %v7705, 16
    %v7922 = vpop.permute.xlu0 %7921
    %7927 = vrot.lane.b32.xlu0 %v7737, 32
    %v7928 = vpop.permute.xlu0 %7927
    %7929 = vrot.lane.b32.xlu0 %v7740, 32
    %v7930 = vpop.permute.xlu0 %7929
    %7935 = vrot.lane.b32.xlu0 %v7772, 48
    %v7936 = vpop.permute.xlu0 %7935
    %7937 = vrot.lane.b32.xlu0 %v7775, 48
    %v7938 = vpop.permute.xlu0 %7937
    %7943 = vrot.lane.b32.xlu0 %v7807, 64
    %v7944 = vpop.permute.xlu0 %7943
    %7945 = vrot.lane.b32.xlu0 %v7810, 64
    %v7946 = vpop.permute.xlu0 %7945
    %7951 = vrot.lane.b32.xlu0 %v7842, 80
    %v7952 = vpop.permute.xlu0 %7951
    %7953 = vrot.lane.b32.xlu0 %v7845, 80
    %v7954 = vpop.permute.xlu0 %7953
    %7959 = vrot.lane.b32.xlu0 %v7877, 96
    %v7960 = vpop.permute.xlu0 %7959
    %7961 = vrot.lane.b32.xlu0 %v7880, 96
    %v7962 = vpop.permute.xlu0 %7961
    %7967 = vrot.lane.b32.xlu0 %v7912, 112
    %v7968 = vpop.permute.xlu0 %7967
    %7969 = vrot.lane.b32.xlu0 %v7915, 112
    %v7970 = vpop.permute.xlu0 %7969
    %v7973 = vsel %vm403, %v7665, %v7920
    %v7974 = vsel %vm403, %v7668, %v7922
    %v7975 = vsel %vm144, %v7973, %v7928
    %v7976 = vsel %vm144, %v7974, %v7930
    %v7977 = vsel %vm1224, %v7975, %v7936
    %v7978 = vsel %vm1224, %v7976, %v7938
    %v7979 = vsel %vm1227, %v7977, %v7944
    %v7980 = vsel %vm1227, %v7978, %v7946
    %v7981 = vsel %vm1230, %v7979, %v7952
    %v7982 = vsel %vm1230, %v7980, %v7954
    %v7983 = vsel %vm1233, %v7981, %v7960
    %v7984 = vsel %vm1233, %v7982, %v7962
    %v7985 = vsel %vm1236, %v7983, %v7968
    %v7986 = vsel %vm1236, %v7984, %v7970
    %v7987 = vpack.c.bf16 %v7986, %v7985
    %v7988 = vld [vmem:[#allocation7 + $0x758] sm:$0xf]
    %v7989 = vld [vmem:[#allocation7 + $0x75c] sm:$0xf]
    %v7990 = vld [vmem:[#allocation7 + $0x760] sm:$0xf]
    %v7991 = vld [vmem:[#allocation7 + $0x764] sm:$0xf]
    %v7992 = vld [vmem:[#allocation7 + $0x768] sm:$0xf]
    %v7993 = vld [vmem:[#allocation7 + $0x76c] sm:$0xf]
    %v7994 = vld [vmem:[#allocation7 + $0x770] sm:$0xf]
    %v7995 = vld [vmem:[#allocation7 + $0x774] sm:$0xf]
    %v7996 = vld [vmem:[#allocation7 + $0x778] sm:$0xf]
    %v7997 = vld [vmem:[#allocation7 + $0x77c] sm:$0xf]
    %v7998 = vld [vmem:[#allocation7 + $0x780] sm:$0xf]
    %v7999 = vld [vmem:[#allocation7 + $0x784] sm:$0xf]
    %v8000 = vld [vmem:[#allocation7 + $0x788] sm:$0xf]
    %v8001 = vld [vmem:[#allocation7 + $0x78c] sm:$0xf]
    %v8002 = vld [vmem:[#allocation7 + $0x790] sm:$0xf]
    %v8003 = vld [vmem:[#allocation7 + $0x794] sm:$0xf]
    %v8004 = vld [vmem:[#allocation9 + $0x158] sm:$0x1]
    %v8005 = vperm.slane %v8004, 0
    %v8022 = vunpack.c.l.b16 %v7988
    %v8023 = vunpack.c.l.b16 %v7989
    %v8024 = vunpack.c.l.b16 %v7990
    %v8025 = vunpack.c.l.b16 %v7991
    %v8026 = vunpack.c.l.b16 %v7992
    %v8027 = vunpack.c.l.b16 %v7993
    %v8028 = vunpack.c.l.b16 %v7994
    %v8029 = vunpack.c.l.b16 %v7995
    %v8030 = vunpack.c.l.b16 %v7996
    %v8031 = vunpack.c.l.b16 %v7997
    %v8032 = vunpack.c.l.b16 %v7998
    %v8033 = vunpack.c.l.b16 %v7999
    %v8034 = vunpack.c.l.b16 %v8000
    %v8035 = vunpack.c.l.b16 %v8001
    %v8036 = vunpack.c.l.b16 %v8002
    %v8037 = vunpack.c.l.b16 %v8003
    %v8038 = vpack.c.b16 %v8023, %v8022
    %v8039 = vpack.c.b16 %v8025, %v8024
    %v8040 = vpack.c.b16 %v8027, %v8026
    %v8041 = vpack.c.b16 %v8029, %v8028
    %v8042 = vpack.c.b16 %v8031, %v8030
    %v8043 = vpack.c.b16 %v8033, %v8032
    %v8044 = vpack.c.b16 %v8035, %v8034
    %v8045 = vpack.c.b16 %v8037, %v8036
    %8054 = vmatpush.bf16.msra.mxu0 %v8045
    %8055 = vmatpush.bf16.msra.mxu0 %v8044
    %8056 = vmatpush.bf16.msra.mxu0 %v8043
    %8057 = vmatpush.bf16.msra.mxu0 %v8042
    %8058 = vmatpush.bf16.msra.mxu0 %v8041
    %8059 = vmatpush.bf16.msra.mxu0 %v8040
    %8060 = vmatpush.bf16.msra.mxu0 %v8039
    %8061 = vmatpush.bf16.msra.mxu0 %v8038
    %8062 = vmatmul.bf16.gmra.mxu0 %v7987
    %v8063 = vpop.f32.mrf.mxu0
    %v8064 = vadd.f32 %v8005, %v8063
    %v8065 = vpop.f32.mrf.mxu0
    %v8066 = vadd.f32 %v8005, %v8065
    %8067 = vdwg.mxu0
    %v8068 = vadd.f32 %v6914, %v8064
    %v8069 = vadd.f32 %v6915, %v8066
    %8070 = vadd.xlane.f32.xlu0 %v8068
    %v8071 = vpop.xlane.xlu0 %8070
    %8072 = vadd.xlane.f32.xlu0 %v8069
    %v8073 = vpop.xlane.xlu0 %8072
    %v8074 = vmul.f32 %v8071, %v1332
    %v8075 = vmul.f32 %v8073, %v1332
    %v8076 = vsub.f32 %v8068, %v8074
    %v8077 = vsub.f32 %v8069, %v8075
    %v8078 = vmul.f32 %v8076, %v8076
    %v8079 = vmul.f32 %v8077, %v8077
    %8080 = vadd.xlane.f32.xlu0 %v8078
    %v8081 = vpop.xlane.xlu0 %8080
    %8082 = vadd.xlane.f32.xlu0 %v8079
    %v8083 = vpop.xlane.xlu0 %8082
    %v8084 = vmul.f32 %v8081, %v1332
    %v8085 = vmul.f32 %v8083, %v1332
    %v8086 = vadd.f32 %v8084, 1e-05
    %v8087 = vadd.f32 %v8085, 1e-05
    %v8088 = vrsqrt.pop %v8086
    %v8089 = vmul.f32 %v8088, %v8086
    %v8090 = vmul.f32 %v8089, %v8088
    %v8091 = vmul.f32 0.5, %v8090
    %v8092 = vsub.f32 1.5, %v8091
    %v8093 = vmul.f32 %v8088, %v8092
    %vm8094 = vweird.f32 %v8086
    %vm8095 = vweird.f32 %v8088
    %vm8096 = vmor %vm8094, %vm8095
    %v8097 = vsel %vm8096, %v8088, %v8093
    %v8098 = vrsqrt.pop %v8087
    %v8099 = vmul.f32 %v8098, %v8087
    %v8100 = vmul.f32 %v8099, %v8098
    %v8101 = vmul.f32 0.5, %v8100
    %v8102 = vsub.f32 1.5, %v8101
    %v8103 = vmul.f32 %v8098, %v8102
    %vm8104 = vweird.f32 %v8087
    %vm8105 = vweird.f32 %v8098
    %vm8106 = vmor %vm8104, %vm8105
    %v8107 = vsel %vm8106, %v8098, %v8103
    %v8108 = vmul.f32 %v8076, %v8097
    %v8109 = vmul.f32 %v8077, %v8107
    %v8110 = vld [vmem:[#allocation9 + $0x170] sm:$0x1]
    %v8111 = vperm.slane %v8110, 0
    %v8112 = vmul.f32 %v8108, %v8111
    %v8113 = vmul.f32 %v8109, %v8111
    %v8114 = vld [vmem:[#allocation9 + $0x178] sm:$0x1]
    %v8115 = vperm.slane %v8114, 0
    %v8116 = vadd.f32 %v8112, %v8115
    %v8117 = vadd.f32 %v8113, %v8115
    %v8118 = vpack.c.bf16 %v8117, %v8116
    %v8119 = vld [vmem:[#allocation7 + $0x798] sm:$0xf]
    %v8120 = vld [vmem:[#allocation7 + $0x79c] sm:$0xf]
    %v8121 = vld [vmem:[#allocation7 + $0x7a0] sm:$0xf]
    %v8122 = vld [vmem:[#allocation7 + $0x7a4] sm:$0xf]
    %v8123 = vld [vmem:[#allocation7 + $0x7a8] sm:$0xf]
    %v8124 = vld [vmem:[#allocation7 + $0x7ac] sm:$0xf]
    %v8125 = vld [vmem:[#allocation7 + $0x7b0] sm:$0xf]
    %v8126 = vld [vmem:[#allocation7 + $0x7b4] sm:$0xf]
    %v8127 = vld [vmem:[#allocation7 + $0x7b8] sm:$0xf]
    %v8128 = vld [vmem:[#allocation7 + $0x7bc] sm:$0xf]
    %v8129 = vld [vmem:[#allocation7 + $0x7c0] sm:$0xf]
    %v8130 = vld [vmem:[#allocation7 + $0x7c4] sm:$0xf]
    %v8131 = vld [vmem:[#allocation7 + $0x7c8] sm:$0xf]
    %v8132 = vld [vmem:[#allocation7 + $0x7cc] sm:$0xf]
    %v8133 = vld [vmem:[#allocation7 + $0x7d0] sm:$0xf]
    %v8134 = vld [vmem:[#allocation7 + $0x7d4] sm:$0xf]
    %v8135 = vld [vmem:[#allocation9 + $0x190] sm:$0x1]
    %v8136 = vperm.slane %v8135, 0
    %v8153 = vunpack.c.l.b16 %v8119
    %v8154 = vunpack.c.l.b16 %v8120
    %v8155 = vunpack.c.l.b16 %v8121
    %v8156 = vunpack.c.l.b16 %v8122
    %v8157 = vunpack.c.l.b16 %v8123
    %v8158 = vunpack.c.l.b16 %v8124
    %v8159 = vunpack.c.l.b16 %v8125
    %v8160 = vunpack.c.l.b16 %v8126
    %v8161 = vunpack.c.l.b16 %v8127
    %v8162 = vunpack.c.l.b16 %v8128
    %v8163 = vunpack.c.l.b16 %v8129
    %v8164 = vunpack.c.l.b16 %v8130
    %v8165 = vunpack.c.l.b16 %v8131
    %v8166 = vunpack.c.l.b16 %v8132
    %v8167 = vunpack.c.l.b16 %v8133
    %v8168 = vunpack.c.l.b16 %v8134
    %v8169 = vpack.c.b16 %v8154, %v8153
    %v8170 = vpack.c.b16 %v8156, %v8155
    %v8171 = vpack.c.b16 %v8158, %v8157
    %v8172 = vpack.c.b16 %v8160, %v8159
    %v8173 = vpack.c.b16 %v8162, %v8161
    %v8174 = vpack.c.b16 %v8164, %v8163
    %v8175 = vpack.c.b16 %v8166, %v8165
    %v8176 = vpack.c.b16 %v8168, %v8167
    %8185 = vmatpush.bf16.msra.mxu0 %v8176
    %8186 = vmatpush.bf16.msra.mxu0 %v8175
    %8187 = vmatpush.bf16.msra.mxu0 %v8174
    %8188 = vmatpush.bf16.msra.mxu0 %v8173
    %8189 = vmatpush.bf16.msra.mxu0 %v8172
    %8190 = vmatpush.bf16.msra.mxu0 %v8171
    %8191 = vmatpush.bf16.msra.mxu0 %v8170
    %8192 = vmatpush.bf16.msra.mxu0 %v8169
    %8193 = vmatmul.bf16.gmra.mxu0 %v8118
    %v8194 = vpop.f32.mrf.mxu0
    %v8195 = vadd.f32 %v8136, %v8194
    %v8196 = vpop.f32.mrf.mxu0
    %v8197 = vadd.f32 %v8136, %v8196
    %8198 = vdwg.mxu0
    %v8199 = vmax.f32 %v8195, 0.0
    %v8200 = vmax.f32 %v8197, 0.0
    %v8201 = vpack.c.bf16 %v8200, %v8199
    %v8202 = vld [vmem:[#allocation7 + $0x7d8] sm:$0xf]
    %v8203 = vld [vmem:[#allocation7 + $0x7dc] sm:$0xf]
    %v8204 = vld [vmem:[#allocation7 + $0x7e0] sm:$0xf]
    %v8205 = vld [vmem:[#allocation7 + $0x7e4] sm:$0xf]
    %v8206 = vld [vmem:[#allocation7 + $0x7e8] sm:$0xf]
    %v8207 = vld [vmem:[#allocation7 + $0x7ec] sm:$0xf]
    %v8208 = vld [vmem:[#allocation7 + $0x7f0] sm:$0xf]
    %v8209 = vld [vmem:[#allocation7 + $0x7f4] sm:$0xf]
    %v8210 = vld [vmem:[#allocation7 + $0x7f8] sm:$0xf]
    %v8211 = vld [vmem:[#allocation7 + $0x7fc] sm:$0xf]
    %v8212 = vld [vmem:[#allocation7 + $0x800] sm:$0xf]
    %v8213 = vld [vmem:[#allocation7 + $0x804] sm:$0xf]
    %v8214 = vld [vmem:[#allocation7 + $0x808] sm:$0xf]
    %v8215 = vld [vmem:[#allocation7 + $0x80c] sm:$0xf]
    %v8216 = vld [vmem:[#allocation7 + $0x810] sm:$0xf]
    %v8217 = vld [vmem:[#allocation7 + $0x814] sm:$0xf]
    %v8218 = vld [vmem:[#allocation9 + $0x198] sm:$0x1]
    %v8219 = vperm.slane %v8218, 0
    %v8236 = vunpack.c.l.b16 %v8202
    %v8237 = vunpack.c.l.b16 %v8203
    %v8238 = vunpack.c.l.b16 %v8204
    %v8239 = vunpack.c.l.b16 %v8205
    %v8240 = vunpack.c.l.b16 %v8206
    %v8241 = vunpack.c.l.b16 %v8207
    %v8242 = vunpack.c.l.b16 %v8208
    %v8243 = vunpack.c.l.b16 %v8209
    %v8244 = vunpack.c.l.b16 %v8210
    %v8245 = vunpack.c.l.b16 %v8211
    %v8246 = vunpack.c.l.b16 %v8212
    %v8247 = vunpack.c.l.b16 %v8213
    %v8248 = vunpack.c.l.b16 %v8214
    %v8249 = vunpack.c.l.b16 %v8215
    %v8250 = vunpack.c.l.b16 %v8216
    %v8251 = vunpack.c.l.b16 %v8217
    %v8252 = vpack.c.b16 %v8237, %v8236
    %v8253 = vpack.c.b16 %v8239, %v8238
    %v8254 = vpack.c.b16 %v8241, %v8240
    %v8255 = vpack.c.b16 %v8243, %v8242
    %v8256 = vpack.c.b16 %v8245, %v8244
    %v8257 = vpack.c.b16 %v8247, %v8246
    %v8258 = vpack.c.b16 %v8249, %v8248
    %v8259 = vpack.c.b16 %v8251, %v8250
    %8268 = vmatpush.bf16.msra.mxu0 %v8259
    %8269 = vmatpush.bf16.msra.mxu0 %v8258
    %8270 = vmatpush.bf16.msra.mxu0 %v8257
    %8271 = vmatpush.bf16.msra.mxu0 %v8256
    %8272 = vmatpush.bf16.msra.mxu0 %v8255
    %8273 = vmatpush.bf16.msra.mxu0 %v8254
    %8274 = vmatpush.bf16.msra.mxu0 %v8253
    %8275 = vmatpush.bf16.msra.mxu0 %v8252
    %8276 = vmatmul.bf16.gmra.mxu0 %v8201
    %v8277 = vpop.f32.mrf.mxu0
    %v8278 = vadd.f32 %v8219, %v8277
    %v8279 = vpop.f32.mrf.mxu0
    %v8280 = vadd.f32 %v8219, %v8279
    %8281 = vdwg.mxu0
    %v8282 = vadd.f32 %v8116, %v8278
    %v8283 = vadd.f32 %v8117, %v8280
    %8284 = vadd.xlane.f32.xlu0 %v8282
    %v8285 = vpop.xlane.xlu0 %8284
    %8286 = vadd.xlane.f32.xlu0 %v8283
    %v8287 = vpop.xlane.xlu0 %8286
    %v8288 = vmul.f32 %v8285, %v1332
    %v8289 = vmul.f32 %v8287, %v1332
    %v8290 = vsub.f32 %v8282, %v8288
    %v8291 = vsub.f32 %v8283, %v8289
    %v8292 = vmul.f32 %v8290, %v8290
    %v8293 = vmul.f32 %v8291, %v8291
    %8294 = vadd.xlane.f32.xlu0 %v8292
    %v8295 = vpop.xlane.xlu0 %8294
    %8296 = vadd.xlane.f32.xlu0 %v8293
    %v8297 = vpop.xlane.xlu0 %8296
    %v8298 = vmul.f32 %v8295, %v1332
    %v8299 = vmul.f32 %v8297, %v1332
    %v8300 = vadd.f32 %v8298, 1e-05
    %v8301 = vadd.f32 %v8299, 1e-05
    %v8302 = vrsqrt.pop %v8300
    %v8303 = vmul.f32 %v8302, %v8300
    %v8304 = vmul.f32 %v8303, %v8302
    %v8305 = vmul.f32 0.5, %v8304
    %v8306 = vsub.f32 1.5, %v8305
    %v8307 = vmul.f32 %v8302, %v8306
    %vm8308 = vweird.f32 %v8300
    %vm8309 = vweird.f32 %v8302
    %vm8310 = vmor %vm8308, %vm8309
    %v8311 = vsel %vm8310, %v8302, %v8307
    %v8312 = vrsqrt.pop %v8301
    %v8313 = vmul.f32 %v8312, %v8301
    %v8314 = vmul.f32 %v8313, %v8312
    %v8315 = vmul.f32 0.5, %v8314
    %v8316 = vsub.f32 1.5, %v8315
    %v8317 = vmul.f32 %v8312, %v8316
    %vm8318 = vweird.f32 %v8301
    %vm8319 = vweird.f32 %v8312
    %vm8320 = vmor %vm8318, %vm8319
    %v8321 = vsel %vm8320, %v8312, %v8317
    %v8322 = vmul.f32 %v8290, %v8311
    %v8323 = vmul.f32 %v8291, %v8321
    %v8324 = vld [vmem:[#allocation9 + $0x180] sm:$0x1]
    %v8325 = vperm.slane %v8324, 0
    %v8326 = vmul.f32 %v8322, %v8325
    %v8327 = vmul.f32 %v8323, %v8325
    %v8328 = vld [vmem:[#allocation9 + $0x188] sm:$0x1]
    %v8329 = vperm.slane %v8328, 0
    %v8330 = vadd.f32 %v8326, %v8329
    %v8331 = vadd.f32 %v8327, %v8329
    %8332 = vadd.xlane.f32.xlu0 %v8330
    %v8333 = vpop.xlane.xlu0 %8332
    %8334 = vadd.xlane.f32.xlu0 %v8331
    %v8335 = vpop.xlane.xlu0 %8334
    %v8336 = vmul.f32 %v8333, %v1332
    %v8337 = vmul.f32 %v8335, %v1332
    %v8338 = vsub.f32 %v8330, %v8336
    %v8339 = vsub.f32 %v8331, %v8337
    %v8340 = vmul.f32 %v8338, %v8338
    %v8341 = vmul.f32 %v8339, %v8339
    %8342 = vadd.xlane.f32.xlu0 %v8340
    %v8343 = vpop.xlane.xlu0 %8342
    %8344 = vadd.xlane.f32.xlu0 %v8341
    %v8345 = vpop.xlane.xlu0 %8344
    %v8346 = vmul.f32 %v8343, %v1332
    %v8347 = vmul.f32 %v8345, %v1332
    %v8348 = vadd.f32 %v8346, 1e-05
    %v8349 = vadd.f32 %v8347, 1e-05
    %v8350 = vrsqrt.pop %v8348
    %v8351 = vmul.f32 %v8350, %v8348
    %v8352 = vmul.f32 %v8351, %v8350
    %v8353 = vmul.f32 0.5, %v8352
    %v8354 = vsub.f32 1.5, %v8353
    %v8355 = vmul.f32 %v8350, %v8354
    %vm8356 = vweird.f32 %v8348
    %vm8357 = vweird.f32 %v8350
    %vm8358 = vmor %vm8356, %vm8357
    %v8359 = vsel %vm8358, %v8350, %v8355
    %v8360 = vrsqrt.pop %v8349
    %v8361 = vmul.f32 %v8360, %v8349
    %v8362 = vmul.f32 %v8361, %v8360
    %v8363 = vmul.f32 0.5, %v8362
    %v8364 = vsub.f32 1.5, %v8363
    %v8365 = vmul.f32 %v8360, %v8364
    %vm8366 = vweird.f32 %v8349
    %vm8367 = vweird.f32 %v8360
    %vm8368 = vmor %vm8366, %vm8367
    %v8369 = vsel %vm8368, %v8360, %v8365
    %v8370 = vmul.f32 %v8338, %v8359
    %v8371 = vmul.f32 %v8339, %v8369
    %v8372 = vld [vmem:[#allocation9 + $0x1b0] sm:$0x1]
    %v8373 = vperm.slane %v8372, 0
    %v8374 = vmul.f32 %v8370, %v8373
    %v8375 = vmul.f32 %v8371, %v8373
    %v8376 = vld [vmem:[#allocation9 + $0x1b8] sm:$0x1]
    %v8377 = vperm.slane %v8376, 0
    %v8378 = vadd.f32 %v8374, %v8377
    %v8379 = vadd.f32 %v8375, %v8377
    %v8380 = vpack.c.bf16 %v8379, %v8378
    %v8381 = vld [vmem:[#allocation7 + $0x818] sm:$0xf]
    %v8382 = vld [vmem:[#allocation7 + $0x81c] sm:$0xf]
    %v8383 = vld [vmem:[#allocation7 + $0x820] sm:$0xf]
    %v8384 = vld [vmem:[#allocation7 + $0x824] sm:$0xf]
    %v8385 = vld [vmem:[#allocation7 + $0x828] sm:$0xf]
    %v8386 = vld [vmem:[#allocation7 + $0x82c] sm:$0xf]
    %v8387 = vld [vmem:[#allocation7 + $0x830] sm:$0xf]
    %v8388 = vld [vmem:[#allocation7 + $0x834] sm:$0xf]
    %v8389 = vld [vmem:[#allocation7 + $0x838] sm:$0xf]
    %v8390 = vld [vmem:[#allocation7 + $0x83c] sm:$0xf]
    %v8391 = vld [vmem:[#allocation7 + $0x840] sm:$0xf]
    %v8392 = vld [vmem:[#allocation7 + $0x844] sm:$0xf]
    %v8393 = vld [vmem:[#allocation7 + $0x848] sm:$0xf]
    %v8394 = vld [vmem:[#allocation7 + $0x84c] sm:$0xf]
    %v8395 = vld [vmem:[#allocation7 + $0x850] sm:$0xf]
    %v8396 = vld [vmem:[#allocation7 + $0x854] sm:$0xf]
    %v8397 = vld [vmem:[#allocation9 + $0x1c0] sm:$0x1]
    %v8398 = vperm.slane %v8397, 0
    %v8415 = vunpack.c.l.b16 %v8381
    %v8416 = vunpack.c.l.b16 %v8382
    %v8417 = vunpack.c.l.b16 %v8383
    %v8418 = vunpack.c.l.b16 %v8384
    %v8419 = vunpack.c.l.b16 %v8385
    %v8420 = vunpack.c.l.b16 %v8386
    %v8421 = vunpack.c.l.b16 %v8387
    %v8422 = vunpack.c.l.b16 %v8388
    %v8423 = vunpack.c.l.b16 %v8389
    %v8424 = vunpack.c.l.b16 %v8390
    %v8425 = vunpack.c.l.b16 %v8391
    %v8426 = vunpack.c.l.b16 %v8392
    %v8427 = vunpack.c.l.b16 %v8393
    %v8428 = vunpack.c.l.b16 %v8394
    %v8429 = vunpack.c.l.b16 %v8395
    %v8430 = vunpack.c.l.b16 %v8396
    %v8431 = vpack.c.b16 %v8416, %v8415
    %v8432 = vpack.c.b16 %v8418, %v8417
    %v8433 = vpack.c.b16 %v8420, %v8419
    %v8434 = vpack.c.b16 %v8422, %v8421
    %v8435 = vpack.c.b16 %v8424, %v8423
    %v8436 = vpack.c.b16 %v8426, %v8425
    %v8437 = vpack.c.b16 %v8428, %v8427
    %v8438 = vpack.c.b16 %v8430, %v8429
    %8447 = vmatpush.bf16.msra.mxu0 %v8438
    %8448 = vmatpush.bf16.msra.mxu0 %v8437
    %8449 = vmatpush.bf16.msra.mxu0 %v8436
    %8450 = vmatpush.bf16.msra.mxu0 %v8435
    %8451 = vmatpush.bf16.msra.mxu0 %v8434
    %8452 = vmatpush.bf16.msra.mxu0 %v8433
    %8453 = vmatpush.bf16.msra.mxu0 %v8432
    %8454 = vmatpush.bf16.msra.mxu0 %v8431
    %8455 = vmatmul.bf16.gmra.mxu0 %v8380
    %v8456 = vpop.f32.mrf.mxu0
    %v8457 = vadd.f32 %v8398, %v8456
    %v8458 = vpop.f32.mrf.mxu0
    %v8459 = vadd.f32 %v8398, %v8458
    %8460 = vdwg.mxu0
    %8461 = vst [vmem:[%s7] sm:$0xff] %v8457
    %8462 = vst [vmem:[%s7 + $0x8] sm:$0xff] %v8459
    // Predicated region
    $region50: #{transformer_forward.1} parent=1 // pred_check
      _
    $region51: #{transformer_forward.1} parent=1 // pred_check_branch
      %8464 = sbr.rel (0) target = $region53
    $region52: #{transformer_forward.1} parent=1 // pred_region
      _
    $region53: #{transformer_forward.1} parent=1 // pred_fallthru
      _
    // Predicated region
    $region54: #{transformer_forward.1} parent=1 // pred_check
      _
    $region55: #{transformer_forward.1} parent=1 // pred_check_branch
      %8466 = sbr.rel (0) target = $region57
    $region56: #{transformer_forward.1} parent=1 // pred_region
      _
    $region57: #{transformer_forward.1} parent=1 // pred_fallthru
      _
    %8467 = vsyncpa [#allocation3], 1
    %8468 = vsyncpa [#allocation5], 1
    %8469 = vsyncpa [#allocation8], 1

</llo_original>
